<compile_context>
chip_gen: v6e
topology: v6e:2x2x1
jax: 0.10.0
libtpu: 0.0.40
codegen_flags: <defaults>
</compile_context>

<pallas_src>
import functools

import jax
import jax.numpy as jnp
from jax.experimental import pallas as pl
from jax.experimental.pallas import tpu as pltpu

# ---- constants.* from the original repo (synthetic values) -------------------
MY_POOLING_KERNEL = 2
MY_POOLING_STRIDE = 2
BN_EPS = 1e-5  # PyTorch BatchNorm2d default

LANES = 128
SUBLANES = 8


def _col0(pad):
    """First data column inside an in-kernel padded buffer.

    Chosen as a multiple of 8 so the interior store is sublane-aligned while
    still leaving >= `pad` zero columns to the left of the data.
    """
    return 0 if pad <= 0 else ((pad + SUBLANES - 1) // SUBLANES) * SUBLANES


# ------------------------------- kernels --------------------------------------
def _fused_cnn_kernel(x_ref, w0_ref, p0_ref, w1_ref, p1_ref, w2_ref, p2_ref,
                      out_ref, act0_ref, padA_ref, padB_ref,
                      *, k0, oh0, ow0, ph, pw,
                      k1, pd1, oh1, ow1, k2, pd2, oh2, ow2):
    """Per-sample fused: conv0+ReLU+BN -> maxpool(2,2) -> conv1+ReLU+BN -> conv2+ReLU+BN.

    All channel dims are padded to 128 (padded channels carry exact zeros).
    Weights are (k*k, 128, 128) bf16 (tap-major); post arrays are (8, 128) f32
    with rows [bias, bn_scale, bn_shift, 0...].
    """

    def conv_relu_bn(get_win, k, w_ref, post_ref, oh, ow):
        acc = None
        for t in range(k * k):
            i, j = divmod(t, k)
            win = get_win(i, j).reshape(oh * ow, LANES).astype(jnp.bfloat16)
            part = jnp.dot(win, w_ref[t], preferred_element_type=jnp.float32)
            acc = part if acc is None else acc + part
        bias = post_ref[0:1, :]
        scale = post_ref[1:2, :]
        shift = post_ref[2:3, :]
        # conv bias -> ReLU -> BatchNorm2d (inference) affine
        return jnp.maximum(acc + bias, 0.0) * scale + shift        # (oh*ow, 128) f32

    def pad_and_conv(src_val, pad_ref, k, p, ih, iw, oh, ow, w_ref, post_ref):
        c0 = _col0(p)
        pad_ref[...] = jnp.zeros_like(pad_ref)
        pad_ref[p:p + ih, c0:c0 + iw, :] = src_val                 # aligned interior store
        return conv_relu_bn(
            lambda i, j: pad_ref[i:i + oh, (c0 - p + j):(c0 - p + j + ow), :],
            k, w_ref, post_ref, oh, ow)

    # ---- layer0: conv + ReLU + BN (input already spatially & channel padded) --
    a0 = conv_relu_bn(lambda i, j: x_ref[0, i:i + oh0, j:j + ow0, :],
                      k0, w0_ref, p0_ref, oh0, ow0)                # (oh0*ow0, 128)
    act0_ref[...] = a0.reshape(oh0, ow0, LANES)

    # ---- maxpool 2x2 stride 2 (W via strided sublane reads, H via leading split)
    wmax = jnp.maximum(act0_ref[:, pl.ds(0, pw, stride=2), :],
                       act0_ref[:, pl.ds(1, pw, stride=2), :])     # (oh0, pw, 128)
    hm = wmax.reshape(ph, 2, pw, LANES)
    pooled = jnp.maximum(hm[:, 0], hm[:, 1])                       # (ph, pw, 128)

    # ---- layer1 ---------------------------------------------------------------
    a1 = pad_and_conv(pooled, padA_ref, k1, pd1, ph, pw, oh1, ow1,
                      w1_ref, p1_ref)                              # (oh1*ow1, 128)

    # ---- layer2 ---------------------------------------------------------------
    a2 = pad_and_conv(a1.reshape(oh1, ow1, LANES), padB_ref, k2, pd2,
                      oh1, ow1, oh2, ow2, w2_ref, p2_ref)          # (oh2*ow2, 128)

    out_ref[0] = a2.reshape(oh2, ow2, LANES)


def _fc_kernel(x_ref, w_ref, b_ref, o_ref):
    # x: (N, F) f32, w: (F, 128) bf16, b: (1, 128) f32 -> o: (N, 128) f32
    o_ref[...] = jnp.dot(x_ref[...].astype(jnp.bfloat16), w_ref[...],
                         preferred_element_type=jnp.float32) + b_ref[...]


# ------------------------------- glue / wrappers -------------------------------
def _prep_conv(w, b, gamma, beta, mean, var):
    """Conv weight -> (k*k, 128, 128) bf16 taps; bias/BN -> (8, 128) f32 post."""
    OC, Cin, kh, kw = w.shape
    wt = jnp.transpose(w, (2, 3, 1, 0)).reshape(kh * kw, Cin, OC)   # [tap, cin, oc]
    wt = jnp.pad(wt, ((0, 0), (0, LANES - Cin), (0, LANES - OC))).astype(jnp.bfloat16)

    inv_std = 1.0 / jnp.sqrt(var + BN_EPS)
    scale = gamma * inv_std
    shift = beta - mean * scale
    post = jnp.zeros((SUBLANES, LANES), jnp.float32)
    post = post.at[0, :OC].set(b)
    post = post.at[1, :OC].set(scale)
    post = post.at[2, :OC].set(shift)
    return wt, post


def make_forward(parameter_conv, input_size, num_classes):
    """Builds a jitted forward(x, params) matching MyModel.forward."""
    assert MY_POOLING_KERNEL == 2 and MY_POOLING_STRIDE == 2, \
        "TODO(synk): only MaxPool2d(kernel=2, stride=2) implemented"
    for p in parameter_conv:
        assert p['stride'] == 1, "TODO(synk): stride > 1 not implemented"
        assert p['groups'] == 1, "TODO(synk): grouped conv not implemented"
        assert p['channels'] <= LANES
    assert num_classes <= LANES

    k0, k1, k2 = (p['kernel_size'] for p in parameter_conv)
    p0, p1, p2 = (p['padding'] for p in parameter_conv)
    H = W = input_size

    oh0, ow0 = H + 2 * p0 - k0 + 1, W + 2 * p0 - k0 + 1
    assert oh0 % 2 == 0 and ow0 % 2 == 0
    ph, pw = oh0 // 2, ow0 // 2
    oh1, ow1 = ph + 2 * p1 - k1 + 1, pw + 2 * p1 - k1 + 1
    oh2, ow2 = oh1 + 2 * p2 - k2 + 1, ow1 + 2 * p2 - k2 + 1
    # layout assumption for free in-kernel reshapes (holds for this config)
    assert ow0 % 8 == 0 and pw % 8 == 0 and ow1 % 8 == 0 and ow2 % 8 == 0

    kernel = functools.partial(
        _fused_cnn_kernel,
        k0=k0, oh0=oh0, ow0=ow0, ph=ph, pw=pw,
        k1=k1, pd1=p1, oh1=oh1, ow1=ow1,
        k2=k2, pd2=p2, oh2=oh2, ow2=ow2)

    padA_shape = (ph + 2 * p1, _col0(p1) + pw + p1, LANES)
    padB_shape = (oh1 + 2 * p2, _col0(p2) + ow1 + p2, LANES)
    c2 = parameter_conv[2]['channels']

    @jax.jit
    def forward(x, params):
        N = x.shape[0]
        w0t, post0 = _prep_conv(**params['conv0'])
        w1t, post1 = _prep_conv(**params['conv1'])
        w2t, post2 = _prep_conv(**params['conv2'])

        # model input: NCHW -> NHWC, zero-pad spatial by p0 and channels to 128
        xh = jnp.transpose(x, (0, 2, 3, 1))
        xp = jnp.pad(xh, ((0, 0), (p0, p0), (p0, p0), (0, LANES - xh.shape[-1])))

        act = pl.pallas_call(
            kernel,
            out_shape=jax.ShapeDtypeStruct((N, oh2, ow2, LANES), jnp.float32),
            grid=(N,),
            in_specs=[
                pl.BlockSpec((1, H + 2 * p0, W + 2 * p0, LANES),
                             lambda n: (n, 0, 0, 0)),
                pl.BlockSpec((k0 * k0, LANES, LANES), lambda n: (0, 0, 0)),
                pl.BlockSpec((SUBLANES, LANES), lambda n: (0, 0)),
                pl.BlockSpec((k1 * k1, LANES, LANES), lambda n: (0, 0, 0)),
                pl.BlockSpec((SUBLANES, LANES), lambda n: (0, 0)),
                pl.BlockSpec((k2 * k2, LANES, LANES), lambda n: (0, 0, 0)),
                pl.BlockSpec((SUBLANES, LANES), lambda n: (0, 0)),
            ],
            out_specs=pl.BlockSpec((1, oh2, ow2, LANES), lambda n: (n, 0, 0, 0)),
            scratch_shapes=[
                pltpu.VMEM((oh0, ow0, LANES), jnp.float32),   # conv0 output (for pool)
                pltpu.VMEM(padA_shape, jnp.float32),          # padded conv1 input
                pltpu.VMEM(padB_shape, jnp.float32),          # padded conv2 input
            ],
            compiler_params=pltpu.CompilerParams(
                dimension_semantics=("parallel",)),
        )(xp, w0t, post0, w1t, post1, w2t, post2)

        # flatten (NHWC order) + fc.  fc weight columns are re-ordered from the
        # PyTorch NCHW flatten order (c,h,w) to (h,w,c_pad) and padded so the
        # Pallas fc output is lane-dense (num_classes -> 128).
        feats = act.reshape(N, oh2 * ow2 * LANES)
        fw, fb = params['fc']['w'], params['fc']['b']
        wf = fw.reshape(num_classes, c2, oh2, ow2)
        wf = jnp.transpose(wf, (2, 3, 1, 0))                            # (h, w, c, cls)
        wf = jnp.pad(wf, ((0, 0), (0, 0),
                          (0, LANES - c2), (0, LANES - num_classes)))
        wf = wf.reshape(oh2 * ow2 * LANES, LANES).astype(jnp.bfloat16)
        fbp = jnp.pad(fb, (0, LANES - num_classes)).reshape(1, LANES)

        logits = pl.pallas_call(
            _fc_kernel,
            out_shape=jax.ShapeDtypeStruct((N, LANES), jnp.float32),
        )(feats, wf, fbp)
        return logits[:, :num_classes]

    return forward


# ------------------------------- parameter init -------------------------------
def init_params(key, input_size, num_classes, parameter_conv):
    keys = jax.random.split(key, 16)
    params = {}
    cin = 3
    ki = 0
    for li, p in enumerate(parameter_conv):
        oc, k = p['channels'], p['kernel_size']
        w = 0.1 * jax.random.normal(keys[ki], (oc, cin, k, k), jnp.float32); ki += 1
        if p['bias']:
            b = 0.01 * jax.random.normal(keys[ki], (oc,), jnp.float32)
        else:
            b = jnp.zeros((oc,), jnp.float32)
        ki += 1
        gamma = 1.0 + 0.1 * jax.random.normal(keys[ki], (oc,), jnp.float32); ki += 1
        beta = 0.05 * jax.random.normal(keys[ki], (oc,), jnp.float32); ki += 1
        mean = 0.01 * jnp.arange(oc, dtype=jnp.float32)
        var = 1.0 + 0.01 * jnp.arange(oc, dtype=jnp.float32)
        params[f'conv{li}'] = dict(w=w, b=b, gamma=gamma, beta=beta, mean=mean, var=var)
        cin = oc

    # replicate MyModel.__init__ size arithmetic for the fc layer
    size0 = 1 + (input_size - parameter_conv[0]['kernel_size']
                 + 2 * parameter_conv[0]['padding']) // parameter_conv[0]['stride']
    size_pool = 1 + (size0 - MY_POOLING_KERNEL) // MY_POOLING_STRIDE
    size1 = 1 + (size_pool - parameter_conv[1]['kernel_size']
                 + 2 * parameter_conv[1]['padding']) // parameter_conv[1]['stride']
    size2 = 1 + (size1 - parameter_conv[2]['kernel_size']
                 + 2 * parameter_conv[2]['padding']) // parameter_conv[2]['stride']
    fc_in = size2 * size2 * parameter_conv[2]['channels']
    fc_w = 0.05 * jax.random.normal(keys[ki], (num_classes, fc_in), jnp.float32); ki += 1
    fc_b = 0.01 * jax.random.normal(keys[ki], (num_classes,), jnp.float32); ki += 1
    params['fc'] = dict(w=fc_w, b=fc_b)
    return params


# ----------------------------------- main --------------------------------------
if __name__ == "__main__":
    key = jax.random.PRNGKey(0)
    pkey, xkey = jax.random.split(key)

    input_size = 16
    num_classes = 10
    batch = 2
    parameter_conv = [
        dict(channels=8, kernel_size=3, stride=1, padding=1, bias=True, groups=1),
        dict(channels=16, kernel_size=3, stride=1, padding=1, bias=True, groups=1),
        dict(channels=16, kernel_size=3, stride=1, padding=1, bias=True, groups=1),
    ]

    params = init_params(pkey, input_size, num_classes, parameter_conv)
    x = jax.random.normal(xkey, (batch, 3, input_size, input_size), jnp.float32)

    forward = make_forward(parameter_conv, input_size, num_classes)
    out = jax.block_until_ready(forward(x, params))

    assert out.shape == (batch, num_classes), out.shape
    assert bool(jnp.all(jnp.isfinite(out)))
    print("KERNEL_OK")
</pallas_src>

<mosaic_0001>
module attributes {stable_mosaic.version = 11 : i64} {
  func.func @_fused_cnn_kernel(%arg0: i32, %arg1: memref<1x18x18x128xf32, #tpu.memory_space<vmem>>, %arg2: memref<9x128x128xbf16, #tpu.memory_space<vmem>>, %arg3: memref<8x128xf32, #tpu.memory_space<vmem>>, %arg4: memref<9x128x128xbf16, #tpu.memory_space<vmem>>, %arg5: memref<8x128xf32, #tpu.memory_space<vmem>>, %arg6: memref<9x128x128xbf16, #tpu.memory_space<vmem>>, %arg7: memref<8x128xf32, #tpu.memory_space<vmem>>, %arg8: memref<1x8x8x128xf32, #tpu.memory_space<vmem>>, %arg9: memref<16x16x128xf32, #tpu.memory_space<vmem>>, %arg10: memref<10x17x128xf32, #tpu.memory_space<vmem>>, %arg11: memref<10x17x128xf32, #tpu.memory_space<vmem>>) attributes {dimension_semantics = [#tpu.dimension_semantics<parallel>], iteration_bounds = array<i64: 2>, scalar_prefetch = 0 : i64, scratch_operands = 3 : i64, tpu.core_type = #tpu.core_type<tc>, window_params = [{transform_indices = @transform_0, window_bounds = array<i64: 1, 18, 18, 128>}, {pipeline_mode = #tpu.pipeline_mode<synchronous>, transform_indices = @transform_1, window_bounds = array<i64: 9, 128, 128>}, {pipeline_mode = #tpu.pipeline_mode<synchronous>, transform_indices = @transform_2, window_bounds = array<i64: 8, 128>}, {pipeline_mode = #tpu.pipeline_mode<synchronous>, transform_indices = @transform_3, window_bounds = array<i64: 9, 128, 128>}, {pipeline_mode = #tpu.pipeline_mode<synchronous>, transform_indices = @transform_4, window_bounds = array<i64: 8, 128>}, {pipeline_mode = #tpu.pipeline_mode<synchronous>, transform_indices = @transform_5, window_bounds = array<i64: 9, 128, 128>}, {pipeline_mode = #tpu.pipeline_mode<synchronous>, transform_indices = @transform_6, window_bounds = array<i64: 8, 128>}, {transform_indices = @transform_7, window_bounds = array<i64: 1, 8, 8, 128>}]} {
    %c0 = arith.constant 0 : index
    %c0_0 = arith.constant 0 : index
    %c0_1 = arith.constant 0 : index
    %c0_2 = arith.constant 0 : index
    %0 = vector.load %arg1[%c0, %c0_0, %c0_1, %c0_2] : memref<1x18x18x128xf32, #tpu.memory_space<vmem>>, vector<1x16x16x128xf32>
    %1 = vector.shape_cast %0 : vector<1x16x16x128xf32> to vector<16x16x128xf32>
    %2 = vector.shape_cast %1 : vector<16x16x128xf32> to vector<256x128xf32>
    %3 = arith.truncf %2 : vector<256x128xf32> to vector<256x128xbf16>
    %c0_3 = arith.constant 0 : index
    %c0_4 = arith.constant 0 : index
    %c0_5 = arith.constant 0 : index
    %4 = vector.load %arg2[%c0_3, %c0_4, %c0_5] : memref<9x128x128xbf16, #tpu.memory_space<vmem>>, vector<1x128x128xbf16>
    %5 = vector.shape_cast %4 : vector<1x128x128xbf16> to vector<128x128xbf16>
    %cst = arith.constant dense<0.000000e+00> : vector<256x128xf32>
    %6 = tpu.matmul %3, %5, %cst {dimension_numbers = #tpu.dot_dimension_numbers<[1], [0], [0], [1], [0, 0, 1, 1], [], []>} : vector<256x128xbf16>, vector<128x128xbf16>, vector<256x128xf32> -> vector<256x128xf32>
    %c0_6 = arith.constant 0 : index
    %c0_7 = arith.constant 0 : index
    %c1 = arith.constant 1 : index
    %c0_8 = arith.constant 0 : index
    %7 = vector.load %arg1[%c0_6, %c0_7, %c1, %c0_8] : memref<1x18x18x128xf32, #tpu.memory_space<vmem>>, vector<1x16x16x128xf32>
    %8 = vector.shape_cast %7 : vector<1x16x16x128xf32> to vector<16x16x128xf32>
    %9 = vector.shape_cast %8 : vector<16x16x128xf32> to vector<256x128xf32>
    %10 = arith.truncf %9 : vector<256x128xf32> to vector<256x128xbf16>
    %c1_9 = arith.constant 1 : index
    %c0_10 = arith.constant 0 : index
    %c0_11 = arith.constant 0 : index
    %11 = vector.load %arg2[%c1_9, %c0_10, %c0_11] : memref<9x128x128xbf16, #tpu.memory_space<vmem>>, vector<1x128x128xbf16>
    %12 = vector.shape_cast %11 : vector<1x128x128xbf16> to vector<128x128xbf16>
    %cst_12 = arith.constant dense<0.000000e+00> : vector<256x128xf32>
    %13 = tpu.matmul %10, %12, %cst_12 {dimension_numbers = #tpu.dot_dimension_numbers<[1], [0], [0], [1], [0, 0, 1, 1], [], []>} : vector<256x128xbf16>, vector<128x128xbf16>, vector<256x128xf32> -> vector<256x128xf32>
    %14 = arith.addf %6, %13 : vector<256x128xf32>
    %c0_13 = arith.constant 0 : index
    %c0_14 = arith.constant 0 : index
    %c2 = arith.constant 2 : index
    %c0_15 = arith.constant 0 : index
    %15 = vector.load %arg1[%c0_13, %c0_14, %c2, %c0_15] : memref<1x18x18x128xf32, #tpu.memory_space<vmem>>, vector<1x16x16x128xf32>
    %16 = vector.shape_cast %15 : vector<1x16x16x128xf32> to vector<16x16x128xf32>
    %17 = vector.shape_cast %16 : vector<16x16x128xf32> to vector<256x128xf32>
    %18 = arith.truncf %17 : vector<256x128xf32> to vector<256x128xbf16>
    %c2_16 = arith.constant 2 : index
    %c0_17 = arith.constant 0 : index
    %c0_18 = arith.constant 0 : index
    %19 = vector.load %arg2[%c2_16, %c0_17, %c0_18] : memref<9x128x128xbf16, #tpu.memory_space<vmem>>, vector<1x128x128xbf16>
    %20 = vector.shape_cast %19 : vector<1x128x128xbf16> to vector<128x128xbf16>
    %cst_19 = arith.constant dense<0.000000e+00> : vector<256x128xf32>
    %21 = tpu.matmul %18, %20, %cst_19 {dimension_numbers = #tpu.dot_dimension_numbers<[1], [0], [0], [1], [0, 0, 1, 1], [], []>} : vector<256x128xbf16>, vector<128x128xbf16>, vector<256x128xf32> -> vector<256x128xf32>
    %22 = arith.addf %14, %21 : vector<256x128xf32>
    %c0_20 = arith.constant 0 : index
    %c1_21 = arith.constant 1 : index
    %c0_22 = arith.constant 0 : index
    %c0_23 = arith.constant 0 : index
    %23 = vector.load %arg1[%c0_20, %c1_21, %c0_22, %c0_23] : memref<1x18x18x128xf32, #tpu.memory_space<vmem>>, vector<1x16x16x128xf32>
    %24 = vector.shape_cast %23 : vector<1x16x16x128xf32> to vector<16x16x128xf32>
    %25 = vector.shape_cast %24 : vector<16x16x128xf32> to vector<256x128xf32>
    %26 = arith.truncf %25 : vector<256x128xf32> to vector<256x128xbf16>
    %c3 = arith.constant 3 : index
    %c0_24 = arith.constant 0 : index
    %c0_25 = arith.constant 0 : index
    %27 = vector.load %arg2[%c3, %c0_24, %c0_25] : memref<9x128x128xbf16, #tpu.memory_space<vmem>>, vector<1x128x128xbf16>
    %28 = vector.shape_cast %27 : vector<1x128x128xbf16> to vector<128x128xbf16>
    %cst_26 = arith.constant dense<0.000000e+00> : vector<256x128xf32>
    %29 = tpu.matmul %26, %28, %cst_26 {dimension_numbers = #tpu.dot_dimension_numbers<[1], [0], [0], [1], [0, 0, 1, 1], [], []>} : vector<256x128xbf16>, vector<128x128xbf16>, vector<256x128xf32> -> vector<256x128xf32>
    %30 = arith.addf %22, %29 : vector<256x128xf32>
    %c0_27 = arith.constant 0 : index
    %c1_28 = arith.constant 1 : index
    %c1_29 = arith.constant 1 : index
    %c0_30 = arith.constant 0 : index
    %31 = vector.load %arg1[%c0_27, %c1_28, %c1_29, %c0_30] : memref<1x18x18x128xf32, #tpu.memory_space<vmem>>, vector<1x16x16x128xf32>
    %32 = vector.shape_cast %31 : vector<1x16x16x128xf32> to vector<16x16x128xf32>
    %33 = vector.shape_cast %32 : vector<16x16x128xf32> to vector<256x128xf32>
    %34 = arith.truncf %33 : vector<256x128xf32> to vector<256x128xbf16>
    %c4 = arith.constant 4 : index
    %c0_31 = arith.constant 0 : index
    %c0_32 = arith.constant 0 : index
    %35 = vector.load %arg2[%c4, %c0_31, %c0_32] : memref<9x128x128xbf16, #tpu.memory_space<vmem>>, vector<1x128x128xbf16>
    %36 = vector.shape_cast %35 : vector<1x128x128xbf16> to vector<128x128xbf16>
    %cst_33 = arith.constant dense<0.000000e+00> : vector<256x128xf32>
    %37 = tpu.matmul %34, %36, %cst_33 {dimension_numbers = #tpu.dot_dimension_numbers<[1], [0], [0], [1], [0, 0, 1, 1], [], []>} : vector<256x128xbf16>, vector<128x128xbf16>, vector<256x128xf32> -> vector<256x128xf32>
    %38 = arith.addf %30, %37 : vector<256x128xf32>
    %c0_34 = arith.constant 0 : index
    %c1_35 = arith.constant 1 : index
    %c2_36 = arith.constant 2 : index
    %c0_37 = arith.constant 0 : index
    %39 = vector.load %arg1[%c0_34, %c1_35, %c2_36, %c0_37] : memref<1x18x18x128xf32, #tpu.memory_space<vmem>>, vector<1x16x16x128xf32>
    %40 = vector.shape_cast %39 : vector<1x16x16x128xf32> to vector<16x16x128xf32>
    %41 = vector.shape_cast %40 : vector<16x16x128xf32> to vector<256x128xf32>
    %42 = arith.truncf %41 : vector<256x128xf32> to vector<256x128xbf16>
    %c5 = arith.constant 5 : index
    %c0_38 = arith.constant 0 : index
    %c0_39 = arith.constant 0 : index
    %43 = vector.load %arg2[%c5, %c0_38, %c0_39] : memref<9x128x128xbf16, #tpu.memory_space<vmem>>, vector<1x128x128xbf16>
    %44 = vector.shape_cast %43 : vector<1x128x128xbf16> to vector<128x128xbf16>
    %cst_40 = arith.constant dense<0.000000e+00> : vector<256x128xf32>
    %45 = tpu.matmul %42, %44, %cst_40 {dimension_numbers = #tpu.dot_dimension_numbers<[1], [0], [0], [1], [0, 0, 1, 1], [], []>} : vector<256x128xbf16>, vector<128x128xbf16>, vector<256x128xf32> -> vector<256x128xf32>
    %46 = arith.addf %38, %45 : vector<256x128xf32>
    %c0_41 = arith.constant 0 : index
    %c2_42 = arith.constant 2 : index
    %c0_43 = arith.constant 0 : index
    %c0_44 = arith.constant 0 : index
    %47 = vector.load %arg1[%c0_41, %c2_42, %c0_43, %c0_44] : memref<1x18x18x128xf32, #tpu.memory_space<vmem>>, vector<1x16x16x128xf32>
    %48 = vector.shape_cast %47 : vector<1x16x16x128xf32> to vector<16x16x128xf32>
    %49 = vector.shape_cast %48 : vector<16x16x128xf32> to vector<256x128xf32>
    %50 = arith.truncf %49 : vector<256x128xf32> to vector<256x128xbf16>
    %c6 = arith.constant 6 : index
    %c0_45 = arith.constant 0 : index
    %c0_46 = arith.constant 0 : index
    %51 = vector.load %arg2[%c6, %c0_45, %c0_46] : memref<9x128x128xbf16, #tpu.memory_space<vmem>>, vector<1x128x128xbf16>
    %52 = vector.shape_cast %51 : vector<1x128x128xbf16> to vector<128x128xbf16>
    %cst_47 = arith.constant dense<0.000000e+00> : vector<256x128xf32>
    %53 = tpu.matmul %50, %52, %cst_47 {dimension_numbers = #tpu.dot_dimension_numbers<[1], [0], [0], [1], [0, 0, 1, 1], [], []>} : vector<256x128xbf16>, vector<128x128xbf16>, vector<256x128xf32> -> vector<256x128xf32>
    %54 = arith.addf %46, %53 : vector<256x128xf32>
    %c0_48 = arith.constant 0 : index
    %c2_49 = arith.constant 2 : index
    %c1_50 = arith.constant 1 : index
    %c0_51 = arith.constant 0 : index
    %55 = vector.load %arg1[%c0_48, %c2_49, %c1_50, %c0_51] : memref<1x18x18x128xf32, #tpu.memory_space<vmem>>, vector<1x16x16x128xf32>
    %56 = vector.shape_cast %55 : vector<1x16x16x128xf32> to vector<16x16x128xf32>
    %57 = vector.shape_cast %56 : vector<16x16x128xf32> to vector<256x128xf32>
    %58 = arith.truncf %57 : vector<256x128xf32> to vector<256x128xbf16>
    %c7 = arith.constant 7 : index
    %c0_52 = arith.constant 0 : index
    %c0_53 = arith.constant 0 : index
    %59 = vector.load %arg2[%c7, %c0_52, %c0_53] : memref<9x128x128xbf16, #tpu.memory_space<vmem>>, vector<1x128x128xbf16>
    %60 = vector.shape_cast %59 : vector<1x128x128xbf16> to vector<128x128xbf16>
    %cst_54 = arith.constant dense<0.000000e+00> : vector<256x128xf32>
    %61 = tpu.matmul %58, %60, %cst_54 {dimension_numbers = #tpu.dot_dimension_numbers<[1], [0], [0], [1], [0, 0, 1, 1], [], []>} : vector<256x128xbf16>, vector<128x128xbf16>, vector<256x128xf32> -> vector<256x128xf32>
    %62 = arith.addf %54, %61 : vector<256x128xf32>
    %c0_55 = arith.constant 0 : index
    %c2_56 = arith.constant 2 : index
    %c2_57 = arith.constant 2 : index
    %c0_58 = arith.constant 0 : index
    %63 = vector.load %arg1[%c0_55, %c2_56, %c2_57, %c0_58] : memref<1x18x18x128xf32, #tpu.memory_space<vmem>>, vector<1x16x16x128xf32>
    %64 = vector.shape_cast %63 : vector<1x16x16x128xf32> to vector<16x16x128xf32>
    %65 = vector.shape_cast %64 : vector<16x16x128xf32> to vector<256x128xf32>
    %66 = arith.truncf %65 : vector<256x128xf32> to vector<256x128xbf16>
    %c8 = arith.constant 8 : index
    %c0_59 = arith.constant 0 : index
    %c0_60 = arith.constant 0 : index
    %67 = vector.load %arg2[%c8, %c0_59, %c0_60] : memref<9x128x128xbf16, #tpu.memory_space<vmem>>, vector<1x128x128xbf16>
    %68 = vector.shape_cast %67 : vector<1x128x128xbf16> to vector<128x128xbf16>
    %cst_61 = arith.constant dense<0.000000e+00> : vector<256x128xf32>
    %69 = tpu.matmul %66, %68, %cst_61 {dimension_numbers = #tpu.dot_dimension_numbers<[1], [0], [0], [1], [0, 0, 1, 1], [], []>} : vector<256x128xbf16>, vector<128x128xbf16>, vector<256x128xf32> -> vector<256x128xf32>
    %70 = arith.addf %62, %69 : vector<256x128xf32>
    %c0_62 = arith.constant 0 : index
    %c0_63 = arith.constant 0 : index
    %71 = vector.load %arg3[%c0_62, %c0_63] : memref<8x128xf32, #tpu.memory_space<vmem>>, vector<1x128xf32>
    %c1_64 = arith.constant 1 : index
    %c0_65 = arith.constant 0 : index
    %72 = vector.load %arg3[%c1_64, %c0_65] : memref<8x128xf32, #tpu.memory_space<vmem>>, vector<1x128xf32>
    %c2_66 = arith.constant 2 : index
    %c0_67 = arith.constant 0 : index
    %73 = vector.load %arg3[%c2_66, %c0_67] : memref<8x128xf32, #tpu.memory_space<vmem>>, vector<1x128xf32>
    %74 = vector.broadcast %71 : vector<1x128xf32> to vector<256x128xf32>
    %75 = arith.addf %70, %74 : vector<256x128xf32>
    %cst_68 = arith.constant 0.000000e+00 : f32
    %76 = vector.broadcast %cst_68 : f32 to vector<256x128xf32>
    %77 = arith.maximumf %75, %76 : vector<256x128xf32>
    %78 = vector.broadcast %72 : vector<1x128xf32> to vector<256x128xf32>
    %79 = arith.mulf %77, %78 : vector<256x128xf32>
    %80 = vector.broadcast %73 : vector<1x128xf32> to vector<256x128xf32>
    %81 = arith.addf %79, %80 : vector<256x128xf32>
    %82 = vector.shape_cast %81 : vector<256x128xf32> to vector<16x16x128xf32>
    %c0_69 = arith.constant 0 : index
    %c0_70 = arith.constant 0 : index
    %c0_71 = arith.constant 0 : index
    %83 = vector.load %arg9[%c0_69, %c0_70, %c0_71] : memref<16x16x128xf32, #tpu.memory_space<vmem>>, vector<16x16x128xf32>
    tpu.vector_store %arg9[%c0_69, %c0_70, %c0_71], %82 {strides = array<i32>} : memref<16x16x128xf32, #tpu.memory_space<vmem>>, vector<16x16x128xf32>,
    %c0_72 = arith.constant 0 : index
    %c0_73 = arith.constant 0 : index
    %c0_74 = arith.constant 0 : index
    %84 = tpu.strided_load %arg9[%c0_72, %c0_73, %c0_74] {strides = array<i32: 1, 2, 1>} : memref<16x16x128xf32, #tpu.memory_space<vmem>>, vector<16x8x128xf32>
    %c0_75 = arith.constant 0 : index
    %c1_76 = arith.constant 1 : index
    %c0_77 = arith.constant 0 : index
    %85 = tpu.strided_load %arg9[%c0_75, %c1_76, %c0_77] {strides = array<i32: 1, 2, 1>} : memref<16x16x128xf32, #tpu.memory_space<vmem>>, vector<16x8x128xf32>
    %86 = arith.maximumf %84, %85 : vector<16x8x128xf32>
    %87 = vector.shape_cast %86 : vector<16x8x128xf32> to vector<8x2x8x128xf32>
    %88 = vector.extract_strided_slice %87 {offsets = [0, 0, 0, 0], sizes = [8, 1, 8, 128], strides = [1, 1, 1, 1]} : vector<8x2x8x128xf32> to vector<8x1x8x128xf32>
    %89 = vector.shape_cast %88 : vector<8x1x8x128xf32> to vector<8x8x128xf32>
    %90 = vector.extract_strided_slice %87 {offsets = [0, 1, 0, 0], sizes = [8, 1, 8, 128], strides = [1, 1, 1, 1]} : vector<8x2x8x128xf32> to vector<8x1x8x128xf32>
    %91 = vector.shape_cast %90 : vector<8x1x8x128xf32> to vector<8x8x128xf32>
    %92 = arith.maximumf %89, %91 : vector<8x8x128xf32>
    %cst_78 = arith.constant 0.000000e+00 : f32
    %93 = vector.broadcast %cst_78 : f32 to vector<10x17x128xf32>
    %c0_79 = arith.constant 0 : index
    %c0_80 = arith.constant 0 : index
    %c0_81 = arith.constant 0 : index
    %94 = vector.load %arg10[%c0_79, %c0_80, %c0_81] : memref<10x17x128xf32, #tpu.memory_space<vmem>>, vector<10x17x128xf32>
    tpu.vector_store %arg10[%c0_79, %c0_80, %c0_81], %93 {strides = array<i32>} : memref<10x17x128xf32, #tpu.memory_space<vmem>>, vector<10x17x128xf32>,
    %c1_82 = arith.constant 1 : index
    %c8_83 = arith.constant 8 : index
    %c0_84 = arith.constant 0 : index
    %95 = vector.load %arg10[%c1_82, %c8_83, %c0_84] : memref<10x17x128xf32, #tpu.memory_space<vmem>>, vector<8x8x128xf32>
    tpu.vector_store %arg10[%c1_82, %c8_83, %c0_84], %92 {strides = array<i32>} : memref<10x17x128xf32, #tpu.memory_space<vmem>>, vector<8x8x128xf32>,
    %c0_85 = arith.constant 0 : index
    %c7_86 = arith.constant 7 : index
    %c0_87 = arith.constant 0 : index
    %96 = vector.load %arg10[%c0_85, %c7_86, %c0_87] : memref<10x17x128xf32, #tpu.memory_space<vmem>>, vector<8x8x128xf32>
    %97 = vector.shape_cast %96 : vector<8x8x128xf32> to vector<64x128xf32>
    %98 = arith.truncf %97 : vector<64x128xf32> to vector<64x128xbf16>
    %c0_88 = arith.constant 0 : index
    %c0_89 = arith.constant 0 : index
    %c0_90 = arith.constant 0 : index
    %99 = vector.load %arg4[%c0_88, %c0_89, %c0_90] : memref<9x128x128xbf16, #tpu.memory_space<vmem>>, vector<1x128x128xbf16>
    %100 = vector.shape_cast %99 : vector<1x128x128xbf16> to vector<128x128xbf16>
    %cst_91 = arith.constant dense<0.000000e+00> : vector<64x128xf32>
    %101 = tpu.matmul %98, %100, %cst_91 {dimension_numbers = #tpu.dot_dimension_numbers<[1], [0], [0], [1], [0, 0, 1, 1], [], []>} : vector<64x128xbf16>, vector<128x128xbf16>, vector<64x128xf32> -> vector<64x128xf32>
    %c0_92 = arith.constant 0 : index
    %c8_93 = arith.constant 8 : index
    %c0_94 = arith.constant 0 : index
    %102 = vector.load %arg10[%c0_92, %c8_93, %c0_94] : memref<10x17x128xf32, #tpu.memory_space<vmem>>, vector<8x8x128xf32>
    %103 = vector.shape_cast %102 : vector<8x8x128xf32> to vector<64x128xf32>
    %104 = arith.truncf %103 : vector<64x128xf32> to vector<64x128xbf16>
    %c1_95 = arith.constant 1 : index
    %c0_96 = arith.constant 0 : index
    %c0_97 = arith.constant 0 : index
    %105 = vector.load %arg4[%c1_95, %c0_96, %c0_97] : memref<9x128x128xbf16, #tpu.memory_space<vmem>>, vector<1x128x128xbf16>
    %106 = vector.shape_cast %105 : vector<1x128x128xbf16> to vector<128x128xbf16>
    %cst_98 = arith.constant dense<0.000000e+00> : vector<64x128xf32>
    %107 = tpu.matmul %104, %106, %cst_98 {dimension_numbers = #tpu.dot_dimension_numbers<[1], [0], [0], [1], [0, 0, 1, 1], [], []>} : vector<64x128xbf16>, vector<128x128xbf16>, vector<64x128xf32> -> vector<64x128xf32>
    %108 = arith.addf %101, %107 : vector<64x128xf32>
    %c0_99 = arith.constant 0 : index
    %c9 = arith.constant 9 : index
    %c0_100 = arith.constant 0 : index
    %109 = vector.load %arg10[%c0_99, %c9, %c0_100] : memref<10x17x128xf32, #tpu.memory_space<vmem>>, vector<8x8x128xf32>
    %110 = vector.shape_cast %109 : vector<8x8x128xf32> to vector<64x128xf32>
    %111 = arith.truncf %110 : vector<64x128xf32> to vector<64x128xbf16>
    %c2_101 = arith.constant 2 : index
    %c0_102 = arith.constant 0 : index
    %c0_103 = arith.constant 0 : index
    %112 = vector.load %arg4[%c2_101, %c0_102, %c0_103] : memref<9x128x128xbf16, #tpu.memory_space<vmem>>, vector<1x128x128xbf16>
    %113 = vector.shape_cast %112 : vector<1x128x128xbf16> to vector<128x128xbf16>
    %cst_104 = arith.constant dense<0.000000e+00> : vector<64x128xf32>
    %114 = tpu.matmul %111, %113, %cst_104 {dimension_numbers = #tpu.dot_dimension_numbers<[1], [0], [0], [1], [0, 0, 1, 1], [], []>} : vector<64x128xbf16>, vector<128x128xbf16>, vector<64x128xf32> -> vector<64x128xf32>
    %115 = arith.addf %108, %114 : vector<64x128xf32>
    %c1_105 = arith.constant 1 : index
    %c7_106 = arith.constant 7 : index
    %c0_107 = arith.constant 0 : index
    %116 = vector.load %arg10[%c1_105, %c7_106, %c0_107] : memref<10x17x128xf32, #tpu.memory_space<vmem>>, vector<8x8x128xf32>
    %117 = vector.shape_cast %116 : vector<8x8x128xf32> to vector<64x128xf32>
    %118 = arith.truncf %117 : vector<64x128xf32> to vector<64x128xbf16>
    %c3_108 = arith.constant 3 : index
    %c0_109 = arith.constant 0 : index
    %c0_110 = arith.constant 0 : index
    %119 = vector.load %arg4[%c3_108, %c0_109, %c0_110] : memref<9x128x128xbf16, #tpu.memory_space<vmem>>, vector<1x128x128xbf16>
    %120 = vector.shape_cast %119 : vector<1x128x128xbf16> to vector<128x128xbf16>
    %cst_111 = arith.constant dense<0.000000e+00> : vector<64x128xf32>
    %121 = tpu.matmul %118, %120, %cst_111 {dimension_numbers = #tpu.dot_dimension_numbers<[1], [0], [0], [1], [0, 0, 1, 1], [], []>} : vector<64x128xbf16>, vector<128x128xbf16>, vector<64x128xf32> -> vector<64x128xf32>
    %122 = arith.addf %115, %121 : vector<64x128xf32>
    %c1_112 = arith.constant 1 : index
    %c8_113 = arith.constant 8 : index
    %c0_114 = arith.constant 0 : index
    %123 = vector.load %arg10[%c1_112, %c8_113, %c0_114] : memref<10x17x128xf32, #tpu.memory_space<vmem>>, vector<8x8x128xf32>
    %124 = vector.shape_cast %123 : vector<8x8x128xf32> to vector<64x128xf32>
    %125 = arith.truncf %124 : vector<64x128xf32> to vector<64x128xbf16>
    %c4_115 = arith.constant 4 : index
    %c0_116 = arith.constant 0 : index
    %c0_117 = arith.constant 0 : index
    %126 = vector.load %arg4[%c4_115, %c0_116, %c0_117] : memref<9x128x128xbf16, #tpu.memory_space<vmem>>, vector<1x128x128xbf16>
    %127 = vector.shape_cast %126 : vector<1x128x128xbf16> to vector<128x128xbf16>
    %cst_118 = arith.constant dense<0.000000e+00> : vector<64x128xf32>
    %128 = tpu.matmul %125, %127, %cst_118 {dimension_numbers = #tpu.dot_dimension_numbers<[1], [0], [0], [1], [0, 0, 1, 1], [], []>} : vector<64x128xbf16>, vector<128x128xbf16>, vector<64x128xf32> -> vector<64x128xf32>
    %129 = arith.addf %122, %128 : vector<64x128xf32>
    %c1_119 = arith.constant 1 : index
    %c9_120 = arith.constant 9 : index
    %c0_121 = arith.constant 0 : index
    %130 = vector.load %arg10[%c1_119, %c9_120, %c0_121] : memref<10x17x128xf32, #tpu.memory_space<vmem>>, vector<8x8x128xf32>
    %131 = vector.shape_cast %130 : vector<8x8x128xf32> to vector<64x128xf32>
    %132 = arith.truncf %131 : vector<64x128xf32> to vector<64x128xbf16>
    %c5_122 = arith.constant 5 : index
    %c0_123 = arith.constant 0 : index
    %c0_124 = arith.constant 0 : index
    %133 = vector.load %arg4[%c5_122, %c0_123, %c0_124] : memref<9x128x128xbf16, #tpu.memory_space<vmem>>, vector<1x128x128xbf16>
    %134 = vector.shape_cast %133 : vector<1x128x128xbf16> to vector<128x128xbf16>
    %cst_125 = arith.constant dense<0.000000e+00> : vector<64x128xf32>
    %135 = tpu.matmul %132, %134, %cst_125 {dimension_numbers = #tpu.dot_dimension_numbers<[1], [0], [0], [1], [0, 0, 1, 1], [], []>} : vector<64x128xbf16>, vector<128x128xbf16>, vector<64x128xf32> -> vector<64x128xf32>
    %136 = arith.addf %129, %135 : vector<64x128xf32>
    %c2_126 = arith.constant 2 : index
    %c7_127 = arith.constant 7 : index
    %c0_128 = arith.constant 0 : index
    %137 = vector.load %arg10[%c2_126, %c7_127, %c0_128] : memref<10x17x128xf32, #tpu.memory_space<vmem>>, vector<8x8x128xf32>
    %138 = vector.shape_cast %137 : vector<8x8x128xf32> to vector<64x128xf32>
    %139 = arith.truncf %138 : vector<64x128xf32> to vector<64x128xbf16>
    %c6_129 = arith.constant 6 : index
    %c0_130 = arith.constant 0 : index
    %c0_131 = arith.constant 0 : index
    %140 = vector.load %arg4[%c6_129, %c0_130, %c0_131] : memref<9x128x128xbf16, #tpu.memory_space<vmem>>, vector<1x128x128xbf16>
    %141 = vector.shape_cast %140 : vector<1x128x128xbf16> to vector<128x128xbf16>
    %cst_132 = arith.constant dense<0.000000e+00> : vector<64x128xf32>
    %142 = tpu.matmul %139, %141, %cst_132 {dimension_numbers = #tpu.dot_dimension_numbers<[1], [0], [0], [1], [0, 0, 1, 1], [], []>} : vector<64x128xbf16>, vector<128x128xbf16>, vector<64x128xf32> -> vector<64x128xf32>
    %143 = arith.addf %136, %142 : vector<64x128xf32>
    %c2_133 = arith.constant 2 : index
    %c8_134 = arith.constant 8 : index
    %c0_135 = arith.constant 0 : index
    %144 = vector.load %arg10[%c2_133, %c8_134, %c0_135] : memref<10x17x128xf32, #tpu.memory_space<vmem>>, vector<8x8x128xf32>
    %145 = vector.shape_cast %144 : vector<8x8x128xf32> to vector<64x128xf32>
    %146 = arith.truncf %145 : vector<64x128xf32> to vector<64x128xbf16>
    %c7_136 = arith.constant 7 : index
    %c0_137 = arith.constant 0 : index
    %c0_138 = arith.constant 0 : index
    %147 = vector.load %arg4[%c7_136, %c0_137, %c0_138] : memref<9x128x128xbf16, #tpu.memory_space<vmem>>, vector<1x128x128xbf16>
    %148 = vector.shape_cast %147 : vector<1x128x128xbf16> to vector<128x128xbf16>
    %cst_139 = arith.constant dense<0.000000e+00> : vector<64x128xf32>
    %149 = tpu.matmul %146, %148, %cst_139 {dimension_numbers = #tpu.dot_dimension_numbers<[1], [0], [0], [1], [0, 0, 1, 1], [], []>} : vector<64x128xbf16>, vector<128x128xbf16>, vector<64x128xf32> -> vector<64x128xf32>
    %150 = arith.addf %143, %149 : vector<64x128xf32>
    %c2_140 = arith.constant 2 : index
    %c9_141 = arith.constant 9 : index
    %c0_142 = arith.constant 0 : index
    %151 = vector.load %arg10[%c2_140, %c9_141, %c0_142] : memref<10x17x128xf32, #tpu.memory_space<vmem>>, vector<8x8x128xf32>
    %152 = vector.shape_cast %151 : vector<8x8x128xf32> to vector<64x128xf32>
    %153 = arith.truncf %152 : vector<64x128xf32> to vector<64x128xbf16>
    %c8_143 = arith.constant 8 : index
    %c0_144 = arith.constant 0 : index
    %c0_145 = arith.constant 0 : index
    %154 = vector.load %arg4[%c8_143, %c0_144, %c0_145] : memref<9x128x128xbf16, #tpu.memory_space<vmem>>, vector<1x128x128xbf16>
    %155 = vector.shape_cast %154 : vector<1x128x128xbf16> to vector<128x128xbf16>
    %cst_146 = arith.constant dense<0.000000e+00> : vector<64x128xf32>
    %156 = tpu.matmul %153, %155, %cst_146 {dimension_numbers = #tpu.dot_dimension_numbers<[1], [0], [0], [1], [0, 0, 1, 1], [], []>} : vector<64x128xbf16>, vector<128x128xbf16>, vector<64x128xf32> -> vector<64x128xf32>
    %157 = arith.addf %150, %156 : vector<64x128xf32>
    %c0_147 = arith.constant 0 : index
    %c0_148 = arith.constant 0 : index
    %158 = vector.load %arg5[%c0_147, %c0_148] : memref<8x128xf32, #tpu.memory_space<vmem>>, vector<1x128xf32>
    %c1_149 = arith.constant 1 : index
    %c0_150 = arith.constant 0 : index
    %159 = vector.load %arg5[%c1_149, %c0_150] : memref<8x128xf32, #tpu.memory_space<vmem>>, vector<1x128xf32>
    %c2_151 = arith.constant 2 : index
    %c0_152 = arith.constant 0 : index
    %160 = vector.load %arg5[%c2_151, %c0_152] : memref<8x128xf32, #tpu.memory_space<vmem>>, vector<1x128xf32>
    %161 = vector.broadcast %158 : vector<1x128xf32> to vector<64x128xf32>
    %162 = arith.addf %157, %161 : vector<64x128xf32>
    %cst_153 = arith.constant 0.000000e+00 : f32
    %163 = vector.broadcast %cst_153 : f32 to vector<64x128xf32>
    %164 = arith.maximumf %162, %163 : vector<64x128xf32>
    %165 = vector.broadcast %159 : vector<1x128xf32> to vector<64x128xf32>
    %166 = arith.mulf %164, %165 : vector<64x128xf32>
    %167 = vector.broadcast %160 : vector<1x128xf32> to vector<64x128xf32>
    %168 = arith.addf %166, %167 : vector<64x128xf32>
    %169 = vector.shape_cast %168 : vector<64x128xf32> to vector<8x8x128xf32>
    %cst_154 = arith.constant 0.000000e+00 : f32
    %170 = vector.broadcast %cst_154 : f32 to vector<10x17x128xf32>
    %c0_155 = arith.constant 0 : index
    %c0_156 = arith.constant 0 : index
    %c0_157 = arith.constant 0 : index
    %171 = vector.load %arg11[%c0_155, %c0_156, %c0_157] : memref<10x17x128xf32, #tpu.memory_space<vmem>>, vector<10x17x128xf32>
    tpu.vector_store %arg11[%c0_155, %c0_156, %c0_157], %170 {strides = array<i32>} : memref<10x17x128xf32, #tpu.memory_space<vmem>>, vector<10x17x128xf32>,
    %c1_158 = arith.constant 1 : index
    %c8_159 = arith.constant 8 : index
    %c0_160 = arith.constant 0 : index
    %172 = vector.load %arg11[%c1_158, %c8_159, %c0_160] : memref<10x17x128xf32, #tpu.memory_space<vmem>>, vector<8x8x128xf32>
    tpu.vector_store %arg11[%c1_158, %c8_159, %c0_160], %169 {strides = array<i32>} : memref<10x17x128xf32, #tpu.memory_space<vmem>>, vector<8x8x128xf32>,
    %c0_161 = arith.constant 0 : index
    %c7_162 = arith.constant 7 : index
    %c0_163 = arith.constant 0 : index
    %173 = vector.load %arg11[%c0_161, %c7_162, %c0_163] : memref<10x17x128xf32, #tpu.memory_space<vmem>>, vector<8x8x128xf32>
    %174 = vector.shape_cast %173 : vector<8x8x128xf32> to vector<64x128xf32>
    %175 = arith.truncf %174 : vector<64x128xf32> to vector<64x128xbf16>
    %c0_164 = arith.constant 0 : index
    %c0_165 = arith.constant 0 : index
    %c0_166 = arith.constant 0 : index
    %176 = vector.load %arg6[%c0_164, %c0_165, %c0_166] : memref<9x128x128xbf16, #tpu.memory_space<vmem>>, vector<1x128x128xbf16>
    %177 = vector.shape_cast %176 : vector<1x128x128xbf16> to vector<128x128xbf16>
    %cst_167 = arith.constant dense<0.000000e+00> : vector<64x128xf32>
    %178 = tpu.matmul %175, %177, %cst_167 {dimension_numbers = #tpu.dot_dimension_numbers<[1], [0], [0], [1], [0, 0, 1, 1], [], []>} : vector<64x128xbf16>, vector<128x128xbf16>, vector<64x128xf32> -> vector<64x128xf32>
    %c0_168 = arith.constant 0 : index
    %c8_169 = arith.constant 8 : index
    %c0_170 = arith.constant 0 : index
    %179 = vector.load %arg11[%c0_168, %c8_169, %c0_170] : memref<10x17x128xf32, #tpu.memory_space<vmem>>, vector<8x8x128xf32>
    %180 = vector.shape_cast %179 : vector<8x8x128xf32> to vector<64x128xf32>
    %181 = arith.truncf %180 : vector<64x128xf32> to vector<64x128xbf16>
    %c1_171 = arith.constant 1 : index
    %c0_172 = arith.constant 0 : index
    %c0_173 = arith.constant 0 : index
    %182 = vector.load %arg6[%c1_171, %c0_172, %c0_173] : memref<9x128x128xbf16, #tpu.memory_space<vmem>>, vector<1x128x128xbf16>
    %183 = vector.shape_cast %182 : vector<1x128x128xbf16> to vector<128x128xbf16>
    %cst_174 = arith.constant dense<0.000000e+00> : vector<64x128xf32>
    %184 = tpu.matmul %181, %183, %cst_174 {dimension_numbers = #tpu.dot_dimension_numbers<[1], [0], [0], [1], [0, 0, 1, 1], [], []>} : vector<64x128xbf16>, vector<128x128xbf16>, vector<64x128xf32> -> vector<64x128xf32>
    %185 = arith.addf %178, %184 : vector<64x128xf32>
    %c0_175 = arith.constant 0 : index
    %c9_176 = arith.constant 9 : index
    %c0_177 = arith.constant 0 : index
    %186 = vector.load %arg11[%c0_175, %c9_176, %c0_177] : memref<10x17x128xf32, #tpu.memory_space<vmem>>, vector<8x8x128xf32>
    %187 = vector.shape_cast %186 : vector<8x8x128xf32> to vector<64x128xf32>
    %188 = arith.truncf %187 : vector<64x128xf32> to vector<64x128xbf16>
    %c2_178 = arith.constant 2 : index
    %c0_179 = arith.constant 0 : index
    %c0_180 = arith.constant 0 : index
    %189 = vector.load %arg6[%c2_178, %c0_179, %c0_180] : memref<9x128x128xbf16, #tpu.memory_space<vmem>>, vector<1x128x128xbf16>
    %190 = vector.shape_cast %189 : vector<1x128x128xbf16> to vector<128x128xbf16>
    %cst_181 = arith.constant dense<0.000000e+00> : vector<64x128xf32>
    %191 = tpu.matmul %188, %190, %cst_181 {dimension_numbers = #tpu.dot_dimension_numbers<[1], [0], [0], [1], [0, 0, 1, 1], [], []>} : vector<64x128xbf16>, vector<128x128xbf16>, vector<64x128xf32> -> vector<64x128xf32>
    %192 = arith.addf %185, %191 : vector<64x128xf32>
    %c1_182 = arith.constant 1 : index
    %c7_183 = arith.constant 7 : index
    %c0_184 = arith.constant 0 : index
    %193 = vector.load %arg11[%c1_182, %c7_183, %c0_184] : memref<10x17x128xf32, #tpu.memory_space<vmem>>, vector<8x8x128xf32>
    %194 = vector.shape_cast %193 : vector<8x8x128xf32> to vector<64x128xf32>
    %195 = arith.truncf %194 : vector<64x128xf32> to vector<64x128xbf16>
    %c3_185 = arith.constant 3 : index
    %c0_186 = arith.constant 0 : index
    %c0_187 = arith.constant 0 : index
    %196 = vector.load %arg6[%c3_185, %c0_186, %c0_187] : memref<9x128x128xbf16, #tpu.memory_space<vmem>>, vector<1x128x128xbf16>
    %197 = vector.shape_cast %196 : vector<1x128x128xbf16> to vector<128x128xbf16>
    %cst_188 = arith.constant dense<0.000000e+00> : vector<64x128xf32>
    %198 = tpu.matmul %195, %197, %cst_188 {dimension_numbers = #tpu.dot_dimension_numbers<[1], [0], [0], [1], [0, 0, 1, 1], [], []>} : vector<64x128xbf16>, vector<128x128xbf16>, vector<64x128xf32> -> vector<64x128xf32>
    %199 = arith.addf %192, %198 : vector<64x128xf32>
    %c1_189 = arith.constant 1 : index
    %c8_190 = arith.constant 8 : index
    %c0_191 = arith.constant 0 : index
    %200 = vector.load %arg11[%c1_189, %c8_190, %c0_191] : memref<10x17x128xf32, #tpu.memory_space<vmem>>, vector<8x8x128xf32>
    %201 = vector.shape_cast %200 : vector<8x8x128xf32> to vector<64x128xf32>
    %202 = arith.truncf %201 : vector<64x128xf32> to vector<64x128xbf16>
    %c4_192 = arith.constant 4 : index
    %c0_193 = arith.constant 0 : index
    %c0_194 = arith.constant 0 : index
    %203 = vector.load %arg6[%c4_192, %c0_193, %c0_194] : memref<9x128x128xbf16, #tpu.memory_space<vmem>>, vector<1x128x128xbf16>
    %204 = vector.shape_cast %203 : vector<1x128x128xbf16> to vector<128x128xbf16>
    %cst_195 = arith.constant dense<0.000000e+00> : vector<64x128xf32>
    %205 = tpu.matmul %202, %204, %cst_195 {dimension_numbers = #tpu.dot_dimension_numbers<[1], [0], [0], [1], [0, 0, 1, 1], [], []>} : vector<64x128xbf16>, vector<128x128xbf16>, vector<64x128xf32> -> vector<64x128xf32>
    %206 = arith.addf %199, %205 : vector<64x128xf32>
    %c1_196 = arith.constant 1 : index
    %c9_197 = arith.constant 9 : index
    %c0_198 = arith.constant 0 : index
    %207 = vector.load %arg11[%c1_196, %c9_197, %c0_198] : memref<10x17x128xf32, #tpu.memory_space<vmem>>, vector<8x8x128xf32>
    %208 = vector.shape_cast %207 : vector<8x8x128xf32> to vector<64x128xf32>
    %209 = arith.truncf %208 : vector<64x128xf32> to vector<64x128xbf16>
    %c5_199 = arith.constant 5 : index
    %c0_200 = arith.constant 0 : index
    %c0_201 = arith.constant 0 : index
    %210 = vector.load %arg6[%c5_199, %c0_200, %c0_201] : memref<9x128x128xbf16, #tpu.memory_space<vmem>>, vector<1x128x128xbf16>
    %211 = vector.shape_cast %210 : vector<1x128x128xbf16> to vector<128x128xbf16>
    %cst_202 = arith.constant dense<0.000000e+00> : vector<64x128xf32>
    %212 = tpu.matmul %209, %211, %cst_202 {dimension_numbers = #tpu.dot_dimension_numbers<[1], [0], [0], [1], [0, 0, 1, 1], [], []>} : vector<64x128xbf16>, vector<128x128xbf16>, vector<64x128xf32> -> vector<64x128xf32>
    %213 = arith.addf %206, %212 : vector<64x128xf32>
    %c2_203 = arith.constant 2 : index
    %c7_204 = arith.constant 7 : index
    %c0_205 = arith.constant 0 : index
    %214 = vector.load %arg11[%c2_203, %c7_204, %c0_205] : memref<10x17x128xf32, #tpu.memory_space<vmem>>, vector<8x8x128xf32>
    %215 = vector.shape_cast %214 : vector<8x8x128xf32> to vector<64x128xf32>
    %216 = arith.truncf %215 : vector<64x128xf32> to vector<64x128xbf16>
    %c6_206 = arith.constant 6 : index
    %c0_207 = arith.constant 0 : index
    %c0_208 = arith.constant 0 : index
    %217 = vector.load %arg6[%c6_206, %c0_207, %c0_208] : memref<9x128x128xbf16, #tpu.memory_space<vmem>>, vector<1x128x128xbf16>
    %218 = vector.shape_cast %217 : vector<1x128x128xbf16> to vector<128x128xbf16>
    %cst_209 = arith.constant dense<0.000000e+00> : vector<64x128xf32>
    %219 = tpu.matmul %216, %218, %cst_209 {dimension_numbers = #tpu.dot_dimension_numbers<[1], [0], [0], [1], [0, 0, 1, 1], [], []>} : vector<64x128xbf16>, vector<128x128xbf16>, vector<64x128xf32> -> vector<64x128xf32>
    %220 = arith.addf %213, %219 : vector<64x128xf32>
    %c2_210 = arith.constant 2 : index
    %c8_211 = arith.constant 8 : index
    %c0_212 = arith.constant 0 : index
    %221 = vector.load %arg11[%c2_210, %c8_211, %c0_212] : memref<10x17x128xf32, #tpu.memory_space<vmem>>, vector<8x8x128xf32>
    %222 = vector.shape_cast %221 : vector<8x8x128xf32> to vector<64x128xf32>
    %223 = arith.truncf %222 : vector<64x128xf32> to vector<64x128xbf16>
    %c7_213 = arith.constant 7 : index
    %c0_214 = arith.constant 0 : index
    %c0_215 = arith.constant 0 : index
    %224 = vector.load %arg6[%c7_213, %c0_214, %c0_215] : memref<9x128x128xbf16, #tpu.memory_space<vmem>>, vector<1x128x128xbf16>
    %225 = vector.shape_cast %224 : vector<1x128x128xbf16> to vector<128x128xbf16>
    %cst_216 = arith.constant dense<0.000000e+00> : vector<64x128xf32>
    %226 = tpu.matmul %223, %225, %cst_216 {dimension_numbers = #tpu.dot_dimension_numbers<[1], [0], [0], [1], [0, 0, 1, 1], [], []>} : vector<64x128xbf16>, vector<128x128xbf16>, vector<64x128xf32> -> vector<64x128xf32>
    %227 = arith.addf %220, %226 : vector<64x128xf32>
    %c2_217 = arith.constant 2 : index
    %c9_218 = arith.constant 9 : index
    %c0_219 = arith.constant 0 : index
    %228 = vector.load %arg11[%c2_217, %c9_218, %c0_219] : memref<10x17x128xf32, #tpu.memory_space<vmem>>, vector<8x8x128xf32>
    %229 = vector.shape_cast %228 : vector<8x8x128xf32> to vector<64x128xf32>
    %230 = arith.truncf %229 : vector<64x128xf32> to vector<64x128xbf16>
    %c8_220 = arith.constant 8 : index
    %c0_221 = arith.constant 0 : index
    %c0_222 = arith.constant 0 : index
    %231 = vector.load %arg6[%c8_220, %c0_221, %c0_222] : memref<9x128x128xbf16, #tpu.memory_space<vmem>>, vector<1x128x128xbf16>
    %232 = vector.shape_cast %231 : vector<1x128x128xbf16> to vector<128x128xbf16>
    %cst_223 = arith.constant dense<0.000000e+00> : vector<64x128xf32>
    %233 = tpu.matmul %230, %232, %cst_223 {dimension_numbers = #tpu.dot_dimension_numbers<[1], [0], [0], [1], [0, 0, 1, 1], [], []>} : vector<64x128xbf16>, vector<128x128xbf16>, vector<64x128xf32> -> vector<64x128xf32>
    %234 = arith.addf %227, %233 : vector<64x128xf32>
    %c0_224 = arith.constant 0 : index
    %c0_225 = arith.constant 0 : index
    %235 = vector.load %arg7[%c0_224, %c0_225] : memref<8x128xf32, #tpu.memory_space<vmem>>, vector<1x128xf32>
    %c1_226 = arith.constant 1 : index
    %c0_227 = arith.constant 0 : index
    %236 = vector.load %arg7[%c1_226, %c0_227] : memref<8x128xf32, #tpu.memory_space<vmem>>, vector<1x128xf32>
    %c2_228 = arith.constant 2 : index
    %c0_229 = arith.constant 0 : index
    %237 = vector.load %arg7[%c2_228, %c0_229] : memref<8x128xf32, #tpu.memory_space<vmem>>, vector<1x128xf32>
    %238 = vector.broadcast %235 : vector<1x128xf32> to vector<64x128xf32>
    %239 = arith.addf %234, %238 : vector<64x128xf32>
    %cst_230 = arith.constant 0.000000e+00 : f32
    %240 = vector.broadcast %cst_230 : f32 to vector<64x128xf32>
    %241 = arith.maximumf %239, %240 : vector<64x128xf32>
    %242 = vector.broadcast %236 : vector<1x128xf32> to vector<64x128xf32>
    %243 = arith.mulf %241, %242 : vector<64x128xf32>
    %244 = vector.broadcast %237 : vector<1x128xf32> to vector<64x128xf32>
    %245 = arith.addf %243, %244 : vector<64x128xf32>
    %246 = vector.shape_cast %245 : vector<64x128xf32> to vector<8x8x128xf32>
    %c0_231 = arith.constant 0 : index
    %c0_232 = arith.constant 0 : index
    %c0_233 = arith.constant 0 : index
    %c0_234 = arith.constant 0 : index
    %247 = vector.load %arg8[%c0_231, %c0_232, %c0_233, %c0_234] : memref<1x8x8x128xf32, #tpu.memory_space<vmem>>, vector<1x8x8x128xf32>
    %248 = vector.shape_cast %247 : vector<1x8x8x128xf32> to vector<8x8x128xf32>
    %249 = vector.shape_cast %246 : vector<8x8x128xf32> to vector<1x8x8x128xf32>
    tpu.vector_store %arg8[%c0_231, %c0_232, %c0_233, %c0_234], %249 {strides = array<i32>} : memref<1x8x8x128xf32, #tpu.memory_space<vmem>>, vector<1x8x8x128xf32>,
    return
  }
  func.func @transform_0(%arg0: i32) -> (i32, i32, i32, i32) {
    %c0_i32 = arith.constant 0 : i32
    %c0_i32_0 = arith.constant 0 : i32
    %c0_i32_1 = arith.constant 0 : i32
    %c0_i32_2 = arith.constant 0 : i32
    return %arg0, %c0_i32, %c0_i32_0, %c0_i32_1 : i32, i32, i32, i32
  }
  func.func @transform_1(%arg0: i32) -> (i32, i32, i32) {
    %c0_i32 = arith.constant 0 : i32
    %c0_i32_0 = arith.constant 0 : i32
    %c0_i32_1 = arith.constant 0 : i32
    %c0_i32_2 = arith.constant 0 : i32
    return %c0_i32, %c0_i32_0, %c0_i32_1 : i32, i32, i32
  }
  func.func @transform_2(%arg0: i32) -> (i32, i32) {
    %c0_i32 = arith.constant 0 : i32
    %c0_i32_0 = arith.constant 0 : i32
    %c0_i32_1 = arith.constant 0 : i32
    return %c0_i32, %c0_i32_0 : i32, i32
  }
  func.func @transform_3(%arg0: i32) -> (i32, i32, i32) {
    %c0_i32 = arith.constant 0 : i32
    %c0_i32_0 = arith.constant 0 : i32
    %c0_i32_1 = arith.constant 0 : i32
    %c0_i32_2 = arith.constant 0 : i32
    return %c0_i32, %c0_i32_0, %c0_i32_1 : i32, i32, i32
  }
  func.func @transform_4(%arg0: i32) -> (i32, i32) {
    %c0_i32 = arith.constant 0 : i32
    %c0_i32_0 = arith.constant 0 : i32
    %c0_i32_1 = arith.constant 0 : i32
    return %c0_i32, %c0_i32_0 : i32, i32
  }
  func.func @transform_5(%arg0: i32) -> (i32, i32, i32) {
    %c0_i32 = arith.constant 0 : i32
    %c0_i32_0 = arith.constant 0 : i32
    %c0_i32_1 = arith.constant 0 : i32
    %c0_i32_2 = arith.constant 0 : i32
    return %c0_i32, %c0_i32_0, %c0_i32_1 : i32, i32, i32
  }
  func.func @transform_6(%arg0: i32) -> (i32, i32) {
    %c0_i32 = arith.constant 0 : i32
    %c0_i32_0 = arith.constant 0 : i32
    %c0_i32_1 = arith.constant 0 : i32
    return %c0_i32, %c0_i32_0 : i32, i32
  }
  func.func @transform_7(%arg0: i32) -> (i32, i32, i32, i32) {
    %c0_i32 = arith.constant 0 : i32
    %c0_i32_0 = arith.constant 0 : i32
    %c0_i32_1 = arith.constant 0 : i32
    %c0_i32_2 = arith.constant 0 : i32
    return %arg0, %c0_i32, %c0_i32_0, %c0_i32_1 : i32, i32, i32, i32
  }
}

module attributes {stable_mosaic.version = 11 : i64} {
  func.func @_fc_kernel(%arg0: memref<2x8192xf32, #tpu.memory_space<vmem>>, %arg1: memref<8192x128xbf16, #tpu.memory_space<vmem>>, %arg2: memref<1x128xf32, #tpu.memory_space<vmem>>, %arg3: memref<2x128xf32, #tpu.memory_space<vmem>>) attributes {dimension_semantics = [], scalar_prefetch = 0 : i64, scratch_operands = 0 : i64, tpu.core_type = #tpu.core_type<tc>} {
    %c0 = arith.constant 0 : index
    %c0_0 = arith.constant 0 : index
    %0 = vector.load %arg0[%c0, %c0_0] : memref<2x8192xf32, #tpu.memory_space<vmem>>, vector<2x8192xf32>
    %1 = arith.truncf %0 : vector<2x8192xf32> to vector<2x8192xbf16>
    %c0_1 = arith.constant 0 : index
    %c0_2 = arith.constant 0 : index
    %2 = vector.load %arg1[%c0_1, %c0_2] : memref<8192x128xbf16, #tpu.memory_space<vmem>>, vector<8192x128xbf16>
    %cst = arith.constant dense<0.000000e+00> : vector<2x128xf32>
    %3 = tpu.matmul %1, %2, %cst {dimension_numbers = #tpu.dot_dimension_numbers<[1], [0], [0], [1], [0, 0, 1, 1], [], []>} : vector<2x8192xbf16>, vector<8192x128xbf16>, vector<2x128xf32> -> vector<2x128xf32>
    %c0_3 = arith.constant 0 : index
    %c0_4 = arith.constant 0 : index
    %4 = vector.load %arg2[%c0_3, %c0_4] : memref<1x128xf32, #tpu.memory_space<vmem>>, vector<1x128xf32>
    %5 = vector.broadcast %4 : vector<1x128xf32> to vector<2x128xf32>
    %6 = arith.addf %3, %5 : vector<2x128xf32>
    %c0_5 = arith.constant 0 : index
    %c0_6 = arith.constant 0 : index
    %7 = vector.load %arg3[%c0_5, %c0_6] : memref<2x128xf32, #tpu.memory_space<vmem>>, vector<2x128xf32>
    tpu.vector_store %arg3[%c0_5, %c0_6], %6 {strides = array<i32>} : memref<2x128xf32, #tpu.memory_space<vmem>>, vector<2x128xf32>,
    return
  }
}

</mosaic_0001>

<llo_original>
// kernel: forward.2
$region0: #{forward.2}
  #allocation0 [shape = 'u32[]', space=smem, size = 0x4, offset = 0x4, fixed_abs, tag = 'smem constant byte address 0x4 - core index']
  #allocation1 [shape = 'u32[144,128]{1,0:T(1,128)}', space=vmem, size = 0x12000, scoped, tag = 'internal scratch']
  #allocation2 [shape = 'f32[16,16,128]{2,1,0:T(8,128)}', space=vmem, size = 0x20000, scoped, tag = 'scratch operand']
  #allocation3 [shape = 'f32[10,17,128]{2,1,0:T(8,128)}', space=vmem, size = 0x1e000, scoped, tag = 'scratch operand']
  #allocation4 [shape = 'f32[10,17,128]{2,1,0:T(8,128)}', space=vmem, size = 0x1e000, scoped, tag = 'scratch operand']
  %s0 = inlined_call_operand.vmem [shape: f32[2,18,18,128], index: 0, kind: input, shape index: {}]
  %s1 = inlined_call_operand.vmem [shape: bf16[9,128,128], index: 1, kind: input, shape index: {}]
  %s2 = inlined_call_operand.vmem [shape: f32[8,128], index: 2, kind: input, shape index: {}]
  %s3 = inlined_call_operand.vmem [shape: bf16[9,128,128], index: 3, kind: input, shape index: {}]
  %s4 = inlined_call_operand.vmem [shape: f32[8,128], index: 4, kind: input, shape index: {}]
  %s5 = inlined_call_operand.vmem [shape: bf16[9,128,128], index: 5, kind: input, shape index: {}]
  %s6 = inlined_call_operand.vmem [shape: f32[8,128], index: 6, kind: input, shape index: {}]
  %s7 = inlined_call_operand.vmem [shape: f32[2,8,8,128], index: 7, kind: output, shape index: {}]
  %s8 = sld [smem:[#allocation0]]
  $region61: #{forward.2} parent=0
    _
  %s10 = ssub.s32 1, %s8
  %s11 = scalar_select 0, %s10, %s8
  loop: start=0, step=1, limit=4
  $region2: #{forward.2} parent=0 // loop_pre_header
    _
  $region3: #{forward.2} parent=0 // loop_header
    %s13 = sphi 0, %s17
    %p14 = scmp.ge.s32.totalorder %s13, 4
    %s23 = sphi 0, %s25
    %s26 = sphi 0, %s23
    %s27 = sphi 0, %s26
    %s43 = sphi 0, %s27
    %s47 = sphi 0, %s47
    %s49 = sphi 0, %s47
    %s50 = sphi 0, %s49
    %s64 = sphi 0, %s50
    %s68 = sphi 0, %s68
    %s70 = sphi 0, %s68
    %s71 = sphi 0, %s70
    %s85 = sphi 0, %s71
    %s89 = sphi 0, %s89
    %s91 = sphi 0, %s89
    %s92 = sphi 0, %s91
    %s106 = sphi 0, %s92
    %s110 = sphi 0, %s110
    %s112 = sphi 0, %s110
    %s113 = sphi 0, %s112
    %s127 = sphi 0, %s113
    %s131 = sphi 0, %s131
    %s133 = sphi 0, %s131
    %s134 = sphi 0, %s133
    %s148 = sphi 0, %s134
    %s152 = sphi 0, %s152
    %s154 = sphi 0, %s152
    %s155 = sphi 0, %s154
    %s169 = sphi 0, %s155
    %s175 = sphi 0, %s177
    %s178 = sphi 0, %s175
    %s179 = sphi 0, %s178
    %s195 = sphi 0, %s179
  $region4: #{forward.2} parent=0 // loop_header_branch
    %16 = sbr.rel (%p14) target = $region8
  $region5: #{forward.2} parent=0 // loop_body
    %s18 = ssub.s32 %s13, 1
    %s19 = ssub.s32 %s13, 2
    %s20 = sadd.s32 %s13, 1
    %s21 = ssub.s32 %s13, %s20
    %p22 = scmp.eq.s32.totalorder %s21, 0
    %s24 = sadd.s32 %s23, 1
    %s25 = scalar_select %p22, %s23, %s24
    %p28 = pneg %p22
    %p29 = scmp.eq.s32.totalorder %s13, 1
    %p30 = por %p28, %p29
    %p31 = scmp.ne.s32.totalorder %s23, %s26
    %p32 = scmp.eq.s32.totalorder %s13, 0
    %p33 = por %p31, %p32
    %p34 = scmp.ne.s32.totalorder %s23, %s26
    %p35 = scmp.eq.s32.totalorder %s18, 1
    %p36 = por %p34, %p35
    %p37 = scmp.ne.s32.totalorder %s26, %s27
    %p38 = scmp.eq.s32.totalorder %s18, 0
    %p39 = por %p37, %p38
    %p40 = scmp.ne.s32.totalorder %s26, %s27
    %p41 = scmp.eq.s32.totalorder %s19, 1
    %p42 = por %p40, %p41
    %p44 = scmp.ne.s32.totalorder %s27, %s43
    %p45 = scmp.eq.s32.totalorder %s19, 0
    %p46 = por %p44, %p45
    %s48 = sadd.s32 %s47, 1
    %p51 = scmp.eq.s32.totalorder %s13, 1
    %p52 = scmp.ne.s32.totalorder %s47, %s49
    %p53 = scmp.eq.s32.totalorder %s13, 0
    %p54 = por %p52, %p53
    %p55 = scmp.ne.s32.totalorder %s47, %s49
    %p56 = scmp.eq.s32.totalorder %s18, 1
    %p57 = por %p55, %p56
    %p58 = scmp.ne.s32.totalorder %s49, %s50
    %p59 = scmp.eq.s32.totalorder %s18, 0
    %p60 = por %p58, %p59
    %p61 = scmp.ne.s32.totalorder %s49, %s50
    %p62 = scmp.eq.s32.totalorder %s19, 1
    %p63 = por %p61, %p62
    %p65 = scmp.ne.s32.totalorder %s50, %s64
    %p66 = scmp.eq.s32.totalorder %s19, 0
    %p67 = por %p65, %p66
    %s69 = sadd.s32 %s68, 1
    %p72 = scmp.eq.s32.totalorder %s13, 1
    %p73 = scmp.ne.s32.totalorder %s68, %s70
    %p74 = scmp.eq.s32.totalorder %s13, 0
    %p75 = por %p73, %p74
    %p76 = scmp.ne.s32.totalorder %s68, %s70
    %p77 = scmp.eq.s32.totalorder %s18, 1
    %p78 = por %p76, %p77
    %p79 = scmp.ne.s32.totalorder %s70, %s71
    %p80 = scmp.eq.s32.totalorder %s18, 0
    %p81 = por %p79, %p80
    %p82 = scmp.ne.s32.totalorder %s70, %s71
    %p83 = scmp.eq.s32.totalorder %s19, 1
    %p84 = por %p82, %p83
    %p86 = scmp.ne.s32.totalorder %s71, %s85
    %p87 = scmp.eq.s32.totalorder %s19, 0
    %p88 = por %p86, %p87
    %s90 = sadd.s32 %s89, 1
    %p93 = scmp.eq.s32.totalorder %s13, 1
    %p94 = scmp.ne.s32.totalorder %s89, %s91
    %p95 = scmp.eq.s32.totalorder %s13, 0
    %p96 = por %p94, %p95
    %p97 = scmp.ne.s32.totalorder %s89, %s91
    %p98 = scmp.eq.s32.totalorder %s18, 1
    %p99 = por %p97, %p98
    %p100 = scmp.ne.s32.totalorder %s91, %s92
    %p101 = scmp.eq.s32.totalorder %s18, 0
    %p102 = por %p100, %p101
    %p103 = scmp.ne.s32.totalorder %s91, %s92
    %p104 = scmp.eq.s32.totalorder %s19, 1
    %p105 = por %p103, %p104
    %p107 = scmp.ne.s32.totalorder %s92, %s106
    %p108 = scmp.eq.s32.totalorder %s19, 0
    %p109 = por %p107, %p108
    %s111 = sadd.s32 %s110, 1
    %p114 = scmp.eq.s32.totalorder %s13, 1
    %p115 = scmp.ne.s32.totalorder %s110, %s112
    %p116 = scmp.eq.s32.totalorder %s13, 0
    %p117 = por %p115, %p116
    %p118 = scmp.ne.s32.totalorder %s110, %s112
    %p119 = scmp.eq.s32.totalorder %s18, 1
    %p120 = por %p118, %p119
    %p121 = scmp.ne.s32.totalorder %s112, %s113
    %p122 = scmp.eq.s32.totalorder %s18, 0
    %p123 = por %p121, %p122
    %p124 = scmp.ne.s32.totalorder %s112, %s113
    %p125 = scmp.eq.s32.totalorder %s19, 1
    %p126 = por %p124, %p125
    %p128 = scmp.ne.s32.totalorder %s113, %s127
    %p129 = scmp.eq.s32.totalorder %s19, 0
    %p130 = por %p128, %p129
    %s132 = sadd.s32 %s131, 1
    %p135 = scmp.eq.s32.totalorder %s13, 1
    %p136 = scmp.ne.s32.totalorder %s131, %s133
    %p137 = scmp.eq.s32.totalorder %s13, 0
    %p138 = por %p136, %p137
    %p139 = scmp.ne.s32.totalorder %s131, %s133
    %p140 = scmp.eq.s32.totalorder %s18, 1
    %p141 = por %p139, %p140
    %p142 = scmp.ne.s32.totalorder %s133, %s134
    %p143 = scmp.eq.s32.totalorder %s18, 0
    %p144 = por %p142, %p143
    %p145 = scmp.ne.s32.totalorder %s133, %s134
    %p146 = scmp.eq.s32.totalorder %s19, 1
    %p147 = por %p145, %p146
    %p149 = scmp.ne.s32.totalorder %s134, %s148
    %p150 = scmp.eq.s32.totalorder %s19, 0
    %p151 = por %p149, %p150
    %s153 = sadd.s32 %s152, 1
    %p156 = scmp.eq.s32.totalorder %s13, 1
    %p157 = scmp.ne.s32.totalorder %s152, %s154
    %p158 = scmp.eq.s32.totalorder %s13, 0
    %p159 = por %p157, %p158
    %p160 = scmp.ne.s32.totalorder %s152, %s154
    %p161 = scmp.eq.s32.totalorder %s18, 1
    %p162 = por %p160, %p161
    %p163 = scmp.ne.s32.totalorder %s154, %s155
    %p164 = scmp.eq.s32.totalorder %s18, 0
    %p165 = por %p163, %p164
    %p166 = scmp.ne.s32.totalorder %s154, %s155
    %p167 = scmp.eq.s32.totalorder %s19, 1
    %p168 = por %p166, %p167
    %p170 = scmp.ne.s32.totalorder %s155, %s169
    %p171 = scmp.eq.s32.totalorder %s19, 0
    %p172 = por %p170, %p171
    %s173 = ssub.s32 %s13, %s20
    %p174 = scmp.eq.s32.totalorder %s173, 0
    %s176 = sadd.s32 %s175, 1
    %s177 = scalar_select %p174, %s175, %s176
    %p180 = pneg %p174
    %p181 = scmp.eq.s32.totalorder %s13, 1
    %p182 = por %p180, %p181
    %p183 = scmp.ne.s32.totalorder %s175, %s178
    %p184 = scmp.eq.s32.totalorder %s13, 0
    %p185 = por %p183, %p184
    %p186 = scmp.ne.s32.totalorder %s175, %s178
    %p187 = scmp.eq.s32.totalorder %s18, 1
    %p188 = por %p186, %p187
    %p189 = scmp.ne.s32.totalorder %s178, %s179
    %p190 = scmp.eq.s32.totalorder %s18, 0
    %p191 = por %p189, %p190
    %p192 = scmp.ne.s32.totalorder %s178, %s179
    %p193 = scmp.eq.s32.totalorder %s19, 1
    %p194 = por %p192, %p193
    %p196 = scmp.ne.s32.totalorder %s179, %s195
    %p197 = scmp.eq.s32.totalorder %s19, 0
    %p198 = por %p196, %p197
    %p199 = scmp.le.s32.totalorder 1, %s13
    %p200 = scmp.lt.s32.totalorder %s13, 3
    %p201 = pnand %p199, %p200
    %p202 = pneg %p201
    // Predicated region
    $region9: #{forward.2} parent=5 // pred_check
      _
    $region10: #{forward.2} parent=5 // pred_check_branch
      %204 = sbr.rel (%p201) target = $region12
    $region11: #{forward.2} parent=5 // pred_region
      %s205 = ssub.s32 %s13, 1
      // Predicated region
      $region13: #{forward.2} parent=11 // pred_check
        %p206 = pneg %p60
      $region14: #{forward.2} parent=11 // pred_check_branch
        %208 = sbr.rel (%p206) target = $region16
      $region15: #{forward.2} parent=11 // pred_region
        _
      $region16: #{forward.2} parent=11 // pred_fallthru
        _
      // Predicated region
      $region17: #{forward.2} parent=11 // pred_check
        %p209 = pneg %p81
      $region18: #{forward.2} parent=11 // pred_check_branch
        %211 = sbr.rel (%p209) target = $region20
      $region19: #{forward.2} parent=11 // pred_region
        _
      $region20: #{forward.2} parent=11 // pred_fallthru
        _
      // Predicated region
      $region21: #{forward.2} parent=11 // pred_check
        %p212 = pneg %p102
      $region22: #{forward.2} parent=11 // pred_check_branch
        %214 = sbr.rel (%p212) target = $region24
      $region23: #{forward.2} parent=11 // pred_region
        _
      $region24: #{forward.2} parent=11 // pred_fallthru
        _
      // Predicated region
      $region25: #{forward.2} parent=11 // pred_check
        %p215 = pneg %p123
      $region26: #{forward.2} parent=11 // pred_check_branch
        %217 = sbr.rel (%p215) target = $region28
      $region27: #{forward.2} parent=11 // pred_region
        _
      $region28: #{forward.2} parent=11 // pred_fallthru
        _
      // Predicated region
      $region29: #{forward.2} parent=11 // pred_check
        %p218 = pneg %p144
      $region30: #{forward.2} parent=11 // pred_check_branch
        %220 = sbr.rel (%p218) target = $region32
      $region31: #{forward.2} parent=11 // pred_region
        _
      $region32: #{forward.2} parent=11 // pred_fallthru
        _
      // Predicated region
      $region33: #{forward.2} parent=11 // pred_check
        %p221 = pneg %p165
      $region34: #{forward.2} parent=11 // pred_check_branch
        %223 = sbr.rel (%p221) target = $region36
      $region35: #{forward.2} parent=11 // pred_region
        _
      $region36: #{forward.2} parent=11 // pred_fallthru
        _
    $region12: #{forward.2} parent=5 // pred_fallthru
      _
    %p224 = scmp.lt.s32.totalorder %s13, 2
    // Predicated region
    $region37: #{forward.2} parent=5 // pred_check
      %p225 = pneg %p224
    $region38: #{forward.2} parent=5 // pred_check_branch
      %227 = sbr.rel (%p225) target = $region40
    $region39: #{forward.2} parent=5 // pred_region
      // Predicated region
      $region41: #{forward.2} parent=39 // pred_check
        %p228 = pneg %p33
      $region42: #{forward.2} parent=39 // pred_check_branch
        %230 = sbr.rel (%p228) target = $region44
      $region43: #{forward.2} parent=39 // pred_region
        %p231 = scmp.lt.s32.totalorder %s13, 1
        %s232 = scalar_select %p231, %s13, 1
        %s233 = smul.addr %s232, 54
        %s234 = smul.addr %s233, 8
        %s235 = scalar_lea.vmem %s0, %s234
      $region44: #{forward.2} parent=39 // pred_fallthru
        _
    $region40: #{forward.2} parent=5 // pred_fallthru
      _
    %p236 = scmp.le.s32.totalorder 1, %s13
    %p237 = scmp.lt.s32.totalorder %s13, 3
    %p238 = pnand %p236, %p237
    %p239 = pneg %p238
    // Predicated region
    $region45: #{forward.2} parent=5 // pred_check
      _
    $region46: #{forward.2} parent=5 // pred_check_branch
      %241 = sbr.rel (%p238) target = $region48
    $region47: #{forward.2} parent=5 // pred_region
      %s242 = ssub.s32 %s13, 1
      %p243 = scmp.lt.s32.totalorder %s18, 1
      %s244 = scalar_select %p243, %s18, 1
      %s245 = smul.addr %s244, 54
      %s246 = smul.addr %s245, 8
      %s247 = scalar_lea.vmem %s0, %s246
      %p248 = pneg %p39
      %p249 = pneg %p36
      %p250 = pneg %p60
      %p251 = pneg %p57
      %p252 = pneg %p81
      %p253 = pneg %p78
      %p254 = pneg %p102
      %p255 = pneg %p99
      %p256 = pneg %p123
      %p257 = pneg %p120
      %p258 = pneg %p144
      %p259 = pneg %p141
      %p260 = pneg %p165
      %p261 = pneg %p162
      %p262 = pneg %p191
      %p263 = pneg %p188
      %p264 = scmp.lt.s32.totalorder %s18, 1
      %s265 = scalar_select %p264, %s18, 1
      %s266 = smul.addr %s265, 8
      %s267 = smul.addr %s266, 8
      %s268 = scalar_lea.vmem %s7, %s267
      %p269 = scmp.lt.s32.totalorder %s18, 1
      %s270 = scalar_select %p269, %s18, 1
      %s271 = smul.addr %s270, 54
      %s272 = smul.addr %s271, 8
      %s273 = scalar_lea.vmem %s0, %s272
      %p274 = scmp.lt.s32.totalorder %s18, 1
      %s275 = scalar_select %p274, %s18, 1
      %s276 = smul.addr %s275, 8
      %s277 = smul.addr %s276, 8
      %s278 = scalar_lea.vmem %s7, %s277
      %v280 = vld [vmem:[%s273] sm:$0xff]
      %v281 = vld [vmem:[%s273 + $0x8] sm:$0xff]
      %v282 = vld [vmem:[%s273 + $0x18] sm:$0xff]
      %v283 = vld [vmem:[%s273 + $0x20] sm:$0xff]
      %v284 = vld [vmem:[%s273 + $0x30] sm:$0xff]
      %v285 = vld [vmem:[%s273 + $0x38] sm:$0xff]
      %v286 = vld [vmem:[%s273 + $0x48] sm:$0xff]
      %v287 = vld [vmem:[%s273 + $0x50] sm:$0xff]
      %v288 = vld [vmem:[%s273 + $0x60] sm:$0xff]
      %v289 = vld [vmem:[%s273 + $0x68] sm:$0xff]
      %v290 = vld [vmem:[%s273 + $0x78] sm:$0xff]
      %v291 = vld [vmem:[%s273 + $0x80] sm:$0xff]
      %v292 = vld [vmem:[%s273 + $0x90] sm:$0xff]
      %v293 = vld [vmem:[%s273 + $0x98] sm:$0xff]
      %v294 = vld [vmem:[%s273 + $0xa8] sm:$0xff]
      %v295 = vld [vmem:[%s273 + $0xb0] sm:$0xff]
      %v296 = vld [vmem:[%s273 + $0xc0] sm:$0xff]
      %v297 = vld [vmem:[%s273 + $0xc8] sm:$0xff]
      %v298 = vld [vmem:[%s273 + $0xd8] sm:$0xff]
      %v299 = vld [vmem:[%s273 + $0xe0] sm:$0xff]
      %v300 = vld [vmem:[%s273 + $0xf0] sm:$0xff]
      %v301 = vld [vmem:[%s273 + $0xf8] sm:$0xff]
      %v302 = vld [vmem:[%s273 + $0x108] sm:$0xff]
      %v303 = vld [vmem:[%s273 + $0x110] sm:$0xff]
      %v304 = vld [vmem:[%s273 + $0x120] sm:$0xff]
      %v305 = vld [vmem:[%s273 + $0x128] sm:$0xff]
      %v306 = vld [vmem:[%s273 + $0x138] sm:$0xff]
      %v307 = vld [vmem:[%s273 + $0x140] sm:$0xff]
      %v308 = vld [vmem:[%s273 + $0x150] sm:$0xff]
      %v309 = vld [vmem:[%s273 + $0x158] sm:$0xff]
      %v310 = vld [vmem:[%s273 + $0x168] sm:$0xff]
      %v311 = vld [vmem:[%s273 + $0x170] sm:$0xff]
      %v312 = vpack.c.bf16 %v281, %v280
      %v313 = vpack.c.bf16 %v283, %v282
      %v314 = vpack.c.bf16 %v285, %v284
      %v315 = vpack.c.bf16 %v287, %v286
      %v316 = vpack.c.bf16 %v289, %v288
      %v317 = vpack.c.bf16 %v291, %v290
      %v318 = vpack.c.bf16 %v293, %v292
      %v319 = vpack.c.bf16 %v295, %v294
      %v320 = vpack.c.bf16 %v297, %v296
      %v321 = vpack.c.bf16 %v299, %v298
      %v322 = vpack.c.bf16 %v301, %v300
      %v323 = vpack.c.bf16 %v303, %v302
      %v324 = vpack.c.bf16 %v305, %v304
      %v325 = vpack.c.bf16 %v307, %v306
      %v326 = vpack.c.bf16 %v309, %v308
      %v327 = vpack.c.bf16 %v311, %v310
      %v328 = vld [vmem:[%s1] sm:$0xf]
      %v329 = vld [vmem:[%s1 + $0x4] sm:$0xf]
      %v330 = vld [vmem:[%s1 + $0x8] sm:$0xf]
      %v331 = vld [vmem:[%s1 + $0xc] sm:$0xf]
      %v332 = vld [vmem:[%s1 + $0x10] sm:$0xf]
      %v333 = vld [vmem:[%s1 + $0x14] sm:$0xf]
      %v334 = vld [vmem:[%s1 + $0x18] sm:$0xf]
      %v335 = vld [vmem:[%s1 + $0x1c] sm:$0xf]
      %v336 = vld [vmem:[%s1 + $0x20] sm:$0xf]
      %v337 = vld [vmem:[%s1 + $0x24] sm:$0xf]
      %v338 = vld [vmem:[%s1 + $0x28] sm:$0xf]
      %v339 = vld [vmem:[%s1 + $0x2c] sm:$0xf]
      %v340 = vld [vmem:[%s1 + $0x30] sm:$0xf]
      %v341 = vld [vmem:[%s1 + $0x34] sm:$0xf]
      %v342 = vld [vmem:[%s1 + $0x38] sm:$0xf]
      %v343 = vld [vmem:[%s1 + $0x3c] sm:$0xf]
      %v344 = vld [vmem:[%s273 + $0x1] sm:$0xff]
      %v345 = vld [vmem:[%s273 + $0x9] sm:$0xff]
      %v346 = vld [vmem:[%s273 + $0x19] sm:$0xff]
      %v347 = vld [vmem:[%s273 + $0x21] sm:$0xff]
      %v348 = vld [vmem:[%s273 + $0x31] sm:$0xff]
      %v349 = vld [vmem:[%s273 + $0x39] sm:$0xff]
      %v350 = vld [vmem:[%s273 + $0x49] sm:$0xff]
      %v351 = vld [vmem:[%s273 + $0x51] sm:$0xff]
      %v352 = vld [vmem:[%s273 + $0x61] sm:$0xff]
      %v353 = vld [vmem:[%s273 + $0x69] sm:$0xff]
      %v354 = vld [vmem:[%s273 + $0x79] sm:$0xff]
      %v355 = vld [vmem:[%s273 + $0x81] sm:$0xff]
      %v356 = vld [vmem:[%s273 + $0x91] sm:$0xff]
      %v357 = vld [vmem:[%s273 + $0x99] sm:$0xff]
      %v358 = vld [vmem:[%s273 + $0xa9] sm:$0xff]
      %v359 = vld [vmem:[%s273 + $0xb1] sm:$0xff]
      %v360 = vld [vmem:[%s273 + $0xc1] sm:$0xff]
      %v361 = vld [vmem:[%s273 + $0xc9] sm:$0xff]
      %v362 = vld [vmem:[%s273 + $0xd9] sm:$0xff]
      %v363 = vld [vmem:[%s273 + $0xe1] sm:$0xff]
      %v364 = vld [vmem:[%s273 + $0xf1] sm:$0xff]
      %v365 = vld [vmem:[%s273 + $0xf9] sm:$0xff]
      %v366 = vld [vmem:[%s273 + $0x109] sm:$0xff]
      %v367 = vld [vmem:[%s273 + $0x111] sm:$0xff]
      %v368 = vld [vmem:[%s273 + $0x121] sm:$0xff]
      %v369 = vld [vmem:[%s273 + $0x129] sm:$0xff]
      %v370 = vld [vmem:[%s273 + $0x139] sm:$0xff]
      %v371 = vld [vmem:[%s273 + $0x141] sm:$0xff]
      %v372 = vld [vmem:[%s273 + $0x151] sm:$0xff]
      %v373 = vld [vmem:[%s273 + $0x159] sm:$0xff]
      %v374 = vld [vmem:[%s273 + $0x169] sm:$0xff]
      %v375 = vld [vmem:[%s273 + $0x171] sm:$0xff]
      %v376 = vpack.c.bf16 %v345, %v344
      %v377 = vpack.c.bf16 %v347, %v346
      %v378 = vpack.c.bf16 %v349, %v348
      %v379 = vpack.c.bf16 %v351, %v350
      %v380 = vpack.c.bf16 %v353, %v352
      %v381 = vpack.c.bf16 %v355, %v354
      %v382 = vpack.c.bf16 %v357, %v356
      %v383 = vpack.c.bf16 %v359, %v358
      %v384 = vpack.c.bf16 %v361, %v360
      %v385 = vpack.c.bf16 %v363, %v362
      %v386 = vpack.c.bf16 %v365, %v364
      %v387 = vpack.c.bf16 %v367, %v366
      %v388 = vpack.c.bf16 %v369, %v368
      %v389 = vpack.c.bf16 %v371, %v370
      %v390 = vpack.c.bf16 %v373, %v372
      %v391 = vpack.c.bf16 %v375, %v374
      %s392 = scalar_lea.vmem %s1, 64
      %v393 = vld [vmem:[%s392] sm:$0xf]
      %v394 = vld [vmem:[%s392 + $0x4] sm:$0xf]
      %v395 = vld [vmem:[%s392 + $0x8] sm:$0xf]
      %v396 = vld [vmem:[%s392 + $0xc] sm:$0xf]
      %v397 = vld [vmem:[%s392 + $0x10] sm:$0xf]
      %v398 = vld [vmem:[%s392 + $0x14] sm:$0xf]
      %v399 = vld [vmem:[%s392 + $0x18] sm:$0xf]
      %v400 = vld [vmem:[%s392 + $0x1c] sm:$0xf]
      %v401 = vld [vmem:[%s392 + $0x20] sm:$0xf]
      %v402 = vld [vmem:[%s392 + $0x24] sm:$0xf]
      %v403 = vld [vmem:[%s392 + $0x28] sm:$0xf]
      %v404 = vld [vmem:[%s392 + $0x2c] sm:$0xf]
      %v405 = vld [vmem:[%s392 + $0x30] sm:$0xf]
      %v406 = vld [vmem:[%s392 + $0x34] sm:$0xf]
      %v407 = vld [vmem:[%s392 + $0x38] sm:$0xf]
      %v408 = vld [vmem:[%s392 + $0x3c] sm:$0xf]
      %v425 = vunpack.c.l.b16 %v393
      %v426 = vunpack.c.l.b16 %v394
      %v427 = vunpack.c.l.b16 %v395
      %v428 = vunpack.c.l.b16 %v396
      %v429 = vunpack.c.l.b16 %v397
      %v430 = vunpack.c.l.b16 %v398
      %v431 = vunpack.c.l.b16 %v399
      %v432 = vunpack.c.l.b16 %v400
      %v433 = vunpack.c.l.b16 %v401
      %v434 = vunpack.c.l.b16 %v402
      %v435 = vunpack.c.l.b16 %v403
      %v436 = vunpack.c.l.b16 %v404
      %v437 = vunpack.c.l.b16 %v405
      %v438 = vunpack.c.l.b16 %v406
      %v439 = vunpack.c.l.b16 %v407
      %v440 = vunpack.c.l.b16 %v408
      %v441 = vpack.c.b16 %v426, %v425
      %v442 = vpack.c.b16 %v428, %v427
      %v443 = vpack.c.b16 %v430, %v429
      %v444 = vpack.c.b16 %v432, %v431
      %v445 = vpack.c.b16 %v434, %v433
      %v446 = vpack.c.b16 %v436, %v435
      %v447 = vpack.c.b16 %v438, %v437
      %v448 = vpack.c.b16 %v440, %v439
      %457 = vmatprep.subr.bf16.mxu0 0
      %458 = vmatpush1.bf16.msra.mxu0 %v448
      %459 = vmatprep.subr.bf16.mxu0 0
      %460 = vmatpush1.bf16.msra.mxu0 %v447
      %461 = vmatprep.subr.bf16.mxu0 0
      %462 = vmatpush1.bf16.msra.mxu0 %v446
      %463 = vmatprep.subr.bf16.mxu0 0
      %464 = vmatpush1.bf16.msra.mxu0 %v445
      %465 = vmatprep.subr.bf16.mxu0 0
      %466 = vmatpush1.bf16.msra.mxu0 %v444
      %467 = vmatprep.subr.bf16.mxu0 0
      %468 = vmatpush1.bf16.msra.mxu0 %v443
      %469 = vmatprep.subr.bf16.mxu0 0
      %470 = vmatpush1.bf16.msra.mxu0 %v442
      %471 = vmatprep.subr.bf16.mxu0 0
      %472 = vmatpush1.bf16.msra.mxu0 %v441
      %473 = vmatprep.subr.bf16.mxu0 0
      %474 = vmatpush2.bf16.msra.mxu0 0
      %475 = vmatprep.subr.bf16.mxu0 0
      %476 = vmatpush2.bf16.msra.mxu0 0
      %477 = vmatprep.subr.bf16.mxu0 0
      %478 = vmatpush2.bf16.msra.mxu0 0
      %479 = vmatprep.subr.bf16.mxu0 0
      %480 = vmatpush2.bf16.msra.mxu0 0
      %481 = vmatprep.subr.bf16.mxu0 0
      %482 = vmatpush2.bf16.msra.mxu0 0
      %483 = vmatprep.subr.bf16.mxu0 0
      %484 = vmatpush2.bf16.msra.mxu0 0
      %485 = vmatprep.subr.bf16.mxu0 0
      %486 = vmatpush2.bf16.msra.mxu0 0
      %487 = vmatprep.subr.bf16.mxu0 0
      %488 = vmatpush2.bf16.msra.mxu0 0
      %489 = vmatprep.mubr.bf16.mxu0 0
      %490 = vmatmul.mubr.bf16.gmra.mxu0 %v376
      %v491 = vpop.f32.mrf.mxu0
      %v492 = vadd.f32 0.0, %v491
      %v493 = vpop.f32.mrf.mxu0
      %v494 = vpop.f32.mrf.mxu0
      %v495 = vadd.f32 0.0, %v494
      %v496 = vpop.f32.mrf.mxu0
      %497 = vmatprep.mubr.bf16.mxu0 0
      %498 = vmatmul.mubr.bf16.gmra.mxu0 %v377
      %v499 = vpop.f32.mrf.mxu0
      %v500 = vadd.f32 0.0, %v499
      %v501 = vpop.f32.mrf.mxu0
      %v502 = vpop.f32.mrf.mxu0
      %v503 = vadd.f32 0.0, %v502
      %v504 = vpop.f32.mrf.mxu0
      %505 = vmatprep.mubr.bf16.mxu0 0
      %506 = vmatmul.mubr.bf16.gmra.mxu0 %v378
      %v507 = vpop.f32.mrf.mxu0
      %v508 = vadd.f32 0.0, %v507
      %v509 = vpop.f32.mrf.mxu0
      %v510 = vpop.f32.mrf.mxu0
      %v511 = vadd.f32 0.0, %v510
      %v512 = vpop.f32.mrf.mxu0
      %513 = vmatprep.mubr.bf16.mxu0 0
      %514 = vmatmul.mubr.bf16.gmra.mxu0 %v379
      %v515 = vpop.f32.mrf.mxu0
      %v516 = vadd.f32 0.0, %v515
      %v517 = vpop.f32.mrf.mxu0
      %v518 = vpop.f32.mrf.mxu0
      %v519 = vadd.f32 0.0, %v518
      %v520 = vpop.f32.mrf.mxu0
      %521 = vmatprep.mubr.bf16.mxu0 0
      %522 = vmatmul.mubr.bf16.gmra.mxu0 %v380
      %v523 = vpop.f32.mrf.mxu0
      %v524 = vadd.f32 0.0, %v523
      %v525 = vpop.f32.mrf.mxu0
      %v526 = vpop.f32.mrf.mxu0
      %v527 = vadd.f32 0.0, %v526
      %v528 = vpop.f32.mrf.mxu0
      %529 = vmatprep.mubr.bf16.mxu0 0
      %530 = vmatmul.mubr.bf16.gmra.mxu0 %v381
      %v531 = vpop.f32.mrf.mxu0
      %v532 = vadd.f32 0.0, %v531
      %v533 = vpop.f32.mrf.mxu0
      %v534 = vpop.f32.mrf.mxu0
      %v535 = vadd.f32 0.0, %v534
      %v536 = vpop.f32.mrf.mxu0
      %537 = vmatprep.mubr.bf16.mxu0 0
      %538 = vmatmul.mubr.bf16.gmra.mxu0 %v382
      %v539 = vpop.f32.mrf.mxu0
      %v540 = vadd.f32 0.0, %v539
      %v541 = vpop.f32.mrf.mxu0
      %v542 = vpop.f32.mrf.mxu0
      %v543 = vadd.f32 0.0, %v542
      %v544 = vpop.f32.mrf.mxu0
      %545 = vmatprep.mubr.bf16.mxu0 0
      %546 = vmatmul.mubr.bf16.gmra.mxu0 %v383
      %v547 = vpop.f32.mrf.mxu0
      %v548 = vadd.f32 0.0, %v547
      %v549 = vpop.f32.mrf.mxu0
      %v550 = vpop.f32.mrf.mxu0
      %v551 = vadd.f32 0.0, %v550
      %v552 = vpop.f32.mrf.mxu0
      %553 = vmatprep.mubr.bf16.mxu0 0
      %554 = vmatmul.mubr.bf16.gmra.mxu0 %v384
      %v555 = vpop.f32.mrf.mxu0
      %v556 = vadd.f32 0.0, %v555
      %v557 = vpop.f32.mrf.mxu0
      %v558 = vpop.f32.mrf.mxu0
      %v559 = vadd.f32 0.0, %v558
      %v560 = vpop.f32.mrf.mxu0
      %561 = vmatprep.mubr.bf16.mxu0 0
      %562 = vmatmul.mubr.bf16.gmra.mxu0 %v385
      %v563 = vpop.f32.mrf.mxu0
      %v564 = vadd.f32 0.0, %v563
      %v565 = vpop.f32.mrf.mxu0
      %v566 = vpop.f32.mrf.mxu0
      %v567 = vadd.f32 0.0, %v566
      %v568 = vpop.f32.mrf.mxu0
      %569 = vmatprep.mubr.bf16.mxu0 0
      %570 = vmatmul.mubr.bf16.gmra.mxu0 %v386
      %v571 = vpop.f32.mrf.mxu0
      %v572 = vadd.f32 0.0, %v571
      %v573 = vpop.f32.mrf.mxu0
      %v574 = vpop.f32.mrf.mxu0
      %v575 = vadd.f32 0.0, %v574
      %v576 = vpop.f32.mrf.mxu0
      %577 = vmatprep.mubr.bf16.mxu0 0
      %578 = vmatmul.mubr.bf16.gmra.mxu0 %v387
      %v579 = vpop.f32.mrf.mxu0
      %v580 = vadd.f32 0.0, %v579
      %v581 = vpop.f32.mrf.mxu0
      %v582 = vpop.f32.mrf.mxu0
      %v583 = vadd.f32 0.0, %v582
      %v584 = vpop.f32.mrf.mxu0
      %585 = vmatprep.mubr.bf16.mxu0 0
      %586 = vmatmul.mubr.bf16.gmra.mxu0 %v388
      %v587 = vpop.f32.mrf.mxu0
      %v588 = vadd.f32 0.0, %v587
      %v589 = vpop.f32.mrf.mxu0
      %v590 = vpop.f32.mrf.mxu0
      %v591 = vadd.f32 0.0, %v590
      %v592 = vpop.f32.mrf.mxu0
      %593 = vmatprep.mubr.bf16.mxu0 0
      %594 = vmatmul.mubr.bf16.gmra.mxu0 %v389
      %v595 = vpop.f32.mrf.mxu0
      %v596 = vadd.f32 0.0, %v595
      %v597 = vpop.f32.mrf.mxu0
      %v598 = vpop.f32.mrf.mxu0
      %v599 = vadd.f32 0.0, %v598
      %v600 = vpop.f32.mrf.mxu0
      %601 = vmatprep.mubr.bf16.mxu0 0
      %602 = vmatmul.mubr.bf16.gmra.mxu0 %v390
      %v603 = vpop.f32.mrf.mxu0
      %v604 = vadd.f32 0.0, %v603
      %v605 = vpop.f32.mrf.mxu0
      %v606 = vpop.f32.mrf.mxu0
      %v607 = vadd.f32 0.0, %v606
      %v608 = vpop.f32.mrf.mxu0
      %609 = vmatprep.mubr.bf16.mxu0 0
      %610 = vmatmul.mubr.bf16.gmra.mxu0 %v391
      %v611 = vpop.f32.mrf.mxu0
      %v612 = vadd.f32 0.0, %v611
      %v613 = vpop.f32.mrf.mxu0
      %v614 = vpop.f32.mrf.mxu0
      %v615 = vadd.f32 0.0, %v614
      %v616 = vpop.f32.mrf.mxu0
      %617 = vdwg.mxu0
      %v634 = vunpack.c.l.b16 %v328
      %v635 = vunpack.c.l.b16 %v329
      %v636 = vunpack.c.l.b16 %v330
      %v637 = vunpack.c.l.b16 %v331
      %v638 = vunpack.c.l.b16 %v332
      %v639 = vunpack.c.l.b16 %v333
      %v640 = vunpack.c.l.b16 %v334
      %v641 = vunpack.c.l.b16 %v335
      %v642 = vunpack.c.l.b16 %v336
      %v643 = vunpack.c.l.b16 %v337
      %v644 = vunpack.c.l.b16 %v338
      %v645 = vunpack.c.l.b16 %v339
      %v646 = vunpack.c.l.b16 %v340
      %v647 = vunpack.c.l.b16 %v341
      %v648 = vunpack.c.l.b16 %v342
      %v649 = vunpack.c.l.b16 %v343
      %v650 = vpack.c.b16 %v635, %v634
      %v651 = vpack.c.b16 %v637, %v636
      %v652 = vpack.c.b16 %v639, %v638
      %v653 = vpack.c.b16 %v641, %v640
      %v654 = vpack.c.b16 %v643, %v642
      %v655 = vpack.c.b16 %v645, %v644
      %v656 = vpack.c.b16 %v647, %v646
      %v657 = vpack.c.b16 %v649, %v648
      %666 = vmatprep.subr.bf16.mxu0 0
      %667 = vmatpush1.bf16.msra.mxu0 %v657
      %668 = vmatprep.subr.bf16.mxu0 0
      %669 = vmatpush1.bf16.msra.mxu0 %v656
      %670 = vmatprep.subr.bf16.mxu0 0
      %671 = vmatpush1.bf16.msra.mxu0 %v655
      %672 = vmatprep.subr.bf16.mxu0 0
      %673 = vmatpush1.bf16.msra.mxu0 %v654
      %674 = vmatprep.subr.bf16.mxu0 0
      %675 = vmatpush1.bf16.msra.mxu0 %v653
      %676 = vmatprep.subr.bf16.mxu0 0
      %677 = vmatpush1.bf16.msra.mxu0 %v652
      %678 = vmatprep.subr.bf16.mxu0 0
      %679 = vmatpush1.bf16.msra.mxu0 %v651
      %680 = vmatprep.subr.bf16.mxu0 0
      %681 = vmatpush1.bf16.msra.mxu0 %v650
      %682 = vmatprep.subr.bf16.mxu0 0
      %683 = vmatpush2.bf16.msra.mxu0 0
      %684 = vmatprep.subr.bf16.mxu0 0
      %685 = vmatpush2.bf16.msra.mxu0 0
      %686 = vmatprep.subr.bf16.mxu0 0
      %687 = vmatpush2.bf16.msra.mxu0 0
      %688 = vmatprep.subr.bf16.mxu0 0
      %689 = vmatpush2.bf16.msra.mxu0 0
      %690 = vmatprep.subr.bf16.mxu0 0
      %691 = vmatpush2.bf16.msra.mxu0 0
      %692 = vmatprep.subr.bf16.mxu0 0
      %693 = vmatpush2.bf16.msra.mxu0 0
      %694 = vmatprep.subr.bf16.mxu0 0
      %695 = vmatpush2.bf16.msra.mxu0 0
      %696 = vmatprep.subr.bf16.mxu0 0
      %697 = vmatpush2.bf16.msra.mxu0 0
      %698 = vmatprep.mubr.bf16.mxu0 0
      %699 = vmatmul.mubr.bf16.gmra.mxu0 %v312
      %v700 = vpop.f32.mrf.mxu0
      %v701 = vadd.f32 %v492, %v700
      %v702 = vpop.f32.mrf.mxu0
      %v703 = vpop.f32.mrf.mxu0
      %v704 = vadd.f32 %v495, %v703
      %v705 = vpop.f32.mrf.mxu0
      %706 = vmatprep.mubr.bf16.mxu0 0
      %707 = vmatmul.mubr.bf16.gmra.mxu0 %v313
      %v708 = vpop.f32.mrf.mxu0
      %v709 = vadd.f32 %v500, %v708
      %v710 = vpop.f32.mrf.mxu0
      %v711 = vpop.f32.mrf.mxu0
      %v712 = vadd.f32 %v503, %v711
      %v713 = vpop.f32.mrf.mxu0
      %714 = vmatprep.mubr.bf16.mxu0 0
      %715 = vmatmul.mubr.bf16.gmra.mxu0 %v314
      %v716 = vpop.f32.mrf.mxu0
      %v717 = vadd.f32 %v508, %v716
      %v718 = vpop.f32.mrf.mxu0
      %v719 = vpop.f32.mrf.mxu0
      %v720 = vadd.f32 %v511, %v719
      %v721 = vpop.f32.mrf.mxu0
      %722 = vmatprep.mubr.bf16.mxu0 0
      %723 = vmatmul.mubr.bf16.gmra.mxu0 %v315
      %v724 = vpop.f32.mrf.mxu0
      %v725 = vadd.f32 %v516, %v724
      %v726 = vpop.f32.mrf.mxu0
      %v727 = vpop.f32.mrf.mxu0
      %v728 = vadd.f32 %v519, %v727
      %v729 = vpop.f32.mrf.mxu0
      %730 = vmatprep.mubr.bf16.mxu0 0
      %731 = vmatmul.mubr.bf16.gmra.mxu0 %v316
      %v732 = vpop.f32.mrf.mxu0
      %v733 = vadd.f32 %v524, %v732
      %v734 = vpop.f32.mrf.mxu0
      %v735 = vpop.f32.mrf.mxu0
      %v736 = vadd.f32 %v527, %v735
      %v737 = vpop.f32.mrf.mxu0
      %738 = vmatprep.mubr.bf16.mxu0 0
      %739 = vmatmul.mubr.bf16.gmra.mxu0 %v317
      %v740 = vpop.f32.mrf.mxu0
      %v741 = vadd.f32 %v532, %v740
      %v742 = vpop.f32.mrf.mxu0
      %v743 = vpop.f32.mrf.mxu0
      %v744 = vadd.f32 %v535, %v743
      %v745 = vpop.f32.mrf.mxu0
      %746 = vmatprep.mubr.bf16.mxu0 0
      %747 = vmatmul.mubr.bf16.gmra.mxu0 %v318
      %v748 = vpop.f32.mrf.mxu0
      %v749 = vadd.f32 %v540, %v748
      %v750 = vpop.f32.mrf.mxu0
      %v751 = vpop.f32.mrf.mxu0
      %v752 = vadd.f32 %v543, %v751
      %v753 = vpop.f32.mrf.mxu0
      %754 = vmatprep.mubr.bf16.mxu0 0
      %755 = vmatmul.mubr.bf16.gmra.mxu0 %v319
      %v756 = vpop.f32.mrf.mxu0
      %v757 = vadd.f32 %v548, %v756
      %v758 = vpop.f32.mrf.mxu0
      %v759 = vpop.f32.mrf.mxu0
      %v760 = vadd.f32 %v551, %v759
      %v761 = vpop.f32.mrf.mxu0
      %762 = vmatprep.mubr.bf16.mxu0 0
      %763 = vmatmul.mubr.bf16.gmra.mxu0 %v320
      %v764 = vpop.f32.mrf.mxu0
      %v765 = vadd.f32 %v556, %v764
      %v766 = vpop.f32.mrf.mxu0
      %v767 = vpop.f32.mrf.mxu0
      %v768 = vadd.f32 %v559, %v767
      %v769 = vpop.f32.mrf.mxu0
      %770 = vmatprep.mubr.bf16.mxu0 0
      %771 = vmatmul.mubr.bf16.gmra.mxu0 %v321
      %v772 = vpop.f32.mrf.mxu0
      %v773 = vadd.f32 %v564, %v772
      %v774 = vpop.f32.mrf.mxu0
      %v775 = vpop.f32.mrf.mxu0
      %v776 = vadd.f32 %v567, %v775
      %v777 = vpop.f32.mrf.mxu0
      %778 = vmatprep.mubr.bf16.mxu0 0
      %779 = vmatmul.mubr.bf16.gmra.mxu0 %v322
      %v780 = vpop.f32.mrf.mxu0
      %v781 = vadd.f32 %v572, %v780
      %v782 = vpop.f32.mrf.mxu0
      %v783 = vpop.f32.mrf.mxu0
      %v784 = vadd.f32 %v575, %v783
      %v785 = vpop.f32.mrf.mxu0
      %786 = vmatprep.mubr.bf16.mxu0 0
      %787 = vmatmul.mubr.bf16.gmra.mxu0 %v323
      %v788 = vpop.f32.mrf.mxu0
      %v789 = vadd.f32 %v580, %v788
      %v790 = vpop.f32.mrf.mxu0
      %v791 = vpop.f32.mrf.mxu0
      %v792 = vadd.f32 %v583, %v791
      %v793 = vpop.f32.mrf.mxu0
      %794 = vmatprep.mubr.bf16.mxu0 0
      %795 = vmatmul.mubr.bf16.gmra.mxu0 %v324
      %v796 = vpop.f32.mrf.mxu0
      %v797 = vadd.f32 %v588, %v796
      %v798 = vpop.f32.mrf.mxu0
      %v799 = vpop.f32.mrf.mxu0
      %v800 = vadd.f32 %v591, %v799
      %v801 = vpop.f32.mrf.mxu0
      %802 = vmatprep.mubr.bf16.mxu0 0
      %803 = vmatmul.mubr.bf16.gmra.mxu0 %v325
      %v804 = vpop.f32.mrf.mxu0
      %v805 = vadd.f32 %v596, %v804
      %v806 = vpop.f32.mrf.mxu0
      %v807 = vpop.f32.mrf.mxu0
      %v808 = vadd.f32 %v599, %v807
      %v809 = vpop.f32.mrf.mxu0
      %810 = vmatprep.mubr.bf16.mxu0 0
      %811 = vmatmul.mubr.bf16.gmra.mxu0 %v326
      %v812 = vpop.f32.mrf.mxu0
      %v813 = vadd.f32 %v604, %v812
      %v814 = vpop.f32.mrf.mxu0
      %v815 = vpop.f32.mrf.mxu0
      %v816 = vadd.f32 %v607, %v815
      %v817 = vpop.f32.mrf.mxu0
      %818 = vmatprep.mubr.bf16.mxu0 0
      %819 = vmatmul.mubr.bf16.gmra.mxu0 %v327
      %v820 = vpop.f32.mrf.mxu0
      %v821 = vadd.f32 %v612, %v820
      %v822 = vpop.f32.mrf.mxu0
      %v823 = vpop.f32.mrf.mxu0
      %v824 = vadd.f32 %v615, %v823
      %v825 = vpop.f32.mrf.mxu0
      %826 = vdwg.mxu0
      %v827 = vld [vmem:[%s273 + $0x2] sm:$0xff]
      %v828 = vld [vmem:[%s273 + $0xa] sm:$0xff]
      %v829 = vld [vmem:[%s273 + $0x1a] sm:$0xff]
      %v830 = vld [vmem:[%s273 + $0x22] sm:$0xff]
      %v831 = vld [vmem:[%s273 + $0x32] sm:$0xff]
      %v832 = vld [vmem:[%s273 + $0x3a] sm:$0xff]
      %v833 = vld [vmem:[%s273 + $0x4a] sm:$0xff]
      %v834 = vld [vmem:[%s273 + $0x52] sm:$0xff]
      %v835 = vld [vmem:[%s273 + $0x62] sm:$0xff]
      %v836 = vld [vmem:[%s273 + $0x6a] sm:$0xff]
      %v837 = vld [vmem:[%s273 + $0x7a] sm:$0xff]
      %v838 = vld [vmem:[%s273 + $0x82] sm:$0xff]
      %v839 = vld [vmem:[%s273 + $0x92] sm:$0xff]
      %v840 = vld [vmem:[%s273 + $0x9a] sm:$0xff]
      %v841 = vld [vmem:[%s273 + $0xaa] sm:$0xff]
      %v842 = vld [vmem:[%s273 + $0xb2] sm:$0xff]
      %v843 = vld [vmem:[%s273 + $0xc2] sm:$0xff]
      %v844 = vld [vmem:[%s273 + $0xca] sm:$0xff]
      %v845 = vld [vmem:[%s273 + $0xda] sm:$0xff]
      %v846 = vld [vmem:[%s273 + $0xe2] sm:$0xff]
      %v847 = vld [vmem:[%s273 + $0xf2] sm:$0xff]
      %v848 = vld [vmem:[%s273 + $0xfa] sm:$0xff]
      %v849 = vld [vmem:[%s273 + $0x10a] sm:$0xff]
      %v850 = vld [vmem:[%s273 + $0x112] sm:$0xff]
      %v851 = vld [vmem:[%s273 + $0x122] sm:$0xff]
      %v852 = vld [vmem:[%s273 + $0x12a] sm:$0xff]
      %v853 = vld [vmem:[%s273 + $0x13a] sm:$0xff]
      %v854 = vld [vmem:[%s273 + $0x142] sm:$0xff]
      %v855 = vld [vmem:[%s273 + $0x152] sm:$0xff]
      %v856 = vld [vmem:[%s273 + $0x15a] sm:$0xff]
      %v857 = vld [vmem:[%s273 + $0x16a] sm:$0xff]
      %v858 = vld [vmem:[%s273 + $0x172] sm:$0xff]
      %v859 = vpack.c.bf16 %v828, %v827
      %v860 = vpack.c.bf16 %v830, %v829
      %v861 = vpack.c.bf16 %v832, %v831
      %v862 = vpack.c.bf16 %v834, %v833
      %v863 = vpack.c.bf16 %v836, %v835
      %v864 = vpack.c.bf16 %v838, %v837
      %v865 = vpack.c.bf16 %v840, %v839
      %v866 = vpack.c.bf16 %v842, %v841
      %v867 = vpack.c.bf16 %v844, %v843
      %v868 = vpack.c.bf16 %v846, %v845
      %v869 = vpack.c.bf16 %v848, %v847
      %v870 = vpack.c.bf16 %v850, %v849
      %v871 = vpack.c.bf16 %v852, %v851
      %v872 = vpack.c.bf16 %v854, %v853
      %v873 = vpack.c.bf16 %v856, %v855
      %v874 = vpack.c.bf16 %v858, %v857
      %s875 = scalar_lea.vmem %s1, 128
      %v876 = vld [vmem:[%s875] sm:$0xf]
      %v877 = vld [vmem:[%s875 + $0x4] sm:$0xf]
      %v878 = vld [vmem:[%s875 + $0x8] sm:$0xf]
      %v879 = vld [vmem:[%s875 + $0xc] sm:$0xf]
      %v880 = vld [vmem:[%s875 + $0x10] sm:$0xf]
      %v881 = vld [vmem:[%s875 + $0x14] sm:$0xf]
      %v882 = vld [vmem:[%s875 + $0x18] sm:$0xf]
      %v883 = vld [vmem:[%s875 + $0x1c] sm:$0xf]
      %v884 = vld [vmem:[%s875 + $0x20] sm:$0xf]
      %v885 = vld [vmem:[%s875 + $0x24] sm:$0xf]
      %v886 = vld [vmem:[%s875 + $0x28] sm:$0xf]
      %v887 = vld [vmem:[%s875 + $0x2c] sm:$0xf]
      %v888 = vld [vmem:[%s875 + $0x30] sm:$0xf]
      %v889 = vld [vmem:[%s875 + $0x34] sm:$0xf]
      %v890 = vld [vmem:[%s875 + $0x38] sm:$0xf]
      %v891 = vld [vmem:[%s875 + $0x3c] sm:$0xf]
      %v908 = vunpack.c.l.b16 %v876
      %v909 = vunpack.c.l.b16 %v877
      %v910 = vunpack.c.l.b16 %v878
      %v911 = vunpack.c.l.b16 %v879
      %v912 = vunpack.c.l.b16 %v880
      %v913 = vunpack.c.l.b16 %v881
      %v914 = vunpack.c.l.b16 %v882
      %v915 = vunpack.c.l.b16 %v883
      %v916 = vunpack.c.l.b16 %v884
      %v917 = vunpack.c.l.b16 %v885
      %v918 = vunpack.c.l.b16 %v886
      %v919 = vunpack.c.l.b16 %v887
      %v920 = vunpack.c.l.b16 %v888
      %v921 = vunpack.c.l.b16 %v889
      %v922 = vunpack.c.l.b16 %v890
      %v923 = vunpack.c.l.b16 %v891
      %v924 = vpack.c.b16 %v909, %v908
      %v925 = vpack.c.b16 %v911, %v910
      %v926 = vpack.c.b16 %v913, %v912
      %v927 = vpack.c.b16 %v915, %v914
      %v928 = vpack.c.b16 %v917, %v916
      %v929 = vpack.c.b16 %v919, %v918
      %v930 = vpack.c.b16 %v921, %v920
      %v931 = vpack.c.b16 %v923, %v922
      %940 = vmatprep.subr.bf16.mxu0 0
      %941 = vmatpush1.bf16.msra.mxu0 %v931
      %942 = vmatprep.subr.bf16.mxu0 0
      %943 = vmatpush1.bf16.msra.mxu0 %v930
      %944 = vmatprep.subr.bf16.mxu0 0
      %945 = vmatpush1.bf16.msra.mxu0 %v929
      %946 = vmatprep.subr.bf16.mxu0 0
      %947 = vmatpush1.bf16.msra.mxu0 %v928
      %948 = vmatprep.subr.bf16.mxu0 0
      %949 = vmatpush1.bf16.msra.mxu0 %v927
      %950 = vmatprep.subr.bf16.mxu0 0
      %951 = vmatpush1.bf16.msra.mxu0 %v926
      %952 = vmatprep.subr.bf16.mxu0 0
      %953 = vmatpush1.bf16.msra.mxu0 %v925
      %954 = vmatprep.subr.bf16.mxu0 0
      %955 = vmatpush1.bf16.msra.mxu0 %v924
      %956 = vmatprep.subr.bf16.mxu0 0
      %957 = vmatpush2.bf16.msra.mxu0 0
      %958 = vmatprep.subr.bf16.mxu0 0
      %959 = vmatpush2.bf16.msra.mxu0 0
      %960 = vmatprep.subr.bf16.mxu0 0
      %961 = vmatpush2.bf16.msra.mxu0 0
      %962 = vmatprep.subr.bf16.mxu0 0
      %963 = vmatpush2.bf16.msra.mxu0 0
      %964 = vmatprep.subr.bf16.mxu0 0
      %965 = vmatpush2.bf16.msra.mxu0 0
      %966 = vmatprep.subr.bf16.mxu0 0
      %967 = vmatpush2.bf16.msra.mxu0 0
      %968 = vmatprep.subr.bf16.mxu0 0
      %969 = vmatpush2.bf16.msra.mxu0 0
      %970 = vmatprep.subr.bf16.mxu0 0
      %971 = vmatpush2.bf16.msra.mxu0 0
      %972 = vmatprep.mubr.bf16.mxu0 0
      %973 = vmatmul.mubr.bf16.gmra.mxu0 %v859
      %v974 = vpop.f32.mrf.mxu0
      %v975 = vadd.f32 0.0, %v974
      %v976 = vpop.f32.mrf.mxu0
      %v977 = vpop.f32.mrf.mxu0
      %v978 = vadd.f32 0.0, %v977
      %v979 = vpop.f32.mrf.mxu0
      %980 = vmatprep.mubr.bf16.mxu0 0
      %981 = vmatmul.mubr.bf16.gmra.mxu0 %v860
      %v982 = vpop.f32.mrf.mxu0
      %v983 = vadd.f32 0.0, %v982
      %v984 = vpop.f32.mrf.mxu0
      %v985 = vpop.f32.mrf.mxu0
      %v986 = vadd.f32 0.0, %v985
      %v987 = vpop.f32.mrf.mxu0
      %988 = vmatprep.mubr.bf16.mxu0 0
      %989 = vmatmul.mubr.bf16.gmra.mxu0 %v861
      %v990 = vpop.f32.mrf.mxu0
      %v991 = vadd.f32 0.0, %v990
      %v992 = vpop.f32.mrf.mxu0
      %v993 = vpop.f32.mrf.mxu0
      %v994 = vadd.f32 0.0, %v993
      %v995 = vpop.f32.mrf.mxu0
      %996 = vmatprep.mubr.bf16.mxu0 0
      %997 = vmatmul.mubr.bf16.gmra.mxu0 %v862
      %v998 = vpop.f32.mrf.mxu0
      %v999 = vadd.f32 0.0, %v998
      %v1000 = vpop.f32.mrf.mxu0
      %v1001 = vpop.f32.mrf.mxu0
      %v1002 = vadd.f32 0.0, %v1001
      %v1003 = vpop.f32.mrf.mxu0
      %1004 = vmatprep.mubr.bf16.mxu0 0
      %1005 = vmatmul.mubr.bf16.gmra.mxu0 %v863
      %v1006 = vpop.f32.mrf.mxu0
      %v1007 = vadd.f32 0.0, %v1006
      %v1008 = vpop.f32.mrf.mxu0
      %v1009 = vpop.f32.mrf.mxu0
      %v1010 = vadd.f32 0.0, %v1009
      %v1011 = vpop.f32.mrf.mxu0
      %1012 = vmatprep.mubr.bf16.mxu0 0
      %1013 = vmatmul.mubr.bf16.gmra.mxu0 %v864
      %v1014 = vpop.f32.mrf.mxu0
      %v1015 = vadd.f32 0.0, %v1014
      %v1016 = vpop.f32.mrf.mxu0
      %v1017 = vpop.f32.mrf.mxu0
      %v1018 = vadd.f32 0.0, %v1017
      %v1019 = vpop.f32.mrf.mxu0
      %1020 = vmatprep.mubr.bf16.mxu0 0
      %1021 = vmatmul.mubr.bf16.gmra.mxu0 %v865
      %v1022 = vpop.f32.mrf.mxu0
      %v1023 = vadd.f32 0.0, %v1022
      %v1024 = vpop.f32.mrf.mxu0
      %v1025 = vpop.f32.mrf.mxu0
      %v1026 = vadd.f32 0.0, %v1025
      %v1027 = vpop.f32.mrf.mxu0
      %1028 = vmatprep.mubr.bf16.mxu0 0
      %1029 = vmatmul.mubr.bf16.gmra.mxu0 %v866
      %v1030 = vpop.f32.mrf.mxu0
      %v1031 = vadd.f32 0.0, %v1030
      %v1032 = vpop.f32.mrf.mxu0
      %v1033 = vpop.f32.mrf.mxu0
      %v1034 = vadd.f32 0.0, %v1033
      %v1035 = vpop.f32.mrf.mxu0
      %1036 = vmatprep.mubr.bf16.mxu0 0
      %1037 = vmatmul.mubr.bf16.gmra.mxu0 %v867
      %v1038 = vpop.f32.mrf.mxu0
      %v1039 = vadd.f32 0.0, %v1038
      %v1040 = vpop.f32.mrf.mxu0
      %v1041 = vpop.f32.mrf.mxu0
      %v1042 = vadd.f32 0.0, %v1041
      %v1043 = vpop.f32.mrf.mxu0
      %1044 = vmatprep.mubr.bf16.mxu0 0
      %1045 = vmatmul.mubr.bf16.gmra.mxu0 %v868
      %v1046 = vpop.f32.mrf.mxu0
      %v1047 = vadd.f32 0.0, %v1046
      %v1048 = vpop.f32.mrf.mxu0
      %v1049 = vpop.f32.mrf.mxu0
      %v1050 = vadd.f32 0.0, %v1049
      %v1051 = vpop.f32.mrf.mxu0
      %1052 = vmatprep.mubr.bf16.mxu0 0
      %1053 = vmatmul.mubr.bf16.gmra.mxu0 %v869
      %v1054 = vpop.f32.mrf.mxu0
      %v1055 = vadd.f32 0.0, %v1054
      %v1056 = vpop.f32.mrf.mxu0
      %v1057 = vpop.f32.mrf.mxu0
      %v1058 = vadd.f32 0.0, %v1057
      %v1059 = vpop.f32.mrf.mxu0
      %1060 = vmatprep.mubr.bf16.mxu0 0
      %1061 = vmatmul.mubr.bf16.gmra.mxu0 %v870
      %v1062 = vpop.f32.mrf.mxu0
      %v1063 = vadd.f32 0.0, %v1062
      %v1064 = vpop.f32.mrf.mxu0
      %v1065 = vpop.f32.mrf.mxu0
      %v1066 = vadd.f32 0.0, %v1065
      %v1067 = vpop.f32.mrf.mxu0
      %1068 = vmatprep.mubr.bf16.mxu0 0
      %1069 = vmatmul.mubr.bf16.gmra.mxu0 %v871
      %v1070 = vpop.f32.mrf.mxu0
      %v1071 = vadd.f32 0.0, %v1070
      %v1072 = vpop.f32.mrf.mxu0
      %v1073 = vpop.f32.mrf.mxu0
      %v1074 = vadd.f32 0.0, %v1073
      %v1075 = vpop.f32.mrf.mxu0
      %1076 = vmatprep.mubr.bf16.mxu0 0
      %1077 = vmatmul.mubr.bf16.gmra.mxu0 %v872
      %v1078 = vpop.f32.mrf.mxu0
      %v1079 = vadd.f32 0.0, %v1078
      %v1080 = vpop.f32.mrf.mxu0
      %v1081 = vpop.f32.mrf.mxu0
      %v1082 = vadd.f32 0.0, %v1081
      %v1083 = vpop.f32.mrf.mxu0
      %1084 = vmatprep.mubr.bf16.mxu0 0
      %1085 = vmatmul.mubr.bf16.gmra.mxu0 %v873
      %v1086 = vpop.f32.mrf.mxu0
      %v1087 = vadd.f32 0.0, %v1086
      %v1088 = vpop.f32.mrf.mxu0
      %v1089 = vpop.f32.mrf.mxu0
      %v1090 = vadd.f32 0.0, %v1089
      %v1091 = vpop.f32.mrf.mxu0
      %1092 = vmatprep.mubr.bf16.mxu0 0
      %1093 = vmatmul.mubr.bf16.gmra.mxu0 %v874
      %v1094 = vpop.f32.mrf.mxu0
      %v1095 = vadd.f32 0.0, %v1094
      %v1096 = vpop.f32.mrf.mxu0
      %v1097 = vpop.f32.mrf.mxu0
      %v1098 = vadd.f32 0.0, %v1097
      %v1099 = vpop.f32.mrf.mxu0
      %1100 = vdwg.mxu0
      %v1101 = vadd.f32 %v701, %v975
      %v1102 = vadd.f32 %v704, %v978
      %v1103 = vadd.f32 %v709, %v983
      %v1104 = vadd.f32 %v712, %v986
      %v1105 = vadd.f32 %v717, %v991
      %v1106 = vadd.f32 %v720, %v994
      %v1107 = vadd.f32 %v725, %v999
      %v1108 = vadd.f32 %v728, %v1002
      %v1109 = vadd.f32 %v733, %v1007
      %v1110 = vadd.f32 %v736, %v1010
      %v1111 = vadd.f32 %v741, %v1015
      %v1112 = vadd.f32 %v744, %v1018
      %v1113 = vadd.f32 %v749, %v1023
      %v1114 = vadd.f32 %v752, %v1026
      %v1115 = vadd.f32 %v757, %v1031
      %v1116 = vadd.f32 %v760, %v1034
      %v1117 = vadd.f32 %v765, %v1039
      %v1118 = vadd.f32 %v768, %v1042
      %v1119 = vadd.f32 %v773, %v1047
      %v1120 = vadd.f32 %v776, %v1050
      %v1121 = vadd.f32 %v781, %v1055
      %v1122 = vadd.f32 %v784, %v1058
      %v1123 = vadd.f32 %v789, %v1063
      %v1124 = vadd.f32 %v792, %v1066
      %v1125 = vadd.f32 %v797, %v1071
      %v1126 = vadd.f32 %v800, %v1074
      %v1127 = vadd.f32 %v805, %v1079
      %v1128 = vadd.f32 %v808, %v1082
      %v1129 = vadd.f32 %v813, %v1087
      %v1130 = vadd.f32 %v816, %v1090
      %v1131 = vadd.f32 %v821, %v1095
      %v1132 = vadd.f32 %v824, %v1098
      %s1133 = scalar_lea.vmem %s273, 24
      %v1134 = vld [vmem:[%s1133] sm:$0xff]
      %v1135 = vld [vmem:[%s1133 + $0x8] sm:$0xff]
      %v1136 = vld [vmem:[%s1133 + $0x18] sm:$0xff]
      %v1137 = vld [vmem:[%s1133 + $0x20] sm:$0xff]
      %v1138 = vld [vmem:[%s1133 + $0x30] sm:$0xff]
      %v1139 = vld [vmem:[%s1133 + $0x38] sm:$0xff]
      %v1140 = vld [vmem:[%s1133 + $0x48] sm:$0xff]
      %v1141 = vld [vmem:[%s1133 + $0x50] sm:$0xff]
      %v1142 = vld [vmem:[%s1133 + $0x60] sm:$0xff]
      %v1143 = vld [vmem:[%s1133 + $0x68] sm:$0xff]
      %v1144 = vld [vmem:[%s1133 + $0x78] sm:$0xff]
      %v1145 = vld [vmem:[%s1133 + $0x80] sm:$0xff]
      %v1146 = vld [vmem:[%s1133 + $0x90] sm:$0xff]
      %v1147 = vld [vmem:[%s1133 + $0x98] sm:$0xff]
      %v1148 = vld [vmem:[%s1133 + $0xa8] sm:$0xff]
      %v1149 = vld [vmem:[%s1133 + $0xb0] sm:$0xff]
      %v1150 = vld [vmem:[%s1133 + $0xc0] sm:$0xff]
      %v1151 = vld [vmem:[%s1133 + $0xc8] sm:$0xff]
      %v1152 = vld [vmem:[%s1133 + $0xd8] sm:$0xff]
      %v1153 = vld [vmem:[%s1133 + $0xe0] sm:$0xff]
      %v1154 = vld [vmem:[%s1133 + $0xf0] sm:$0xff]
      %v1155 = vld [vmem:[%s1133 + $0xf8] sm:$0xff]
      %v1156 = vld [vmem:[%s1133 + $0x108] sm:$0xff]
      %v1157 = vld [vmem:[%s1133 + $0x110] sm:$0xff]
      %v1158 = vld [vmem:[%s1133 + $0x120] sm:$0xff]
      %v1159 = vld [vmem:[%s1133 + $0x128] sm:$0xff]
      %v1160 = vld [vmem:[%s1133 + $0x138] sm:$0xff]
      %v1161 = vld [vmem:[%s1133 + $0x140] sm:$0xff]
      %v1162 = vld [vmem:[%s1133 + $0x150] sm:$0xff]
      %v1163 = vld [vmem:[%s1133 + $0x158] sm:$0xff]
      %v1164 = vld [vmem:[%s1133 + $0x168] sm:$0xff]
      %v1165 = vld [vmem:[%s1133 + $0x170] sm:$0xff]
      %v1166 = vpack.c.bf16 %v1135, %v1134
      %v1167 = vpack.c.bf16 %v1137, %v1136
      %v1168 = vpack.c.bf16 %v1139, %v1138
      %v1169 = vpack.c.bf16 %v1141, %v1140
      %v1170 = vpack.c.bf16 %v1143, %v1142
      %v1171 = vpack.c.bf16 %v1145, %v1144
      %v1172 = vpack.c.bf16 %v1147, %v1146
      %v1173 = vpack.c.bf16 %v1149, %v1148
      %v1174 = vpack.c.bf16 %v1151, %v1150
      %v1175 = vpack.c.bf16 %v1153, %v1152
      %v1176 = vpack.c.bf16 %v1155, %v1154
      %v1177 = vpack.c.bf16 %v1157, %v1156
      %v1178 = vpack.c.bf16 %v1159, %v1158
      %v1179 = vpack.c.bf16 %v1161, %v1160
      %v1180 = vpack.c.bf16 %v1163, %v1162
      %v1181 = vpack.c.bf16 %v1165, %v1164
      %s1182 = scalar_lea.vmem %s1, 192
      %v1183 = vld [vmem:[%s1182] sm:$0xf]
      %v1184 = vld [vmem:[%s1182 + $0x4] sm:$0xf]
      %v1185 = vld [vmem:[%s1182 + $0x8] sm:$0xf]
      %v1186 = vld [vmem:[%s1182 + $0xc] sm:$0xf]
      %v1187 = vld [vmem:[%s1182 + $0x10] sm:$0xf]
      %v1188 = vld [vmem:[%s1182 + $0x14] sm:$0xf]
      %v1189 = vld [vmem:[%s1182 + $0x18] sm:$0xf]
      %v1190 = vld [vmem:[%s1182 + $0x1c] sm:$0xf]
      %v1191 = vld [vmem:[%s1182 + $0x20] sm:$0xf]
      %v1192 = vld [vmem:[%s1182 + $0x24] sm:$0xf]
      %v1193 = vld [vmem:[%s1182 + $0x28] sm:$0xf]
      %v1194 = vld [vmem:[%s1182 + $0x2c] sm:$0xf]
      %v1195 = vld [vmem:[%s1182 + $0x30] sm:$0xf]
      %v1196 = vld [vmem:[%s1182 + $0x34] sm:$0xf]
      %v1197 = vld [vmem:[%s1182 + $0x38] sm:$0xf]
      %v1198 = vld [vmem:[%s1182 + $0x3c] sm:$0xf]
      %v1215 = vunpack.c.l.b16 %v1183
      %v1216 = vunpack.c.l.b16 %v1184
      %v1217 = vunpack.c.l.b16 %v1185
      %v1218 = vunpack.c.l.b16 %v1186
      %v1219 = vunpack.c.l.b16 %v1187
      %v1220 = vunpack.c.l.b16 %v1188
      %v1221 = vunpack.c.l.b16 %v1189
      %v1222 = vunpack.c.l.b16 %v1190
      %v1223 = vunpack.c.l.b16 %v1191
      %v1224 = vunpack.c.l.b16 %v1192
      %v1225 = vunpack.c.l.b16 %v1193
      %v1226 = vunpack.c.l.b16 %v1194
      %v1227 = vunpack.c.l.b16 %v1195
      %v1228 = vunpack.c.l.b16 %v1196
      %v1229 = vunpack.c.l.b16 %v1197
      %v1230 = vunpack.c.l.b16 %v1198
      %v1231 = vpack.c.b16 %v1216, %v1215
      %v1232 = vpack.c.b16 %v1218, %v1217
      %v1233 = vpack.c.b16 %v1220, %v1219
      %v1234 = vpack.c.b16 %v1222, %v1221
      %v1235 = vpack.c.b16 %v1224, %v1223
      %v1236 = vpack.c.b16 %v1226, %v1225
      %v1237 = vpack.c.b16 %v1228, %v1227
      %v1238 = vpack.c.b16 %v1230, %v1229
      %1247 = vmatprep.subr.bf16.mxu0 0
      %1248 = vmatpush1.bf16.msra.mxu0 %v1238
      %1249 = vmatprep.subr.bf16.mxu0 0
      %1250 = vmatpush1.bf16.msra.mxu0 %v1237
      %1251 = vmatprep.subr.bf16.mxu0 0
      %1252 = vmatpush1.bf16.msra.mxu0 %v1236
      %1253 = vmatprep.subr.bf16.mxu0 0
      %1254 = vmatpush1.bf16.msra.mxu0 %v1235
      %1255 = vmatprep.subr.bf16.mxu0 0
      %1256 = vmatpush1.bf16.msra.mxu0 %v1234
      %1257 = vmatprep.subr.bf16.mxu0 0
      %1258 = vmatpush1.bf16.msra.mxu0 %v1233
      %1259 = vmatprep.subr.bf16.mxu0 0
      %1260 = vmatpush1.bf16.msra.mxu0 %v1232
      %1261 = vmatprep.subr.bf16.mxu0 0
      %1262 = vmatpush1.bf16.msra.mxu0 %v1231
      %1263 = vmatprep.subr.bf16.mxu0 0
      %1264 = vmatpush2.bf16.msra.mxu0 0
      %1265 = vmatprep.subr.bf16.mxu0 0
      %1266 = vmatpush2.bf16.msra.mxu0 0
      %1267 = vmatprep.subr.bf16.mxu0 0
      %1268 = vmatpush2.bf16.msra.mxu0 0
      %1269 = vmatprep.subr.bf16.mxu0 0
      %1270 = vmatpush2.bf16.msra.mxu0 0
      %1271 = vmatprep.subr.bf16.mxu0 0
      %1272 = vmatpush2.bf16.msra.mxu0 0
      %1273 = vmatprep.subr.bf16.mxu0 0
      %1274 = vmatpush2.bf16.msra.mxu0 0
      %1275 = vmatprep.subr.bf16.mxu0 0
      %1276 = vmatpush2.bf16.msra.mxu0 0
      %1277 = vmatprep.subr.bf16.mxu0 0
      %1278 = vmatpush2.bf16.msra.mxu0 0
      %1279 = vmatprep.mubr.bf16.mxu0 0
      %1280 = vmatmul.mubr.bf16.gmra.mxu0 %v1166
      %v1281 = vpop.f32.mrf.mxu0
      %v1282 = vadd.f32 0.0, %v1281
      %v1283 = vpop.f32.mrf.mxu0
      %v1284 = vpop.f32.mrf.mxu0
      %v1285 = vadd.f32 0.0, %v1284
      %v1286 = vpop.f32.mrf.mxu0
      %1287 = vmatprep.mubr.bf16.mxu0 0
      %1288 = vmatmul.mubr.bf16.gmra.mxu0 %v1167
      %v1289 = vpop.f32.mrf.mxu0
      %v1290 = vadd.f32 0.0, %v1289
      %v1291 = vpop.f32.mrf.mxu0
      %v1292 = vpop.f32.mrf.mxu0
      %v1293 = vadd.f32 0.0, %v1292
      %v1294 = vpop.f32.mrf.mxu0
      %1295 = vmatprep.mubr.bf16.mxu0 0
      %1296 = vmatmul.mubr.bf16.gmra.mxu0 %v1168
      %v1297 = vpop.f32.mrf.mxu0
      %v1298 = vadd.f32 0.0, %v1297
      %v1299 = vpop.f32.mrf.mxu0
      %v1300 = vpop.f32.mrf.mxu0
      %v1301 = vadd.f32 0.0, %v1300
      %v1302 = vpop.f32.mrf.mxu0
      %1303 = vmatprep.mubr.bf16.mxu0 0
      %1304 = vmatmul.mubr.bf16.gmra.mxu0 %v1169
      %v1305 = vpop.f32.mrf.mxu0
      %v1306 = vadd.f32 0.0, %v1305
      %v1307 = vpop.f32.mrf.mxu0
      %v1308 = vpop.f32.mrf.mxu0
      %v1309 = vadd.f32 0.0, %v1308
      %v1310 = vpop.f32.mrf.mxu0
      %1311 = vmatprep.mubr.bf16.mxu0 0
      %1312 = vmatmul.mubr.bf16.gmra.mxu0 %v1170
      %v1313 = vpop.f32.mrf.mxu0
      %v1314 = vadd.f32 0.0, %v1313
      %v1315 = vpop.f32.mrf.mxu0
      %v1316 = vpop.f32.mrf.mxu0
      %v1317 = vadd.f32 0.0, %v1316
      %v1318 = vpop.f32.mrf.mxu0
      %1319 = vmatprep.mubr.bf16.mxu0 0
      %1320 = vmatmul.mubr.bf16.gmra.mxu0 %v1171
      %v1321 = vpop.f32.mrf.mxu0
      %v1322 = vadd.f32 0.0, %v1321
      %v1323 = vpop.f32.mrf.mxu0
      %v1324 = vpop.f32.mrf.mxu0
      %v1325 = vadd.f32 0.0, %v1324
      %v1326 = vpop.f32.mrf.mxu0
      %1327 = vmatprep.mubr.bf16.mxu0 0
      %1328 = vmatmul.mubr.bf16.gmra.mxu0 %v1172
      %v1329 = vpop.f32.mrf.mxu0
      %v1330 = vadd.f32 0.0, %v1329
      %v1331 = vpop.f32.mrf.mxu0
      %v1332 = vpop.f32.mrf.mxu0
      %v1333 = vadd.f32 0.0, %v1332
      %v1334 = vpop.f32.mrf.mxu0
      %1335 = vmatprep.mubr.bf16.mxu0 0
      %1336 = vmatmul.mubr.bf16.gmra.mxu0 %v1173
      %v1337 = vpop.f32.mrf.mxu0
      %v1338 = vadd.f32 0.0, %v1337
      %v1339 = vpop.f32.mrf.mxu0
      %v1340 = vpop.f32.mrf.mxu0
      %v1341 = vadd.f32 0.0, %v1340
      %v1342 = vpop.f32.mrf.mxu0
      %1343 = vmatprep.mubr.bf16.mxu0 0
      %1344 = vmatmul.mubr.bf16.gmra.mxu0 %v1174
      %v1345 = vpop.f32.mrf.mxu0
      %v1346 = vadd.f32 0.0, %v1345
      %v1347 = vpop.f32.mrf.mxu0
      %v1348 = vpop.f32.mrf.mxu0
      %v1349 = vadd.f32 0.0, %v1348
      %v1350 = vpop.f32.mrf.mxu0
      %1351 = vmatprep.mubr.bf16.mxu0 0
      %1352 = vmatmul.mubr.bf16.gmra.mxu0 %v1175
      %v1353 = vpop.f32.mrf.mxu0
      %v1354 = vadd.f32 0.0, %v1353
      %v1355 = vpop.f32.mrf.mxu0
      %v1356 = vpop.f32.mrf.mxu0
      %v1357 = vadd.f32 0.0, %v1356
      %v1358 = vpop.f32.mrf.mxu0
      %1359 = vmatprep.mubr.bf16.mxu0 0
      %1360 = vmatmul.mubr.bf16.gmra.mxu0 %v1176
      %v1361 = vpop.f32.mrf.mxu0
      %v1362 = vadd.f32 0.0, %v1361
      %v1363 = vpop.f32.mrf.mxu0
      %v1364 = vpop.f32.mrf.mxu0
      %v1365 = vadd.f32 0.0, %v1364
      %v1366 = vpop.f32.mrf.mxu0
      %1367 = vmatprep.mubr.bf16.mxu0 0
      %1368 = vmatmul.mubr.bf16.gmra.mxu0 %v1177
      %v1369 = vpop.f32.mrf.mxu0
      %v1370 = vadd.f32 0.0, %v1369
      %v1371 = vpop.f32.mrf.mxu0
      %v1372 = vpop.f32.mrf.mxu0
      %v1373 = vadd.f32 0.0, %v1372
      %v1374 = vpop.f32.mrf.mxu0
      %1375 = vmatprep.mubr.bf16.mxu0 0
      %1376 = vmatmul.mubr.bf16.gmra.mxu0 %v1178
      %v1377 = vpop.f32.mrf.mxu0
      %v1378 = vadd.f32 0.0, %v1377
      %v1379 = vpop.f32.mrf.mxu0
      %v1380 = vpop.f32.mrf.mxu0
      %v1381 = vadd.f32 0.0, %v1380
      %v1382 = vpop.f32.mrf.mxu0
      %1383 = vmatprep.mubr.bf16.mxu0 0
      %1384 = vmatmul.mubr.bf16.gmra.mxu0 %v1179
      %v1385 = vpop.f32.mrf.mxu0
      %v1386 = vadd.f32 0.0, %v1385
      %v1387 = vpop.f32.mrf.mxu0
      %v1388 = vpop.f32.mrf.mxu0
      %v1389 = vadd.f32 0.0, %v1388
      %v1390 = vpop.f32.mrf.mxu0
      %1391 = vmatprep.mubr.bf16.mxu0 0
      %1392 = vmatmul.mubr.bf16.gmra.mxu0 %v1180
      %v1393 = vpop.f32.mrf.mxu0
      %v1394 = vadd.f32 0.0, %v1393
      %v1395 = vpop.f32.mrf.mxu0
      %v1396 = vpop.f32.mrf.mxu0
      %v1397 = vadd.f32 0.0, %v1396
      %v1398 = vpop.f32.mrf.mxu0
      %1399 = vmatprep.mubr.bf16.mxu0 0
      %1400 = vmatmul.mubr.bf16.gmra.mxu0 %v1181
      %v1401 = vpop.f32.mrf.mxu0
      %v1402 = vadd.f32 0.0, %v1401
      %v1403 = vpop.f32.mrf.mxu0
      %v1404 = vpop.f32.mrf.mxu0
      %v1405 = vadd.f32 0.0, %v1404
      %v1406 = vpop.f32.mrf.mxu0
      %1407 = vdwg.mxu0
      %v1408 = vadd.f32 %v1101, %v1282
      %v1409 = vadd.f32 %v1102, %v1285
      %v1410 = vadd.f32 %v1103, %v1290
      %v1411 = vadd.f32 %v1104, %v1293
      %v1412 = vadd.f32 %v1105, %v1298
      %v1413 = vadd.f32 %v1106, %v1301
      %v1414 = vadd.f32 %v1107, %v1306
      %v1415 = vadd.f32 %v1108, %v1309
      %v1416 = vadd.f32 %v1109, %v1314
      %v1417 = vadd.f32 %v1110, %v1317
      %v1418 = vadd.f32 %v1111, %v1322
      %v1419 = vadd.f32 %v1112, %v1325
      %v1420 = vadd.f32 %v1113, %v1330
      %v1421 = vadd.f32 %v1114, %v1333
      %v1422 = vadd.f32 %v1115, %v1338
      %v1423 = vadd.f32 %v1116, %v1341
      %v1424 = vadd.f32 %v1117, %v1346
      %v1425 = vadd.f32 %v1118, %v1349
      %v1426 = vadd.f32 %v1119, %v1354
      %v1427 = vadd.f32 %v1120, %v1357
      %v1428 = vadd.f32 %v1121, %v1362
      %v1429 = vadd.f32 %v1122, %v1365
      %v1430 = vadd.f32 %v1123, %v1370
      %v1431 = vadd.f32 %v1124, %v1373
      %v1432 = vadd.f32 %v1125, %v1378
      %v1433 = vadd.f32 %v1126, %v1381
      %v1434 = vadd.f32 %v1127, %v1386
      %v1435 = vadd.f32 %v1128, %v1389
      %v1436 = vadd.f32 %v1129, %v1394
      %v1437 = vadd.f32 %v1130, %v1397
      %v1438 = vadd.f32 %v1131, %v1402
      %v1439 = vadd.f32 %v1132, %v1405
      %v1440 = vld [vmem:[%s1133 + $0x1] sm:$0xff]
      %v1441 = vld [vmem:[%s1133 + $0x9] sm:$0xff]
      %v1442 = vld [vmem:[%s1133 + $0x19] sm:$0xff]
      %v1443 = vld [vmem:[%s1133 + $0x21] sm:$0xff]
      %v1444 = vld [vmem:[%s1133 + $0x31] sm:$0xff]
      %v1445 = vld [vmem:[%s1133 + $0x39] sm:$0xff]
      %v1446 = vld [vmem:[%s1133 + $0x49] sm:$0xff]
      %v1447 = vld [vmem:[%s1133 + $0x51] sm:$0xff]
      %v1448 = vld [vmem:[%s1133 + $0x61] sm:$0xff]
      %v1449 = vld [vmem:[%s1133 + $0x69] sm:$0xff]
      %v1450 = vld [vmem:[%s1133 + $0x79] sm:$0xff]
      %v1451 = vld [vmem:[%s1133 + $0x81] sm:$0xff]
      %v1452 = vld [vmem:[%s1133 + $0x91] sm:$0xff]
      %v1453 = vld [vmem:[%s1133 + $0x99] sm:$0xff]
      %v1454 = vld [vmem:[%s1133 + $0xa9] sm:$0xff]
      %v1455 = vld [vmem:[%s1133 + $0xb1] sm:$0xff]
      %v1456 = vld [vmem:[%s1133 + $0xc1] sm:$0xff]
      %v1457 = vld [vmem:[%s1133 + $0xc9] sm:$0xff]
      %v1458 = vld [vmem:[%s1133 + $0xd9] sm:$0xff]
      %v1459 = vld [vmem:[%s1133 + $0xe1] sm:$0xff]
      %v1460 = vld [vmem:[%s1133 + $0xf1] sm:$0xff]
      %v1461 = vld [vmem:[%s1133 + $0xf9] sm:$0xff]
      %v1462 = vld [vmem:[%s1133 + $0x109] sm:$0xff]
      %v1463 = vld [vmem:[%s1133 + $0x111] sm:$0xff]
      %v1464 = vld [vmem:[%s1133 + $0x121] sm:$0xff]
      %v1465 = vld [vmem:[%s1133 + $0x129] sm:$0xff]
      %v1466 = vld [vmem:[%s1133 + $0x139] sm:$0xff]
      %v1467 = vld [vmem:[%s1133 + $0x141] sm:$0xff]
      %v1468 = vld [vmem:[%s1133 + $0x151] sm:$0xff]
      %v1469 = vld [vmem:[%s1133 + $0x159] sm:$0xff]
      %v1470 = vld [vmem:[%s1133 + $0x169] sm:$0xff]
      %v1471 = vld [vmem:[%s1133 + $0x171] sm:$0xff]
      %v1472 = vpack.c.bf16 %v1441, %v1440
      %v1473 = vpack.c.bf16 %v1443, %v1442
      %v1474 = vpack.c.bf16 %v1445, %v1444
      %v1475 = vpack.c.bf16 %v1447, %v1446
      %v1476 = vpack.c.bf16 %v1449, %v1448
      %v1477 = vpack.c.bf16 %v1451, %v1450
      %v1478 = vpack.c.bf16 %v1453, %v1452
      %v1479 = vpack.c.bf16 %v1455, %v1454
      %v1480 = vpack.c.bf16 %v1457, %v1456
      %v1481 = vpack.c.bf16 %v1459, %v1458
      %v1482 = vpack.c.bf16 %v1461, %v1460
      %v1483 = vpack.c.bf16 %v1463, %v1462
      %v1484 = vpack.c.bf16 %v1465, %v1464
      %v1485 = vpack.c.bf16 %v1467, %v1466
      %v1486 = vpack.c.bf16 %v1469, %v1468
      %v1487 = vpack.c.bf16 %v1471, %v1470
      %s1488 = scalar_lea.vmem %s1, 256
      %v1489 = vld [vmem:[%s1488] sm:$0xf]
      %v1490 = vld [vmem:[%s1488 + $0x4] sm:$0xf]
      %v1491 = vld [vmem:[%s1488 + $0x8] sm:$0xf]
      %v1492 = vld [vmem:[%s1488 + $0xc] sm:$0xf]
      %v1493 = vld [vmem:[%s1488 + $0x10] sm:$0xf]
      %v1494 = vld [vmem:[%s1488 + $0x14] sm:$0xf]
      %v1495 = vld [vmem:[%s1488 + $0x18] sm:$0xf]
      %v1496 = vld [vmem:[%s1488 + $0x1c] sm:$0xf]
      %v1497 = vld [vmem:[%s1488 + $0x20] sm:$0xf]
      %v1498 = vld [vmem:[%s1488 + $0x24] sm:$0xf]
      %v1499 = vld [vmem:[%s1488 + $0x28] sm:$0xf]
      %v1500 = vld [vmem:[%s1488 + $0x2c] sm:$0xf]
      %v1501 = vld [vmem:[%s1488 + $0x30] sm:$0xf]
      %v1502 = vld [vmem:[%s1488 + $0x34] sm:$0xf]
      %v1503 = vld [vmem:[%s1488 + $0x38] sm:$0xf]
      %v1504 = vld [vmem:[%s1488 + $0x3c] sm:$0xf]
      %v1521 = vunpack.c.l.b16 %v1489
      %v1522 = vunpack.c.l.b16 %v1490
      %v1523 = vunpack.c.l.b16 %v1491
      %v1524 = vunpack.c.l.b16 %v1492
      %v1525 = vunpack.c.l.b16 %v1493
      %v1526 = vunpack.c.l.b16 %v1494
      %v1527 = vunpack.c.l.b16 %v1495
      %v1528 = vunpack.c.l.b16 %v1496
      %v1529 = vunpack.c.l.b16 %v1497
      %v1530 = vunpack.c.l.b16 %v1498
      %v1531 = vunpack.c.l.b16 %v1499
      %v1532 = vunpack.c.l.b16 %v1500
      %v1533 = vunpack.c.l.b16 %v1501
      %v1534 = vunpack.c.l.b16 %v1502
      %v1535 = vunpack.c.l.b16 %v1503
      %v1536 = vunpack.c.l.b16 %v1504
      %v1537 = vpack.c.b16 %v1522, %v1521
      %v1538 = vpack.c.b16 %v1524, %v1523
      %v1539 = vpack.c.b16 %v1526, %v1525
      %v1540 = vpack.c.b16 %v1528, %v1527
      %v1541 = vpack.c.b16 %v1530, %v1529
      %v1542 = vpack.c.b16 %v1532, %v1531
      %v1543 = vpack.c.b16 %v1534, %v1533
      %v1544 = vpack.c.b16 %v1536, %v1535
      %1553 = vmatprep.subr.bf16.mxu0 0
      %1554 = vmatpush1.bf16.msra.mxu0 %v1544
      %1555 = vmatprep.subr.bf16.mxu0 0
      %1556 = vmatpush1.bf16.msra.mxu0 %v1543
      %1557 = vmatprep.subr.bf16.mxu0 0
      %1558 = vmatpush1.bf16.msra.mxu0 %v1542
      %1559 = vmatprep.subr.bf16.mxu0 0
      %1560 = vmatpush1.bf16.msra.mxu0 %v1541
      %1561 = vmatprep.subr.bf16.mxu0 0
      %1562 = vmatpush1.bf16.msra.mxu0 %v1540
      %1563 = vmatprep.subr.bf16.mxu0 0
      %1564 = vmatpush1.bf16.msra.mxu0 %v1539
      %1565 = vmatprep.subr.bf16.mxu0 0
      %1566 = vmatpush1.bf16.msra.mxu0 %v1538
      %1567 = vmatprep.subr.bf16.mxu0 0
      %1568 = vmatpush1.bf16.msra.mxu0 %v1537
      %1569 = vmatprep.subr.bf16.mxu0 0
      %1570 = vmatpush2.bf16.msra.mxu0 0
      %1571 = vmatprep.subr.bf16.mxu0 0
      %1572 = vmatpush2.bf16.msra.mxu0 0
      %1573 = vmatprep.subr.bf16.mxu0 0
      %1574 = vmatpush2.bf16.msra.mxu0 0
      %1575 = vmatprep.subr.bf16.mxu0 0
      %1576 = vmatpush2.bf16.msra.mxu0 0
      %1577 = vmatprep.subr.bf16.mxu0 0
      %1578 = vmatpush2.bf16.msra.mxu0 0
      %1579 = vmatprep.subr.bf16.mxu0 0
      %1580 = vmatpush2.bf16.msra.mxu0 0
      %1581 = vmatprep.subr.bf16.mxu0 0
      %1582 = vmatpush2.bf16.msra.mxu0 0
      %1583 = vmatprep.subr.bf16.mxu0 0
      %1584 = vmatpush2.bf16.msra.mxu0 0
      %1585 = vmatprep.mubr.bf16.mxu0 0
      %1586 = vmatmul.mubr.bf16.gmra.mxu0 %v1472
      %v1587 = vpop.f32.mrf.mxu0
      %v1588 = vadd.f32 0.0, %v1587
      %v1589 = vpop.f32.mrf.mxu0
      %v1590 = vpop.f32.mrf.mxu0
      %v1591 = vadd.f32 0.0, %v1590
      %v1592 = vpop.f32.mrf.mxu0
      %1593 = vmatprep.mubr.bf16.mxu0 0
      %1594 = vmatmul.mubr.bf16.gmra.mxu0 %v1473
      %v1595 = vpop.f32.mrf.mxu0
      %v1596 = vadd.f32 0.0, %v1595
      %v1597 = vpop.f32.mrf.mxu0
      %v1598 = vpop.f32.mrf.mxu0
      %v1599 = vadd.f32 0.0, %v1598
      %v1600 = vpop.f32.mrf.mxu0
      %1601 = vmatprep.mubr.bf16.mxu0 0
      %1602 = vmatmul.mubr.bf16.gmra.mxu0 %v1474
      %v1603 = vpop.f32.mrf.mxu0
      %v1604 = vadd.f32 0.0, %v1603
      %v1605 = vpop.f32.mrf.mxu0
      %v1606 = vpop.f32.mrf.mxu0
      %v1607 = vadd.f32 0.0, %v1606
      %v1608 = vpop.f32.mrf.mxu0
      %1609 = vmatprep.mubr.bf16.mxu0 0
      %1610 = vmatmul.mubr.bf16.gmra.mxu0 %v1475
      %v1611 = vpop.f32.mrf.mxu0
      %v1612 = vadd.f32 0.0, %v1611
      %v1613 = vpop.f32.mrf.mxu0
      %v1614 = vpop.f32.mrf.mxu0
      %v1615 = vadd.f32 0.0, %v1614
      %v1616 = vpop.f32.mrf.mxu0
      %1617 = vmatprep.mubr.bf16.mxu0 0
      %1618 = vmatmul.mubr.bf16.gmra.mxu0 %v1476
      %v1619 = vpop.f32.mrf.mxu0
      %v1620 = vadd.f32 0.0, %v1619
      %v1621 = vpop.f32.mrf.mxu0
      %v1622 = vpop.f32.mrf.mxu0
      %v1623 = vadd.f32 0.0, %v1622
      %v1624 = vpop.f32.mrf.mxu0
      %1625 = vmatprep.mubr.bf16.mxu0 0
      %1626 = vmatmul.mubr.bf16.gmra.mxu0 %v1477
      %v1627 = vpop.f32.mrf.mxu0
      %v1628 = vadd.f32 0.0, %v1627
      %v1629 = vpop.f32.mrf.mxu0
      %v1630 = vpop.f32.mrf.mxu0
      %v1631 = vadd.f32 0.0, %v1630
      %v1632 = vpop.f32.mrf.mxu0
      %1633 = vmatprep.mubr.bf16.mxu0 0
      %1634 = vmatmul.mubr.bf16.gmra.mxu0 %v1478
      %v1635 = vpop.f32.mrf.mxu0
      %v1636 = vadd.f32 0.0, %v1635
      %v1637 = vpop.f32.mrf.mxu0
      %v1638 = vpop.f32.mrf.mxu0
      %v1639 = vadd.f32 0.0, %v1638
      %v1640 = vpop.f32.mrf.mxu0
      %1641 = vmatprep.mubr.bf16.mxu0 0
      %1642 = vmatmul.mubr.bf16.gmra.mxu0 %v1479
      %v1643 = vpop.f32.mrf.mxu0
      %v1644 = vadd.f32 0.0, %v1643
      %v1645 = vpop.f32.mrf.mxu0
      %v1646 = vpop.f32.mrf.mxu0
      %v1647 = vadd.f32 0.0, %v1646
      %v1648 = vpop.f32.mrf.mxu0
      %1649 = vmatprep.mubr.bf16.mxu0 0
      %1650 = vmatmul.mubr.bf16.gmra.mxu0 %v1480
      %v1651 = vpop.f32.mrf.mxu0
      %v1652 = vadd.f32 0.0, %v1651
      %v1653 = vpop.f32.mrf.mxu0
      %v1654 = vpop.f32.mrf.mxu0
      %v1655 = vadd.f32 0.0, %v1654
      %v1656 = vpop.f32.mrf.mxu0
      %1657 = vmatprep.mubr.bf16.mxu0 0
      %1658 = vmatmul.mubr.bf16.gmra.mxu0 %v1481
      %v1659 = vpop.f32.mrf.mxu0
      %v1660 = vadd.f32 0.0, %v1659
      %v1661 = vpop.f32.mrf.mxu0
      %v1662 = vpop.f32.mrf.mxu0
      %v1663 = vadd.f32 0.0, %v1662
      %v1664 = vpop.f32.mrf.mxu0
      %1665 = vmatprep.mubr.bf16.mxu0 0
      %1666 = vmatmul.mubr.bf16.gmra.mxu0 %v1482
      %v1667 = vpop.f32.mrf.mxu0
      %v1668 = vadd.f32 0.0, %v1667
      %v1669 = vpop.f32.mrf.mxu0
      %v1670 = vpop.f32.mrf.mxu0
      %v1671 = vadd.f32 0.0, %v1670
      %v1672 = vpop.f32.mrf.mxu0
      %1673 = vmatprep.mubr.bf16.mxu0 0
      %1674 = vmatmul.mubr.bf16.gmra.mxu0 %v1483
      %v1675 = vpop.f32.mrf.mxu0
      %v1676 = vadd.f32 0.0, %v1675
      %v1677 = vpop.f32.mrf.mxu0
      %v1678 = vpop.f32.mrf.mxu0
      %v1679 = vadd.f32 0.0, %v1678
      %v1680 = vpop.f32.mrf.mxu0
      %1681 = vmatprep.mubr.bf16.mxu0 0
      %1682 = vmatmul.mubr.bf16.gmra.mxu0 %v1484
      %v1683 = vpop.f32.mrf.mxu0
      %v1684 = vadd.f32 0.0, %v1683
      %v1685 = vpop.f32.mrf.mxu0
      %v1686 = vpop.f32.mrf.mxu0
      %v1687 = vadd.f32 0.0, %v1686
      %v1688 = vpop.f32.mrf.mxu0
      %1689 = vmatprep.mubr.bf16.mxu0 0
      %1690 = vmatmul.mubr.bf16.gmra.mxu0 %v1485
      %v1691 = vpop.f32.mrf.mxu0
      %v1692 = vadd.f32 0.0, %v1691
      %v1693 = vpop.f32.mrf.mxu0
      %v1694 = vpop.f32.mrf.mxu0
      %v1695 = vadd.f32 0.0, %v1694
      %v1696 = vpop.f32.mrf.mxu0
      %1697 = vmatprep.mubr.bf16.mxu0 0
      %1698 = vmatmul.mubr.bf16.gmra.mxu0 %v1486
      %v1699 = vpop.f32.mrf.mxu0
      %v1700 = vadd.f32 0.0, %v1699
      %v1701 = vpop.f32.mrf.mxu0
      %v1702 = vpop.f32.mrf.mxu0
      %v1703 = vadd.f32 0.0, %v1702
      %v1704 = vpop.f32.mrf.mxu0
      %1705 = vmatprep.mubr.bf16.mxu0 0
      %1706 = vmatmul.mubr.bf16.gmra.mxu0 %v1487
      %v1707 = vpop.f32.mrf.mxu0
      %v1708 = vadd.f32 0.0, %v1707
      %v1709 = vpop.f32.mrf.mxu0
      %v1710 = vpop.f32.mrf.mxu0
      %v1711 = vadd.f32 0.0, %v1710
      %v1712 = vpop.f32.mrf.mxu0
      %1713 = vdwg.mxu0
      %v1714 = vadd.f32 %v1408, %v1588
      %v1715 = vadd.f32 %v1409, %v1591
      %v1716 = vadd.f32 %v1410, %v1596
      %v1717 = vadd.f32 %v1411, %v1599
      %v1718 = vadd.f32 %v1412, %v1604
      %v1719 = vadd.f32 %v1413, %v1607
      %v1720 = vadd.f32 %v1414, %v1612
      %v1721 = vadd.f32 %v1415, %v1615
      %v1722 = vadd.f32 %v1416, %v1620
      %v1723 = vadd.f32 %v1417, %v1623
      %v1724 = vadd.f32 %v1418, %v1628
      %v1725 = vadd.f32 %v1419, %v1631
      %v1726 = vadd.f32 %v1420, %v1636
      %v1727 = vadd.f32 %v1421, %v1639
      %v1728 = vadd.f32 %v1422, %v1644
      %v1729 = vadd.f32 %v1423, %v1647
      %v1730 = vadd.f32 %v1424, %v1652
      %v1731 = vadd.f32 %v1425, %v1655
      %v1732 = vadd.f32 %v1426, %v1660
      %v1733 = vadd.f32 %v1427, %v1663
      %v1734 = vadd.f32 %v1428, %v1668
      %v1735 = vadd.f32 %v1429, %v1671
      %v1736 = vadd.f32 %v1430, %v1676
      %v1737 = vadd.f32 %v1431, %v1679
      %v1738 = vadd.f32 %v1432, %v1684
      %v1739 = vadd.f32 %v1433, %v1687
      %v1740 = vadd.f32 %v1434, %v1692
      %v1741 = vadd.f32 %v1435, %v1695
      %v1742 = vadd.f32 %v1436, %v1700
      %v1743 = vadd.f32 %v1437, %v1703
      %v1744 = vadd.f32 %v1438, %v1708
      %v1745 = vadd.f32 %v1439, %v1711
      %v1746 = vld [vmem:[%s1133 + $0x2] sm:$0xff]
      %v1747 = vld [vmem:[%s1133 + $0xa] sm:$0xff]
      %v1748 = vld [vmem:[%s1133 + $0x1a] sm:$0xff]
      %v1749 = vld [vmem:[%s1133 + $0x22] sm:$0xff]
      %v1750 = vld [vmem:[%s1133 + $0x32] sm:$0xff]
      %v1751 = vld [vmem:[%s1133 + $0x3a] sm:$0xff]
      %v1752 = vld [vmem:[%s1133 + $0x4a] sm:$0xff]
      %v1753 = vld [vmem:[%s1133 + $0x52] sm:$0xff]
      %v1754 = vld [vmem:[%s1133 + $0x62] sm:$0xff]
      %v1755 = vld [vmem:[%s1133 + $0x6a] sm:$0xff]
      %v1756 = vld [vmem:[%s1133 + $0x7a] sm:$0xff]
      %v1757 = vld [vmem:[%s1133 + $0x82] sm:$0xff]
      %v1758 = vld [vmem:[%s1133 + $0x92] sm:$0xff]
      %v1759 = vld [vmem:[%s1133 + $0x9a] sm:$0xff]
      %v1760 = vld [vmem:[%s1133 + $0xaa] sm:$0xff]
      %v1761 = vld [vmem:[%s1133 + $0xb2] sm:$0xff]
      %v1762 = vld [vmem:[%s1133 + $0xc2] sm:$0xff]
      %v1763 = vld [vmem:[%s1133 + $0xca] sm:$0xff]
      %v1764 = vld [vmem:[%s1133 + $0xda] sm:$0xff]
      %v1765 = vld [vmem:[%s1133 + $0xe2] sm:$0xff]
      %v1766 = vld [vmem:[%s1133 + $0xf2] sm:$0xff]
      %v1767 = vld [vmem:[%s1133 + $0xfa] sm:$0xff]
      %v1768 = vld [vmem:[%s1133 + $0x10a] sm:$0xff]
      %v1769 = vld [vmem:[%s1133 + $0x112] sm:$0xff]
      %v1770 = vld [vmem:[%s1133 + $0x122] sm:$0xff]
      %v1771 = vld [vmem:[%s1133 + $0x12a] sm:$0xff]
      %v1772 = vld [vmem:[%s1133 + $0x13a] sm:$0xff]
      %v1773 = vld [vmem:[%s1133 + $0x142] sm:$0xff]
      %v1774 = vld [vmem:[%s1133 + $0x152] sm:$0xff]
      %v1775 = vld [vmem:[%s1133 + $0x15a] sm:$0xff]
      %v1776 = vld [vmem:[%s1133 + $0x16a] sm:$0xff]
      %v1777 = vld [vmem:[%s1133 + $0x172] sm:$0xff]
      %v1778 = vpack.c.bf16 %v1747, %v1746
      %v1779 = vpack.c.bf16 %v1749, %v1748
      %v1780 = vpack.c.bf16 %v1751, %v1750
      %v1781 = vpack.c.bf16 %v1753, %v1752
      %v1782 = vpack.c.bf16 %v1755, %v1754
      %v1783 = vpack.c.bf16 %v1757, %v1756
      %v1784 = vpack.c.bf16 %v1759, %v1758
      %v1785 = vpack.c.bf16 %v1761, %v1760
      %v1786 = vpack.c.bf16 %v1763, %v1762
      %v1787 = vpack.c.bf16 %v1765, %v1764
      %v1788 = vpack.c.bf16 %v1767, %v1766
      %v1789 = vpack.c.bf16 %v1769, %v1768
      %v1790 = vpack.c.bf16 %v1771, %v1770
      %v1791 = vpack.c.bf16 %v1773, %v1772
      %v1792 = vpack.c.bf16 %v1775, %v1774
      %v1793 = vpack.c.bf16 %v1777, %v1776
      %s1794 = scalar_lea.vmem %s1, 320
      %v1795 = vld [vmem:[%s1794] sm:$0xf]
      %v1796 = vld [vmem:[%s1794 + $0x4] sm:$0xf]
      %v1797 = vld [vmem:[%s1794 + $0x8] sm:$0xf]
      %v1798 = vld [vmem:[%s1794 + $0xc] sm:$0xf]
      %v1799 = vld [vmem:[%s1794 + $0x10] sm:$0xf]
      %v1800 = vld [vmem:[%s1794 + $0x14] sm:$0xf]
      %v1801 = vld [vmem:[%s1794 + $0x18] sm:$0xf]
      %v1802 = vld [vmem:[%s1794 + $0x1c] sm:$0xf]
      %v1803 = vld [vmem:[%s1794 + $0x20] sm:$0xf]
      %v1804 = vld [vmem:[%s1794 + $0x24] sm:$0xf]
      %v1805 = vld [vmem:[%s1794 + $0x28] sm:$0xf]
      %v1806 = vld [vmem:[%s1794 + $0x2c] sm:$0xf]
      %v1807 = vld [vmem:[%s1794 + $0x30] sm:$0xf]
      %v1808 = vld [vmem:[%s1794 + $0x34] sm:$0xf]
      %v1809 = vld [vmem:[%s1794 + $0x38] sm:$0xf]
      %v1810 = vld [vmem:[%s1794 + $0x3c] sm:$0xf]
      %v1827 = vunpack.c.l.b16 %v1795
      %v1828 = vunpack.c.l.b16 %v1796
      %v1829 = vunpack.c.l.b16 %v1797
      %v1830 = vunpack.c.l.b16 %v1798
      %v1831 = vunpack.c.l.b16 %v1799
      %v1832 = vunpack.c.l.b16 %v1800
      %v1833 = vunpack.c.l.b16 %v1801
      %v1834 = vunpack.c.l.b16 %v1802
      %v1835 = vunpack.c.l.b16 %v1803
      %v1836 = vunpack.c.l.b16 %v1804
      %v1837 = vunpack.c.l.b16 %v1805
      %v1838 = vunpack.c.l.b16 %v1806
      %v1839 = vunpack.c.l.b16 %v1807
      %v1840 = vunpack.c.l.b16 %v1808
      %v1841 = vunpack.c.l.b16 %v1809
      %v1842 = vunpack.c.l.b16 %v1810
      %v1843 = vpack.c.b16 %v1828, %v1827
      %v1844 = vpack.c.b16 %v1830, %v1829
      %v1845 = vpack.c.b16 %v1832, %v1831
      %v1846 = vpack.c.b16 %v1834, %v1833
      %v1847 = vpack.c.b16 %v1836, %v1835
      %v1848 = vpack.c.b16 %v1838, %v1837
      %v1849 = vpack.c.b16 %v1840, %v1839
      %v1850 = vpack.c.b16 %v1842, %v1841
      %1859 = vmatprep.subr.bf16.mxu0 0
      %1860 = vmatpush1.bf16.msra.mxu0 %v1850
      %1861 = vmatprep.subr.bf16.mxu0 0
      %1862 = vmatpush1.bf16.msra.mxu0 %v1849
      %1863 = vmatprep.subr.bf16.mxu0 0
      %1864 = vmatpush1.bf16.msra.mxu0 %v1848
      %1865 = vmatprep.subr.bf16.mxu0 0
      %1866 = vmatpush1.bf16.msra.mxu0 %v1847
      %1867 = vmatprep.subr.bf16.mxu0 0
      %1868 = vmatpush1.bf16.msra.mxu0 %v1846
      %1869 = vmatprep.subr.bf16.mxu0 0
      %1870 = vmatpush1.bf16.msra.mxu0 %v1845
      %1871 = vmatprep.subr.bf16.mxu0 0
      %1872 = vmatpush1.bf16.msra.mxu0 %v1844
      %1873 = vmatprep.subr.bf16.mxu0 0
      %1874 = vmatpush1.bf16.msra.mxu0 %v1843
      %1875 = vmatprep.subr.bf16.mxu0 0
      %1876 = vmatpush2.bf16.msra.mxu0 0
      %1877 = vmatprep.subr.bf16.mxu0 0
      %1878 = vmatpush2.bf16.msra.mxu0 0
      %1879 = vmatprep.subr.bf16.mxu0 0
      %1880 = vmatpush2.bf16.msra.mxu0 0
      %1881 = vmatprep.subr.bf16.mxu0 0
      %1882 = vmatpush2.bf16.msra.mxu0 0
      %1883 = vmatprep.subr.bf16.mxu0 0
      %1884 = vmatpush2.bf16.msra.mxu0 0
      %1885 = vmatprep.subr.bf16.mxu0 0
      %1886 = vmatpush2.bf16.msra.mxu0 0
      %1887 = vmatprep.subr.bf16.mxu0 0
      %1888 = vmatpush2.bf16.msra.mxu0 0
      %1889 = vmatprep.subr.bf16.mxu0 0
      %1890 = vmatpush2.bf16.msra.mxu0 0
      %1891 = vmatprep.mubr.bf16.mxu0 0
      %1892 = vmatmul.mubr.bf16.gmra.mxu0 %v1778
      %v1893 = vpop.f32.mrf.mxu0
      %v1894 = vadd.f32 0.0, %v1893
      %v1895 = vpop.f32.mrf.mxu0
      %v1896 = vpop.f32.mrf.mxu0
      %v1897 = vadd.f32 0.0, %v1896
      %v1898 = vpop.f32.mrf.mxu0
      %1899 = vmatprep.mubr.bf16.mxu0 0
      %1900 = vmatmul.mubr.bf16.gmra.mxu0 %v1779
      %v1901 = vpop.f32.mrf.mxu0
      %v1902 = vadd.f32 0.0, %v1901
      %v1903 = vpop.f32.mrf.mxu0
      %v1904 = vpop.f32.mrf.mxu0
      %v1905 = vadd.f32 0.0, %v1904
      %v1906 = vpop.f32.mrf.mxu0
      %1907 = vmatprep.mubr.bf16.mxu0 0
      %1908 = vmatmul.mubr.bf16.gmra.mxu0 %v1780
      %v1909 = vpop.f32.mrf.mxu0
      %v1910 = vadd.f32 0.0, %v1909
      %v1911 = vpop.f32.mrf.mxu0
      %v1912 = vpop.f32.mrf.mxu0
      %v1913 = vadd.f32 0.0, %v1912
      %v1914 = vpop.f32.mrf.mxu0
      %1915 = vmatprep.mubr.bf16.mxu0 0
      %1916 = vmatmul.mubr.bf16.gmra.mxu0 %v1781
      %v1917 = vpop.f32.mrf.mxu0
      %v1918 = vadd.f32 0.0, %v1917
      %v1919 = vpop.f32.mrf.mxu0
      %v1920 = vpop.f32.mrf.mxu0
      %v1921 = vadd.f32 0.0, %v1920
      %v1922 = vpop.f32.mrf.mxu0
      %1923 = vmatprep.mubr.bf16.mxu0 0
      %1924 = vmatmul.mubr.bf16.gmra.mxu0 %v1782
      %v1925 = vpop.f32.mrf.mxu0
      %v1926 = vadd.f32 0.0, %v1925
      %v1927 = vpop.f32.mrf.mxu0
      %v1928 = vpop.f32.mrf.mxu0
      %v1929 = vadd.f32 0.0, %v1928
      %v1930 = vpop.f32.mrf.mxu0
      %1931 = vmatprep.mubr.bf16.mxu0 0
      %1932 = vmatmul.mubr.bf16.gmra.mxu0 %v1783
      %v1933 = vpop.f32.mrf.mxu0
      %v1934 = vadd.f32 0.0, %v1933
      %v1935 = vpop.f32.mrf.mxu0
      %v1936 = vpop.f32.mrf.mxu0
      %v1937 = vadd.f32 0.0, %v1936
      %v1938 = vpop.f32.mrf.mxu0
      %1939 = vmatprep.mubr.bf16.mxu0 0
      %1940 = vmatmul.mubr.bf16.gmra.mxu0 %v1784
      %v1941 = vpop.f32.mrf.mxu0
      %v1942 = vadd.f32 0.0, %v1941
      %v1943 = vpop.f32.mrf.mxu0
      %v1944 = vpop.f32.mrf.mxu0
      %v1945 = vadd.f32 0.0, %v1944
      %v1946 = vpop.f32.mrf.mxu0
      %1947 = vmatprep.mubr.bf16.mxu0 0
      %1948 = vmatmul.mubr.bf16.gmra.mxu0 %v1785
      %v1949 = vpop.f32.mrf.mxu0
      %v1950 = vadd.f32 0.0, %v1949
      %v1951 = vpop.f32.mrf.mxu0
      %v1952 = vpop.f32.mrf.mxu0
      %v1953 = vadd.f32 0.0, %v1952
      %v1954 = vpop.f32.mrf.mxu0
      %1955 = vmatprep.mubr.bf16.mxu0 0
      %1956 = vmatmul.mubr.bf16.gmra.mxu0 %v1786
      %v1957 = vpop.f32.mrf.mxu0
      %v1958 = vadd.f32 0.0, %v1957
      %v1959 = vpop.f32.mrf.mxu0
      %v1960 = vpop.f32.mrf.mxu0
      %v1961 = vadd.f32 0.0, %v1960
      %v1962 = vpop.f32.mrf.mxu0
      %1963 = vmatprep.mubr.bf16.mxu0 0
      %1964 = vmatmul.mubr.bf16.gmra.mxu0 %v1787
      %v1965 = vpop.f32.mrf.mxu0
      %v1966 = vadd.f32 0.0, %v1965
      %v1967 = vpop.f32.mrf.mxu0
      %v1968 = vpop.f32.mrf.mxu0
      %v1969 = vadd.f32 0.0, %v1968
      %v1970 = vpop.f32.mrf.mxu0
      %1971 = vmatprep.mubr.bf16.mxu0 0
      %1972 = vmatmul.mubr.bf16.gmra.mxu0 %v1788
      %v1973 = vpop.f32.mrf.mxu0
      %v1974 = vadd.f32 0.0, %v1973
      %v1975 = vpop.f32.mrf.mxu0
      %v1976 = vpop.f32.mrf.mxu0
      %v1977 = vadd.f32 0.0, %v1976
      %v1978 = vpop.f32.mrf.mxu0
      %1979 = vmatprep.mubr.bf16.mxu0 0
      %1980 = vmatmul.mubr.bf16.gmra.mxu0 %v1789
      %v1981 = vpop.f32.mrf.mxu0
      %v1982 = vadd.f32 0.0, %v1981
      %v1983 = vpop.f32.mrf.mxu0
      %v1984 = vpop.f32.mrf.mxu0
      %v1985 = vadd.f32 0.0, %v1984
      %v1986 = vpop.f32.mrf.mxu0
      %1987 = vmatprep.mubr.bf16.mxu0 0
      %1988 = vmatmul.mubr.bf16.gmra.mxu0 %v1790
      %v1989 = vpop.f32.mrf.mxu0
      %v1990 = vadd.f32 0.0, %v1989
      %v1991 = vpop.f32.mrf.mxu0
      %v1992 = vpop.f32.mrf.mxu0
      %v1993 = vadd.f32 0.0, %v1992
      %v1994 = vpop.f32.mrf.mxu0
      %1995 = vmatprep.mubr.bf16.mxu0 0
      %1996 = vmatmul.mubr.bf16.gmra.mxu0 %v1791
      %v1997 = vpop.f32.mrf.mxu0
      %v1998 = vadd.f32 0.0, %v1997
      %v1999 = vpop.f32.mrf.mxu0
      %v2000 = vpop.f32.mrf.mxu0
      %v2001 = vadd.f32 0.0, %v2000
      %v2002 = vpop.f32.mrf.mxu0
      %2003 = vmatprep.mubr.bf16.mxu0 0
      %2004 = vmatmul.mubr.bf16.gmra.mxu0 %v1792
      %v2005 = vpop.f32.mrf.mxu0
      %v2006 = vadd.f32 0.0, %v2005
      %v2007 = vpop.f32.mrf.mxu0
      %v2008 = vpop.f32.mrf.mxu0
      %v2009 = vadd.f32 0.0, %v2008
      %v2010 = vpop.f32.mrf.mxu0
      %2011 = vmatprep.mubr.bf16.mxu0 0
      %2012 = vmatmul.mubr.bf16.gmra.mxu0 %v1793
      %v2013 = vpop.f32.mrf.mxu0
      %v2014 = vadd.f32 0.0, %v2013
      %v2015 = vpop.f32.mrf.mxu0
      %v2016 = vpop.f32.mrf.mxu0
      %v2017 = vadd.f32 0.0, %v2016
      %v2018 = vpop.f32.mrf.mxu0
      %2019 = vdwg.mxu0
      %v2020 = vadd.f32 %v1714, %v1894
      %v2021 = vadd.f32 %v1715, %v1897
      %v2022 = vadd.f32 %v1716, %v1902
      %v2023 = vadd.f32 %v1717, %v1905
      %v2024 = vadd.f32 %v1718, %v1910
      %v2025 = vadd.f32 %v1719, %v1913
      %v2026 = vadd.f32 %v1720, %v1918
      %v2027 = vadd.f32 %v1721, %v1921
      %v2028 = vadd.f32 %v1722, %v1926
      %v2029 = vadd.f32 %v1723, %v1929
      %v2030 = vadd.f32 %v1724, %v1934
      %v2031 = vadd.f32 %v1725, %v1937
      %v2032 = vadd.f32 %v1726, %v1942
      %v2033 = vadd.f32 %v1727, %v1945
      %v2034 = vadd.f32 %v1728, %v1950
      %v2035 = vadd.f32 %v1729, %v1953
      %v2036 = vadd.f32 %v1730, %v1958
      %v2037 = vadd.f32 %v1731, %v1961
      %v2038 = vadd.f32 %v1732, %v1966
      %v2039 = vadd.f32 %v1733, %v1969
      %v2040 = vadd.f32 %v1734, %v1974
      %v2041 = vadd.f32 %v1735, %v1977
      %v2042 = vadd.f32 %v1736, %v1982
      %v2043 = vadd.f32 %v1737, %v1985
      %v2044 = vadd.f32 %v1738, %v1990
      %v2045 = vadd.f32 %v1739, %v1993
      %v2046 = vadd.f32 %v1740, %v1998
      %v2047 = vadd.f32 %v1741, %v2001
      %v2048 = vadd.f32 %v1742, %v2006
      %v2049 = vadd.f32 %v1743, %v2009
      %v2050 = vadd.f32 %v1744, %v2014
      %v2051 = vadd.f32 %v1745, %v2017
      %s2052 = scalar_lea.vmem %s273, 48
      %v2053 = vld [vmem:[%s2052] sm:$0xff]
      %v2054 = vld [vmem:[%s2052 + $0x8] sm:$0xff]
      %v2055 = vld [vmem:[%s2052 + $0x18] sm:$0xff]
      %v2056 = vld [vmem:[%s2052 + $0x20] sm:$0xff]
      %v2057 = vld [vmem:[%s2052 + $0x30] sm:$0xff]
      %v2058 = vld [vmem:[%s2052 + $0x38] sm:$0xff]
      %v2059 = vld [vmem:[%s2052 + $0x48] sm:$0xff]
      %v2060 = vld [vmem:[%s2052 + $0x50] sm:$0xff]
      %v2061 = vld [vmem:[%s2052 + $0x60] sm:$0xff]
      %v2062 = vld [vmem:[%s2052 + $0x68] sm:$0xff]
      %v2063 = vld [vmem:[%s2052 + $0x78] sm:$0xff]
      %v2064 = vld [vmem:[%s2052 + $0x80] sm:$0xff]
      %v2065 = vld [vmem:[%s2052 + $0x90] sm:$0xff]
      %v2066 = vld [vmem:[%s2052 + $0x98] sm:$0xff]
      %v2067 = vld [vmem:[%s2052 + $0xa8] sm:$0xff]
      %v2068 = vld [vmem:[%s2052 + $0xb0] sm:$0xff]
      %v2069 = vld [vmem:[%s2052 + $0xc0] sm:$0xff]
      %v2070 = vld [vmem:[%s2052 + $0xc8] sm:$0xff]
      %v2071 = vld [vmem:[%s2052 + $0xd8] sm:$0xff]
      %v2072 = vld [vmem:[%s2052 + $0xe0] sm:$0xff]
      %v2073 = vld [vmem:[%s2052 + $0xf0] sm:$0xff]
      %v2074 = vld [vmem:[%s2052 + $0xf8] sm:$0xff]
      %v2075 = vld [vmem:[%s2052 + $0x108] sm:$0xff]
      %v2076 = vld [vmem:[%s2052 + $0x110] sm:$0xff]
      %v2077 = vld [vmem:[%s2052 + $0x120] sm:$0xff]
      %v2078 = vld [vmem:[%s2052 + $0x128] sm:$0xff]
      %v2079 = vld [vmem:[%s2052 + $0x138] sm:$0xff]
      %v2080 = vld [vmem:[%s2052 + $0x140] sm:$0xff]
      %v2081 = vld [vmem:[%s2052 + $0x150] sm:$0xff]
      %v2082 = vld [vmem:[%s2052 + $0x158] sm:$0xff]
      %v2083 = vld [vmem:[%s2052 + $0x168] sm:$0xff]
      %v2084 = vld [vmem:[%s2052 + $0x170] sm:$0xff]
      %v2085 = vpack.c.bf16 %v2054, %v2053
      %v2086 = vpack.c.bf16 %v2056, %v2055
      %v2087 = vpack.c.bf16 %v2058, %v2057
      %v2088 = vpack.c.bf16 %v2060, %v2059
      %v2089 = vpack.c.bf16 %v2062, %v2061
      %v2090 = vpack.c.bf16 %v2064, %v2063
      %v2091 = vpack.c.bf16 %v2066, %v2065
      %v2092 = vpack.c.bf16 %v2068, %v2067
      %v2093 = vpack.c.bf16 %v2070, %v2069
      %v2094 = vpack.c.bf16 %v2072, %v2071
      %v2095 = vpack.c.bf16 %v2074, %v2073
      %v2096 = vpack.c.bf16 %v2076, %v2075
      %v2097 = vpack.c.bf16 %v2078, %v2077
      %v2098 = vpack.c.bf16 %v2080, %v2079
      %v2099 = vpack.c.bf16 %v2082, %v2081
      %v2100 = vpack.c.bf16 %v2084, %v2083
      %s2101 = scalar_lea.vmem %s1, 384
      %v2102 = vld [vmem:[%s2101] sm:$0xf]
      %v2103 = vld [vmem:[%s2101 + $0x4] sm:$0xf]
      %v2104 = vld [vmem:[%s2101 + $0x8] sm:$0xf]
      %v2105 = vld [vmem:[%s2101 + $0xc] sm:$0xf]
      %v2106 = vld [vmem:[%s2101 + $0x10] sm:$0xf]
      %v2107 = vld [vmem:[%s2101 + $0x14] sm:$0xf]
      %v2108 = vld [vmem:[%s2101 + $0x18] sm:$0xf]
      %v2109 = vld [vmem:[%s2101 + $0x1c] sm:$0xf]
      %v2110 = vld [vmem:[%s2101 + $0x20] sm:$0xf]
      %v2111 = vld [vmem:[%s2101 + $0x24] sm:$0xf]
      %v2112 = vld [vmem:[%s2101 + $0x28] sm:$0xf]
      %v2113 = vld [vmem:[%s2101 + $0x2c] sm:$0xf]
      %v2114 = vld [vmem:[%s2101 + $0x30] sm:$0xf]
      %v2115 = vld [vmem:[%s2101 + $0x34] sm:$0xf]
      %v2116 = vld [vmem:[%s2101 + $0x38] sm:$0xf]
      %v2117 = vld [vmem:[%s2101 + $0x3c] sm:$0xf]
      %v2134 = vunpack.c.l.b16 %v2102
      %v2135 = vunpack.c.l.b16 %v2103
      %v2136 = vunpack.c.l.b16 %v2104
      %v2137 = vunpack.c.l.b16 %v2105
      %v2138 = vunpack.c.l.b16 %v2106
      %v2139 = vunpack.c.l.b16 %v2107
      %v2140 = vunpack.c.l.b16 %v2108
      %v2141 = vunpack.c.l.b16 %v2109
      %v2142 = vunpack.c.l.b16 %v2110
      %v2143 = vunpack.c.l.b16 %v2111
      %v2144 = vunpack.c.l.b16 %v2112
      %v2145 = vunpack.c.l.b16 %v2113
      %v2146 = vunpack.c.l.b16 %v2114
      %v2147 = vunpack.c.l.b16 %v2115
      %v2148 = vunpack.c.l.b16 %v2116
      %v2149 = vunpack.c.l.b16 %v2117
      %v2150 = vpack.c.b16 %v2135, %v2134
      %v2151 = vpack.c.b16 %v2137, %v2136
      %v2152 = vpack.c.b16 %v2139, %v2138
      %v2153 = vpack.c.b16 %v2141, %v2140
      %v2154 = vpack.c.b16 %v2143, %v2142
      %v2155 = vpack.c.b16 %v2145, %v2144
      %v2156 = vpack.c.b16 %v2147, %v2146
      %v2157 = vpack.c.b16 %v2149, %v2148
      %2166 = vmatprep.subr.bf16.mxu0 0
      %2167 = vmatpush1.bf16.msra.mxu0 %v2157
      %2168 = vmatprep.subr.bf16.mxu0 0
      %2169 = vmatpush1.bf16.msra.mxu0 %v2156
      %2170 = vmatprep.subr.bf16.mxu0 0
      %2171 = vmatpush1.bf16.msra.mxu0 %v2155
      %2172 = vmatprep.subr.bf16.mxu0 0
      %2173 = vmatpush1.bf16.msra.mxu0 %v2154
      %2174 = vmatprep.subr.bf16.mxu0 0
      %2175 = vmatpush1.bf16.msra.mxu0 %v2153
      %2176 = vmatprep.subr.bf16.mxu0 0
      %2177 = vmatpush1.bf16.msra.mxu0 %v2152
      %2178 = vmatprep.subr.bf16.mxu0 0
      %2179 = vmatpush1.bf16.msra.mxu0 %v2151
      %2180 = vmatprep.subr.bf16.mxu0 0
      %2181 = vmatpush1.bf16.msra.mxu0 %v2150
      %2182 = vmatprep.subr.bf16.mxu0 0
      %2183 = vmatpush2.bf16.msra.mxu0 0
      %2184 = vmatprep.subr.bf16.mxu0 0
      %2185 = vmatpush2.bf16.msra.mxu0 0
      %2186 = vmatprep.subr.bf16.mxu0 0
      %2187 = vmatpush2.bf16.msra.mxu0 0
      %2188 = vmatprep.subr.bf16.mxu0 0
      %2189 = vmatpush2.bf16.msra.mxu0 0
      %2190 = vmatprep.subr.bf16.mxu0 0
      %2191 = vmatpush2.bf16.msra.mxu0 0
      %2192 = vmatprep.subr.bf16.mxu0 0
      %2193 = vmatpush2.bf16.msra.mxu0 0
      %2194 = vmatprep.subr.bf16.mxu0 0
      %2195 = vmatpush2.bf16.msra.mxu0 0
      %2196 = vmatprep.subr.bf16.mxu0 0
      %2197 = vmatpush2.bf16.msra.mxu0 0
      %2198 = vmatprep.mubr.bf16.mxu0 0
      %2199 = vmatmul.mubr.bf16.gmra.mxu0 %v2085
      %v2200 = vpop.f32.mrf.mxu0
      %v2201 = vadd.f32 0.0, %v2200
      %v2202 = vpop.f32.mrf.mxu0
      %v2203 = vpop.f32.mrf.mxu0
      %v2204 = vadd.f32 0.0, %v2203
      %v2205 = vpop.f32.mrf.mxu0
      %2206 = vmatprep.mubr.bf16.mxu0 0
      %2207 = vmatmul.mubr.bf16.gmra.mxu0 %v2086
      %v2208 = vpop.f32.mrf.mxu0
      %v2209 = vadd.f32 0.0, %v2208
      %v2210 = vpop.f32.mrf.mxu0
      %v2211 = vpop.f32.mrf.mxu0
      %v2212 = vadd.f32 0.0, %v2211
      %v2213 = vpop.f32.mrf.mxu0
      %2214 = vmatprep.mubr.bf16.mxu0 0
      %2215 = vmatmul.mubr.bf16.gmra.mxu0 %v2087
      %v2216 = vpop.f32.mrf.mxu0
      %v2217 = vadd.f32 0.0, %v2216
      %v2218 = vpop.f32.mrf.mxu0
      %v2219 = vpop.f32.mrf.mxu0
      %v2220 = vadd.f32 0.0, %v2219
      %v2221 = vpop.f32.mrf.mxu0
      %2222 = vmatprep.mubr.bf16.mxu0 0
      %2223 = vmatmul.mubr.bf16.gmra.mxu0 %v2088
      %v2224 = vpop.f32.mrf.mxu0
      %v2225 = vadd.f32 0.0, %v2224
      %v2226 = vpop.f32.mrf.mxu0
      %v2227 = vpop.f32.mrf.mxu0
      %v2228 = vadd.f32 0.0, %v2227
      %v2229 = vpop.f32.mrf.mxu0
      %2230 = vmatprep.mubr.bf16.mxu0 0
      %2231 = vmatmul.mubr.bf16.gmra.mxu0 %v2089
      %v2232 = vpop.f32.mrf.mxu0
      %v2233 = vadd.f32 0.0, %v2232
      %v2234 = vpop.f32.mrf.mxu0
      %v2235 = vpop.f32.mrf.mxu0
      %v2236 = vadd.f32 0.0, %v2235
      %v2237 = vpop.f32.mrf.mxu0
      %2238 = vmatprep.mubr.bf16.mxu0 0
      %2239 = vmatmul.mubr.bf16.gmra.mxu0 %v2090
      %v2240 = vpop.f32.mrf.mxu0
      %v2241 = vadd.f32 0.0, %v2240
      %v2242 = vpop.f32.mrf.mxu0
      %v2243 = vpop.f32.mrf.mxu0
      %v2244 = vadd.f32 0.0, %v2243
      %v2245 = vpop.f32.mrf.mxu0
      %2246 = vmatprep.mubr.bf16.mxu0 0
      %2247 = vmatmul.mubr.bf16.gmra.mxu0 %v2091
      %v2248 = vpop.f32.mrf.mxu0
      %v2249 = vadd.f32 0.0, %v2248
      %v2250 = vpop.f32.mrf.mxu0
      %v2251 = vpop.f32.mrf.mxu0
      %v2252 = vadd.f32 0.0, %v2251
      %v2253 = vpop.f32.mrf.mxu0
      %2254 = vmatprep.mubr.bf16.mxu0 0
      %2255 = vmatmul.mubr.bf16.gmra.mxu0 %v2092
      %v2256 = vpop.f32.mrf.mxu0
      %v2257 = vadd.f32 0.0, %v2256
      %v2258 = vpop.f32.mrf.mxu0
      %v2259 = vpop.f32.mrf.mxu0
      %v2260 = vadd.f32 0.0, %v2259
      %v2261 = vpop.f32.mrf.mxu0
      %2262 = vmatprep.mubr.bf16.mxu0 0
      %2263 = vmatmul.mubr.bf16.gmra.mxu0 %v2093
      %v2264 = vpop.f32.mrf.mxu0
      %v2265 = vadd.f32 0.0, %v2264
      %v2266 = vpop.f32.mrf.mxu0
      %v2267 = vpop.f32.mrf.mxu0
      %v2268 = vadd.f32 0.0, %v2267
      %v2269 = vpop.f32.mrf.mxu0
      %2270 = vmatprep.mubr.bf16.mxu0 0
      %2271 = vmatmul.mubr.bf16.gmra.mxu0 %v2094
      %v2272 = vpop.f32.mrf.mxu0
      %v2273 = vadd.f32 0.0, %v2272
      %v2274 = vpop.f32.mrf.mxu0
      %v2275 = vpop.f32.mrf.mxu0
      %v2276 = vadd.f32 0.0, %v2275
      %v2277 = vpop.f32.mrf.mxu0
      %2278 = vmatprep.mubr.bf16.mxu0 0
      %2279 = vmatmul.mubr.bf16.gmra.mxu0 %v2095
      %v2280 = vpop.f32.mrf.mxu0
      %v2281 = vadd.f32 0.0, %v2280
      %v2282 = vpop.f32.mrf.mxu0
      %v2283 = vpop.f32.mrf.mxu0
      %v2284 = vadd.f32 0.0, %v2283
      %v2285 = vpop.f32.mrf.mxu0
      %2286 = vmatprep.mubr.bf16.mxu0 0
      %2287 = vmatmul.mubr.bf16.gmra.mxu0 %v2096
      %v2288 = vpop.f32.mrf.mxu0
      %v2289 = vadd.f32 0.0, %v2288
      %v2290 = vpop.f32.mrf.mxu0
      %v2291 = vpop.f32.mrf.mxu0
      %v2292 = vadd.f32 0.0, %v2291
      %v2293 = vpop.f32.mrf.mxu0
      %2294 = vmatprep.mubr.bf16.mxu0 0
      %2295 = vmatmul.mubr.bf16.gmra.mxu0 %v2097
      %v2296 = vpop.f32.mrf.mxu0
      %v2297 = vadd.f32 0.0, %v2296
      %v2298 = vpop.f32.mrf.mxu0
      %v2299 = vpop.f32.mrf.mxu0
      %v2300 = vadd.f32 0.0, %v2299
      %v2301 = vpop.f32.mrf.mxu0
      %2302 = vmatprep.mubr.bf16.mxu0 0
      %2303 = vmatmul.mubr.bf16.gmra.mxu0 %v2098
      %v2304 = vpop.f32.mrf.mxu0
      %v2305 = vadd.f32 0.0, %v2304
      %v2306 = vpop.f32.mrf.mxu0
      %v2307 = vpop.f32.mrf.mxu0
      %v2308 = vadd.f32 0.0, %v2307
      %v2309 = vpop.f32.mrf.mxu0
      %2310 = vmatprep.mubr.bf16.mxu0 0
      %2311 = vmatmul.mubr.bf16.gmra.mxu0 %v2099
      %v2312 = vpop.f32.mrf.mxu0
      %v2313 = vadd.f32 0.0, %v2312
      %v2314 = vpop.f32.mrf.mxu0
      %v2315 = vpop.f32.mrf.mxu0
      %v2316 = vadd.f32 0.0, %v2315
      %v2317 = vpop.f32.mrf.mxu0
      %2318 = vmatprep.mubr.bf16.mxu0 0
      %2319 = vmatmul.mubr.bf16.gmra.mxu0 %v2100
      %v2320 = vpop.f32.mrf.mxu0
      %v2321 = vadd.f32 0.0, %v2320
      %v2322 = vpop.f32.mrf.mxu0
      %v2323 = vpop.f32.mrf.mxu0
      %v2324 = vadd.f32 0.0, %v2323
      %v2325 = vpop.f32.mrf.mxu0
      %2326 = vdwg.mxu0
      %v2327 = vadd.f32 %v2020, %v2201
      %v2328 = vadd.f32 %v2021, %v2204
      %v2329 = vadd.f32 %v2022, %v2209
      %v2330 = vadd.f32 %v2023, %v2212
      %v2331 = vadd.f32 %v2024, %v2217
      %v2332 = vadd.f32 %v2025, %v2220
      %v2333 = vadd.f32 %v2026, %v2225
      %v2334 = vadd.f32 %v2027, %v2228
      %v2335 = vadd.f32 %v2028, %v2233
      %v2336 = vadd.f32 %v2029, %v2236
      %v2337 = vadd.f32 %v2030, %v2241
      %v2338 = vadd.f32 %v2031, %v2244
      %v2339 = vadd.f32 %v2032, %v2249
      %v2340 = vadd.f32 %v2033, %v2252
      %v2341 = vadd.f32 %v2034, %v2257
      %v2342 = vadd.f32 %v2035, %v2260
      %v2343 = vadd.f32 %v2036, %v2265
      %v2344 = vadd.f32 %v2037, %v2268
      %v2345 = vadd.f32 %v2038, %v2273
      %v2346 = vadd.f32 %v2039, %v2276
      %v2347 = vadd.f32 %v2040, %v2281
      %v2348 = vadd.f32 %v2041, %v2284
      %v2349 = vadd.f32 %v2042, %v2289
      %v2350 = vadd.f32 %v2043, %v2292
      %v2351 = vadd.f32 %v2044, %v2297
      %v2352 = vadd.f32 %v2045, %v2300
      %v2353 = vadd.f32 %v2046, %v2305
      %v2354 = vadd.f32 %v2047, %v2308
      %v2355 = vadd.f32 %v2048, %v2313
      %v2356 = vadd.f32 %v2049, %v2316
      %v2357 = vadd.f32 %v2050, %v2321
      %v2358 = vadd.f32 %v2051, %v2324
      %v2359 = vld [vmem:[%s2052 + $0x1] sm:$0xff]
      %v2360 = vld [vmem:[%s2052 + $0x9] sm:$0xff]
      %v2361 = vld [vmem:[%s2052 + $0x19] sm:$0xff]
      %v2362 = vld [vmem:[%s2052 + $0x21] sm:$0xff]
      %v2363 = vld [vmem:[%s2052 + $0x31] sm:$0xff]
      %v2364 = vld [vmem:[%s2052 + $0x39] sm:$0xff]
      %v2365 = vld [vmem:[%s2052 + $0x49] sm:$0xff]
      %v2366 = vld [vmem:[%s2052 + $0x51] sm:$0xff]
      %v2367 = vld [vmem:[%s2052 + $0x61] sm:$0xff]
      %v2368 = vld [vmem:[%s2052 + $0x69] sm:$0xff]
      %v2369 = vld [vmem:[%s2052 + $0x79] sm:$0xff]
      %v2370 = vld [vmem:[%s2052 + $0x81] sm:$0xff]
      %v2371 = vld [vmem:[%s2052 + $0x91] sm:$0xff]
      %v2372 = vld [vmem:[%s2052 + $0x99] sm:$0xff]
      %v2373 = vld [vmem:[%s2052 + $0xa9] sm:$0xff]
      %v2374 = vld [vmem:[%s2052 + $0xb1] sm:$0xff]
      %v2375 = vld [vmem:[%s2052 + $0xc1] sm:$0xff]
      %v2376 = vld [vmem:[%s2052 + $0xc9] sm:$0xff]
      %v2377 = vld [vmem:[%s2052 + $0xd9] sm:$0xff]
      %v2378 = vld [vmem:[%s2052 + $0xe1] sm:$0xff]
      %v2379 = vld [vmem:[%s2052 + $0xf1] sm:$0xff]
      %v2380 = vld [vmem:[%s2052 + $0xf9] sm:$0xff]
      %v2381 = vld [vmem:[%s2052 + $0x109] sm:$0xff]
      %v2382 = vld [vmem:[%s2052 + $0x111] sm:$0xff]
      %v2383 = vld [vmem:[%s2052 + $0x121] sm:$0xff]
      %v2384 = vld [vmem:[%s2052 + $0x129] sm:$0xff]
      %v2385 = vld [vmem:[%s2052 + $0x139] sm:$0xff]
      %v2386 = vld [vmem:[%s2052 + $0x141] sm:$0xff]
      %v2387 = vld [vmem:[%s2052 + $0x151] sm:$0xff]
      %v2388 = vld [vmem:[%s2052 + $0x159] sm:$0xff]
      %v2389 = vld [vmem:[%s2052 + $0x169] sm:$0xff]
      %v2390 = vld [vmem:[%s2052 + $0x171] sm:$0xff]
      %v2391 = vpack.c.bf16 %v2360, %v2359
      %v2392 = vpack.c.bf16 %v2362, %v2361
      %v2393 = vpack.c.bf16 %v2364, %v2363
      %v2394 = vpack.c.bf16 %v2366, %v2365
      %v2395 = vpack.c.bf16 %v2368, %v2367
      %v2396 = vpack.c.bf16 %v2370, %v2369
      %v2397 = vpack.c.bf16 %v2372, %v2371
      %v2398 = vpack.c.bf16 %v2374, %v2373
      %v2399 = vpack.c.bf16 %v2376, %v2375
      %v2400 = vpack.c.bf16 %v2378, %v2377
      %v2401 = vpack.c.bf16 %v2380, %v2379
      %v2402 = vpack.c.bf16 %v2382, %v2381
      %v2403 = vpack.c.bf16 %v2384, %v2383
      %v2404 = vpack.c.bf16 %v2386, %v2385
      %v2405 = vpack.c.bf16 %v2388, %v2387
      %v2406 = vpack.c.bf16 %v2390, %v2389
      %s2407 = scalar_lea.vmem %s1, 448
      %v2408 = vld [vmem:[%s2407] sm:$0xf]
      %v2409 = vld [vmem:[%s2407 + $0x4] sm:$0xf]
      %v2410 = vld [vmem:[%s2407 + $0x8] sm:$0xf]
      %v2411 = vld [vmem:[%s2407 + $0xc] sm:$0xf]
      %v2412 = vld [vmem:[%s2407 + $0x10] sm:$0xf]
      %v2413 = vld [vmem:[%s2407 + $0x14] sm:$0xf]
      %v2414 = vld [vmem:[%s2407 + $0x18] sm:$0xf]
      %v2415 = vld [vmem:[%s2407 + $0x1c] sm:$0xf]
      %v2416 = vld [vmem:[%s2407 + $0x20] sm:$0xf]
      %v2417 = vld [vmem:[%s2407 + $0x24] sm:$0xf]
      %v2418 = vld [vmem:[%s2407 + $0x28] sm:$0xf]
      %v2419 = vld [vmem:[%s2407 + $0x2c] sm:$0xf]
      %v2420 = vld [vmem:[%s2407 + $0x30] sm:$0xf]
      %v2421 = vld [vmem:[%s2407 + $0x34] sm:$0xf]
      %v2422 = vld [vmem:[%s2407 + $0x38] sm:$0xf]
      %v2423 = vld [vmem:[%s2407 + $0x3c] sm:$0xf]
      %v2440 = vunpack.c.l.b16 %v2408
      %v2441 = vunpack.c.l.b16 %v2409
      %v2442 = vunpack.c.l.b16 %v2410
      %v2443 = vunpack.c.l.b16 %v2411
      %v2444 = vunpack.c.l.b16 %v2412
      %v2445 = vunpack.c.l.b16 %v2413
      %v2446 = vunpack.c.l.b16 %v2414
      %v2447 = vunpack.c.l.b16 %v2415
      %v2448 = vunpack.c.l.b16 %v2416
      %v2449 = vunpack.c.l.b16 %v2417
      %v2450 = vunpack.c.l.b16 %v2418
      %v2451 = vunpack.c.l.b16 %v2419
      %v2452 = vunpack.c.l.b16 %v2420
      %v2453 = vunpack.c.l.b16 %v2421
      %v2454 = vunpack.c.l.b16 %v2422
      %v2455 = vunpack.c.l.b16 %v2423
      %v2456 = vpack.c.b16 %v2441, %v2440
      %v2457 = vpack.c.b16 %v2443, %v2442
      %v2458 = vpack.c.b16 %v2445, %v2444
      %v2459 = vpack.c.b16 %v2447, %v2446
      %v2460 = vpack.c.b16 %v2449, %v2448
      %v2461 = vpack.c.b16 %v2451, %v2450
      %v2462 = vpack.c.b16 %v2453, %v2452
      %v2463 = vpack.c.b16 %v2455, %v2454
      %2472 = vmatprep.subr.bf16.mxu0 0
      %2473 = vmatpush1.bf16.msra.mxu0 %v2463
      %2474 = vmatprep.subr.bf16.mxu0 0
      %2475 = vmatpush1.bf16.msra.mxu0 %v2462
      %2476 = vmatprep.subr.bf16.mxu0 0
      %2477 = vmatpush1.bf16.msra.mxu0 %v2461
      %2478 = vmatprep.subr.bf16.mxu0 0
      %2479 = vmatpush1.bf16.msra.mxu0 %v2460
      %2480 = vmatprep.subr.bf16.mxu0 0
      %2481 = vmatpush1.bf16.msra.mxu0 %v2459
      %2482 = vmatprep.subr.bf16.mxu0 0
      %2483 = vmatpush1.bf16.msra.mxu0 %v2458
      %2484 = vmatprep.subr.bf16.mxu0 0
      %2485 = vmatpush1.bf16.msra.mxu0 %v2457
      %2486 = vmatprep.subr.bf16.mxu0 0
      %2487 = vmatpush1.bf16.msra.mxu0 %v2456
      %2488 = vmatprep.subr.bf16.mxu0 0
      %2489 = vmatpush2.bf16.msra.mxu0 0
      %2490 = vmatprep.subr.bf16.mxu0 0
      %2491 = vmatpush2.bf16.msra.mxu0 0
      %2492 = vmatprep.subr.bf16.mxu0 0
      %2493 = vmatpush2.bf16.msra.mxu0 0
      %2494 = vmatprep.subr.bf16.mxu0 0
      %2495 = vmatpush2.bf16.msra.mxu0 0
      %2496 = vmatprep.subr.bf16.mxu0 0
      %2497 = vmatpush2.bf16.msra.mxu0 0
      %2498 = vmatprep.subr.bf16.mxu0 0
      %2499 = vmatpush2.bf16.msra.mxu0 0
      %2500 = vmatprep.subr.bf16.mxu0 0
      %2501 = vmatpush2.bf16.msra.mxu0 0
      %2502 = vmatprep.subr.bf16.mxu0 0
      %2503 = vmatpush2.bf16.msra.mxu0 0
      %2504 = vmatprep.mubr.bf16.mxu0 0
      %2505 = vmatmul.mubr.bf16.gmra.mxu0 %v2391
      %v2506 = vpop.f32.mrf.mxu0
      %v2507 = vadd.f32 0.0, %v2506
      %v2508 = vpop.f32.mrf.mxu0
      %v2509 = vpop.f32.mrf.mxu0
      %v2510 = vadd.f32 0.0, %v2509
      %v2511 = vpop.f32.mrf.mxu0
      %2512 = vmatprep.mubr.bf16.mxu0 0
      %2513 = vmatmul.mubr.bf16.gmra.mxu0 %v2392
      %v2514 = vpop.f32.mrf.mxu0
      %v2515 = vadd.f32 0.0, %v2514
      %v2516 = vpop.f32.mrf.mxu0
      %v2517 = vpop.f32.mrf.mxu0
      %v2518 = vadd.f32 0.0, %v2517
      %v2519 = vpop.f32.mrf.mxu0
      %2520 = vmatprep.mubr.bf16.mxu0 0
      %2521 = vmatmul.mubr.bf16.gmra.mxu0 %v2393
      %v2522 = vpop.f32.mrf.mxu0
      %v2523 = vadd.f32 0.0, %v2522
      %v2524 = vpop.f32.mrf.mxu0
      %v2525 = vpop.f32.mrf.mxu0
      %v2526 = vadd.f32 0.0, %v2525
      %v2527 = vpop.f32.mrf.mxu0
      %2528 = vmatprep.mubr.bf16.mxu0 0
      %2529 = vmatmul.mubr.bf16.gmra.mxu0 %v2394
      %v2530 = vpop.f32.mrf.mxu0
      %v2531 = vadd.f32 0.0, %v2530
      %v2532 = vpop.f32.mrf.mxu0
      %v2533 = vpop.f32.mrf.mxu0
      %v2534 = vadd.f32 0.0, %v2533
      %v2535 = vpop.f32.mrf.mxu0
      %2536 = vmatprep.mubr.bf16.mxu0 0
      %2537 = vmatmul.mubr.bf16.gmra.mxu0 %v2395
      %v2538 = vpop.f32.mrf.mxu0
      %v2539 = vadd.f32 0.0, %v2538
      %v2540 = vpop.f32.mrf.mxu0
      %v2541 = vpop.f32.mrf.mxu0
      %v2542 = vadd.f32 0.0, %v2541
      %v2543 = vpop.f32.mrf.mxu0
      %2544 = vmatprep.mubr.bf16.mxu0 0
      %2545 = vmatmul.mubr.bf16.gmra.mxu0 %v2396
      %v2546 = vpop.f32.mrf.mxu0
      %v2547 = vadd.f32 0.0, %v2546
      %v2548 = vpop.f32.mrf.mxu0
      %v2549 = vpop.f32.mrf.mxu0
      %v2550 = vadd.f32 0.0, %v2549
      %v2551 = vpop.f32.mrf.mxu0
      %2552 = vmatprep.mubr.bf16.mxu0 0
      %2553 = vmatmul.mubr.bf16.gmra.mxu0 %v2397
      %v2554 = vpop.f32.mrf.mxu0
      %v2555 = vadd.f32 0.0, %v2554
      %v2556 = vpop.f32.mrf.mxu0
      %v2557 = vpop.f32.mrf.mxu0
      %v2558 = vadd.f32 0.0, %v2557
      %v2559 = vpop.f32.mrf.mxu0
      %2560 = vmatprep.mubr.bf16.mxu0 0
      %2561 = vmatmul.mubr.bf16.gmra.mxu0 %v2398
      %v2562 = vpop.f32.mrf.mxu0
      %v2563 = vadd.f32 0.0, %v2562
      %v2564 = vpop.f32.mrf.mxu0
      %v2565 = vpop.f32.mrf.mxu0
      %v2566 = vadd.f32 0.0, %v2565
      %v2567 = vpop.f32.mrf.mxu0
      %2568 = vmatprep.mubr.bf16.mxu0 0
      %2569 = vmatmul.mubr.bf16.gmra.mxu0 %v2399
      %v2570 = vpop.f32.mrf.mxu0
      %v2571 = vadd.f32 0.0, %v2570
      %v2572 = vpop.f32.mrf.mxu0
      %v2573 = vpop.f32.mrf.mxu0
      %v2574 = vadd.f32 0.0, %v2573
      %v2575 = vpop.f32.mrf.mxu0
      %2576 = vmatprep.mubr.bf16.mxu0 0
      %2577 = vmatmul.mubr.bf16.gmra.mxu0 %v2400
      %v2578 = vpop.f32.mrf.mxu0
      %v2579 = vadd.f32 0.0, %v2578
      %v2580 = vpop.f32.mrf.mxu0
      %v2581 = vpop.f32.mrf.mxu0
      %v2582 = vadd.f32 0.0, %v2581
      %v2583 = vpop.f32.mrf.mxu0
      %2584 = vmatprep.mubr.bf16.mxu0 0
      %2585 = vmatmul.mubr.bf16.gmra.mxu0 %v2401
      %v2586 = vpop.f32.mrf.mxu0
      %v2587 = vadd.f32 0.0, %v2586
      %v2588 = vpop.f32.mrf.mxu0
      %v2589 = vpop.f32.mrf.mxu0
      %v2590 = vadd.f32 0.0, %v2589
      %v2591 = vpop.f32.mrf.mxu0
      %2592 = vmatprep.mubr.bf16.mxu0 0
      %2593 = vmatmul.mubr.bf16.gmra.mxu0 %v2402
      %v2594 = vpop.f32.mrf.mxu0
      %v2595 = vadd.f32 0.0, %v2594
      %v2596 = vpop.f32.mrf.mxu0
      %v2597 = vpop.f32.mrf.mxu0
      %v2598 = vadd.f32 0.0, %v2597
      %v2599 = vpop.f32.mrf.mxu0
      %2600 = vmatprep.mubr.bf16.mxu0 0
      %2601 = vmatmul.mubr.bf16.gmra.mxu0 %v2403
      %v2602 = vpop.f32.mrf.mxu0
      %v2603 = vadd.f32 0.0, %v2602
      %v2604 = vpop.f32.mrf.mxu0
      %v2605 = vpop.f32.mrf.mxu0
      %v2606 = vadd.f32 0.0, %v2605
      %v2607 = vpop.f32.mrf.mxu0
      %2608 = vmatprep.mubr.bf16.mxu0 0
      %2609 = vmatmul.mubr.bf16.gmra.mxu0 %v2404
      %v2610 = vpop.f32.mrf.mxu0
      %v2611 = vadd.f32 0.0, %v2610
      %v2612 = vpop.f32.mrf.mxu0
      %v2613 = vpop.f32.mrf.mxu0
      %v2614 = vadd.f32 0.0, %v2613
      %v2615 = vpop.f32.mrf.mxu0
      %2616 = vmatprep.mubr.bf16.mxu0 0
      %2617 = vmatmul.mubr.bf16.gmra.mxu0 %v2405
      %v2618 = vpop.f32.mrf.mxu0
      %v2619 = vadd.f32 0.0, %v2618
      %v2620 = vpop.f32.mrf.mxu0
      %v2621 = vpop.f32.mrf.mxu0
      %v2622 = vadd.f32 0.0, %v2621
      %v2623 = vpop.f32.mrf.mxu0
      %2624 = vmatprep.mubr.bf16.mxu0 0
      %2625 = vmatmul.mubr.bf16.gmra.mxu0 %v2406
      %v2626 = vpop.f32.mrf.mxu0
      %v2627 = vadd.f32 0.0, %v2626
      %v2628 = vpop.f32.mrf.mxu0
      %v2629 = vpop.f32.mrf.mxu0
      %v2630 = vadd.f32 0.0, %v2629
      %v2631 = vpop.f32.mrf.mxu0
      %2632 = vdwg.mxu0
      %v2633 = vadd.f32 %v2327, %v2507
      %v2634 = vadd.f32 %v2328, %v2510
      %v2635 = vadd.f32 %v2329, %v2515
      %v2636 = vadd.f32 %v2330, %v2518
      %v2637 = vadd.f32 %v2331, %v2523
      %v2638 = vadd.f32 %v2332, %v2526
      %v2639 = vadd.f32 %v2333, %v2531
      %v2640 = vadd.f32 %v2334, %v2534
      %v2641 = vadd.f32 %v2335, %v2539
      %v2642 = vadd.f32 %v2336, %v2542
      %v2643 = vadd.f32 %v2337, %v2547
      %v2644 = vadd.f32 %v2338, %v2550
      %v2645 = vadd.f32 %v2339, %v2555
      %v2646 = vadd.f32 %v2340, %v2558
      %v2647 = vadd.f32 %v2341, %v2563
      %v2648 = vadd.f32 %v2342, %v2566
      %v2649 = vadd.f32 %v2343, %v2571
      %v2650 = vadd.f32 %v2344, %v2574
      %v2651 = vadd.f32 %v2345, %v2579
      %v2652 = vadd.f32 %v2346, %v2582
      %v2653 = vadd.f32 %v2347, %v2587
      %v2654 = vadd.f32 %v2348, %v2590
      %v2655 = vadd.f32 %v2349, %v2595
      %v2656 = vadd.f32 %v2350, %v2598
      %v2657 = vadd.f32 %v2351, %v2603
      %v2658 = vadd.f32 %v2352, %v2606
      %v2659 = vadd.f32 %v2353, %v2611
      %v2660 = vadd.f32 %v2354, %v2614
      %v2661 = vadd.f32 %v2355, %v2619
      %v2662 = vadd.f32 %v2356, %v2622
      %v2663 = vadd.f32 %v2357, %v2627
      %v2664 = vadd.f32 %v2358, %v2630
      %v2665 = vld [vmem:[%s2052 + $0x2] sm:$0xff]
      %v2666 = vld [vmem:[%s2052 + $0xa] sm:$0xff]
      %v2667 = vld [vmem:[%s2052 + $0x1a] sm:$0xff]
      %v2668 = vld [vmem:[%s2052 + $0x22] sm:$0xff]
      %v2669 = vld [vmem:[%s2052 + $0x32] sm:$0xff]
      %v2670 = vld [vmem:[%s2052 + $0x3a] sm:$0xff]
      %v2671 = vld [vmem:[%s2052 + $0x4a] sm:$0xff]
      %v2672 = vld [vmem:[%s2052 + $0x52] sm:$0xff]
      %v2673 = vld [vmem:[%s2052 + $0x62] sm:$0xff]
      %v2674 = vld [vmem:[%s2052 + $0x6a] sm:$0xff]
      %v2675 = vld [vmem:[%s2052 + $0x7a] sm:$0xff]
      %v2676 = vld [vmem:[%s2052 + $0x82] sm:$0xff]
      %v2677 = vld [vmem:[%s2052 + $0x92] sm:$0xff]
      %v2678 = vld [vmem:[%s2052 + $0x9a] sm:$0xff]
      %v2679 = vld [vmem:[%s2052 + $0xaa] sm:$0xff]
      %v2680 = vld [vmem:[%s2052 + $0xb2] sm:$0xff]
      %v2681 = vld [vmem:[%s2052 + $0xc2] sm:$0xff]
      %v2682 = vld [vmem:[%s2052 + $0xca] sm:$0xff]
      %v2683 = vld [vmem:[%s2052 + $0xda] sm:$0xff]
      %v2684 = vld [vmem:[%s2052 + $0xe2] sm:$0xff]
      %v2685 = vld [vmem:[%s2052 + $0xf2] sm:$0xff]
      %v2686 = vld [vmem:[%s2052 + $0xfa] sm:$0xff]
      %v2687 = vld [vmem:[%s2052 + $0x10a] sm:$0xff]
      %v2688 = vld [vmem:[%s2052 + $0x112] sm:$0xff]
      %v2689 = vld [vmem:[%s2052 + $0x122] sm:$0xff]
      %v2690 = vld [vmem:[%s2052 + $0x12a] sm:$0xff]
      %v2691 = vld [vmem:[%s2052 + $0x13a] sm:$0xff]
      %v2692 = vld [vmem:[%s2052 + $0x142] sm:$0xff]
      %v2693 = vld [vmem:[%s2052 + $0x152] sm:$0xff]
      %v2694 = vld [vmem:[%s2052 + $0x15a] sm:$0xff]
      %v2695 = vld [vmem:[%s2052 + $0x16a] sm:$0xff]
      %v2696 = vld [vmem:[%s2052 + $0x172] sm:$0xff]
      %v2697 = vpack.c.bf16 %v2666, %v2665
      %v2698 = vpack.c.bf16 %v2668, %v2667
      %v2699 = vpack.c.bf16 %v2670, %v2669
      %v2700 = vpack.c.bf16 %v2672, %v2671
      %v2701 = vpack.c.bf16 %v2674, %v2673
      %v2702 = vpack.c.bf16 %v2676, %v2675
      %v2703 = vpack.c.bf16 %v2678, %v2677
      %v2704 = vpack.c.bf16 %v2680, %v2679
      %v2705 = vpack.c.bf16 %v2682, %v2681
      %v2706 = vpack.c.bf16 %v2684, %v2683
      %v2707 = vpack.c.bf16 %v2686, %v2685
      %v2708 = vpack.c.bf16 %v2688, %v2687
      %v2709 = vpack.c.bf16 %v2690, %v2689
      %v2710 = vpack.c.bf16 %v2692, %v2691
      %v2711 = vpack.c.bf16 %v2694, %v2693
      %v2712 = vpack.c.bf16 %v2696, %v2695
      %s2713 = scalar_lea.vmem %s1, 512
      %v2714 = vld [vmem:[%s2713] sm:$0xf]
      %v2715 = vld [vmem:[%s2713 + $0x4] sm:$0xf]
      %v2716 = vld [vmem:[%s2713 + $0x8] sm:$0xf]
      %v2717 = vld [vmem:[%s2713 + $0xc] sm:$0xf]
      %v2718 = vld [vmem:[%s2713 + $0x10] sm:$0xf]
      %v2719 = vld [vmem:[%s2713 + $0x14] sm:$0xf]
      %v2720 = vld [vmem:[%s2713 + $0x18] sm:$0xf]
      %v2721 = vld [vmem:[%s2713 + $0x1c] sm:$0xf]
      %v2722 = vld [vmem:[%s2713 + $0x20] sm:$0xf]
      %v2723 = vld [vmem:[%s2713 + $0x24] sm:$0xf]
      %v2724 = vld [vmem:[%s2713 + $0x28] sm:$0xf]
      %v2725 = vld [vmem:[%s2713 + $0x2c] sm:$0xf]
      %v2726 = vld [vmem:[%s2713 + $0x30] sm:$0xf]
      %v2727 = vld [vmem:[%s2713 + $0x34] sm:$0xf]
      %v2728 = vld [vmem:[%s2713 + $0x38] sm:$0xf]
      %v2729 = vld [vmem:[%s2713 + $0x3c] sm:$0xf]
      %v2746 = vunpack.c.l.b16 %v2714
      %v2747 = vunpack.c.l.b16 %v2715
      %v2748 = vunpack.c.l.b16 %v2716
      %v2749 = vunpack.c.l.b16 %v2717
      %v2750 = vunpack.c.l.b16 %v2718
      %v2751 = vunpack.c.l.b16 %v2719
      %v2752 = vunpack.c.l.b16 %v2720
      %v2753 = vunpack.c.l.b16 %v2721
      %v2754 = vunpack.c.l.b16 %v2722
      %v2755 = vunpack.c.l.b16 %v2723
      %v2756 = vunpack.c.l.b16 %v2724
      %v2757 = vunpack.c.l.b16 %v2725
      %v2758 = vunpack.c.l.b16 %v2726
      %v2759 = vunpack.c.l.b16 %v2727
      %v2760 = vunpack.c.l.b16 %v2728
      %v2761 = vunpack.c.l.b16 %v2729
      %v2762 = vpack.c.b16 %v2747, %v2746
      %v2763 = vpack.c.b16 %v2749, %v2748
      %v2764 = vpack.c.b16 %v2751, %v2750
      %v2765 = vpack.c.b16 %v2753, %v2752
      %v2766 = vpack.c.b16 %v2755, %v2754
      %v2767 = vpack.c.b16 %v2757, %v2756
      %v2768 = vpack.c.b16 %v2759, %v2758
      %v2769 = vpack.c.b16 %v2761, %v2760
      %2778 = vmatprep.subr.bf16.mxu0 0
      %2779 = vmatpush1.bf16.msra.mxu0 %v2769
      %2780 = vmatprep.subr.bf16.mxu0 0
      %2781 = vmatpush1.bf16.msra.mxu0 %v2768
      %2782 = vmatprep.subr.bf16.mxu0 0
      %2783 = vmatpush1.bf16.msra.mxu0 %v2767
      %2784 = vmatprep.subr.bf16.mxu0 0
      %2785 = vmatpush1.bf16.msra.mxu0 %v2766
      %2786 = vmatprep.subr.bf16.mxu0 0
      %2787 = vmatpush1.bf16.msra.mxu0 %v2765
      %2788 = vmatprep.subr.bf16.mxu0 0
      %2789 = vmatpush1.bf16.msra.mxu0 %v2764
      %2790 = vmatprep.subr.bf16.mxu0 0
      %2791 = vmatpush1.bf16.msra.mxu0 %v2763
      %2792 = vmatprep.subr.bf16.mxu0 0
      %2793 = vmatpush1.bf16.msra.mxu0 %v2762
      %2794 = vmatprep.subr.bf16.mxu0 0
      %2795 = vmatpush2.bf16.msra.mxu0 0
      %2796 = vmatprep.subr.bf16.mxu0 0
      %2797 = vmatpush2.bf16.msra.mxu0 0
      %2798 = vmatprep.subr.bf16.mxu0 0
      %2799 = vmatpush2.bf16.msra.mxu0 0
      %2800 = vmatprep.subr.bf16.mxu0 0
      %2801 = vmatpush2.bf16.msra.mxu0 0
      %2802 = vmatprep.subr.bf16.mxu0 0
      %2803 = vmatpush2.bf16.msra.mxu0 0
      %2804 = vmatprep.subr.bf16.mxu0 0
      %2805 = vmatpush2.bf16.msra.mxu0 0
      %2806 = vmatprep.subr.bf16.mxu0 0
      %2807 = vmatpush2.bf16.msra.mxu0 0
      %2808 = vmatprep.subr.bf16.mxu0 0
      %2809 = vmatpush2.bf16.msra.mxu0 0
      %2810 = vmatprep.mubr.bf16.mxu0 0
      %2811 = vmatmul.mubr.bf16.gmra.mxu0 %v2697
      %v2812 = vpop.f32.mrf.mxu0
      %v2813 = vadd.f32 0.0, %v2812
      %v2814 = vpop.f32.mrf.mxu0
      %v2815 = vpop.f32.mrf.mxu0
      %v2816 = vadd.f32 0.0, %v2815
      %v2817 = vpop.f32.mrf.mxu0
      %2818 = vmatprep.mubr.bf16.mxu0 0
      %2819 = vmatmul.mubr.bf16.gmra.mxu0 %v2698
      %v2820 = vpop.f32.mrf.mxu0
      %v2821 = vadd.f32 0.0, %v2820
      %v2822 = vpop.f32.mrf.mxu0
      %v2823 = vpop.f32.mrf.mxu0
      %v2824 = vadd.f32 0.0, %v2823
      %v2825 = vpop.f32.mrf.mxu0
      %2826 = vmatprep.mubr.bf16.mxu0 0
      %2827 = vmatmul.mubr.bf16.gmra.mxu0 %v2699
      %v2828 = vpop.f32.mrf.mxu0
      %v2829 = vadd.f32 0.0, %v2828
      %v2830 = vpop.f32.mrf.mxu0
      %v2831 = vpop.f32.mrf.mxu0
      %v2832 = vadd.f32 0.0, %v2831
      %v2833 = vpop.f32.mrf.mxu0
      %2834 = vmatprep.mubr.bf16.mxu0 0
      %2835 = vmatmul.mubr.bf16.gmra.mxu0 %v2700
      %v2836 = vpop.f32.mrf.mxu0
      %v2837 = vadd.f32 0.0, %v2836
      %v2838 = vpop.f32.mrf.mxu0
      %v2839 = vpop.f32.mrf.mxu0
      %v2840 = vadd.f32 0.0, %v2839
      %v2841 = vpop.f32.mrf.mxu0
      %2842 = vmatprep.mubr.bf16.mxu0 0
      %2843 = vmatmul.mubr.bf16.gmra.mxu0 %v2701
      %v2844 = vpop.f32.mrf.mxu0
      %v2845 = vadd.f32 0.0, %v2844
      %v2846 = vpop.f32.mrf.mxu0
      %v2847 = vpop.f32.mrf.mxu0
      %v2848 = vadd.f32 0.0, %v2847
      %v2849 = vpop.f32.mrf.mxu0
      %2850 = vmatprep.mubr.bf16.mxu0 0
      %2851 = vmatmul.mubr.bf16.gmra.mxu0 %v2702
      %v2852 = vpop.f32.mrf.mxu0
      %v2853 = vadd.f32 0.0, %v2852
      %v2854 = vpop.f32.mrf.mxu0
      %v2855 = vpop.f32.mrf.mxu0
      %v2856 = vadd.f32 0.0, %v2855
      %v2857 = vpop.f32.mrf.mxu0
      %2858 = vmatprep.mubr.bf16.mxu0 0
      %2859 = vmatmul.mubr.bf16.gmra.mxu0 %v2703
      %v2860 = vpop.f32.mrf.mxu0
      %v2861 = vadd.f32 0.0, %v2860
      %v2862 = vpop.f32.mrf.mxu0
      %v2863 = vpop.f32.mrf.mxu0
      %v2864 = vadd.f32 0.0, %v2863
      %v2865 = vpop.f32.mrf.mxu0
      %2866 = vmatprep.mubr.bf16.mxu0 0
      %2867 = vmatmul.mubr.bf16.gmra.mxu0 %v2704
      %v2868 = vpop.f32.mrf.mxu0
      %v2869 = vadd.f32 0.0, %v2868
      %v2870 = vpop.f32.mrf.mxu0
      %v2871 = vpop.f32.mrf.mxu0
      %v2872 = vadd.f32 0.0, %v2871
      %v2873 = vpop.f32.mrf.mxu0
      %2874 = vmatprep.mubr.bf16.mxu0 0
      %2875 = vmatmul.mubr.bf16.gmra.mxu0 %v2705
      %v2876 = vpop.f32.mrf.mxu0
      %v2877 = vadd.f32 0.0, %v2876
      %v2878 = vpop.f32.mrf.mxu0
      %v2879 = vpop.f32.mrf.mxu0
      %v2880 = vadd.f32 0.0, %v2879
      %v2881 = vpop.f32.mrf.mxu0
      %2882 = vmatprep.mubr.bf16.mxu0 0
      %2883 = vmatmul.mubr.bf16.gmra.mxu0 %v2706
      %v2884 = vpop.f32.mrf.mxu0
      %v2885 = vadd.f32 0.0, %v2884
      %v2886 = vpop.f32.mrf.mxu0
      %v2887 = vpop.f32.mrf.mxu0
      %v2888 = vadd.f32 0.0, %v2887
      %v2889 = vpop.f32.mrf.mxu0
      %2890 = vmatprep.mubr.bf16.mxu0 0
      %2891 = vmatmul.mubr.bf16.gmra.mxu0 %v2707
      %v2892 = vpop.f32.mrf.mxu0
      %v2893 = vadd.f32 0.0, %v2892
      %v2894 = vpop.f32.mrf.mxu0
      %v2895 = vpop.f32.mrf.mxu0
      %v2896 = vadd.f32 0.0, %v2895
      %v2897 = vpop.f32.mrf.mxu0
      %2898 = vmatprep.mubr.bf16.mxu0 0
      %2899 = vmatmul.mubr.bf16.gmra.mxu0 %v2708
      %v2900 = vpop.f32.mrf.mxu0
      %v2901 = vadd.f32 0.0, %v2900
      %v2902 = vpop.f32.mrf.mxu0
      %v2903 = vpop.f32.mrf.mxu0
      %v2904 = vadd.f32 0.0, %v2903
      %v2905 = vpop.f32.mrf.mxu0
      %2906 = vmatprep.mubr.bf16.mxu0 0
      %2907 = vmatmul.mubr.bf16.gmra.mxu0 %v2709
      %v2908 = vpop.f32.mrf.mxu0
      %v2909 = vadd.f32 0.0, %v2908
      %v2910 = vpop.f32.mrf.mxu0
      %v2911 = vpop.f32.mrf.mxu0
      %v2912 = vadd.f32 0.0, %v2911
      %v2913 = vpop.f32.mrf.mxu0
      %2914 = vmatprep.mubr.bf16.mxu0 0
      %2915 = vmatmul.mubr.bf16.gmra.mxu0 %v2710
      %v2916 = vpop.f32.mrf.mxu0
      %v2917 = vadd.f32 0.0, %v2916
      %v2918 = vpop.f32.mrf.mxu0
      %v2919 = vpop.f32.mrf.mxu0
      %v2920 = vadd.f32 0.0, %v2919
      %v2921 = vpop.f32.mrf.mxu0
      %2922 = vmatprep.mubr.bf16.mxu0 0
      %2923 = vmatmul.mubr.bf16.gmra.mxu0 %v2711
      %v2924 = vpop.f32.mrf.mxu0
      %v2925 = vadd.f32 0.0, %v2924
      %v2926 = vpop.f32.mrf.mxu0
      %v2927 = vpop.f32.mrf.mxu0
      %v2928 = vadd.f32 0.0, %v2927
      %v2929 = vpop.f32.mrf.mxu0
      %2930 = vmatprep.mubr.bf16.mxu0 0
      %2931 = vmatmul.mubr.bf16.gmra.mxu0 %v2712
      %v2932 = vpop.f32.mrf.mxu0
      %v2933 = vadd.f32 0.0, %v2932
      %v2934 = vpop.f32.mrf.mxu0
      %v2935 = vpop.f32.mrf.mxu0
      %v2936 = vadd.f32 0.0, %v2935
      %v2937 = vpop.f32.mrf.mxu0
      %2938 = vdwg.mxu0
      %v2939 = vadd.f32 %v2633, %v2813
      %v2940 = vadd.f32 %v2634, %v2816
      %v2941 = vadd.f32 %v2635, %v2821
      %v2942 = vadd.f32 %v2636, %v2824
      %v2943 = vadd.f32 %v2637, %v2829
      %v2944 = vadd.f32 %v2638, %v2832
      %v2945 = vadd.f32 %v2639, %v2837
      %v2946 = vadd.f32 %v2640, %v2840
      %v2947 = vadd.f32 %v2641, %v2845
      %v2948 = vadd.f32 %v2642, %v2848
      %v2949 = vadd.f32 %v2643, %v2853
      %v2950 = vadd.f32 %v2644, %v2856
      %v2951 = vadd.f32 %v2645, %v2861
      %v2952 = vadd.f32 %v2646, %v2864
      %v2953 = vadd.f32 %v2647, %v2869
      %v2954 = vadd.f32 %v2648, %v2872
      %v2955 = vadd.f32 %v2649, %v2877
      %v2956 = vadd.f32 %v2650, %v2880
      %v2957 = vadd.f32 %v2651, %v2885
      %v2958 = vadd.f32 %v2652, %v2888
      %v2959 = vadd.f32 %v2653, %v2893
      %v2960 = vadd.f32 %v2654, %v2896
      %v2961 = vadd.f32 %v2655, %v2901
      %v2962 = vadd.f32 %v2656, %v2904
      %v2963 = vadd.f32 %v2657, %v2909
      %v2964 = vadd.f32 %v2658, %v2912
      %v2965 = vadd.f32 %v2659, %v2917
      %v2966 = vadd.f32 %v2660, %v2920
      %v2967 = vadd.f32 %v2661, %v2925
      %v2968 = vadd.f32 %v2662, %v2928
      %v2969 = vadd.f32 %v2663, %v2933
      %v2970 = vadd.f32 %v2664, %v2936
      %v2971 = vld [vmem:[%s2] sm:$0x1]
      %v2972 = vld [vmem:[%s2 + $0x1] sm:$0x1]
      %v2973 = vld [vmem:[%s2 + $0x2] sm:$0x1]
      %v2974 = vlaneseq
      %v2975 = vshrl.u32 %v2974, 7
      %v2976 = vsub.s32 0, %v2975
      %v2977 = vrot.slane %v2971, %v2976
      %v2978 = vadd.f32 %v2939, %v2977
      %v2979 = vadd.f32 %v2940, %v2977
      %v2980 = vadd.f32 %v2941, %v2977
      %v2981 = vadd.f32 %v2942, %v2977
      %v2982 = vadd.f32 %v2943, %v2977
      %v2983 = vadd.f32 %v2944, %v2977
      %v2984 = vadd.f32 %v2945, %v2977
      %v2985 = vadd.f32 %v2946, %v2977
      %v2986 = vadd.f32 %v2947, %v2977
      %v2987 = vadd.f32 %v2948, %v2977
      %v2988 = vadd.f32 %v2949, %v2977
      %v2989 = vadd.f32 %v2950, %v2977
      %v2990 = vadd.f32 %v2951, %v2977
      %v2991 = vadd.f32 %v2952, %v2977
      %v2992 = vadd.f32 %v2953, %v2977
      %v2993 = vadd.f32 %v2954, %v2977
      %v2994 = vadd.f32 %v2955, %v2977
      %v2995 = vadd.f32 %v2956, %v2977
      %v2996 = vadd.f32 %v2957, %v2977
      %v2997 = vadd.f32 %v2958, %v2977
      %v2998 = vadd.f32 %v2959, %v2977
      %v2999 = vadd.f32 %v2960, %v2977
      %v3000 = vadd.f32 %v2961, %v2977
      %v3001 = vadd.f32 %v2962, %v2977
      %v3002 = vadd.f32 %v2963, %v2977
      %v3003 = vadd.f32 %v2964, %v2977
      %v3004 = vadd.f32 %v2965, %v2977
      %v3005 = vadd.f32 %v2966, %v2977
      %v3006 = vadd.f32 %v2967, %v2977
      %v3007 = vadd.f32 %v2968, %v2977
      %v3008 = vadd.f32 %v2969, %v2977
      %v3009 = vadd.f32 %v2970, %v2977
      %v3010 = vmax.f32 %v2978, 0.0
      %v3011 = vmax.f32 %v2979, 0.0
      %v3012 = vmax.f32 %v2980, 0.0
      %v3013 = vmax.f32 %v2981, 0.0
      %v3014 = vmax.f32 %v2982, 0.0
      %v3015 = vmax.f32 %v2983, 0.0
      %v3016 = vmax.f32 %v2984, 0.0
      %v3017 = vmax.f32 %v2985, 0.0
      %v3018 = vmax.f32 %v2986, 0.0
      %v3019 = vmax.f32 %v2987, 0.0
      %v3020 = vmax.f32 %v2988, 0.0
      %v3021 = vmax.f32 %v2989, 0.0
      %v3022 = vmax.f32 %v2990, 0.0
      %v3023 = vmax.f32 %v2991, 0.0
      %v3024 = vmax.f32 %v2992, 0.0
      %v3025 = vmax.f32 %v2993, 0.0
      %v3026 = vmax.f32 %v2994, 0.0
      %v3027 = vmax.f32 %v2995, 0.0
      %v3028 = vmax.f32 %v2996, 0.0
      %v3029 = vmax.f32 %v2997, 0.0
      %v3030 = vmax.f32 %v2998, 0.0
      %v3031 = vmax.f32 %v2999, 0.0
      %v3032 = vmax.f32 %v3000, 0.0
      %v3033 = vmax.f32 %v3001, 0.0
      %v3034 = vmax.f32 %v3002, 0.0
      %v3035 = vmax.f32 %v3003, 0.0
      %v3036 = vmax.f32 %v3004, 0.0
      %v3037 = vmax.f32 %v3005, 0.0
      %v3038 = vmax.f32 %v3006, 0.0
      %v3039 = vmax.f32 %v3007, 0.0
      %v3040 = vmax.f32 %v3008, 0.0
      %v3041 = vmax.f32 %v3009, 0.0
      %v3042 = vlaneseq
      %v3043 = vshrl.u32 %v3042, 7
      %v3044 = vsub.s32 0, %v3043
      %v3045 = vrot.slane %v2972, %v3044
      %v3046 = vmul.f32 %v3010, %v3045
      %v3047 = vmul.f32 %v3011, %v3045
      %v3048 = vmul.f32 %v3012, %v3045
      %v3049 = vmul.f32 %v3013, %v3045
      %v3050 = vmul.f32 %v3014, %v3045
      %v3051 = vmul.f32 %v3015, %v3045
      %v3052 = vmul.f32 %v3016, %v3045
      %v3053 = vmul.f32 %v3017, %v3045
      %v3054 = vmul.f32 %v3018, %v3045
      %v3055 = vmul.f32 %v3019, %v3045
      %v3056 = vmul.f32 %v3020, %v3045
      %v3057 = vmul.f32 %v3021, %v3045
      %v3058 = vmul.f32 %v3022, %v3045
      %v3059 = vmul.f32 %v3023, %v3045
      %v3060 = vmul.f32 %v3024, %v3045
      %v3061 = vmul.f32 %v3025, %v3045
      %v3062 = vmul.f32 %v3026, %v3045
      %v3063 = vmul.f32 %v3027, %v3045
      %v3064 = vmul.f32 %v3028, %v3045
      %v3065 = vmul.f32 %v3029, %v3045
      %v3066 = vmul.f32 %v3030, %v3045
      %v3067 = vmul.f32 %v3031, %v3045
      %v3068 = vmul.f32 %v3032, %v3045
      %v3069 = vmul.f32 %v3033, %v3045
      %v3070 = vmul.f32 %v3034, %v3045
      %v3071 = vmul.f32 %v3035, %v3045
      %v3072 = vmul.f32 %v3036, %v3045
      %v3073 = vmul.f32 %v3037, %v3045
      %v3074 = vmul.f32 %v3038, %v3045
      %v3075 = vmul.f32 %v3039, %v3045
      %v3076 = vmul.f32 %v3040, %v3045
      %v3077 = vmul.f32 %v3041, %v3045
      %v3078 = vlaneseq
      %v3079 = vshrl.u32 %v3078, 7
      %v3080 = vsub.s32 0, %v3079
      %v3081 = vrot.slane %v2973, %v3080
      %v3082 = vadd.f32 %v3046, %v3081
      %v3083 = vadd.f32 %v3047, %v3081
      %v3084 = vadd.f32 %v3048, %v3081
      %v3085 = vadd.f32 %v3049, %v3081
      %v3086 = vadd.f32 %v3050, %v3081
      %v3087 = vadd.f32 %v3051, %v3081
      %v3088 = vadd.f32 %v3052, %v3081
      %v3089 = vadd.f32 %v3053, %v3081
      %v3090 = vadd.f32 %v3054, %v3081
      %v3091 = vadd.f32 %v3055, %v3081
      %v3092 = vadd.f32 %v3056, %v3081
      %v3093 = vadd.f32 %v3057, %v3081
      %v3094 = vadd.f32 %v3058, %v3081
      %v3095 = vadd.f32 %v3059, %v3081
      %v3096 = vadd.f32 %v3060, %v3081
      %v3097 = vadd.f32 %v3061, %v3081
      %v3098 = vadd.f32 %v3062, %v3081
      %v3099 = vadd.f32 %v3063, %v3081
      %v3100 = vadd.f32 %v3064, %v3081
      %v3101 = vadd.f32 %v3065, %v3081
      %v3102 = vadd.f32 %v3066, %v3081
      %v3103 = vadd.f32 %v3067, %v3081
      %v3104 = vadd.f32 %v3068, %v3081
      %v3105 = vadd.f32 %v3069, %v3081
      %v3106 = vadd.f32 %v3070, %v3081
      %v3107 = vadd.f32 %v3071, %v3081
      %v3108 = vadd.f32 %v3072, %v3081
      %v3109 = vadd.f32 %v3073, %v3081
      %v3110 = vadd.f32 %v3074, %v3081
      %v3111 = vadd.f32 %v3075, %v3081
      %v3112 = vadd.f32 %v3076, %v3081
      %v3113 = vadd.f32 %v3077, %v3081
      %3114 = vst [vmem:[#allocation2] sm:$0xff] %v3082
      %3115 = vst [vmem:[#allocation2 + $0x8] sm:$0xff] %v3083
      %3116 = vst [vmem:[#allocation2 + $0x10] sm:$0xff] %v3084
      %3117 = vst [vmem:[#allocation2 + $0x18] sm:$0xff] %v3085
      %3118 = vst [vmem:[#allocation2 + $0x20] sm:$0xff] %v3086
      %3119 = vst [vmem:[#allocation2 + $0x28] sm:$0xff] %v3087
      %3120 = vst [vmem:[#allocation2 + $0x30] sm:$0xff] %v3088
      %3121 = vst [vmem:[#allocation2 + $0x38] sm:$0xff] %v3089
      %3122 = vst [vmem:[#allocation2 + $0x40] sm:$0xff] %v3090
      %3123 = vst [vmem:[#allocation2 + $0x48] sm:$0xff] %v3091
      %3124 = vst [vmem:[#allocation2 + $0x50] sm:$0xff] %v3092
      %3125 = vst [vmem:[#allocation2 + $0x58] sm:$0xff] %v3093
      %3126 = vst [vmem:[#allocation2 + $0x60] sm:$0xff] %v3094
      %3127 = vst [vmem:[#allocation2 + $0x68] sm:$0xff] %v3095
      %3128 = vst [vmem:[#allocation2 + $0x70] sm:$0xff] %v3096
      %3129 = vst [vmem:[#allocation2 + $0x78] sm:$0xff] %v3097
      %3130 = vst [vmem:[#allocation2 + $0x80] sm:$0xff] %v3098
      %3131 = vst [vmem:[#allocation2 + $0x88] sm:$0xff] %v3099
      %3132 = vst [vmem:[#allocation2 + $0x90] sm:$0xff] %v3100
      %3133 = vst [vmem:[#allocation2 + $0x98] sm:$0xff] %v3101
      %3134 = vst [vmem:[#allocation2 + $0xa0] sm:$0xff] %v3102
      %3135 = vst [vmem:[#allocation2 + $0xa8] sm:$0xff] %v3103
      %3136 = vst [vmem:[#allocation2 + $0xb0] sm:$0xff] %v3104
      %3137 = vst [vmem:[#allocation2 + $0xb8] sm:$0xff] %v3105
      %3138 = vst [vmem:[#allocation2 + $0xc0] sm:$0xff] %v3106
      %3139 = vst [vmem:[#allocation2 + $0xc8] sm:$0xff] %v3107
      %3140 = vst [vmem:[#allocation2 + $0xd0] sm:$0xff] %v3108
      %3141 = vst [vmem:[#allocation2 + $0xd8] sm:$0xff] %v3109
      %3142 = vst [vmem:[#allocation2 + $0xe0] sm:$0xff] %v3110
      %3143 = vst [vmem:[#allocation2 + $0xe8] sm:$0xff] %v3111
      %3144 = vst [vmem:[#allocation2 + $0xf0] sm:$0xff] %v3112
      %3145 = vst [vmem:[#allocation2 + $0xf8] sm:$0xff] %v3113
      %v3146 = vld [vmem:[#allocation2] ss:$2 sm:$0xff]
      %s3147 = scalar_lea.vmem [#allocation2], 16
      %v3148 = vld [vmem:[%s3147] ss:$2 sm:$0xff]
      %s3149 = scalar_lea.vmem [#allocation2], 32
      %v3150 = vld [vmem:[%s3149] ss:$2 sm:$0xff]
      %s3151 = scalar_lea.vmem [#allocation2], 48
      %v3152 = vld [vmem:[%s3151] ss:$2 sm:$0xff]
      %s3153 = scalar_lea.vmem [#allocation2], 64
      %v3154 = vld [vmem:[%s3153] ss:$2 sm:$0xff]
      %s3155 = scalar_lea.vmem [#allocation2], 80
      %v3156 = vld [vmem:[%s3155] ss:$2 sm:$0xff]
      %s3157 = scalar_lea.vmem [#allocation2], 96
      %v3158 = vld [vmem:[%s3157] ss:$2 sm:$0xff]
      %s3159 = scalar_lea.vmem [#allocation2], 112
      %v3160 = vld [vmem:[%s3159] ss:$2 sm:$0xff]
      %s3161 = scalar_lea.vmem [#allocation2], 128
      %v3162 = vld [vmem:[%s3161] ss:$2 sm:$0xff]
      %s3163 = scalar_lea.vmem [#allocation2], 144
      %v3164 = vld [vmem:[%s3163] ss:$2 sm:$0xff]
      %s3165 = scalar_lea.vmem [#allocation2], 160
      %v3166 = vld [vmem:[%s3165] ss:$2 sm:$0xff]
      %s3167 = scalar_lea.vmem [#allocation2], 176
      %v3168 = vld [vmem:[%s3167] ss:$2 sm:$0xff]
      %s3169 = scalar_lea.vmem [#allocation2], 192
      %v3170 = vld [vmem:[%s3169] ss:$2 sm:$0xff]
      %s3171 = scalar_lea.vmem [#allocation2], 208
      %v3172 = vld [vmem:[%s3171] ss:$2 sm:$0xff]
      %s3173 = scalar_lea.vmem [#allocation2], 224
      %v3174 = vld [vmem:[%s3173] ss:$2 sm:$0xff]
      %s3175 = scalar_lea.vmem [#allocation2], 240
      %v3176 = vld [vmem:[%s3175] ss:$2 sm:$0xff]
      %s3177 = scalar_lea.vmem [#allocation2], 1
      %v3178 = vld [vmem:[%s3177] ss:$2 sm:$0xff]
      %s3179 = scalar_lea.vmem [#allocation2], 17
      %v3180 = vld [vmem:[%s3179] ss:$2 sm:$0xff]
      %s3181 = scalar_lea.vmem [#allocation2], 33
      %v3182 = vld [vmem:[%s3181] ss:$2 sm:$0xff]
      %s3183 = scalar_lea.vmem [#allocation2], 49
      %v3184 = vld [vmem:[%s3183] ss:$2 sm:$0xff]
      %s3185 = scalar_lea.vmem [#allocation2], 65
      %v3186 = vld [vmem:[%s3185] ss:$2 sm:$0xff]
      %s3187 = scalar_lea.vmem [#allocation2], 81
      %v3188 = vld [vmem:[%s3187] ss:$2 sm:$0xff]
      %s3189 = scalar_lea.vmem [#allocation2], 97
      %v3190 = vld [vmem:[%s3189] ss:$2 sm:$0xff]
      %s3191 = scalar_lea.vmem [#allocation2], 113
      %v3192 = vld [vmem:[%s3191] ss:$2 sm:$0xff]
      %s3193 = scalar_lea.vmem [#allocation2], 129
      %v3194 = vld [vmem:[%s3193] ss:$2 sm:$0xff]
      %s3195 = scalar_lea.vmem [#allocation2], 145
      %v3196 = vld [vmem:[%s3195] ss:$2 sm:$0xff]
      %s3197 = scalar_lea.vmem [#allocation2], 161
      %v3198 = vld [vmem:[%s3197] ss:$2 sm:$0xff]
      %s3199 = scalar_lea.vmem [#allocation2], 177
      %v3200 = vld [vmem:[%s3199] ss:$2 sm:$0xff]
      %s3201 = scalar_lea.vmem [#allocation2], 193
      %v3202 = vld [vmem:[%s3201] ss:$2 sm:$0xff]
      %s3203 = scalar_lea.vmem [#allocation2], 209
      %v3204 = vld [vmem:[%s3203] ss:$2 sm:$0xff]
      %s3205 = scalar_lea.vmem [#allocation2], 225
      %v3206 = vld [vmem:[%s3205] ss:$2 sm:$0xff]
      %s3207 = scalar_lea.vmem [#allocation2], 241
      %v3208 = vld [vmem:[%s3207] ss:$2 sm:$0xff]
      %v3209 = vmax.f32 %v3146, %v3178
      %v3210 = vmax.f32 %v3148, %v3180
      %v3211 = vmax.f32 %v3150, %v3182
      %v3212 = vmax.f32 %v3152, %v3184
      %v3213 = vmax.f32 %v3154, %v3186
      %v3214 = vmax.f32 %v3156, %v3188
      %v3215 = vmax.f32 %v3158, %v3190
      %v3216 = vmax.f32 %v3160, %v3192
      %v3217 = vmax.f32 %v3162, %v3194
      %v3218 = vmax.f32 %v3164, %v3196
      %v3219 = vmax.f32 %v3166, %v3198
      %v3220 = vmax.f32 %v3168, %v3200
      %v3221 = vmax.f32 %v3170, %v3202
      %v3222 = vmax.f32 %v3172, %v3204
      %v3223 = vmax.f32 %v3174, %v3206
      %v3224 = vmax.f32 %v3176, %v3208
      %v3225 = vmax.f32 %v3209, %v3210
      %v3226 = vmax.f32 %v3211, %v3212
      %v3227 = vmax.f32 %v3213, %v3214
      %v3228 = vmax.f32 %v3215, %v3216
      %v3229 = vmax.f32 %v3217, %v3218
      %v3230 = vmax.f32 %v3219, %v3220
      %v3231 = vmax.f32 %v3221, %v3222
      %v3232 = vmax.f32 %v3223, %v3224
      %3233 = vst [vmem:[#allocation3] sm:$0xff] 0.0
      %3234 = vst [vmem:[#allocation3 + $0x8] sm:$0xff] 0.0
      %3235 = vst [vmem:[#allocation3 + $0x10] sm:$0x1] 0.0
      %3236 = vst [vmem:[#allocation3 + $0x18] sm:$0xff] 0.0
      %3237 = vst [vmem:[#allocation3 + $0x20] sm:$0xff] 0.0
      %3238 = vst [vmem:[#allocation3 + $0x28] sm:$0x1] 0.0
      %3239 = vst [vmem:[#allocation3 + $0x30] sm:$0xff] 0.0
      %3240 = vst [vmem:[#allocation3 + $0x38] sm:$0xff] 0.0
      %3241 = vst [vmem:[#allocation3 + $0x40] sm:$0x1] 0.0
      %3242 = vst [vmem:[#allocation3 + $0x48] sm:$0xff] 0.0
      %3243 = vst [vmem:[#allocation3 + $0x50] sm:$0xff] 0.0
      %3244 = vst [vmem:[#allocation3 + $0x58] sm:$0x1] 0.0
      %3245 = vst [vmem:[#allocation3 + $0x60] sm:$0xff] 0.0
      %3246 = vst [vmem:[#allocation3 + $0x68] sm:$0xff] 0.0
      %3247 = vst [vmem:[#allocation3 + $0x70] sm:$0x1] 0.0
      %3248 = vst [vmem:[#allocation3 + $0x78] sm:$0xff] 0.0
      %3249 = vst [vmem:[#allocation3 + $0x80] sm:$0xff] 0.0
      %3250 = vst [vmem:[#allocation3 + $0x88] sm:$0x1] 0.0
      %3251 = vst [vmem:[#allocation3 + $0x90] sm:$0xff] 0.0
      %3252 = vst [vmem:[#allocation3 + $0x98] sm:$0xff] 0.0
      %3253 = vst [vmem:[#allocation3 + $0xa0] sm:$0x1] 0.0
      %3254 = vst [vmem:[#allocation3 + $0xa8] sm:$0xff] 0.0
      %3255 = vst [vmem:[#allocation3 + $0xb0] sm:$0xff] 0.0
      %3256 = vst [vmem:[#allocation3 + $0xb8] sm:$0x1] 0.0
      %3257 = vst [vmem:[#allocation3 + $0xc0] sm:$0xff] 0.0
      %3258 = vst [vmem:[#allocation3 + $0xc8] sm:$0xff] 0.0
      %3259 = vst [vmem:[#allocation3 + $0xd0] sm:$0x1] 0.0
      %3260 = vst [vmem:[#allocation3 + $0xd8] sm:$0xff] 0.0
      %3261 = vst [vmem:[#allocation3 + $0xe0] sm:$0xff] 0.0
      %3262 = vst [vmem:[#allocation3 + $0xe8] sm:$0x1] 0.0
      %s3263 = scalar_lea.vmem [#allocation3], 24
      %3264 = vst [vmem:[%s3263 + $0x8] sm:$0xff] %v3225
      %3265 = vst [vmem:[%s3263 + $0x20] sm:$0xff] %v3226
      %3266 = vst [vmem:[%s3263 + $0x38] sm:$0xff] %v3227
      %3267 = vst [vmem:[%s3263 + $0x50] sm:$0xff] %v3228
      %3268 = vst [vmem:[%s3263 + $0x68] sm:$0xff] %v3229
      %3269 = vst [vmem:[%s3263 + $0x80] sm:$0xff] %v3230
      %3270 = vst [vmem:[%s3263 + $0x98] sm:$0xff] %v3231
      %3271 = vst [vmem:[%s3263 + $0xb0] sm:$0xff] %v3232
      %v3272 = vld [vmem:[#allocation3 + $0x7] sm:$0xff]
      %v3273 = vld [vmem:[#allocation3 + $0x1f] sm:$0xff]
      %v3274 = vld [vmem:[#allocation3 + $0x37] sm:$0xff]
      %v3275 = vld [vmem:[#allocation3 + $0x4f] sm:$0xff]
      %v3276 = vld [vmem:[#allocation3 + $0x67] sm:$0xff]
      %v3277 = vld [vmem:[#allocation3 + $0x7f] sm:$0xff]
      %v3278 = vld [vmem:[#allocation3 + $0x97] sm:$0xff]
      %v3279 = vld [vmem:[#allocation3 + $0xaf] sm:$0xff]
      %v3280 = vpack.c.bf16 %v3273, %v3272
      %v3281 = vpack.c.bf16 %v3275, %v3274
      %v3282 = vpack.c.bf16 %v3277, %v3276
      %v3283 = vpack.c.bf16 %v3279, %v3278
      %v3284 = vld [vmem:[%s3] sm:$0xf]
      %v3285 = vld [vmem:[%s3 + $0x4] sm:$0xf]
      %v3286 = vld [vmem:[%s3 + $0x8] sm:$0xf]
      %v3287 = vld [vmem:[%s3 + $0xc] sm:$0xf]
      %v3288 = vld [vmem:[%s3 + $0x10] sm:$0xf]
      %v3289 = vld [vmem:[%s3 + $0x14] sm:$0xf]
      %v3290 = vld [vmem:[%s3 + $0x18] sm:$0xf]
      %v3291 = vld [vmem:[%s3 + $0x1c] sm:$0xf]
      %v3292 = vld [vmem:[%s3 + $0x20] sm:$0xf]
      %v3293 = vld [vmem:[%s3 + $0x24] sm:$0xf]
      %v3294 = vld [vmem:[%s3 + $0x28] sm:$0xf]
      %v3295 = vld [vmem:[%s3 + $0x2c] sm:$0xf]
      %v3296 = vld [vmem:[%s3 + $0x30] sm:$0xf]
      %v3297 = vld [vmem:[%s3 + $0x34] sm:$0xf]
      %v3298 = vld [vmem:[%s3 + $0x38] sm:$0xf]
      %v3299 = vld [vmem:[%s3 + $0x3c] sm:$0xf]
      %v3300 = vld [vmem:[#allocation3 + $0x8] sm:$0xff]
      %v3301 = vld [vmem:[#allocation3 + $0x20] sm:$0xff]
      %v3302 = vld [vmem:[#allocation3 + $0x38] sm:$0xff]
      %v3303 = vld [vmem:[#allocation3 + $0x50] sm:$0xff]
      %v3304 = vld [vmem:[#allocation3 + $0x68] sm:$0xff]
      %v3305 = vld [vmem:[#allocation3 + $0x80] sm:$0xff]
      %v3306 = vld [vmem:[#allocation3 + $0x98] sm:$0xff]
      %v3307 = vld [vmem:[#allocation3 + $0xb0] sm:$0xff]
      %v3308 = vpack.c.bf16 %v3301, %v3300
      %v3309 = vpack.c.bf16 %v3303, %v3302
      %v3310 = vpack.c.bf16 %v3305, %v3304
      %v3311 = vpack.c.bf16 %v3307, %v3306
      %s3312 = scalar_lea.vmem %s3, 64
      %v3313 = vld [vmem:[%s3312] sm:$0xf]
      %v3314 = vld [vmem:[%s3312 + $0x4] sm:$0xf]
      %v3315 = vld [vmem:[%s3312 + $0x8] sm:$0xf]
      %v3316 = vld [vmem:[%s3312 + $0xc] sm:$0xf]
      %v3317 = vld [vmem:[%s3312 + $0x10] sm:$0xf]
      %v3318 = vld [vmem:[%s3312 + $0x14] sm:$0xf]
      %v3319 = vld [vmem:[%s3312 + $0x18] sm:$0xf]
      %v3320 = vld [vmem:[%s3312 + $0x1c] sm:$0xf]
      %v3321 = vld [vmem:[%s3312 + $0x20] sm:$0xf]
      %v3322 = vld [vmem:[%s3312 + $0x24] sm:$0xf]
      %v3323 = vld [vmem:[%s3312 + $0x28] sm:$0xf]
      %v3324 = vld [vmem:[%s3312 + $0x2c] sm:$0xf]
      %v3325 = vld [vmem:[%s3312 + $0x30] sm:$0xf]
      %v3326 = vld [vmem:[%s3312 + $0x34] sm:$0xf]
      %v3327 = vld [vmem:[%s3312 + $0x38] sm:$0xf]
      %v3328 = vld [vmem:[%s3312 + $0x3c] sm:$0xf]
      %v3345 = vunpack.c.l.b16 %v3313
      %v3346 = vunpack.c.l.b16 %v3314
      %v3347 = vunpack.c.l.b16 %v3315
      %v3348 = vunpack.c.l.b16 %v3316
      %v3349 = vunpack.c.l.b16 %v3317
      %v3350 = vunpack.c.l.b16 %v3318
      %v3351 = vunpack.c.l.b16 %v3319
      %v3352 = vunpack.c.l.b16 %v3320
      %v3353 = vunpack.c.l.b16 %v3321
      %v3354 = vunpack.c.l.b16 %v3322
      %v3355 = vunpack.c.l.b16 %v3323
      %v3356 = vunpack.c.l.b16 %v3324
      %v3357 = vunpack.c.l.b16 %v3325
      %v3358 = vunpack.c.l.b16 %v3326
      %v3359 = vunpack.c.l.b16 %v3327
      %v3360 = vunpack.c.l.b16 %v3328
      %v3361 = vpack.c.b16 %v3346, %v3345
      %v3362 = vpack.c.b16 %v3348, %v3347
      %v3363 = vpack.c.b16 %v3350, %v3349
      %v3364 = vpack.c.b16 %v3352, %v3351
      %v3365 = vpack.c.b16 %v3354, %v3353
      %v3366 = vpack.c.b16 %v3356, %v3355
      %v3367 = vpack.c.b16 %v3358, %v3357
      %v3368 = vpack.c.b16 %v3360, %v3359
      %3377 = vmatprep.subr.bf16.mxu0 0
      %3378 = vmatpush1.bf16.msra.mxu0 %v3368
      %3379 = vmatprep.subr.bf16.mxu0 0
      %3380 = vmatpush1.bf16.msra.mxu0 %v3367
      %3381 = vmatprep.subr.bf16.mxu0 0
      %3382 = vmatpush1.bf16.msra.mxu0 %v3366
      %3383 = vmatprep.subr.bf16.mxu0 0
      %3384 = vmatpush1.bf16.msra.mxu0 %v3365
      %3385 = vmatprep.subr.bf16.mxu0 0
      %3386 = vmatpush1.bf16.msra.mxu0 %v3364
      %3387 = vmatprep.subr.bf16.mxu0 0
      %3388 = vmatpush1.bf16.msra.mxu0 %v3363
      %3389 = vmatprep.subr.bf16.mxu0 0
      %3390 = vmatpush1.bf16.msra.mxu0 %v3362
      %3391 = vmatprep.subr.bf16.mxu0 0
      %3392 = vmatpush1.bf16.msra.mxu0 %v3361
      %3393 = vmatprep.subr.bf16.mxu0 0
      %3394 = vmatpush2.bf16.msra.mxu0 0
      %3395 = vmatprep.subr.bf16.mxu0 0
      %3396 = vmatpush2.bf16.msra.mxu0 0
      %3397 = vmatprep.subr.bf16.mxu0 0
      %3398 = vmatpush2.bf16.msra.mxu0 0
      %3399 = vmatprep.subr.bf16.mxu0 0
      %3400 = vmatpush2.bf16.msra.mxu0 0
      %3401 = vmatprep.subr.bf16.mxu0 0
      %3402 = vmatpush2.bf16.msra.mxu0 0
      %3403 = vmatprep.subr.bf16.mxu0 0
      %3404 = vmatpush2.bf16.msra.mxu0 0
      %3405 = vmatprep.subr.bf16.mxu0 0
      %3406 = vmatpush2.bf16.msra.mxu0 0
      %3407 = vmatprep.subr.bf16.mxu0 0
      %3408 = vmatpush2.bf16.msra.mxu0 0
      %3409 = vmatprep.mubr.bf16.mxu0 0
      %3410 = vmatmul.mubr.bf16.gmra.mxu0 %v3308
      %v3411 = vpop.f32.mrf.mxu0
      %v3412 = vadd.f32 0.0, %v3411
      %v3413 = vpop.f32.mrf.mxu0
      %v3414 = vpop.f32.mrf.mxu0
      %v3415 = vadd.f32 0.0, %v3414
      %v3416 = vpop.f32.mrf.mxu0
      %3417 = vmatprep.mubr.bf16.mxu0 0
      %3418 = vmatmul.mubr.bf16.gmra.mxu0 %v3309
      %v3419 = vpop.f32.mrf.mxu0
      %v3420 = vadd.f32 0.0, %v3419
      %v3421 = vpop.f32.mrf.mxu0
      %v3422 = vpop.f32.mrf.mxu0
      %v3423 = vadd.f32 0.0, %v3422
      %v3424 = vpop.f32.mrf.mxu0
      %3425 = vmatprep.mubr.bf16.mxu0 0
      %3426 = vmatmul.mubr.bf16.gmra.mxu0 %v3310
      %v3427 = vpop.f32.mrf.mxu0
      %v3428 = vadd.f32 0.0, %v3427
      %v3429 = vpop.f32.mrf.mxu0
      %v3430 = vpop.f32.mrf.mxu0
      %v3431 = vadd.f32 0.0, %v3430
      %v3432 = vpop.f32.mrf.mxu0
      %3433 = vmatprep.mubr.bf16.mxu0 0
      %3434 = vmatmul.mubr.bf16.gmra.mxu0 %v3311
      %v3435 = vpop.f32.mrf.mxu0
      %v3436 = vadd.f32 0.0, %v3435
      %v3437 = vpop.f32.mrf.mxu0
      %v3438 = vpop.f32.mrf.mxu0
      %v3439 = vadd.f32 0.0, %v3438
      %v3440 = vpop.f32.mrf.mxu0
      %3441 = vdwg.mxu0
      %v3458 = vunpack.c.l.b16 %v3284
      %v3459 = vunpack.c.l.b16 %v3285
      %v3460 = vunpack.c.l.b16 %v3286
      %v3461 = vunpack.c.l.b16 %v3287
      %v3462 = vunpack.c.l.b16 %v3288
      %v3463 = vunpack.c.l.b16 %v3289
      %v3464 = vunpack.c.l.b16 %v3290
      %v3465 = vunpack.c.l.b16 %v3291
      %v3466 = vunpack.c.l.b16 %v3292
      %v3467 = vunpack.c.l.b16 %v3293
      %v3468 = vunpack.c.l.b16 %v3294
      %v3469 = vunpack.c.l.b16 %v3295
      %v3470 = vunpack.c.l.b16 %v3296
      %v3471 = vunpack.c.l.b16 %v3297
      %v3472 = vunpack.c.l.b16 %v3298
      %v3473 = vunpack.c.l.b16 %v3299
      %v3474 = vpack.c.b16 %v3459, %v3458
      %v3475 = vpack.c.b16 %v3461, %v3460
      %v3476 = vpack.c.b16 %v3463, %v3462
      %v3477 = vpack.c.b16 %v3465, %v3464
      %v3478 = vpack.c.b16 %v3467, %v3466
      %v3479 = vpack.c.b16 %v3469, %v3468
      %v3480 = vpack.c.b16 %v3471, %v3470
      %v3481 = vpack.c.b16 %v3473, %v3472
      %3490 = vmatprep.subr.bf16.mxu0 0
      %3491 = vmatpush1.bf16.msra.mxu0 %v3481
      %3492 = vmatprep.subr.bf16.mxu0 0
      %3493 = vmatpush1.bf16.msra.mxu0 %v3480
      %3494 = vmatprep.subr.bf16.mxu0 0
      %3495 = vmatpush1.bf16.msra.mxu0 %v3479
      %3496 = vmatprep.subr.bf16.mxu0 0
      %3497 = vmatpush1.bf16.msra.mxu0 %v3478
      %3498 = vmatprep.subr.bf16.mxu0 0
      %3499 = vmatpush1.bf16.msra.mxu0 %v3477
      %3500 = vmatprep.subr.bf16.mxu0 0
      %3501 = vmatpush1.bf16.msra.mxu0 %v3476
      %3502 = vmatprep.subr.bf16.mxu0 0
      %3503 = vmatpush1.bf16.msra.mxu0 %v3475
      %3504 = vmatprep.subr.bf16.mxu0 0
      %3505 = vmatpush1.bf16.msra.mxu0 %v3474
      %3506 = vmatprep.subr.bf16.mxu0 0
      %3507 = vmatpush2.bf16.msra.mxu0 0
      %3508 = vmatprep.subr.bf16.mxu0 0
      %3509 = vmatpush2.bf16.msra.mxu0 0
      %3510 = vmatprep.subr.bf16.mxu0 0
      %3511 = vmatpush2.bf16.msra.mxu0 0
      %3512 = vmatprep.subr.bf16.mxu0 0
      %3513 = vmatpush2.bf16.msra.mxu0 0
      %3514 = vmatprep.subr.bf16.mxu0 0
      %3515 = vmatpush2.bf16.msra.mxu0 0
      %3516 = vmatprep.subr.bf16.mxu0 0
      %3517 = vmatpush2.bf16.msra.mxu0 0
      %3518 = vmatprep.subr.bf16.mxu0 0
      %3519 = vmatpush2.bf16.msra.mxu0 0
      %3520 = vmatprep.subr.bf16.mxu0 0
      %3521 = vmatpush2.bf16.msra.mxu0 0
      %3522 = vmatprep.mubr.bf16.mxu0 0
      %3523 = vmatmul.mubr.bf16.gmra.mxu0 %v3280
      %v3524 = vpop.f32.mrf.mxu0
      %v3525 = vadd.f32 %v3412, %v3524
      %v3526 = vpop.f32.mrf.mxu0
      %v3527 = vpop.f32.mrf.mxu0
      %v3528 = vadd.f32 %v3415, %v3527
      %v3529 = vpop.f32.mrf.mxu0
      %3530 = vmatprep.mubr.bf16.mxu0 0
      %3531 = vmatmul.mubr.bf16.gmra.mxu0 %v3281
      %v3532 = vpop.f32.mrf.mxu0
      %v3533 = vadd.f32 %v3420, %v3532
      %v3534 = vpop.f32.mrf.mxu0
      %v3535 = vpop.f32.mrf.mxu0
      %v3536 = vadd.f32 %v3423, %v3535
      %v3537 = vpop.f32.mrf.mxu0
      %3538 = vmatprep.mubr.bf16.mxu0 0
      %3539 = vmatmul.mubr.bf16.gmra.mxu0 %v3282
      %v3540 = vpop.f32.mrf.mxu0
      %v3541 = vadd.f32 %v3428, %v3540
      %v3542 = vpop.f32.mrf.mxu0
      %v3543 = vpop.f32.mrf.mxu0
      %v3544 = vadd.f32 %v3431, %v3543
      %v3545 = vpop.f32.mrf.mxu0
      %3546 = vmatprep.mubr.bf16.mxu0 0
      %3547 = vmatmul.mubr.bf16.gmra.mxu0 %v3283
      %v3548 = vpop.f32.mrf.mxu0
      %v3549 = vadd.f32 %v3436, %v3548
      %v3550 = vpop.f32.mrf.mxu0
      %v3551 = vpop.f32.mrf.mxu0
      %v3552 = vadd.f32 %v3439, %v3551
      %v3553 = vpop.f32.mrf.mxu0
      %3554 = vdwg.mxu0
      %v3555 = vld [vmem:[#allocation3 + $0x9] sm:$0xff]
      %v3556 = vld [vmem:[#allocation3 + $0x21] sm:$0xff]
      %v3557 = vld [vmem:[#allocation3 + $0x39] sm:$0xff]
      %v3558 = vld [vmem:[#allocation3 + $0x51] sm:$0xff]
      %v3559 = vld [vmem:[#allocation3 + $0x69] sm:$0xff]
      %v3560 = vld [vmem:[#allocation3 + $0x81] sm:$0xff]
      %v3561 = vld [vmem:[#allocation3 + $0x99] sm:$0xff]
      %v3562 = vld [vmem:[#allocation3 + $0xb1] sm:$0xff]
      %v3563 = vpack.c.bf16 %v3556, %v3555
      %v3564 = vpack.c.bf16 %v3558, %v3557
      %v3565 = vpack.c.bf16 %v3560, %v3559
      %v3566 = vpack.c.bf16 %v3562, %v3561
      %s3567 = scalar_lea.vmem %s3, 128
      %v3568 = vld [vmem:[%s3567] sm:$0xf]
      %v3569 = vld [vmem:[%s3567 + $0x4] sm:$0xf]
      %v3570 = vld [vmem:[%s3567 + $0x8] sm:$0xf]
      %v3571 = vld [vmem:[%s3567 + $0xc] sm:$0xf]
      %v3572 = vld [vmem:[%s3567 + $0x10] sm:$0xf]
      %v3573 = vld [vmem:[%s3567 + $0x14] sm:$0xf]
      %v3574 = vld [vmem:[%s3567 + $0x18] sm:$0xf]
      %v3575 = vld [vmem:[%s3567 + $0x1c] sm:$0xf]
      %v3576 = vld [vmem:[%s3567 + $0x20] sm:$0xf]
      %v3577 = vld [vmem:[%s3567 + $0x24] sm:$0xf]
      %v3578 = vld [vmem:[%s3567 + $0x28] sm:$0xf]
      %v3579 = vld [vmem:[%s3567 + $0x2c] sm:$0xf]
      %v3580 = vld [vmem:[%s3567 + $0x30] sm:$0xf]
      %v3581 = vld [vmem:[%s3567 + $0x34] sm:$0xf]
      %v3582 = vld [vmem:[%s3567 + $0x38] sm:$0xf]
      %v3583 = vld [vmem:[%s3567 + $0x3c] sm:$0xf]
      %v3600 = vunpack.c.l.b16 %v3568
      %v3601 = vunpack.c.l.b16 %v3569
      %v3602 = vunpack.c.l.b16 %v3570
      %v3603 = vunpack.c.l.b16 %v3571
      %v3604 = vunpack.c.l.b16 %v3572
      %v3605 = vunpack.c.l.b16 %v3573
      %v3606 = vunpack.c.l.b16 %v3574
      %v3607 = vunpack.c.l.b16 %v3575
      %v3608 = vunpack.c.l.b16 %v3576
      %v3609 = vunpack.c.l.b16 %v3577
      %v3610 = vunpack.c.l.b16 %v3578
      %v3611 = vunpack.c.l.b16 %v3579
      %v3612 = vunpack.c.l.b16 %v3580
      %v3613 = vunpack.c.l.b16 %v3581
      %v3614 = vunpack.c.l.b16 %v3582
      %v3615 = vunpack.c.l.b16 %v3583
      %v3616 = vpack.c.b16 %v3601, %v3600
      %v3617 = vpack.c.b16 %v3603, %v3602
      %v3618 = vpack.c.b16 %v3605, %v3604
      %v3619 = vpack.c.b16 %v3607, %v3606
      %v3620 = vpack.c.b16 %v3609, %v3608
      %v3621 = vpack.c.b16 %v3611, %v3610
      %v3622 = vpack.c.b16 %v3613, %v3612
      %v3623 = vpack.c.b16 %v3615, %v3614
      %3632 = vmatprep.subr.bf16.mxu0 0
      %3633 = vmatpush1.bf16.msra.mxu0 %v3623
      %3634 = vmatprep.subr.bf16.mxu0 0
      %3635 = vmatpush1.bf16.msra.mxu0 %v3622
      %3636 = vmatprep.subr.bf16.mxu0 0
      %3637 = vmatpush1.bf16.msra.mxu0 %v3621
      %3638 = vmatprep.subr.bf16.mxu0 0
      %3639 = vmatpush1.bf16.msra.mxu0 %v3620
      %3640 = vmatprep.subr.bf16.mxu0 0
      %3641 = vmatpush1.bf16.msra.mxu0 %v3619
      %3642 = vmatprep.subr.bf16.mxu0 0
      %3643 = vmatpush1.bf16.msra.mxu0 %v3618
      %3644 = vmatprep.subr.bf16.mxu0 0
      %3645 = vmatpush1.bf16.msra.mxu0 %v3617
      %3646 = vmatprep.subr.bf16.mxu0 0
      %3647 = vmatpush1.bf16.msra.mxu0 %v3616
      %3648 = vmatprep.subr.bf16.mxu0 0
      %3649 = vmatpush2.bf16.msra.mxu0 0
      %3650 = vmatprep.subr.bf16.mxu0 0
      %3651 = vmatpush2.bf16.msra.mxu0 0
      %3652 = vmatprep.subr.bf16.mxu0 0
      %3653 = vmatpush2.bf16.msra.mxu0 0
      %3654 = vmatprep.subr.bf16.mxu0 0
      %3655 = vmatpush2.bf16.msra.mxu0 0
      %3656 = vmatprep.subr.bf16.mxu0 0
      %3657 = vmatpush2.bf16.msra.mxu0 0
      %3658 = vmatprep.subr.bf16.mxu0 0
      %3659 = vmatpush2.bf16.msra.mxu0 0
      %3660 = vmatprep.subr.bf16.mxu0 0
      %3661 = vmatpush2.bf16.msra.mxu0 0
      %3662 = vmatprep.subr.bf16.mxu0 0
      %3663 = vmatpush2.bf16.msra.mxu0 0
      %3664 = vmatprep.mubr.bf16.mxu0 0
      %3665 = vmatmul.mubr.bf16.gmra.mxu0 %v3563
      %v3666 = vpop.f32.mrf.mxu0
      %v3667 = vadd.f32 0.0, %v3666
      %v3668 = vpop.f32.mrf.mxu0
      %v3669 = vpop.f32.mrf.mxu0
      %v3670 = vadd.f32 0.0, %v3669
      %v3671 = vpop.f32.mrf.mxu0
      %3672 = vmatprep.mubr.bf16.mxu0 0
      %3673 = vmatmul.mubr.bf16.gmra.mxu0 %v3564
      %v3674 = vpop.f32.mrf.mxu0
      %v3675 = vadd.f32 0.0, %v3674
      %v3676 = vpop.f32.mrf.mxu0
      %v3677 = vpop.f32.mrf.mxu0
      %v3678 = vadd.f32 0.0, %v3677
      %v3679 = vpop.f32.mrf.mxu0
      %3680 = vmatprep.mubr.bf16.mxu0 0
      %3681 = vmatmul.mubr.bf16.gmra.mxu0 %v3565
      %v3682 = vpop.f32.mrf.mxu0
      %v3683 = vadd.f32 0.0, %v3682
      %v3684 = vpop.f32.mrf.mxu0
      %v3685 = vpop.f32.mrf.mxu0
      %v3686 = vadd.f32 0.0, %v3685
      %v3687 = vpop.f32.mrf.mxu0
      %3688 = vmatprep.mubr.bf16.mxu0 0
      %3689 = vmatmul.mubr.bf16.gmra.mxu0 %v3566
      %v3690 = vpop.f32.mrf.mxu0
      %v3691 = vadd.f32 0.0, %v3690
      %v3692 = vpop.f32.mrf.mxu0
      %v3693 = vpop.f32.mrf.mxu0
      %v3694 = vadd.f32 0.0, %v3693
      %v3695 = vpop.f32.mrf.mxu0
      %3696 = vdwg.mxu0
      %v3697 = vadd.f32 %v3525, %v3667
      %v3698 = vadd.f32 %v3528, %v3670
      %v3699 = vadd.f32 %v3533, %v3675
      %v3700 = vadd.f32 %v3536, %v3678
      %v3701 = vadd.f32 %v3541, %v3683
      %v3702 = vadd.f32 %v3544, %v3686
      %v3703 = vadd.f32 %v3549, %v3691
      %v3704 = vadd.f32 %v3552, %v3694
      %v3705 = vld [vmem:[%s3263 + $0x7] sm:$0xff]
      %v3706 = vld [vmem:[%s3263 + $0x1f] sm:$0xff]
      %v3707 = vld [vmem:[%s3263 + $0x37] sm:$0xff]
      %v3708 = vld [vmem:[%s3263 + $0x4f] sm:$0xff]
      %v3709 = vld [vmem:[%s3263 + $0x67] sm:$0xff]
      %v3710 = vld [vmem:[%s3263 + $0x7f] sm:$0xff]
      %v3711 = vld [vmem:[%s3263 + $0x97] sm:$0xff]
      %v3712 = vld [vmem:[%s3263 + $0xaf] sm:$0xff]
      %v3713 = vpack.c.bf16 %v3706, %v3705
      %v3714 = vpack.c.bf16 %v3708, %v3707
      %v3715 = vpack.c.bf16 %v3710, %v3709
      %v3716 = vpack.c.bf16 %v3712, %v3711
      %s3717 = scalar_lea.vmem %s3, 192
      %v3718 = vld [vmem:[%s3717] sm:$0xf]
      %v3719 = vld [vmem:[%s3717 + $0x4] sm:$0xf]
      %v3720 = vld [vmem:[%s3717 + $0x8] sm:$0xf]
      %v3721 = vld [vmem:[%s3717 + $0xc] sm:$0xf]
      %v3722 = vld [vmem:[%s3717 + $0x10] sm:$0xf]
      %v3723 = vld [vmem:[%s3717 + $0x14] sm:$0xf]
      %v3724 = vld [vmem:[%s3717 + $0x18] sm:$0xf]
      %v3725 = vld [vmem:[%s3717 + $0x1c] sm:$0xf]
      %v3726 = vld [vmem:[%s3717 + $0x20] sm:$0xf]
      %v3727 = vld [vmem:[%s3717 + $0x24] sm:$0xf]
      %v3728 = vld [vmem:[%s3717 + $0x28] sm:$0xf]
      %v3729 = vld [vmem:[%s3717 + $0x2c] sm:$0xf]
      %v3730 = vld [vmem:[%s3717 + $0x30] sm:$0xf]
      %v3731 = vld [vmem:[%s3717 + $0x34] sm:$0xf]
      %v3732 = vld [vmem:[%s3717 + $0x38] sm:$0xf]
      %v3733 = vld [vmem:[%s3717 + $0x3c] sm:$0xf]
      %v3750 = vunpack.c.l.b16 %v3718
      %v3751 = vunpack.c.l.b16 %v3719
      %v3752 = vunpack.c.l.b16 %v3720
      %v3753 = vunpack.c.l.b16 %v3721
      %v3754 = vunpack.c.l.b16 %v3722
      %v3755 = vunpack.c.l.b16 %v3723
      %v3756 = vunpack.c.l.b16 %v3724
      %v3757 = vunpack.c.l.b16 %v3725
      %v3758 = vunpack.c.l.b16 %v3726
      %v3759 = vunpack.c.l.b16 %v3727
      %v3760 = vunpack.c.l.b16 %v3728
      %v3761 = vunpack.c.l.b16 %v3729
      %v3762 = vunpack.c.l.b16 %v3730
      %v3763 = vunpack.c.l.b16 %v3731
      %v3764 = vunpack.c.l.b16 %v3732
      %v3765 = vunpack.c.l.b16 %v3733
      %v3766 = vpack.c.b16 %v3751, %v3750
      %v3767 = vpack.c.b16 %v3753, %v3752
      %v3768 = vpack.c.b16 %v3755, %v3754
      %v3769 = vpack.c.b16 %v3757, %v3756
      %v3770 = vpack.c.b16 %v3759, %v3758
      %v3771 = vpack.c.b16 %v3761, %v3760
      %v3772 = vpack.c.b16 %v3763, %v3762
      %v3773 = vpack.c.b16 %v3765, %v3764
      %3782 = vmatprep.subr.bf16.mxu0 0
      %3783 = vmatpush1.bf16.msra.mxu0 %v3773
      %3784 = vmatprep.subr.bf16.mxu0 0
      %3785 = vmatpush1.bf16.msra.mxu0 %v3772
      %3786 = vmatprep.subr.bf16.mxu0 0
      %3787 = vmatpush1.bf16.msra.mxu0 %v3771
      %3788 = vmatprep.subr.bf16.mxu0 0
      %3789 = vmatpush1.bf16.msra.mxu0 %v3770
      %3790 = vmatprep.subr.bf16.mxu0 0
      %3791 = vmatpush1.bf16.msra.mxu0 %v3769
      %3792 = vmatprep.subr.bf16.mxu0 0
      %3793 = vmatpush1.bf16.msra.mxu0 %v3768
      %3794 = vmatprep.subr.bf16.mxu0 0
      %3795 = vmatpush1.bf16.msra.mxu0 %v3767
      %3796 = vmatprep.subr.bf16.mxu0 0
      %3797 = vmatpush1.bf16.msra.mxu0 %v3766
      %3798 = vmatprep.subr.bf16.mxu0 0
      %3799 = vmatpush2.bf16.msra.mxu0 0
      %3800 = vmatprep.subr.bf16.mxu0 0
      %3801 = vmatpush2.bf16.msra.mxu0 0
      %3802 = vmatprep.subr.bf16.mxu0 0
      %3803 = vmatpush2.bf16.msra.mxu0 0
      %3804 = vmatprep.subr.bf16.mxu0 0
      %3805 = vmatpush2.bf16.msra.mxu0 0
      %3806 = vmatprep.subr.bf16.mxu0 0
      %3807 = vmatpush2.bf16.msra.mxu0 0
      %3808 = vmatprep.subr.bf16.mxu0 0
      %3809 = vmatpush2.bf16.msra.mxu0 0
      %3810 = vmatprep.subr.bf16.mxu0 0
      %3811 = vmatpush2.bf16.msra.mxu0 0
      %3812 = vmatprep.subr.bf16.mxu0 0
      %3813 = vmatpush2.bf16.msra.mxu0 0
      %3814 = vmatprep.mubr.bf16.mxu0 0
      %3815 = vmatmul.mubr.bf16.gmra.mxu0 %v3713
      %v3816 = vpop.f32.mrf.mxu0
      %v3817 = vadd.f32 0.0, %v3816
      %v3818 = vpop.f32.mrf.mxu0
      %v3819 = vpop.f32.mrf.mxu0
      %v3820 = vadd.f32 0.0, %v3819
      %v3821 = vpop.f32.mrf.mxu0
      %3822 = vmatprep.mubr.bf16.mxu0 0
      %3823 = vmatmul.mubr.bf16.gmra.mxu0 %v3714
      %v3824 = vpop.f32.mrf.mxu0
      %v3825 = vadd.f32 0.0, %v3824
      %v3826 = vpop.f32.mrf.mxu0
      %v3827 = vpop.f32.mrf.mxu0
      %v3828 = vadd.f32 0.0, %v3827
      %v3829 = vpop.f32.mrf.mxu0
      %3830 = vmatprep.mubr.bf16.mxu0 0
      %3831 = vmatmul.mubr.bf16.gmra.mxu0 %v3715
      %v3832 = vpop.f32.mrf.mxu0
      %v3833 = vadd.f32 0.0, %v3832
      %v3834 = vpop.f32.mrf.mxu0
      %v3835 = vpop.f32.mrf.mxu0
      %v3836 = vadd.f32 0.0, %v3835
      %v3837 = vpop.f32.mrf.mxu0
      %3838 = vmatprep.mubr.bf16.mxu0 0
      %3839 = vmatmul.mubr.bf16.gmra.mxu0 %v3716
      %v3840 = vpop.f32.mrf.mxu0
      %v3841 = vadd.f32 0.0, %v3840
      %v3842 = vpop.f32.mrf.mxu0
      %v3843 = vpop.f32.mrf.mxu0
      %v3844 = vadd.f32 0.0, %v3843
      %v3845 = vpop.f32.mrf.mxu0
      %3846 = vdwg.mxu0
      %v3847 = vadd.f32 %v3697, %v3817
      %v3848 = vadd.f32 %v3698, %v3820
      %v3849 = vadd.f32 %v3699, %v3825
      %v3850 = vadd.f32 %v3700, %v3828
      %v3851 = vadd.f32 %v3701, %v3833
      %v3852 = vadd.f32 %v3702, %v3836
      %v3853 = vadd.f32 %v3703, %v3841
      %v3854 = vadd.f32 %v3704, %v3844
      %v3855 = vld [vmem:[%s3263 + $0x8] sm:$0xff]
      %v3856 = vld [vmem:[%s3263 + $0x20] sm:$0xff]
      %v3857 = vld [vmem:[%s3263 + $0x38] sm:$0xff]
      %v3858 = vld [vmem:[%s3263 + $0x50] sm:$0xff]
      %v3859 = vld [vmem:[%s3263 + $0x68] sm:$0xff]
      %v3860 = vld [vmem:[%s3263 + $0x80] sm:$0xff]
      %v3861 = vld [vmem:[%s3263 + $0x98] sm:$0xff]
      %v3862 = vld [vmem:[%s3263 + $0xb0] sm:$0xff]
      %v3863 = vpack.c.bf16 %v3856, %v3855
      %v3864 = vpack.c.bf16 %v3858, %v3857
      %v3865 = vpack.c.bf16 %v3860, %v3859
      %v3866 = vpack.c.bf16 %v3862, %v3861
      %s3867 = scalar_lea.vmem %s3, 256
      %v3868 = vld [vmem:[%s3867] sm:$0xf]
      %v3869 = vld [vmem:[%s3867 + $0x4] sm:$0xf]
      %v3870 = vld [vmem:[%s3867 + $0x8] sm:$0xf]
      %v3871 = vld [vmem:[%s3867 + $0xc] sm:$0xf]
      %v3872 = vld [vmem:[%s3867 + $0x10] sm:$0xf]
      %v3873 = vld [vmem:[%s3867 + $0x14] sm:$0xf]
      %v3874 = vld [vmem:[%s3867 + $0x18] sm:$0xf]
      %v3875 = vld [vmem:[%s3867 + $0x1c] sm:$0xf]
      %v3876 = vld [vmem:[%s3867 + $0x20] sm:$0xf]
      %v3877 = vld [vmem:[%s3867 + $0x24] sm:$0xf]
      %v3878 = vld [vmem:[%s3867 + $0x28] sm:$0xf]
      %v3879 = vld [vmem:[%s3867 + $0x2c] sm:$0xf]
      %v3880 = vld [vmem:[%s3867 + $0x30] sm:$0xf]
      %v3881 = vld [vmem:[%s3867 + $0x34] sm:$0xf]
      %v3882 = vld [vmem:[%s3867 + $0x38] sm:$0xf]
      %v3883 = vld [vmem:[%s3867 + $0x3c] sm:$0xf]
      %v3900 = vunpack.c.l.b16 %v3868
      %v3901 = vunpack.c.l.b16 %v3869
      %v3902 = vunpack.c.l.b16 %v3870
      %v3903 = vunpack.c.l.b16 %v3871
      %v3904 = vunpack.c.l.b16 %v3872
      %v3905 = vunpack.c.l.b16 %v3873
      %v3906 = vunpack.c.l.b16 %v3874
      %v3907 = vunpack.c.l.b16 %v3875
      %v3908 = vunpack.c.l.b16 %v3876
      %v3909 = vunpack.c.l.b16 %v3877
      %v3910 = vunpack.c.l.b16 %v3878
      %v3911 = vunpack.c.l.b16 %v3879
      %v3912 = vunpack.c.l.b16 %v3880
      %v3913 = vunpack.c.l.b16 %v3881
      %v3914 = vunpack.c.l.b16 %v3882
      %v3915 = vunpack.c.l.b16 %v3883
      %v3916 = vpack.c.b16 %v3901, %v3900
      %v3917 = vpack.c.b16 %v3903, %v3902
      %v3918 = vpack.c.b16 %v3905, %v3904
      %v3919 = vpack.c.b16 %v3907, %v3906
      %v3920 = vpack.c.b16 %v3909, %v3908
      %v3921 = vpack.c.b16 %v3911, %v3910
      %v3922 = vpack.c.b16 %v3913, %v3912
      %v3923 = vpack.c.b16 %v3915, %v3914
      %3932 = vmatprep.subr.bf16.mxu0 0
      %3933 = vmatpush1.bf16.msra.mxu0 %v3923
      %3934 = vmatprep.subr.bf16.mxu0 0
      %3935 = vmatpush1.bf16.msra.mxu0 %v3922
      %3936 = vmatprep.subr.bf16.mxu0 0
      %3937 = vmatpush1.bf16.msra.mxu0 %v3921
      %3938 = vmatprep.subr.bf16.mxu0 0
      %3939 = vmatpush1.bf16.msra.mxu0 %v3920
      %3940 = vmatprep.subr.bf16.mxu0 0
      %3941 = vmatpush1.bf16.msra.mxu0 %v3919
      %3942 = vmatprep.subr.bf16.mxu0 0
      %3943 = vmatpush1.bf16.msra.mxu0 %v3918
      %3944 = vmatprep.subr.bf16.mxu0 0
      %3945 = vmatpush1.bf16.msra.mxu0 %v3917
      %3946 = vmatprep.subr.bf16.mxu0 0
      %3947 = vmatpush1.bf16.msra.mxu0 %v3916
      %3948 = vmatprep.subr.bf16.mxu0 0
      %3949 = vmatpush2.bf16.msra.mxu0 0
      %3950 = vmatprep.subr.bf16.mxu0 0
      %3951 = vmatpush2.bf16.msra.mxu0 0
      %3952 = vmatprep.subr.bf16.mxu0 0
      %3953 = vmatpush2.bf16.msra.mxu0 0
      %3954 = vmatprep.subr.bf16.mxu0 0
      %3955 = vmatpush2.bf16.msra.mxu0 0
      %3956 = vmatprep.subr.bf16.mxu0 0
      %3957 = vmatpush2.bf16.msra.mxu0 0
      %3958 = vmatprep.subr.bf16.mxu0 0
      %3959 = vmatpush2.bf16.msra.mxu0 0
      %3960 = vmatprep.subr.bf16.mxu0 0
      %3961 = vmatpush2.bf16.msra.mxu0 0
      %3962 = vmatprep.subr.bf16.mxu0 0
      %3963 = vmatpush2.bf16.msra.mxu0 0
      %3964 = vmatprep.mubr.bf16.mxu0 0
      %3965 = vmatmul.mubr.bf16.gmra.mxu0 %v3863
      %v3966 = vpop.f32.mrf.mxu0
      %v3967 = vadd.f32 0.0, %v3966
      %v3968 = vpop.f32.mrf.mxu0
      %v3969 = vpop.f32.mrf.mxu0
      %v3970 = vadd.f32 0.0, %v3969
      %v3971 = vpop.f32.mrf.mxu0
      %3972 = vmatprep.mubr.bf16.mxu0 0
      %3973 = vmatmul.mubr.bf16.gmra.mxu0 %v3864
      %v3974 = vpop.f32.mrf.mxu0
      %v3975 = vadd.f32 0.0, %v3974
      %v3976 = vpop.f32.mrf.mxu0
      %v3977 = vpop.f32.mrf.mxu0
      %v3978 = vadd.f32 0.0, %v3977
      %v3979 = vpop.f32.mrf.mxu0
      %3980 = vmatprep.mubr.bf16.mxu0 0
      %3981 = vmatmul.mubr.bf16.gmra.mxu0 %v3865
      %v3982 = vpop.f32.mrf.mxu0
      %v3983 = vadd.f32 0.0, %v3982
      %v3984 = vpop.f32.mrf.mxu0
      %v3985 = vpop.f32.mrf.mxu0
      %v3986 = vadd.f32 0.0, %v3985
      %v3987 = vpop.f32.mrf.mxu0
      %3988 = vmatprep.mubr.bf16.mxu0 0
      %3989 = vmatmul.mubr.bf16.gmra.mxu0 %v3866
      %v3990 = vpop.f32.mrf.mxu0
      %v3991 = vadd.f32 0.0, %v3990
      %v3992 = vpop.f32.mrf.mxu0
      %v3993 = vpop.f32.mrf.mxu0
      %v3994 = vadd.f32 0.0, %v3993
      %v3995 = vpop.f32.mrf.mxu0
      %3996 = vdwg.mxu0
      %v3997 = vadd.f32 %v3847, %v3967
      %v3998 = vadd.f32 %v3848, %v3970
      %v3999 = vadd.f32 %v3849, %v3975
      %v4000 = vadd.f32 %v3850, %v3978
      %v4001 = vadd.f32 %v3851, %v3983
      %v4002 = vadd.f32 %v3852, %v3986
      %v4003 = vadd.f32 %v3853, %v3991
      %v4004 = vadd.f32 %v3854, %v3994
      %v4005 = vld [vmem:[%s3263 + $0x9] sm:$0xff]
      %v4006 = vld [vmem:[%s3263 + $0x21] sm:$0xff]
      %v4007 = vld [vmem:[%s3263 + $0x39] sm:$0xff]
      %v4008 = vld [vmem:[%s3263 + $0x51] sm:$0xff]
      %v4009 = vld [vmem:[%s3263 + $0x69] sm:$0xff]
      %v4010 = vld [vmem:[%s3263 + $0x81] sm:$0xff]
      %v4011 = vld [vmem:[%s3263 + $0x99] sm:$0xff]
      %v4012 = vld [vmem:[%s3263 + $0xb1] sm:$0xff]
      %v4013 = vpack.c.bf16 %v4006, %v4005
      %v4014 = vpack.c.bf16 %v4008, %v4007
      %v4015 = vpack.c.bf16 %v4010, %v4009
      %v4016 = vpack.c.bf16 %v4012, %v4011
      %s4017 = scalar_lea.vmem %s3, 320
      %v4018 = vld [vmem:[%s4017] sm:$0xf]
      %v4019 = vld [vmem:[%s4017 + $0x4] sm:$0xf]
      %v4020 = vld [vmem:[%s4017 + $0x8] sm:$0xf]
      %v4021 = vld [vmem:[%s4017 + $0xc] sm:$0xf]
      %v4022 = vld [vmem:[%s4017 + $0x10] sm:$0xf]
      %v4023 = vld [vmem:[%s4017 + $0x14] sm:$0xf]
      %v4024 = vld [vmem:[%s4017 + $0x18] sm:$0xf]
      %v4025 = vld [vmem:[%s4017 + $0x1c] sm:$0xf]
      %v4026 = vld [vmem:[%s4017 + $0x20] sm:$0xf]
      %v4027 = vld [vmem:[%s4017 + $0x24] sm:$0xf]
      %v4028 = vld [vmem:[%s4017 + $0x28] sm:$0xf]
      %v4029 = vld [vmem:[%s4017 + $0x2c] sm:$0xf]
      %v4030 = vld [vmem:[%s4017 + $0x30] sm:$0xf]
      %v4031 = vld [vmem:[%s4017 + $0x34] sm:$0xf]
      %v4032 = vld [vmem:[%s4017 + $0x38] sm:$0xf]
      %v4033 = vld [vmem:[%s4017 + $0x3c] sm:$0xf]
      %v4050 = vunpack.c.l.b16 %v4018
      %v4051 = vunpack.c.l.b16 %v4019
      %v4052 = vunpack.c.l.b16 %v4020
      %v4053 = vunpack.c.l.b16 %v4021
      %v4054 = vunpack.c.l.b16 %v4022
      %v4055 = vunpack.c.l.b16 %v4023
      %v4056 = vunpack.c.l.b16 %v4024
      %v4057 = vunpack.c.l.b16 %v4025
      %v4058 = vunpack.c.l.b16 %v4026
      %v4059 = vunpack.c.l.b16 %v4027
      %v4060 = vunpack.c.l.b16 %v4028
      %v4061 = vunpack.c.l.b16 %v4029
      %v4062 = vunpack.c.l.b16 %v4030
      %v4063 = vunpack.c.l.b16 %v4031
      %v4064 = vunpack.c.l.b16 %v4032
      %v4065 = vunpack.c.l.b16 %v4033
      %v4066 = vpack.c.b16 %v4051, %v4050
      %v4067 = vpack.c.b16 %v4053, %v4052
      %v4068 = vpack.c.b16 %v4055, %v4054
      %v4069 = vpack.c.b16 %v4057, %v4056
      %v4070 = vpack.c.b16 %v4059, %v4058
      %v4071 = vpack.c.b16 %v4061, %v4060
      %v4072 = vpack.c.b16 %v4063, %v4062
      %v4073 = vpack.c.b16 %v4065, %v4064
      %4082 = vmatprep.subr.bf16.mxu0 0
      %4083 = vmatpush1.bf16.msra.mxu0 %v4073
      %4084 = vmatprep.subr.bf16.mxu0 0
      %4085 = vmatpush1.bf16.msra.mxu0 %v4072
      %4086 = vmatprep.subr.bf16.mxu0 0
      %4087 = vmatpush1.bf16.msra.mxu0 %v4071
      %4088 = vmatprep.subr.bf16.mxu0 0
      %4089 = vmatpush1.bf16.msra.mxu0 %v4070
      %4090 = vmatprep.subr.bf16.mxu0 0
      %4091 = vmatpush1.bf16.msra.mxu0 %v4069
      %4092 = vmatprep.subr.bf16.mxu0 0
      %4093 = vmatpush1.bf16.msra.mxu0 %v4068
      %4094 = vmatprep.subr.bf16.mxu0 0
      %4095 = vmatpush1.bf16.msra.mxu0 %v4067
      %4096 = vmatprep.subr.bf16.mxu0 0
      %4097 = vmatpush1.bf16.msra.mxu0 %v4066
      %4098 = vmatprep.subr.bf16.mxu0 0
      %4099 = vmatpush2.bf16.msra.mxu0 0
      %4100 = vmatprep.subr.bf16.mxu0 0
      %4101 = vmatpush2.bf16.msra.mxu0 0
      %4102 = vmatprep.subr.bf16.mxu0 0
      %4103 = vmatpush2.bf16.msra.mxu0 0
      %4104 = vmatprep.subr.bf16.mxu0 0
      %4105 = vmatpush2.bf16.msra.mxu0 0
      %4106 = vmatprep.subr.bf16.mxu0 0
      %4107 = vmatpush2.bf16.msra.mxu0 0
      %4108 = vmatprep.subr.bf16.mxu0 0
      %4109 = vmatpush2.bf16.msra.mxu0 0
      %4110 = vmatprep.subr.bf16.mxu0 0
      %4111 = vmatpush2.bf16.msra.mxu0 0
      %4112 = vmatprep.subr.bf16.mxu0 0
      %4113 = vmatpush2.bf16.msra.mxu0 0
      %4114 = vmatprep.mubr.bf16.mxu0 0
      %4115 = vmatmul.mubr.bf16.gmra.mxu0 %v4013
      %v4116 = vpop.f32.mrf.mxu0
      %v4117 = vadd.f32 0.0, %v4116
      %v4118 = vpop.f32.mrf.mxu0
      %v4119 = vpop.f32.mrf.mxu0
      %v4120 = vadd.f32 0.0, %v4119
      %v4121 = vpop.f32.mrf.mxu0
      %4122 = vmatprep.mubr.bf16.mxu0 0
      %4123 = vmatmul.mubr.bf16.gmra.mxu0 %v4014
      %v4124 = vpop.f32.mrf.mxu0
      %v4125 = vadd.f32 0.0, %v4124
      %v4126 = vpop.f32.mrf.mxu0
      %v4127 = vpop.f32.mrf.mxu0
      %v4128 = vadd.f32 0.0, %v4127
      %v4129 = vpop.f32.mrf.mxu0
      %4130 = vmatprep.mubr.bf16.mxu0 0
      %4131 = vmatmul.mubr.bf16.gmra.mxu0 %v4015
      %v4132 = vpop.f32.mrf.mxu0
      %v4133 = vadd.f32 0.0, %v4132
      %v4134 = vpop.f32.mrf.mxu0
      %v4135 = vpop.f32.mrf.mxu0
      %v4136 = vadd.f32 0.0, %v4135
      %v4137 = vpop.f32.mrf.mxu0
      %4138 = vmatprep.mubr.bf16.mxu0 0
      %4139 = vmatmul.mubr.bf16.gmra.mxu0 %v4016
      %v4140 = vpop.f32.mrf.mxu0
      %v4141 = vadd.f32 0.0, %v4140
      %v4142 = vpop.f32.mrf.mxu0
      %v4143 = vpop.f32.mrf.mxu0
      %v4144 = vadd.f32 0.0, %v4143
      %v4145 = vpop.f32.mrf.mxu0
      %4146 = vdwg.mxu0
      %v4147 = vadd.f32 %v3997, %v4117
      %v4148 = vadd.f32 %v3998, %v4120
      %v4149 = vadd.f32 %v3999, %v4125
      %v4150 = vadd.f32 %v4000, %v4128
      %v4151 = vadd.f32 %v4001, %v4133
      %v4152 = vadd.f32 %v4002, %v4136
      %v4153 = vadd.f32 %v4003, %v4141
      %v4154 = vadd.f32 %v4004, %v4144
      %s4155 = scalar_lea.vmem [#allocation3], 48
      %v4156 = vld [vmem:[%s4155 + $0x7] sm:$0xff]
      %v4157 = vld [vmem:[%s4155 + $0x1f] sm:$0xff]
      %v4158 = vld [vmem:[%s4155 + $0x37] sm:$0xff]
      %v4159 = vld [vmem:[%s4155 + $0x4f] sm:$0xff]
      %v4160 = vld [vmem:[%s4155 + $0x67] sm:$0xff]
      %v4161 = vld [vmem:[%s4155 + $0x7f] sm:$0xff]
      %v4162 = vld [vmem:[%s4155 + $0x97] sm:$0xff]
      %v4163 = vld [vmem:[%s4155 + $0xaf] sm:$0xff]
      %v4164 = vpack.c.bf16 %v4157, %v4156
      %v4165 = vpack.c.bf16 %v4159, %v4158
      %v4166 = vpack.c.bf16 %v4161, %v4160
      %v4167 = vpack.c.bf16 %v4163, %v4162
      %s4168 = scalar_lea.vmem %s3, 384
      %v4169 = vld [vmem:[%s4168] sm:$0xf]
      %v4170 = vld [vmem:[%s4168 + $0x4] sm:$0xf]
      %v4171 = vld [vmem:[%s4168 + $0x8] sm:$0xf]
      %v4172 = vld [vmem:[%s4168 + $0xc] sm:$0xf]
      %v4173 = vld [vmem:[%s4168 + $0x10] sm:$0xf]
      %v4174 = vld [vmem:[%s4168 + $0x14] sm:$0xf]
      %v4175 = vld [vmem:[%s4168 + $0x18] sm:$0xf]
      %v4176 = vld [vmem:[%s4168 + $0x1c] sm:$0xf]
      %v4177 = vld [vmem:[%s4168 + $0x20] sm:$0xf]
      %v4178 = vld [vmem:[%s4168 + $0x24] sm:$0xf]
      %v4179 = vld [vmem:[%s4168 + $0x28] sm:$0xf]
      %v4180 = vld [vmem:[%s4168 + $0x2c] sm:$0xf]
      %v4181 = vld [vmem:[%s4168 + $0x30] sm:$0xf]
      %v4182 = vld [vmem:[%s4168 + $0x34] sm:$0xf]
      %v4183 = vld [vmem:[%s4168 + $0x38] sm:$0xf]
      %v4184 = vld [vmem:[%s4168 + $0x3c] sm:$0xf]
      %v4201 = vunpack.c.l.b16 %v4169
      %v4202 = vunpack.c.l.b16 %v4170
      %v4203 = vunpack.c.l.b16 %v4171
      %v4204 = vunpack.c.l.b16 %v4172
      %v4205 = vunpack.c.l.b16 %v4173
      %v4206 = vunpack.c.l.b16 %v4174
      %v4207 = vunpack.c.l.b16 %v4175
      %v4208 = vunpack.c.l.b16 %v4176
      %v4209 = vunpack.c.l.b16 %v4177
      %v4210 = vunpack.c.l.b16 %v4178
      %v4211 = vunpack.c.l.b16 %v4179
      %v4212 = vunpack.c.l.b16 %v4180
      %v4213 = vunpack.c.l.b16 %v4181
      %v4214 = vunpack.c.l.b16 %v4182
      %v4215 = vunpack.c.l.b16 %v4183
      %v4216 = vunpack.c.l.b16 %v4184
      %v4217 = vpack.c.b16 %v4202, %v4201
      %v4218 = vpack.c.b16 %v4204, %v4203
      %v4219 = vpack.c.b16 %v4206, %v4205
      %v4220 = vpack.c.b16 %v4208, %v4207
      %v4221 = vpack.c.b16 %v4210, %v4209
      %v4222 = vpack.c.b16 %v4212, %v4211
      %v4223 = vpack.c.b16 %v4214, %v4213
      %v4224 = vpack.c.b16 %v4216, %v4215
      %4233 = vmatprep.subr.bf16.mxu0 0
      %4234 = vmatpush1.bf16.msra.mxu0 %v4224
      %4235 = vmatprep.subr.bf16.mxu0 0
      %4236 = vmatpush1.bf16.msra.mxu0 %v4223
      %4237 = vmatprep.subr.bf16.mxu0 0
      %4238 = vmatpush1.bf16.msra.mxu0 %v4222
      %4239 = vmatprep.subr.bf16.mxu0 0
      %4240 = vmatpush1.bf16.msra.mxu0 %v4221
      %4241 = vmatprep.subr.bf16.mxu0 0
      %4242 = vmatpush1.bf16.msra.mxu0 %v4220
      %4243 = vmatprep.subr.bf16.mxu0 0
      %4244 = vmatpush1.bf16.msra.mxu0 %v4219
      %4245 = vmatprep.subr.bf16.mxu0 0
      %4246 = vmatpush1.bf16.msra.mxu0 %v4218
      %4247 = vmatprep.subr.bf16.mxu0 0
      %4248 = vmatpush1.bf16.msra.mxu0 %v4217
      %4249 = vmatprep.subr.bf16.mxu0 0
      %4250 = vmatpush2.bf16.msra.mxu0 0
      %4251 = vmatprep.subr.bf16.mxu0 0
      %4252 = vmatpush2.bf16.msra.mxu0 0
      %4253 = vmatprep.subr.bf16.mxu0 0
      %4254 = vmatpush2.bf16.msra.mxu0 0
      %4255 = vmatprep.subr.bf16.mxu0 0
      %4256 = vmatpush2.bf16.msra.mxu0 0
      %4257 = vmatprep.subr.bf16.mxu0 0
      %4258 = vmatpush2.bf16.msra.mxu0 0
      %4259 = vmatprep.subr.bf16.mxu0 0
      %4260 = vmatpush2.bf16.msra.mxu0 0
      %4261 = vmatprep.subr.bf16.mxu0 0
      %4262 = vmatpush2.bf16.msra.mxu0 0
      %4263 = vmatprep.subr.bf16.mxu0 0
      %4264 = vmatpush2.bf16.msra.mxu0 0
      %4265 = vmatprep.mubr.bf16.mxu0 0
      %4266 = vmatmul.mubr.bf16.gmra.mxu0 %v4164
      %v4267 = vpop.f32.mrf.mxu0
      %v4268 = vadd.f32 0.0, %v4267
      %v4269 = vpop.f32.mrf.mxu0
      %v4270 = vpop.f32.mrf.mxu0
      %v4271 = vadd.f32 0.0, %v4270
      %v4272 = vpop.f32.mrf.mxu0
      %4273 = vmatprep.mubr.bf16.mxu0 0
      %4274 = vmatmul.mubr.bf16.gmra.mxu0 %v4165
      %v4275 = vpop.f32.mrf.mxu0
      %v4276 = vadd.f32 0.0, %v4275
      %v4277 = vpop.f32.mrf.mxu0
      %v4278 = vpop.f32.mrf.mxu0
      %v4279 = vadd.f32 0.0, %v4278
      %v4280 = vpop.f32.mrf.mxu0
      %4281 = vmatprep.mubr.bf16.mxu0 0
      %4282 = vmatmul.mubr.bf16.gmra.mxu0 %v4166
      %v4283 = vpop.f32.mrf.mxu0
      %v4284 = vadd.f32 0.0, %v4283
      %v4285 = vpop.f32.mrf.mxu0
      %v4286 = vpop.f32.mrf.mxu0
      %v4287 = vadd.f32 0.0, %v4286
      %v4288 = vpop.f32.mrf.mxu0
      %4289 = vmatprep.mubr.bf16.mxu0 0
      %4290 = vmatmul.mubr.bf16.gmra.mxu0 %v4167
      %v4291 = vpop.f32.mrf.mxu0
      %v4292 = vadd.f32 0.0, %v4291
      %v4293 = vpop.f32.mrf.mxu0
      %v4294 = vpop.f32.mrf.mxu0
      %v4295 = vadd.f32 0.0, %v4294
      %v4296 = vpop.f32.mrf.mxu0
      %4297 = vdwg.mxu0
      %v4298 = vadd.f32 %v4147, %v4268
      %v4299 = vadd.f32 %v4148, %v4271
      %v4300 = vadd.f32 %v4149, %v4276
      %v4301 = vadd.f32 %v4150, %v4279
      %v4302 = vadd.f32 %v4151, %v4284
      %v4303 = vadd.f32 %v4152, %v4287
      %v4304 = vadd.f32 %v4153, %v4292
      %v4305 = vadd.f32 %v4154, %v4295
      %v4306 = vld [vmem:[%s4155 + $0x8] sm:$0xff]
      %v4307 = vld [vmem:[%s4155 + $0x20] sm:$0xff]
      %v4308 = vld [vmem:[%s4155 + $0x38] sm:$0xff]
      %v4309 = vld [vmem:[%s4155 + $0x50] sm:$0xff]
      %v4310 = vld [vmem:[%s4155 + $0x68] sm:$0xff]
      %v4311 = vld [vmem:[%s4155 + $0x80] sm:$0xff]
      %v4312 = vld [vmem:[%s4155 + $0x98] sm:$0xff]
      %v4313 = vld [vmem:[%s4155 + $0xb0] sm:$0xff]
      %v4314 = vpack.c.bf16 %v4307, %v4306
      %v4315 = vpack.c.bf16 %v4309, %v4308
      %v4316 = vpack.c.bf16 %v4311, %v4310
      %v4317 = vpack.c.bf16 %v4313, %v4312
      %s4318 = scalar_lea.vmem %s3, 448
      %v4319 = vld [vmem:[%s4318] sm:$0xf]
      %v4320 = vld [vmem:[%s4318 + $0x4] sm:$0xf]
      %v4321 = vld [vmem:[%s4318 + $0x8] sm:$0xf]
      %v4322 = vld [vmem:[%s4318 + $0xc] sm:$0xf]
      %v4323 = vld [vmem:[%s4318 + $0x10] sm:$0xf]
      %v4324 = vld [vmem:[%s4318 + $0x14] sm:$0xf]
      %v4325 = vld [vmem:[%s4318 + $0x18] sm:$0xf]
      %v4326 = vld [vmem:[%s4318 + $0x1c] sm:$0xf]
      %v4327 = vld [vmem:[%s4318 + $0x20] sm:$0xf]
      %v4328 = vld [vmem:[%s4318 + $0x24] sm:$0xf]
      %v4329 = vld [vmem:[%s4318 + $0x28] sm:$0xf]
      %v4330 = vld [vmem:[%s4318 + $0x2c] sm:$0xf]
      %v4331 = vld [vmem:[%s4318 + $0x30] sm:$0xf]
      %v4332 = vld [vmem:[%s4318 + $0x34] sm:$0xf]
      %v4333 = vld [vmem:[%s4318 + $0x38] sm:$0xf]
      %v4334 = vld [vmem:[%s4318 + $0x3c] sm:$0xf]
      %v4351 = vunpack.c.l.b16 %v4319
      %v4352 = vunpack.c.l.b16 %v4320
      %v4353 = vunpack.c.l.b16 %v4321
      %v4354 = vunpack.c.l.b16 %v4322
      %v4355 = vunpack.c.l.b16 %v4323
      %v4356 = vunpack.c.l.b16 %v4324
      %v4357 = vunpack.c.l.b16 %v4325
      %v4358 = vunpack.c.l.b16 %v4326
      %v4359 = vunpack.c.l.b16 %v4327
      %v4360 = vunpack.c.l.b16 %v4328
      %v4361 = vunpack.c.l.b16 %v4329
      %v4362 = vunpack.c.l.b16 %v4330
      %v4363 = vunpack.c.l.b16 %v4331
      %v4364 = vunpack.c.l.b16 %v4332
      %v4365 = vunpack.c.l.b16 %v4333
      %v4366 = vunpack.c.l.b16 %v4334
      %v4367 = vpack.c.b16 %v4352, %v4351
      %v4368 = vpack.c.b16 %v4354, %v4353
      %v4369 = vpack.c.b16 %v4356, %v4355
      %v4370 = vpack.c.b16 %v4358, %v4357
      %v4371 = vpack.c.b16 %v4360, %v4359
      %v4372 = vpack.c.b16 %v4362, %v4361
      %v4373 = vpack.c.b16 %v4364, %v4363
      %v4374 = vpack.c.b16 %v4366, %v4365
      %4383 = vmatprep.subr.bf16.mxu0 0
      %4384 = vmatpush1.bf16.msra.mxu0 %v4374
      %4385 = vmatprep.subr.bf16.mxu0 0
      %4386 = vmatpush1.bf16.msra.mxu0 %v4373
      %4387 = vmatprep.subr.bf16.mxu0 0
      %4388 = vmatpush1.bf16.msra.mxu0 %v4372
      %4389 = vmatprep.subr.bf16.mxu0 0
      %4390 = vmatpush1.bf16.msra.mxu0 %v4371
      %4391 = vmatprep.subr.bf16.mxu0 0
      %4392 = vmatpush1.bf16.msra.mxu0 %v4370
      %4393 = vmatprep.subr.bf16.mxu0 0
      %4394 = vmatpush1.bf16.msra.mxu0 %v4369
      %4395 = vmatprep.subr.bf16.mxu0 0
      %4396 = vmatpush1.bf16.msra.mxu0 %v4368
      %4397 = vmatprep.subr.bf16.mxu0 0
      %4398 = vmatpush1.bf16.msra.mxu0 %v4367
      %4399 = vmatprep.subr.bf16.mxu0 0
      %4400 = vmatpush2.bf16.msra.mxu0 0
      %4401 = vmatprep.subr.bf16.mxu0 0
      %4402 = vmatpush2.bf16.msra.mxu0 0
      %4403 = vmatprep.subr.bf16.mxu0 0
      %4404 = vmatpush2.bf16.msra.mxu0 0
      %4405 = vmatprep.subr.bf16.mxu0 0
      %4406 = vmatpush2.bf16.msra.mxu0 0
      %4407 = vmatprep.subr.bf16.mxu0 0
      %4408 = vmatpush2.bf16.msra.mxu0 0
      %4409 = vmatprep.subr.bf16.mxu0 0
      %4410 = vmatpush2.bf16.msra.mxu0 0
      %4411 = vmatprep.subr.bf16.mxu0 0
      %4412 = vmatpush2.bf16.msra.mxu0 0
      %4413 = vmatprep.subr.bf16.mxu0 0
      %4414 = vmatpush2.bf16.msra.mxu0 0
      %4415 = vmatprep.mubr.bf16.mxu0 0
      %4416 = vmatmul.mubr.bf16.gmra.mxu0 %v4314
      %v4417 = vpop.f32.mrf.mxu0
      %v4418 = vadd.f32 0.0, %v4417
      %v4419 = vpop.f32.mrf.mxu0
      %v4420 = vpop.f32.mrf.mxu0
      %v4421 = vadd.f32 0.0, %v4420
      %v4422 = vpop.f32.mrf.mxu0
      %4423 = vmatprep.mubr.bf16.mxu0 0
      %4424 = vmatmul.mubr.bf16.gmra.mxu0 %v4315
      %v4425 = vpop.f32.mrf.mxu0
      %v4426 = vadd.f32 0.0, %v4425
      %v4427 = vpop.f32.mrf.mxu0
      %v4428 = vpop.f32.mrf.mxu0
      %v4429 = vadd.f32 0.0, %v4428
      %v4430 = vpop.f32.mrf.mxu0
      %4431 = vmatprep.mubr.bf16.mxu0 0
      %4432 = vmatmul.mubr.bf16.gmra.mxu0 %v4316
      %v4433 = vpop.f32.mrf.mxu0
      %v4434 = vadd.f32 0.0, %v4433
      %v4435 = vpop.f32.mrf.mxu0
      %v4436 = vpop.f32.mrf.mxu0
      %v4437 = vadd.f32 0.0, %v4436
      %v4438 = vpop.f32.mrf.mxu0
      %4439 = vmatprep.mubr.bf16.mxu0 0
      %4440 = vmatmul.mubr.bf16.gmra.mxu0 %v4317
      %v4441 = vpop.f32.mrf.mxu0
      %v4442 = vadd.f32 0.0, %v4441
      %v4443 = vpop.f32.mrf.mxu0
      %v4444 = vpop.f32.mrf.mxu0
      %v4445 = vadd.f32 0.0, %v4444
      %v4446 = vpop.f32.mrf.mxu0
      %4447 = vdwg.mxu0
      %v4448 = vadd.f32 %v4298, %v4418
      %v4449 = vadd.f32 %v4299, %v4421
      %v4450 = vadd.f32 %v4300, %v4426
      %v4451 = vadd.f32 %v4301, %v4429
      %v4452 = vadd.f32 %v4302, %v4434
      %v4453 = vadd.f32 %v4303, %v4437
      %v4454 = vadd.f32 %v4304, %v4442
      %v4455 = vadd.f32 %v4305, %v4445
      %v4456 = vld [vmem:[%s4155 + $0x9] sm:$0xff]
      %v4457 = vld [vmem:[%s4155 + $0x21] sm:$0xff]
      %v4458 = vld [vmem:[%s4155 + $0x39] sm:$0xff]
      %v4459 = vld [vmem:[%s4155 + $0x51] sm:$0xff]
      %v4460 = vld [vmem:[%s4155 + $0x69] sm:$0xff]
      %v4461 = vld [vmem:[%s4155 + $0x81] sm:$0xff]
      %v4462 = vld [vmem:[%s4155 + $0x99] sm:$0xff]
      %v4463 = vld [vmem:[%s4155 + $0xb1] sm:$0xff]
      %v4464 = vpack.c.bf16 %v4457, %v4456
      %v4465 = vpack.c.bf16 %v4459, %v4458
      %v4466 = vpack.c.bf16 %v4461, %v4460
      %v4467 = vpack.c.bf16 %v4463, %v4462
      %s4468 = scalar_lea.vmem %s3, 512
      %v4469 = vld [vmem:[%s4468] sm:$0xf]
      %v4470 = vld [vmem:[%s4468 + $0x4] sm:$0xf]
      %v4471 = vld [vmem:[%s4468 + $0x8] sm:$0xf]
      %v4472 = vld [vmem:[%s4468 + $0xc] sm:$0xf]
      %v4473 = vld [vmem:[%s4468 + $0x10] sm:$0xf]
      %v4474 = vld [vmem:[%s4468 + $0x14] sm:$0xf]
      %v4475 = vld [vmem:[%s4468 + $0x18] sm:$0xf]
      %v4476 = vld [vmem:[%s4468 + $0x1c] sm:$0xf]
      %v4477 = vld [vmem:[%s4468 + $0x20] sm:$0xf]
      %v4478 = vld [vmem:[%s4468 + $0x24] sm:$0xf]
      %v4479 = vld [vmem:[%s4468 + $0x28] sm:$0xf]
      %v4480 = vld [vmem:[%s4468 + $0x2c] sm:$0xf]
      %v4481 = vld [vmem:[%s4468 + $0x30] sm:$0xf]
      %v4482 = vld [vmem:[%s4468 + $0x34] sm:$0xf]
      %v4483 = vld [vmem:[%s4468 + $0x38] sm:$0xf]
      %v4484 = vld [vmem:[%s4468 + $0x3c] sm:$0xf]
      %v4501 = vunpack.c.l.b16 %v4469
      %v4502 = vunpack.c.l.b16 %v4470
      %v4503 = vunpack.c.l.b16 %v4471
      %v4504 = vunpack.c.l.b16 %v4472
      %v4505 = vunpack.c.l.b16 %v4473
      %v4506 = vunpack.c.l.b16 %v4474
      %v4507 = vunpack.c.l.b16 %v4475
      %v4508 = vunpack.c.l.b16 %v4476
      %v4509 = vunpack.c.l.b16 %v4477
      %v4510 = vunpack.c.l.b16 %v4478
      %v4511 = vunpack.c.l.b16 %v4479
      %v4512 = vunpack.c.l.b16 %v4480
      %v4513 = vunpack.c.l.b16 %v4481
      %v4514 = vunpack.c.l.b16 %v4482
      %v4515 = vunpack.c.l.b16 %v4483
      %v4516 = vunpack.c.l.b16 %v4484
      %v4517 = vpack.c.b16 %v4502, %v4501
      %v4518 = vpack.c.b16 %v4504, %v4503
      %v4519 = vpack.c.b16 %v4506, %v4505
      %v4520 = vpack.c.b16 %v4508, %v4507
      %v4521 = vpack.c.b16 %v4510, %v4509
      %v4522 = vpack.c.b16 %v4512, %v4511
      %v4523 = vpack.c.b16 %v4514, %v4513
      %v4524 = vpack.c.b16 %v4516, %v4515
      %4533 = vmatprep.subr.bf16.mxu0 0
      %4534 = vmatpush1.bf16.msra.mxu0 %v4524
      %4535 = vmatprep.subr.bf16.mxu0 0
      %4536 = vmatpush1.bf16.msra.mxu0 %v4523
      %4537 = vmatprep.subr.bf16.mxu0 0
      %4538 = vmatpush1.bf16.msra.mxu0 %v4522
      %4539 = vmatprep.subr.bf16.mxu0 0
      %4540 = vmatpush1.bf16.msra.mxu0 %v4521
      %4541 = vmatprep.subr.bf16.mxu0 0
      %4542 = vmatpush1.bf16.msra.mxu0 %v4520
      %4543 = vmatprep.subr.bf16.mxu0 0
      %4544 = vmatpush1.bf16.msra.mxu0 %v4519
      %4545 = vmatprep.subr.bf16.mxu0 0
      %4546 = vmatpush1.bf16.msra.mxu0 %v4518
      %4547 = vmatprep.subr.bf16.mxu0 0
      %4548 = vmatpush1.bf16.msra.mxu0 %v4517
      %4549 = vmatprep.subr.bf16.mxu0 0
      %4550 = vmatpush2.bf16.msra.mxu0 0
      %4551 = vmatprep.subr.bf16.mxu0 0
      %4552 = vmatpush2.bf16.msra.mxu0 0
      %4553 = vmatprep.subr.bf16.mxu0 0
      %4554 = vmatpush2.bf16.msra.mxu0 0
      %4555 = vmatprep.subr.bf16.mxu0 0
      %4556 = vmatpush2.bf16.msra.mxu0 0
      %4557 = vmatprep.subr.bf16.mxu0 0
      %4558 = vmatpush2.bf16.msra.mxu0 0
      %4559 = vmatprep.subr.bf16.mxu0 0
      %4560 = vmatpush2.bf16.msra.mxu0 0
      %4561 = vmatprep.subr.bf16.mxu0 0
      %4562 = vmatpush2.bf16.msra.mxu0 0
      %4563 = vmatprep.subr.bf16.mxu0 0
      %4564 = vmatpush2.bf16.msra.mxu0 0
      %4565 = vmatprep.mubr.bf16.mxu0 0
      %4566 = vmatmul.mubr.bf16.gmra.mxu0 %v4464
      %v4567 = vpop.f32.mrf.mxu0
      %v4568 = vadd.f32 0.0, %v4567
      %v4569 = vpop.f32.mrf.mxu0
      %v4570 = vpop.f32.mrf.mxu0
      %v4571 = vadd.f32 0.0, %v4570
      %v4572 = vpop.f32.mrf.mxu0
      %4573 = vmatprep.mubr.bf16.mxu0 0
      %4574 = vmatmul.mubr.bf16.gmra.mxu0 %v4465
      %v4575 = vpop.f32.mrf.mxu0
      %v4576 = vadd.f32 0.0, %v4575
      %v4577 = vpop.f32.mrf.mxu0
      %v4578 = vpop.f32.mrf.mxu0
      %v4579 = vadd.f32 0.0, %v4578
      %v4580 = vpop.f32.mrf.mxu0
      %4581 = vmatprep.mubr.bf16.mxu0 0
      %4582 = vmatmul.mubr.bf16.gmra.mxu0 %v4466
      %v4583 = vpop.f32.mrf.mxu0
      %v4584 = vadd.f32 0.0, %v4583
      %v4585 = vpop.f32.mrf.mxu0
      %v4586 = vpop.f32.mrf.mxu0
      %v4587 = vadd.f32 0.0, %v4586
      %v4588 = vpop.f32.mrf.mxu0
      %4589 = vmatprep.mubr.bf16.mxu0 0
      %4590 = vmatmul.mubr.bf16.gmra.mxu0 %v4467
      %v4591 = vpop.f32.mrf.mxu0
      %v4592 = vadd.f32 0.0, %v4591
      %v4593 = vpop.f32.mrf.mxu0
      %v4594 = vpop.f32.mrf.mxu0
      %v4595 = vadd.f32 0.0, %v4594
      %v4596 = vpop.f32.mrf.mxu0
      %4597 = vdwg.mxu0
      %v4598 = vadd.f32 %v4448, %v4568
      %v4599 = vadd.f32 %v4449, %v4571
      %v4600 = vadd.f32 %v4450, %v4576
      %v4601 = vadd.f32 %v4451, %v4579
      %v4602 = vadd.f32 %v4452, %v4584
      %v4603 = vadd.f32 %v4453, %v4587
      %v4604 = vadd.f32 %v4454, %v4592
      %v4605 = vadd.f32 %v4455, %v4595
      %v4606 = vld [vmem:[%s4] sm:$0x1]
      %v4607 = vld [vmem:[%s4 + $0x1] sm:$0x1]
      %v4608 = vld [vmem:[%s4 + $0x2] sm:$0x1]
      %v4609 = vlaneseq
      %v4610 = vshrl.u32 %v4609, 7
      %v4611 = vsub.s32 0, %v4610
      %v4612 = vrot.slane %v4606, %v4611
      %v4613 = vadd.f32 %v4598, %v4612
      %v4614 = vadd.f32 %v4599, %v4612
      %v4615 = vadd.f32 %v4600, %v4612
      %v4616 = vadd.f32 %v4601, %v4612
      %v4617 = vadd.f32 %v4602, %v4612
      %v4618 = vadd.f32 %v4603, %v4612
      %v4619 = vadd.f32 %v4604, %v4612
      %v4620 = vadd.f32 %v4605, %v4612
      %v4621 = vmax.f32 %v4613, 0.0
      %v4622 = vmax.f32 %v4614, 0.0
      %v4623 = vmax.f32 %v4615, 0.0
      %v4624 = vmax.f32 %v4616, 0.0
      %v4625 = vmax.f32 %v4617, 0.0
      %v4626 = vmax.f32 %v4618, 0.0
      %v4627 = vmax.f32 %v4619, 0.0
      %v4628 = vmax.f32 %v4620, 0.0
      %v4629 = vlaneseq
      %v4630 = vshrl.u32 %v4629, 7
      %v4631 = vsub.s32 0, %v4630
      %v4632 = vrot.slane %v4607, %v4631
      %v4633 = vmul.f32 %v4621, %v4632
      %v4634 = vmul.f32 %v4622, %v4632
      %v4635 = vmul.f32 %v4623, %v4632
      %v4636 = vmul.f32 %v4624, %v4632
      %v4637 = vmul.f32 %v4625, %v4632
      %v4638 = vmul.f32 %v4626, %v4632
      %v4639 = vmul.f32 %v4627, %v4632
      %v4640 = vmul.f32 %v4628, %v4632
      %v4641 = vlaneseq
      %v4642 = vshrl.u32 %v4641, 7
      %v4643 = vsub.s32 0, %v4642
      %v4644 = vrot.slane %v4608, %v4643
      %v4645 = vadd.f32 %v4633, %v4644
      %v4646 = vadd.f32 %v4634, %v4644
      %v4647 = vadd.f32 %v4635, %v4644
      %v4648 = vadd.f32 %v4636, %v4644
      %v4649 = vadd.f32 %v4637, %v4644
      %v4650 = vadd.f32 %v4638, %v4644
      %v4651 = vadd.f32 %v4639, %v4644
      %v4652 = vadd.f32 %v4640, %v4644
      %4653 = vst [vmem:[#allocation4] sm:$0xff] 0.0
      %4654 = vst [vmem:[#allocation4 + $0x8] sm:$0xff] 0.0
      %4655 = vst [vmem:[#allocation4 + $0x10] sm:$0x1] 0.0
      %4656 = vst [vmem:[#allocation4 + $0x18] sm:$0xff] 0.0
      %4657 = vst [vmem:[#allocation4 + $0x20] sm:$0xff] 0.0
      %4658 = vst [vmem:[#allocation4 + $0x28] sm:$0x1] 0.0
      %4659 = vst [vmem:[#allocation4 + $0x30] sm:$0xff] 0.0
      %4660 = vst [vmem:[#allocation4 + $0x38] sm:$0xff] 0.0
      %4661 = vst [vmem:[#allocation4 + $0x40] sm:$0x1] 0.0
      %4662 = vst [vmem:[#allocation4 + $0x48] sm:$0xff] 0.0
      %4663 = vst [vmem:[#allocation4 + $0x50] sm:$0xff] 0.0
      %4664 = vst [vmem:[#allocation4 + $0x58] sm:$0x1] 0.0
      %4665 = vst [vmem:[#allocation4 + $0x60] sm:$0xff] 0.0
      %4666 = vst [vmem:[#allocation4 + $0x68] sm:$0xff] 0.0
      %4667 = vst [vmem:[#allocation4 + $0x70] sm:$0x1] 0.0
      %4668 = vst [vmem:[#allocation4 + $0x78] sm:$0xff] 0.0
      %4669 = vst [vmem:[#allocation4 + $0x80] sm:$0xff] 0.0
      %4670 = vst [vmem:[#allocation4 + $0x88] sm:$0x1] 0.0
      %4671 = vst [vmem:[#allocation4 + $0x90] sm:$0xff] 0.0
      %4672 = vst [vmem:[#allocation4 + $0x98] sm:$0xff] 0.0
      %4673 = vst [vmem:[#allocation4 + $0xa0] sm:$0x1] 0.0
      %4674 = vst [vmem:[#allocation4 + $0xa8] sm:$0xff] 0.0
      %4675 = vst [vmem:[#allocation4 + $0xb0] sm:$0xff] 0.0
      %4676 = vst [vmem:[#allocation4 + $0xb8] sm:$0x1] 0.0
      %4677 = vst [vmem:[#allocation4 + $0xc0] sm:$0xff] 0.0
      %4678 = vst [vmem:[#allocation4 + $0xc8] sm:$0xff] 0.0
      %4679 = vst [vmem:[#allocation4 + $0xd0] sm:$0x1] 0.0
      %4680 = vst [vmem:[#allocation4 + $0xd8] sm:$0xff] 0.0
      %4681 = vst [vmem:[#allocation4 + $0xe0] sm:$0xff] 0.0
      %4682 = vst [vmem:[#allocation4 + $0xe8] sm:$0x1] 0.0
      %s4683 = scalar_lea.vmem [#allocation4], 24
      %4684 = vst [vmem:[%s4683 + $0x8] sm:$0xff] %v4645
      %4685 = vst [vmem:[%s4683 + $0x20] sm:$0xff] %v4646
      %4686 = vst [vmem:[%s4683 + $0x38] sm:$0xff] %v4647
      %4687 = vst [vmem:[%s4683 + $0x50] sm:$0xff] %v4648
      %4688 = vst [vmem:[%s4683 + $0x68] sm:$0xff] %v4649
      %4689 = vst [vmem:[%s4683 + $0x80] sm:$0xff] %v4650
      %4690 = vst [vmem:[%s4683 + $0x98] sm:$0xff] %v4651
      %4691 = vst [vmem:[%s4683 + $0xb0] sm:$0xff] %v4652
      %v4692 = vld [vmem:[#allocation4 + $0x7] sm:$0xff]
      %v4693 = vld [vmem:[#allocation4 + $0x1f] sm:$0xff]
      %v4694 = vld [vmem:[#allocation4 + $0x37] sm:$0xff]
      %v4695 = vld [vmem:[#allocation4 + $0x4f] sm:$0xff]
      %v4696 = vld [vmem:[#allocation4 + $0x67] sm:$0xff]
      %v4697 = vld [vmem:[#allocation4 + $0x7f] sm:$0xff]
      %v4698 = vld [vmem:[#allocation4 + $0x97] sm:$0xff]
      %v4699 = vld [vmem:[#allocation4 + $0xaf] sm:$0xff]
      %v4700 = vpack.c.bf16 %v4693, %v4692
      %v4701 = vpack.c.bf16 %v4695, %v4694
      %v4702 = vpack.c.bf16 %v4697, %v4696
      %v4703 = vpack.c.bf16 %v4699, %v4698
      %v4704 = vld [vmem:[%s5] sm:$0xf]
      %v4705 = vld [vmem:[%s5 + $0x4] sm:$0xf]
      %v4706 = vld [vmem:[%s5 + $0x8] sm:$0xf]
      %v4707 = vld [vmem:[%s5 + $0xc] sm:$0xf]
      %v4708 = vld [vmem:[%s5 + $0x10] sm:$0xf]
      %v4709 = vld [vmem:[%s5 + $0x14] sm:$0xf]
      %v4710 = vld [vmem:[%s5 + $0x18] sm:$0xf]
      %v4711 = vld [vmem:[%s5 + $0x1c] sm:$0xf]
      %v4712 = vld [vmem:[%s5 + $0x20] sm:$0xf]
      %v4713 = vld [vmem:[%s5 + $0x24] sm:$0xf]
      %v4714 = vld [vmem:[%s5 + $0x28] sm:$0xf]
      %v4715 = vld [vmem:[%s5 + $0x2c] sm:$0xf]
      %v4716 = vld [vmem:[%s5 + $0x30] sm:$0xf]
      %v4717 = vld [vmem:[%s5 + $0x34] sm:$0xf]
      %v4718 = vld [vmem:[%s5 + $0x38] sm:$0xf]
      %v4719 = vld [vmem:[%s5 + $0x3c] sm:$0xf]
      %v4720 = vld [vmem:[#allocation4 + $0x8] sm:$0xff]
      %v4721 = vld [vmem:[#allocation4 + $0x20] sm:$0xff]
      %v4722 = vld [vmem:[#allocation4 + $0x38] sm:$0xff]
      %v4723 = vld [vmem:[#allocation4 + $0x50] sm:$0xff]
      %v4724 = vld [vmem:[#allocation4 + $0x68] sm:$0xff]
      %v4725 = vld [vmem:[#allocation4 + $0x80] sm:$0xff]
      %v4726 = vld [vmem:[#allocation4 + $0x98] sm:$0xff]
      %v4727 = vld [vmem:[#allocation4 + $0xb0] sm:$0xff]
      %v4728 = vpack.c.bf16 %v4721, %v4720
      %v4729 = vpack.c.bf16 %v4723, %v4722
      %v4730 = vpack.c.bf16 %v4725, %v4724
      %v4731 = vpack.c.bf16 %v4727, %v4726
      %s4732 = scalar_lea.vmem %s5, 64
      %v4733 = vld [vmem:[%s4732] sm:$0xf]
      %v4734 = vld [vmem:[%s4732 + $0x4] sm:$0xf]
      %v4735 = vld [vmem:[%s4732 + $0x8] sm:$0xf]
      %v4736 = vld [vmem:[%s4732 + $0xc] sm:$0xf]
      %v4737 = vld [vmem:[%s4732 + $0x10] sm:$0xf]
      %v4738 = vld [vmem:[%s4732 + $0x14] sm:$0xf]
      %v4739 = vld [vmem:[%s4732 + $0x18] sm:$0xf]
      %v4740 = vld [vmem:[%s4732 + $0x1c] sm:$0xf]
      %v4741 = vld [vmem:[%s4732 + $0x20] sm:$0xf]
      %v4742 = vld [vmem:[%s4732 + $0x24] sm:$0xf]
      %v4743 = vld [vmem:[%s4732 + $0x28] sm:$0xf]
      %v4744 = vld [vmem:[%s4732 + $0x2c] sm:$0xf]
      %v4745 = vld [vmem:[%s4732 + $0x30] sm:$0xf]
      %v4746 = vld [vmem:[%s4732 + $0x34] sm:$0xf]
      %v4747 = vld [vmem:[%s4732 + $0x38] sm:$0xf]
      %v4748 = vld [vmem:[%s4732 + $0x3c] sm:$0xf]
      %v4765 = vunpack.c.l.b16 %v4733
      %v4766 = vunpack.c.l.b16 %v4734
      %v4767 = vunpack.c.l.b16 %v4735
      %v4768 = vunpack.c.l.b16 %v4736
      %v4769 = vunpack.c.l.b16 %v4737
      %v4770 = vunpack.c.l.b16 %v4738
      %v4771 = vunpack.c.l.b16 %v4739
      %v4772 = vunpack.c.l.b16 %v4740
      %v4773 = vunpack.c.l.b16 %v4741
      %v4774 = vunpack.c.l.b16 %v4742
      %v4775 = vunpack.c.l.b16 %v4743
      %v4776 = vunpack.c.l.b16 %v4744
      %v4777 = vunpack.c.l.b16 %v4745
      %v4778 = vunpack.c.l.b16 %v4746
      %v4779 = vunpack.c.l.b16 %v4747
      %v4780 = vunpack.c.l.b16 %v4748
      %v4781 = vpack.c.b16 %v4766, %v4765
      %v4782 = vpack.c.b16 %v4768, %v4767
      %v4783 = vpack.c.b16 %v4770, %v4769
      %v4784 = vpack.c.b16 %v4772, %v4771
      %v4785 = vpack.c.b16 %v4774, %v4773
      %v4786 = vpack.c.b16 %v4776, %v4775
      %v4787 = vpack.c.b16 %v4778, %v4777
      %v4788 = vpack.c.b16 %v4780, %v4779
      %4797 = vmatprep.subr.bf16.mxu0 0
      %4798 = vmatpush1.bf16.msra.mxu0 %v4788
      %4799 = vmatprep.subr.bf16.mxu0 0
      %4800 = vmatpush1.bf16.msra.mxu0 %v4787
      %4801 = vmatprep.subr.bf16.mxu0 0
      %4802 = vmatpush1.bf16.msra.mxu0 %v4786
      %4803 = vmatprep.subr.bf16.mxu0 0
      %4804 = vmatpush1.bf16.msra.mxu0 %v4785
      %4805 = vmatprep.subr.bf16.mxu0 0
      %4806 = vmatpush1.bf16.msra.mxu0 %v4784
      %4807 = vmatprep.subr.bf16.mxu0 0
      %4808 = vmatpush1.bf16.msra.mxu0 %v4783
      %4809 = vmatprep.subr.bf16.mxu0 0
      %4810 = vmatpush1.bf16.msra.mxu0 %v4782
      %4811 = vmatprep.subr.bf16.mxu0 0
      %4812 = vmatpush1.bf16.msra.mxu0 %v4781
      %4813 = vmatprep.subr.bf16.mxu0 0
      %4814 = vmatpush2.bf16.msra.mxu0 0
      %4815 = vmatprep.subr.bf16.mxu0 0
      %4816 = vmatpush2.bf16.msra.mxu0 0
      %4817 = vmatprep.subr.bf16.mxu0 0
      %4818 = vmatpush2.bf16.msra.mxu0 0
      %4819 = vmatprep.subr.bf16.mxu0 0
      %4820 = vmatpush2.bf16.msra.mxu0 0
      %4821 = vmatprep.subr.bf16.mxu0 0
      %4822 = vmatpush2.bf16.msra.mxu0 0
      %4823 = vmatprep.subr.bf16.mxu0 0
      %4824 = vmatpush2.bf16.msra.mxu0 0
      %4825 = vmatprep.subr.bf16.mxu0 0
      %4826 = vmatpush2.bf16.msra.mxu0 0
      %4827 = vmatprep.subr.bf16.mxu0 0
      %4828 = vmatpush2.bf16.msra.mxu0 0
      %4829 = vmatprep.mubr.bf16.mxu0 0
      %4830 = vmatmul.mubr.bf16.gmra.mxu0 %v4728
      %v4831 = vpop.f32.mrf.mxu0
      %v4832 = vadd.f32 0.0, %v4831
      %v4833 = vpop.f32.mrf.mxu0
      %v4834 = vpop.f32.mrf.mxu0
      %v4835 = vadd.f32 0.0, %v4834
      %v4836 = vpop.f32.mrf.mxu0
      %4837 = vmatprep.mubr.bf16.mxu0 0
      %4838 = vmatmul.mubr.bf16.gmra.mxu0 %v4729
      %v4839 = vpop.f32.mrf.mxu0
      %v4840 = vadd.f32 0.0, %v4839
      %v4841 = vpop.f32.mrf.mxu0
      %v4842 = vpop.f32.mrf.mxu0
      %v4843 = vadd.f32 0.0, %v4842
      %v4844 = vpop.f32.mrf.mxu0
      %4845 = vmatprep.mubr.bf16.mxu0 0
      %4846 = vmatmul.mubr.bf16.gmra.mxu0 %v4730
      %v4847 = vpop.f32.mrf.mxu0
      %v4848 = vadd.f32 0.0, %v4847
      %v4849 = vpop.f32.mrf.mxu0
      %v4850 = vpop.f32.mrf.mxu0
      %v4851 = vadd.f32 0.0, %v4850
      %v4852 = vpop.f32.mrf.mxu0
      %4853 = vmatprep.mubr.bf16.mxu0 0
      %4854 = vmatmul.mubr.bf16.gmra.mxu0 %v4731
      %v4855 = vpop.f32.mrf.mxu0
      %v4856 = vadd.f32 0.0, %v4855
      %v4857 = vpop.f32.mrf.mxu0
      %v4858 = vpop.f32.mrf.mxu0
      %v4859 = vadd.f32 0.0, %v4858
      %v4860 = vpop.f32.mrf.mxu0
      %4861 = vdwg.mxu0
      %v4878 = vunpack.c.l.b16 %v4704
      %v4879 = vunpack.c.l.b16 %v4705
      %v4880 = vunpack.c.l.b16 %v4706
      %v4881 = vunpack.c.l.b16 %v4707
      %v4882 = vunpack.c.l.b16 %v4708
      %v4883 = vunpack.c.l.b16 %v4709
      %v4884 = vunpack.c.l.b16 %v4710
      %v4885 = vunpack.c.l.b16 %v4711
      %v4886 = vunpack.c.l.b16 %v4712
      %v4887 = vunpack.c.l.b16 %v4713
      %v4888 = vunpack.c.l.b16 %v4714
      %v4889 = vunpack.c.l.b16 %v4715
      %v4890 = vunpack.c.l.b16 %v4716
      %v4891 = vunpack.c.l.b16 %v4717
      %v4892 = vunpack.c.l.b16 %v4718
      %v4893 = vunpack.c.l.b16 %v4719
      %v4894 = vpack.c.b16 %v4879, %v4878
      %v4895 = vpack.c.b16 %v4881, %v4880
      %v4896 = vpack.c.b16 %v4883, %v4882
      %v4897 = vpack.c.b16 %v4885, %v4884
      %v4898 = vpack.c.b16 %v4887, %v4886
      %v4899 = vpack.c.b16 %v4889, %v4888
      %v4900 = vpack.c.b16 %v4891, %v4890
      %v4901 = vpack.c.b16 %v4893, %v4892
      %4910 = vmatprep.subr.bf16.mxu0 0
      %4911 = vmatpush1.bf16.msra.mxu0 %v4901
      %4912 = vmatprep.subr.bf16.mxu0 0
      %4913 = vmatpush1.bf16.msra.mxu0 %v4900
      %4914 = vmatprep.subr.bf16.mxu0 0
      %4915 = vmatpush1.bf16.msra.mxu0 %v4899
      %4916 = vmatprep.subr.bf16.mxu0 0
      %4917 = vmatpush1.bf16.msra.mxu0 %v4898
      %4918 = vmatprep.subr.bf16.mxu0 0
      %4919 = vmatpush1.bf16.msra.mxu0 %v4897
      %4920 = vmatprep.subr.bf16.mxu0 0
      %4921 = vmatpush1.bf16.msra.mxu0 %v4896
      %4922 = vmatprep.subr.bf16.mxu0 0
      %4923 = vmatpush1.bf16.msra.mxu0 %v4895
      %4924 = vmatprep.subr.bf16.mxu0 0
      %4925 = vmatpush1.bf16.msra.mxu0 %v4894
      %4926 = vmatprep.subr.bf16.mxu0 0
      %4927 = vmatpush2.bf16.msra.mxu0 0
      %4928 = vmatprep.subr.bf16.mxu0 0
      %4929 = vmatpush2.bf16.msra.mxu0 0
      %4930 = vmatprep.subr.bf16.mxu0 0
      %4931 = vmatpush2.bf16.msra.mxu0 0
      %4932 = vmatprep.subr.bf16.mxu0 0
      %4933 = vmatpush2.bf16.msra.mxu0 0
      %4934 = vmatprep.subr.bf16.mxu0 0
      %4935 = vmatpush2.bf16.msra.mxu0 0
      %4936 = vmatprep.subr.bf16.mxu0 0
      %4937 = vmatpush2.bf16.msra.mxu0 0
      %4938 = vmatprep.subr.bf16.mxu0 0
      %4939 = vmatpush2.bf16.msra.mxu0 0
      %4940 = vmatprep.subr.bf16.mxu0 0
      %4941 = vmatpush2.bf16.msra.mxu0 0
      %4942 = vmatprep.mubr.bf16.mxu0 0
      %4943 = vmatmul.mubr.bf16.gmra.mxu0 %v4700
      %v4944 = vpop.f32.mrf.mxu0
      %v4945 = vadd.f32 %v4832, %v4944
      %v4946 = vpop.f32.mrf.mxu0
      %v4947 = vpop.f32.mrf.mxu0
      %v4948 = vadd.f32 %v4835, %v4947
      %v4949 = vpop.f32.mrf.mxu0
      %4950 = vmatprep.mubr.bf16.mxu0 0
      %4951 = vmatmul.mubr.bf16.gmra.mxu0 %v4701
      %v4952 = vpop.f32.mrf.mxu0
      %v4953 = vadd.f32 %v4840, %v4952
      %v4954 = vpop.f32.mrf.mxu0
      %v4955 = vpop.f32.mrf.mxu0
      %v4956 = vadd.f32 %v4843, %v4955
      %v4957 = vpop.f32.mrf.mxu0
      %4958 = vmatprep.mubr.bf16.mxu0 0
      %4959 = vmatmul.mubr.bf16.gmra.mxu0 %v4702
      %v4960 = vpop.f32.mrf.mxu0
      %v4961 = vadd.f32 %v4848, %v4960
      %v4962 = vpop.f32.mrf.mxu0
      %v4963 = vpop.f32.mrf.mxu0
      %v4964 = vadd.f32 %v4851, %v4963
      %v4965 = vpop.f32.mrf.mxu0
      %4966 = vmatprep.mubr.bf16.mxu0 0
      %4967 = vmatmul.mubr.bf16.gmra.mxu0 %v4703
      %v4968 = vpop.f32.mrf.mxu0
      %v4969 = vadd.f32 %v4856, %v4968
      %v4970 = vpop.f32.mrf.mxu0
      %v4971 = vpop.f32.mrf.mxu0
      %v4972 = vadd.f32 %v4859, %v4971
      %v4973 = vpop.f32.mrf.mxu0
      %4974 = vdwg.mxu0
      %v4975 = vld [vmem:[#allocation4 + $0x9] sm:$0xff]
      %v4976 = vld [vmem:[#allocation4 + $0x21] sm:$0xff]
      %v4977 = vld [vmem:[#allocation4 + $0x39] sm:$0xff]
      %v4978 = vld [vmem:[#allocation4 + $0x51] sm:$0xff]
      %v4979 = vld [vmem:[#allocation4 + $0x69] sm:$0xff]
      %v4980 = vld [vmem:[#allocation4 + $0x81] sm:$0xff]
      %v4981 = vld [vmem:[#allocation4 + $0x99] sm:$0xff]
      %v4982 = vld [vmem:[#allocation4 + $0xb1] sm:$0xff]
      %v4983 = vpack.c.bf16 %v4976, %v4975
      %v4984 = vpack.c.bf16 %v4978, %v4977
      %v4985 = vpack.c.bf16 %v4980, %v4979
      %v4986 = vpack.c.bf16 %v4982, %v4981
      %s4987 = scalar_lea.vmem %s5, 128
      %v4988 = vld [vmem:[%s4987] sm:$0xf]
      %v4989 = vld [vmem:[%s4987 + $0x4] sm:$0xf]
      %v4990 = vld [vmem:[%s4987 + $0x8] sm:$0xf]
      %v4991 = vld [vmem:[%s4987 + $0xc] sm:$0xf]
      %v4992 = vld [vmem:[%s4987 + $0x10] sm:$0xf]
      %v4993 = vld [vmem:[%s4987 + $0x14] sm:$0xf]
      %v4994 = vld [vmem:[%s4987 + $0x18] sm:$0xf]
      %v4995 = vld [vmem:[%s4987 + $0x1c] sm:$0xf]
      %v4996 = vld [vmem:[%s4987 + $0x20] sm:$0xf]
      %v4997 = vld [vmem:[%s4987 + $0x24] sm:$0xf]
      %v4998 = vld [vmem:[%s4987 + $0x28] sm:$0xf]
      %v4999 = vld [vmem:[%s4987 + $0x2c] sm:$0xf]
      %v5000 = vld [vmem:[%s4987 + $0x30] sm:$0xf]
      %v5001 = vld [vmem:[%s4987 + $0x34] sm:$0xf]
      %v5002 = vld [vmem:[%s4987 + $0x38] sm:$0xf]
      %v5003 = vld [vmem:[%s4987 + $0x3c] sm:$0xf]
      %v5020 = vunpack.c.l.b16 %v4988
      %v5021 = vunpack.c.l.b16 %v4989
      %v5022 = vunpack.c.l.b16 %v4990
      %v5023 = vunpack.c.l.b16 %v4991
      %v5024 = vunpack.c.l.b16 %v4992
      %v5025 = vunpack.c.l.b16 %v4993
      %v5026 = vunpack.c.l.b16 %v4994
      %v5027 = vunpack.c.l.b16 %v4995
      %v5028 = vunpack.c.l.b16 %v4996
      %v5029 = vunpack.c.l.b16 %v4997
      %v5030 = vunpack.c.l.b16 %v4998
      %v5031 = vunpack.c.l.b16 %v4999
      %v5032 = vunpack.c.l.b16 %v5000
      %v5033 = vunpack.c.l.b16 %v5001
      %v5034 = vunpack.c.l.b16 %v5002
      %v5035 = vunpack.c.l.b16 %v5003
      %v5036 = vpack.c.b16 %v5021, %v5020
      %v5037 = vpack.c.b16 %v5023, %v5022
      %v5038 = vpack.c.b16 %v5025, %v5024
      %v5039 = vpack.c.b16 %v5027, %v5026
      %v5040 = vpack.c.b16 %v5029, %v5028
      %v5041 = vpack.c.b16 %v5031, %v5030
      %v5042 = vpack.c.b16 %v5033, %v5032
      %v5043 = vpack.c.b16 %v5035, %v5034
      %5052 = vmatprep.subr.bf16.mxu0 0
      %5053 = vmatpush1.bf16.msra.mxu0 %v5043
      %5054 = vmatprep.subr.bf16.mxu0 0
      %5055 = vmatpush1.bf16.msra.mxu0 %v5042
      %5056 = vmatprep.subr.bf16.mxu0 0
      %5057 = vmatpush1.bf16.msra.mxu0 %v5041
      %5058 = vmatprep.subr.bf16.mxu0 0
      %5059 = vmatpush1.bf16.msra.mxu0 %v5040
      %5060 = vmatprep.subr.bf16.mxu0 0
      %5061 = vmatpush1.bf16.msra.mxu0 %v5039
      %5062 = vmatprep.subr.bf16.mxu0 0
      %5063 = vmatpush1.bf16.msra.mxu0 %v5038
      %5064 = vmatprep.subr.bf16.mxu0 0
      %5065 = vmatpush1.bf16.msra.mxu0 %v5037
      %5066 = vmatprep.subr.bf16.mxu0 0
      %5067 = vmatpush1.bf16.msra.mxu0 %v5036
      %5068 = vmatprep.subr.bf16.mxu0 0
      %5069 = vmatpush2.bf16.msra.mxu0 0
      %5070 = vmatprep.subr.bf16.mxu0 0
      %5071 = vmatpush2.bf16.msra.mxu0 0
      %5072 = vmatprep.subr.bf16.mxu0 0
      %5073 = vmatpush2.bf16.msra.mxu0 0
      %5074 = vmatprep.subr.bf16.mxu0 0
      %5075 = vmatpush2.bf16.msra.mxu0 0
      %5076 = vmatprep.subr.bf16.mxu0 0
      %5077 = vmatpush2.bf16.msra.mxu0 0
      %5078 = vmatprep.subr.bf16.mxu0 0
      %5079 = vmatpush2.bf16.msra.mxu0 0
      %5080 = vmatprep.subr.bf16.mxu0 0
      %5081 = vmatpush2.bf16.msra.mxu0 0
      %5082 = vmatprep.subr.bf16.mxu0 0
      %5083 = vmatpush2.bf16.msra.mxu0 0
      %5084 = vmatprep.mubr.bf16.mxu0 0
      %5085 = vmatmul.mubr.bf16.gmra.mxu0 %v4983
      %v5086 = vpop.f32.mrf.mxu0
      %v5087 = vadd.f32 0.0, %v5086
      %v5088 = vpop.f32.mrf.mxu0
      %v5089 = vpop.f32.mrf.mxu0
      %v5090 = vadd.f32 0.0, %v5089
      %v5091 = vpop.f32.mrf.mxu0
      %5092 = vmatprep.mubr.bf16.mxu0 0
      %5093 = vmatmul.mubr.bf16.gmra.mxu0 %v4984
      %v5094 = vpop.f32.mrf.mxu0
      %v5095 = vadd.f32 0.0, %v5094
      %v5096 = vpop.f32.mrf.mxu0
      %v5097 = vpop.f32.mrf.mxu0
      %v5098 = vadd.f32 0.0, %v5097
      %v5099 = vpop.f32.mrf.mxu0
      %5100 = vmatprep.mubr.bf16.mxu0 0
      %5101 = vmatmul.mubr.bf16.gmra.mxu0 %v4985
      %v5102 = vpop.f32.mrf.mxu0
      %v5103 = vadd.f32 0.0, %v5102
      %v5104 = vpop.f32.mrf.mxu0
      %v5105 = vpop.f32.mrf.mxu0
      %v5106 = vadd.f32 0.0, %v5105
      %v5107 = vpop.f32.mrf.mxu0
      %5108 = vmatprep.mubr.bf16.mxu0 0
      %5109 = vmatmul.mubr.bf16.gmra.mxu0 %v4986
      %v5110 = vpop.f32.mrf.mxu0
      %v5111 = vadd.f32 0.0, %v5110
      %v5112 = vpop.f32.mrf.mxu0
      %v5113 = vpop.f32.mrf.mxu0
      %v5114 = vadd.f32 0.0, %v5113
      %v5115 = vpop.f32.mrf.mxu0
      %5116 = vdwg.mxu0
      %v5117 = vadd.f32 %v4945, %v5087
      %v5118 = vadd.f32 %v4948, %v5090
      %v5119 = vadd.f32 %v4953, %v5095
      %v5120 = vadd.f32 %v4956, %v5098
      %v5121 = vadd.f32 %v4961, %v5103
      %v5122 = vadd.f32 %v4964, %v5106
      %v5123 = vadd.f32 %v4969, %v5111
      %v5124 = vadd.f32 %v4972, %v5114
      %v5125 = vld [vmem:[%s4683 + $0x7] sm:$0xff]
      %v5126 = vld [vmem:[%s4683 + $0x1f] sm:$0xff]
      %v5127 = vld [vmem:[%s4683 + $0x37] sm:$0xff]
      %v5128 = vld [vmem:[%s4683 + $0x4f] sm:$0xff]
      %v5129 = vld [vmem:[%s4683 + $0x67] sm:$0xff]
      %v5130 = vld [vmem:[%s4683 + $0x7f] sm:$0xff]
      %v5131 = vld [vmem:[%s4683 + $0x97] sm:$0xff]
      %v5132 = vld [vmem:[%s4683 + $0xaf] sm:$0xff]
      %v5133 = vpack.c.bf16 %v5126, %v5125
      %v5134 = vpack.c.bf16 %v5128, %v5127
      %v5135 = vpack.c.bf16 %v5130, %v5129
      %v5136 = vpack.c.bf16 %v5132, %v5131
      %s5137 = scalar_lea.vmem %s5, 192
      %v5138 = vld [vmem:[%s5137] sm:$0xf]
      %v5139 = vld [vmem:[%s5137 + $0x4] sm:$0xf]
      %v5140 = vld [vmem:[%s5137 + $0x8] sm:$0xf]
      %v5141 = vld [vmem:[%s5137 + $0xc] sm:$0xf]
      %v5142 = vld [vmem:[%s5137 + $0x10] sm:$0xf]
      %v5143 = vld [vmem:[%s5137 + $0x14] sm:$0xf]
      %v5144 = vld [vmem:[%s5137 + $0x18] sm:$0xf]
      %v5145 = vld [vmem:[%s5137 + $0x1c] sm:$0xf]
      %v5146 = vld [vmem:[%s5137 + $0x20] sm:$0xf]
      %v5147 = vld [vmem:[%s5137 + $0x24] sm:$0xf]
      %v5148 = vld [vmem:[%s5137 + $0x28] sm:$0xf]
      %v5149 = vld [vmem:[%s5137 + $0x2c] sm:$0xf]
      %v5150 = vld [vmem:[%s5137 + $0x30] sm:$0xf]
      %v5151 = vld [vmem:[%s5137 + $0x34] sm:$0xf]
      %v5152 = vld [vmem:[%s5137 + $0x38] sm:$0xf]
      %v5153 = vld [vmem:[%s5137 + $0x3c] sm:$0xf]
      %v5170 = vunpack.c.l.b16 %v5138
      %v5171 = vunpack.c.l.b16 %v5139
      %v5172 = vunpack.c.l.b16 %v5140
      %v5173 = vunpack.c.l.b16 %v5141
      %v5174 = vunpack.c.l.b16 %v5142
      %v5175 = vunpack.c.l.b16 %v5143
      %v5176 = vunpack.c.l.b16 %v5144
      %v5177 = vunpack.c.l.b16 %v5145
      %v5178 = vunpack.c.l.b16 %v5146
      %v5179 = vunpack.c.l.b16 %v5147
      %v5180 = vunpack.c.l.b16 %v5148
      %v5181 = vunpack.c.l.b16 %v5149
      %v5182 = vunpack.c.l.b16 %v5150
      %v5183 = vunpack.c.l.b16 %v5151
      %v5184 = vunpack.c.l.b16 %v5152
      %v5185 = vunpack.c.l.b16 %v5153
      %v5186 = vpack.c.b16 %v5171, %v5170
      %v5187 = vpack.c.b16 %v5173, %v5172
      %v5188 = vpack.c.b16 %v5175, %v5174
      %v5189 = vpack.c.b16 %v5177, %v5176
      %v5190 = vpack.c.b16 %v5179, %v5178
      %v5191 = vpack.c.b16 %v5181, %v5180
      %v5192 = vpack.c.b16 %v5183, %v5182
      %v5193 = vpack.c.b16 %v5185, %v5184
      %5202 = vmatprep.subr.bf16.mxu0 0
      %5203 = vmatpush1.bf16.msra.mxu0 %v5193
      %5204 = vmatprep.subr.bf16.mxu0 0
      %5205 = vmatpush1.bf16.msra.mxu0 %v5192
      %5206 = vmatprep.subr.bf16.mxu0 0
      %5207 = vmatpush1.bf16.msra.mxu0 %v5191
      %5208 = vmatprep.subr.bf16.mxu0 0
      %5209 = vmatpush1.bf16.msra.mxu0 %v5190
      %5210 = vmatprep.subr.bf16.mxu0 0
      %5211 = vmatpush1.bf16.msra.mxu0 %v5189
      %5212 = vmatprep.subr.bf16.mxu0 0
      %5213 = vmatpush1.bf16.msra.mxu0 %v5188
      %5214 = vmatprep.subr.bf16.mxu0 0
      %5215 = vmatpush1.bf16.msra.mxu0 %v5187
      %5216 = vmatprep.subr.bf16.mxu0 0
      %5217 = vmatpush1.bf16.msra.mxu0 %v5186
      %5218 = vmatprep.subr.bf16.mxu0 0
      %5219 = vmatpush2.bf16.msra.mxu0 0
      %5220 = vmatprep.subr.bf16.mxu0 0
      %5221 = vmatpush2.bf16.msra.mxu0 0
      %5222 = vmatprep.subr.bf16.mxu0 0
      %5223 = vmatpush2.bf16.msra.mxu0 0
      %5224 = vmatprep.subr.bf16.mxu0 0
      %5225 = vmatpush2.bf16.msra.mxu0 0
      %5226 = vmatprep.subr.bf16.mxu0 0
      %5227 = vmatpush2.bf16.msra.mxu0 0
      %5228 = vmatprep.subr.bf16.mxu0 0
      %5229 = vmatpush2.bf16.msra.mxu0 0
      %5230 = vmatprep.subr.bf16.mxu0 0
      %5231 = vmatpush2.bf16.msra.mxu0 0
      %5232 = vmatprep.subr.bf16.mxu0 0
      %5233 = vmatpush2.bf16.msra.mxu0 0
      %5234 = vmatprep.mubr.bf16.mxu0 0
      %5235 = vmatmul.mubr.bf16.gmra.mxu0 %v5133
      %v5236 = vpop.f32.mrf.mxu0
      %v5237 = vadd.f32 0.0, %v5236
      %v5238 = vpop.f32.mrf.mxu0
      %v5239 = vpop.f32.mrf.mxu0
      %v5240 = vadd.f32 0.0, %v5239
      %v5241 = vpop.f32.mrf.mxu0
      %5242 = vmatprep.mubr.bf16.mxu0 0
      %5243 = vmatmul.mubr.bf16.gmra.mxu0 %v5134
      %v5244 = vpop.f32.mrf.mxu0
      %v5245 = vadd.f32 0.0, %v5244
      %v5246 = vpop.f32.mrf.mxu0
      %v5247 = vpop.f32.mrf.mxu0
      %v5248 = vadd.f32 0.0, %v5247
      %v5249 = vpop.f32.mrf.mxu0
      %5250 = vmatprep.mubr.bf16.mxu0 0
      %5251 = vmatmul.mubr.bf16.gmra.mxu0 %v5135
      %v5252 = vpop.f32.mrf.mxu0
      %v5253 = vadd.f32 0.0, %v5252
      %v5254 = vpop.f32.mrf.mxu0
      %v5255 = vpop.f32.mrf.mxu0
      %v5256 = vadd.f32 0.0, %v5255
      %v5257 = vpop.f32.mrf.mxu0
      %5258 = vmatprep.mubr.bf16.mxu0 0
      %5259 = vmatmul.mubr.bf16.gmra.mxu0 %v5136
      %v5260 = vpop.f32.mrf.mxu0
      %v5261 = vadd.f32 0.0, %v5260
      %v5262 = vpop.f32.mrf.mxu0
      %v5263 = vpop.f32.mrf.mxu0
      %v5264 = vadd.f32 0.0, %v5263
      %v5265 = vpop.f32.mrf.mxu0
      %5266 = vdwg.mxu0
      %v5267 = vadd.f32 %v5117, %v5237
      %v5268 = vadd.f32 %v5118, %v5240
      %v5269 = vadd.f32 %v5119, %v5245
      %v5270 = vadd.f32 %v5120, %v5248
      %v5271 = vadd.f32 %v5121, %v5253
      %v5272 = vadd.f32 %v5122, %v5256
      %v5273 = vadd.f32 %v5123, %v5261
      %v5274 = vadd.f32 %v5124, %v5264
      %v5275 = vld [vmem:[%s4683 + $0x8] sm:$0xff]
      %v5276 = vld [vmem:[%s4683 + $0x20] sm:$0xff]
      %v5277 = vld [vmem:[%s4683 + $0x38] sm:$0xff]
      %v5278 = vld [vmem:[%s4683 + $0x50] sm:$0xff]
      %v5279 = vld [vmem:[%s4683 + $0x68] sm:$0xff]
      %v5280 = vld [vmem:[%s4683 + $0x80] sm:$0xff]
      %v5281 = vld [vmem:[%s4683 + $0x98] sm:$0xff]
      %v5282 = vld [vmem:[%s4683 + $0xb0] sm:$0xff]
      %v5283 = vpack.c.bf16 %v5276, %v5275
      %v5284 = vpack.c.bf16 %v5278, %v5277
      %v5285 = vpack.c.bf16 %v5280, %v5279
      %v5286 = vpack.c.bf16 %v5282, %v5281
      %s5287 = scalar_lea.vmem %s5, 256
      %v5288 = vld [vmem:[%s5287] sm:$0xf]
      %v5289 = vld [vmem:[%s5287 + $0x4] sm:$0xf]
      %v5290 = vld [vmem:[%s5287 + $0x8] sm:$0xf]
      %v5291 = vld [vmem:[%s5287 + $0xc] sm:$0xf]
      %v5292 = vld [vmem:[%s5287 + $0x10] sm:$0xf]
      %v5293 = vld [vmem:[%s5287 + $0x14] sm:$0xf]
      %v5294 = vld [vmem:[%s5287 + $0x18] sm:$0xf]
      %v5295 = vld [vmem:[%s5287 + $0x1c] sm:$0xf]
      %v5296 = vld [vmem:[%s5287 + $0x20] sm:$0xf]
      %v5297 = vld [vmem:[%s5287 + $0x24] sm:$0xf]
      %v5298 = vld [vmem:[%s5287 + $0x28] sm:$0xf]
      %v5299 = vld [vmem:[%s5287 + $0x2c] sm:$0xf]
      %v5300 = vld [vmem:[%s5287 + $0x30] sm:$0xf]
      %v5301 = vld [vmem:[%s5287 + $0x34] sm:$0xf]
      %v5302 = vld [vmem:[%s5287 + $0x38] sm:$0xf]
      %v5303 = vld [vmem:[%s5287 + $0x3c] sm:$0xf]
      %v5320 = vunpack.c.l.b16 %v5288
      %v5321 = vunpack.c.l.b16 %v5289
      %v5322 = vunpack.c.l.b16 %v5290
      %v5323 = vunpack.c.l.b16 %v5291
      %v5324 = vunpack.c.l.b16 %v5292
      %v5325 = vunpack.c.l.b16 %v5293
      %v5326 = vunpack.c.l.b16 %v5294
      %v5327 = vunpack.c.l.b16 %v5295
      %v5328 = vunpack.c.l.b16 %v5296
      %v5329 = vunpack.c.l.b16 %v5297
      %v5330 = vunpack.c.l.b16 %v5298
      %v5331 = vunpack.c.l.b16 %v5299
      %v5332 = vunpack.c.l.b16 %v5300
      %v5333 = vunpack.c.l.b16 %v5301
      %v5334 = vunpack.c.l.b16 %v5302
      %v5335 = vunpack.c.l.b16 %v5303
      %v5336 = vpack.c.b16 %v5321, %v5320
      %v5337 = vpack.c.b16 %v5323, %v5322
      %v5338 = vpack.c.b16 %v5325, %v5324
      %v5339 = vpack.c.b16 %v5327, %v5326
      %v5340 = vpack.c.b16 %v5329, %v5328
      %v5341 = vpack.c.b16 %v5331, %v5330
      %v5342 = vpack.c.b16 %v5333, %v5332
      %v5343 = vpack.c.b16 %v5335, %v5334
      %5352 = vmatprep.subr.bf16.mxu0 0
      %5353 = vmatpush1.bf16.msra.mxu0 %v5343
      %5354 = vmatprep.subr.bf16.mxu0 0
      %5355 = vmatpush1.bf16.msra.mxu0 %v5342
      %5356 = vmatprep.subr.bf16.mxu0 0
      %5357 = vmatpush1.bf16.msra.mxu0 %v5341
      %5358 = vmatprep.subr.bf16.mxu0 0
      %5359 = vmatpush1.bf16.msra.mxu0 %v5340
      %5360 = vmatprep.subr.bf16.mxu0 0
      %5361 = vmatpush1.bf16.msra.mxu0 %v5339
      %5362 = vmatprep.subr.bf16.mxu0 0
      %5363 = vmatpush1.bf16.msra.mxu0 %v5338
      %5364 = vmatprep.subr.bf16.mxu0 0
      %5365 = vmatpush1.bf16.msra.mxu0 %v5337
      %5366 = vmatprep.subr.bf16.mxu0 0
      %5367 = vmatpush1.bf16.msra.mxu0 %v5336
      %5368 = vmatprep.subr.bf16.mxu0 0
      %5369 = vmatpush2.bf16.msra.mxu0 0
      %5370 = vmatprep.subr.bf16.mxu0 0
      %5371 = vmatpush2.bf16.msra.mxu0 0
      %5372 = vmatprep.subr.bf16.mxu0 0
      %5373 = vmatpush2.bf16.msra.mxu0 0
      %5374 = vmatprep.subr.bf16.mxu0 0
      %5375 = vmatpush2.bf16.msra.mxu0 0
      %5376 = vmatprep.subr.bf16.mxu0 0
      %5377 = vmatpush2.bf16.msra.mxu0 0
      %5378 = vmatprep.subr.bf16.mxu0 0
      %5379 = vmatpush2.bf16.msra.mxu0 0
      %5380 = vmatprep.subr.bf16.mxu0 0
      %5381 = vmatpush2.bf16.msra.mxu0 0
      %5382 = vmatprep.subr.bf16.mxu0 0
      %5383 = vmatpush2.bf16.msra.mxu0 0
      %5384 = vmatprep.mubr.bf16.mxu0 0
      %5385 = vmatmul.mubr.bf16.gmra.mxu0 %v5283
      %v5386 = vpop.f32.mrf.mxu0
      %v5387 = vadd.f32 0.0, %v5386
      %v5388 = vpop.f32.mrf.mxu0
      %v5389 = vpop.f32.mrf.mxu0
      %v5390 = vadd.f32 0.0, %v5389
      %v5391 = vpop.f32.mrf.mxu0
      %5392 = vmatprep.mubr.bf16.mxu0 0
      %5393 = vmatmul.mubr.bf16.gmra.mxu0 %v5284
      %v5394 = vpop.f32.mrf.mxu0
      %v5395 = vadd.f32 0.0, %v5394
      %v5396 = vpop.f32.mrf.mxu0
      %v5397 = vpop.f32.mrf.mxu0
      %v5398 = vadd.f32 0.0, %v5397
      %v5399 = vpop.f32.mrf.mxu0
      %5400 = vmatprep.mubr.bf16.mxu0 0
      %5401 = vmatmul.mubr.bf16.gmra.mxu0 %v5285
      %v5402 = vpop.f32.mrf.mxu0
      %v5403 = vadd.f32 0.0, %v5402
      %v5404 = vpop.f32.mrf.mxu0
      %v5405 = vpop.f32.mrf.mxu0
      %v5406 = vadd.f32 0.0, %v5405
      %v5407 = vpop.f32.mrf.mxu0
      %5408 = vmatprep.mubr.bf16.mxu0 0
      %5409 = vmatmul.mubr.bf16.gmra.mxu0 %v5286
      %v5410 = vpop.f32.mrf.mxu0
      %v5411 = vadd.f32 0.0, %v5410
      %v5412 = vpop.f32.mrf.mxu0
      %v5413 = vpop.f32.mrf.mxu0
      %v5414 = vadd.f32 0.0, %v5413
      %v5415 = vpop.f32.mrf.mxu0
      %5416 = vdwg.mxu0
      %v5417 = vadd.f32 %v5267, %v5387
      %v5418 = vadd.f32 %v5268, %v5390
      %v5419 = vadd.f32 %v5269, %v5395
      %v5420 = vadd.f32 %v5270, %v5398
      %v5421 = vadd.f32 %v5271, %v5403
      %v5422 = vadd.f32 %v5272, %v5406
      %v5423 = vadd.f32 %v5273, %v5411
      %v5424 = vadd.f32 %v5274, %v5414
      %v5425 = vld [vmem:[%s4683 + $0x9] sm:$0xff]
      %v5426 = vld [vmem:[%s4683 + $0x21] sm:$0xff]
      %v5427 = vld [vmem:[%s4683 + $0x39] sm:$0xff]
      %v5428 = vld [vmem:[%s4683 + $0x51] sm:$0xff]
      %v5429 = vld [vmem:[%s4683 + $0x69] sm:$0xff]
      %v5430 = vld [vmem:[%s4683 + $0x81] sm:$0xff]
      %v5431 = vld [vmem:[%s4683 + $0x99] sm:$0xff]
      %v5432 = vld [vmem:[%s4683 + $0xb1] sm:$0xff]
      %v5433 = vpack.c.bf16 %v5426, %v5425
      %v5434 = vpack.c.bf16 %v5428, %v5427
      %v5435 = vpack.c.bf16 %v5430, %v5429
      %v5436 = vpack.c.bf16 %v5432, %v5431
      %s5437 = scalar_lea.vmem %s5, 320
      %v5438 = vld [vmem:[%s5437] sm:$0xf]
      %v5439 = vld [vmem:[%s5437 + $0x4] sm:$0xf]
      %v5440 = vld [vmem:[%s5437 + $0x8] sm:$0xf]
      %v5441 = vld [vmem:[%s5437 + $0xc] sm:$0xf]
      %v5442 = vld [vmem:[%s5437 + $0x10] sm:$0xf]
      %v5443 = vld [vmem:[%s5437 + $0x14] sm:$0xf]
      %v5444 = vld [vmem:[%s5437 + $0x18] sm:$0xf]
      %v5445 = vld [vmem:[%s5437 + $0x1c] sm:$0xf]
      %v5446 = vld [vmem:[%s5437 + $0x20] sm:$0xf]
      %v5447 = vld [vmem:[%s5437 + $0x24] sm:$0xf]
      %v5448 = vld [vmem:[%s5437 + $0x28] sm:$0xf]
      %v5449 = vld [vmem:[%s5437 + $0x2c] sm:$0xf]
      %v5450 = vld [vmem:[%s5437 + $0x30] sm:$0xf]
      %v5451 = vld [vmem:[%s5437 + $0x34] sm:$0xf]
      %v5452 = vld [vmem:[%s5437 + $0x38] sm:$0xf]
      %v5453 = vld [vmem:[%s5437 + $0x3c] sm:$0xf]
      %v5470 = vunpack.c.l.b16 %v5438
      %v5471 = vunpack.c.l.b16 %v5439
      %v5472 = vunpack.c.l.b16 %v5440
      %v5473 = vunpack.c.l.b16 %v5441
      %v5474 = vunpack.c.l.b16 %v5442
      %v5475 = vunpack.c.l.b16 %v5443
      %v5476 = vunpack.c.l.b16 %v5444
      %v5477 = vunpack.c.l.b16 %v5445
      %v5478 = vunpack.c.l.b16 %v5446
      %v5479 = vunpack.c.l.b16 %v5447
      %v5480 = vunpack.c.l.b16 %v5448
      %v5481 = vunpack.c.l.b16 %v5449
      %v5482 = vunpack.c.l.b16 %v5450
      %v5483 = vunpack.c.l.b16 %v5451
      %v5484 = vunpack.c.l.b16 %v5452
      %v5485 = vunpack.c.l.b16 %v5453
      %v5486 = vpack.c.b16 %v5471, %v5470
      %v5487 = vpack.c.b16 %v5473, %v5472
      %v5488 = vpack.c.b16 %v5475, %v5474
      %v5489 = vpack.c.b16 %v5477, %v5476
      %v5490 = vpack.c.b16 %v5479, %v5478
      %v5491 = vpack.c.b16 %v5481, %v5480
      %v5492 = vpack.c.b16 %v5483, %v5482
      %v5493 = vpack.c.b16 %v5485, %v5484
      %5502 = vmatprep.subr.bf16.mxu0 0
      %5503 = vmatpush1.bf16.msra.mxu0 %v5493
      %5504 = vmatprep.subr.bf16.mxu0 0
      %5505 = vmatpush1.bf16.msra.mxu0 %v5492
      %5506 = vmatprep.subr.bf16.mxu0 0
      %5507 = vmatpush1.bf16.msra.mxu0 %v5491
      %5508 = vmatprep.subr.bf16.mxu0 0
      %5509 = vmatpush1.bf16.msra.mxu0 %v5490
      %5510 = vmatprep.subr.bf16.mxu0 0
      %5511 = vmatpush1.bf16.msra.mxu0 %v5489
      %5512 = vmatprep.subr.bf16.mxu0 0
      %5513 = vmatpush1.bf16.msra.mxu0 %v5488
      %5514 = vmatprep.subr.bf16.mxu0 0
      %5515 = vmatpush1.bf16.msra.mxu0 %v5487
      %5516 = vmatprep.subr.bf16.mxu0 0
      %5517 = vmatpush1.bf16.msra.mxu0 %v5486
      %5518 = vmatprep.subr.bf16.mxu0 0
      %5519 = vmatpush2.bf16.msra.mxu0 0
      %5520 = vmatprep.subr.bf16.mxu0 0
      %5521 = vmatpush2.bf16.msra.mxu0 0
      %5522 = vmatprep.subr.bf16.mxu0 0
      %5523 = vmatpush2.bf16.msra.mxu0 0
      %5524 = vmatprep.subr.bf16.mxu0 0
      %5525 = vmatpush2.bf16.msra.mxu0 0
      %5526 = vmatprep.subr.bf16.mxu0 0
      %5527 = vmatpush2.bf16.msra.mxu0 0
      %5528 = vmatprep.subr.bf16.mxu0 0
      %5529 = vmatpush2.bf16.msra.mxu0 0
      %5530 = vmatprep.subr.bf16.mxu0 0
      %5531 = vmatpush2.bf16.msra.mxu0 0
      %5532 = vmatprep.subr.bf16.mxu0 0
      %5533 = vmatpush2.bf16.msra.mxu0 0
      %5534 = vmatprep.mubr.bf16.mxu0 0
      %5535 = vmatmul.mubr.bf16.gmra.mxu0 %v5433
      %v5536 = vpop.f32.mrf.mxu0
      %v5537 = vadd.f32 0.0, %v5536
      %v5538 = vpop.f32.mrf.mxu0
      %v5539 = vpop.f32.mrf.mxu0
      %v5540 = vadd.f32 0.0, %v5539
      %v5541 = vpop.f32.mrf.mxu0
      %5542 = vmatprep.mubr.bf16.mxu0 0
      %5543 = vmatmul.mubr.bf16.gmra.mxu0 %v5434
      %v5544 = vpop.f32.mrf.mxu0
      %v5545 = vadd.f32 0.0, %v5544
      %v5546 = vpop.f32.mrf.mxu0
      %v5547 = vpop.f32.mrf.mxu0
      %v5548 = vadd.f32 0.0, %v5547
      %v5549 = vpop.f32.mrf.mxu0
      %5550 = vmatprep.mubr.bf16.mxu0 0
      %5551 = vmatmul.mubr.bf16.gmra.mxu0 %v5435
      %v5552 = vpop.f32.mrf.mxu0
      %v5553 = vadd.f32 0.0, %v5552
      %v5554 = vpop.f32.mrf.mxu0
      %v5555 = vpop.f32.mrf.mxu0
      %v5556 = vadd.f32 0.0, %v5555
      %v5557 = vpop.f32.mrf.mxu0
      %5558 = vmatprep.mubr.bf16.mxu0 0
      %5559 = vmatmul.mubr.bf16.gmra.mxu0 %v5436
      %v5560 = vpop.f32.mrf.mxu0
      %v5561 = vadd.f32 0.0, %v5560
      %v5562 = vpop.f32.mrf.mxu0
      %v5563 = vpop.f32.mrf.mxu0
      %v5564 = vadd.f32 0.0, %v5563
      %v5565 = vpop.f32.mrf.mxu0
      %5566 = vdwg.mxu0
      %v5567 = vadd.f32 %v5417, %v5537
      %v5568 = vadd.f32 %v5418, %v5540
      %v5569 = vadd.f32 %v5419, %v5545
      %v5570 = vadd.f32 %v5420, %v5548
      %v5571 = vadd.f32 %v5421, %v5553
      %v5572 = vadd.f32 %v5422, %v5556
      %v5573 = vadd.f32 %v5423, %v5561
      %v5574 = vadd.f32 %v5424, %v5564
      %s5575 = scalar_lea.vmem [#allocation4], 48
      %v5576 = vld [vmem:[%s5575 + $0x7] sm:$0xff]
      %v5577 = vld [vmem:[%s5575 + $0x1f] sm:$0xff]
      %v5578 = vld [vmem:[%s5575 + $0x37] sm:$0xff]
      %v5579 = vld [vmem:[%s5575 + $0x4f] sm:$0xff]
      %v5580 = vld [vmem:[%s5575 + $0x67] sm:$0xff]
      %v5581 = vld [vmem:[%s5575 + $0x7f] sm:$0xff]
      %v5582 = vld [vmem:[%s5575 + $0x97] sm:$0xff]
      %v5583 = vld [vmem:[%s5575 + $0xaf] sm:$0xff]
      %v5584 = vpack.c.bf16 %v5577, %v5576
      %v5585 = vpack.c.bf16 %v5579, %v5578
      %v5586 = vpack.c.bf16 %v5581, %v5580
      %v5587 = vpack.c.bf16 %v5583, %v5582
      %s5588 = scalar_lea.vmem %s5, 384
      %v5589 = vld [vmem:[%s5588] sm:$0xf]
      %v5590 = vld [vmem:[%s5588 + $0x4] sm:$0xf]
      %v5591 = vld [vmem:[%s5588 + $0x8] sm:$0xf]
      %v5592 = vld [vmem:[%s5588 + $0xc] sm:$0xf]
      %v5593 = vld [vmem:[%s5588 + $0x10] sm:$0xf]
      %v5594 = vld [vmem:[%s5588 + $0x14] sm:$0xf]
      %v5595 = vld [vmem:[%s5588 + $0x18] sm:$0xf]
      %v5596 = vld [vmem:[%s5588 + $0x1c] sm:$0xf]
      %v5597 = vld [vmem:[%s5588 + $0x20] sm:$0xf]
      %v5598 = vld [vmem:[%s5588 + $0x24] sm:$0xf]
      %v5599 = vld [vmem:[%s5588 + $0x28] sm:$0xf]
      %v5600 = vld [vmem:[%s5588 + $0x2c] sm:$0xf]
      %v5601 = vld [vmem:[%s5588 + $0x30] sm:$0xf]
      %v5602 = vld [vmem:[%s5588 + $0x34] sm:$0xf]
      %v5603 = vld [vmem:[%s5588 + $0x38] sm:$0xf]
      %v5604 = vld [vmem:[%s5588 + $0x3c] sm:$0xf]
      %v5621 = vunpack.c.l.b16 %v5589
      %v5622 = vunpack.c.l.b16 %v5590
      %v5623 = vunpack.c.l.b16 %v5591
      %v5624 = vunpack.c.l.b16 %v5592
      %v5625 = vunpack.c.l.b16 %v5593
      %v5626 = vunpack.c.l.b16 %v5594
      %v5627 = vunpack.c.l.b16 %v5595
      %v5628 = vunpack.c.l.b16 %v5596
      %v5629 = vunpack.c.l.b16 %v5597
      %v5630 = vunpack.c.l.b16 %v5598
      %v5631 = vunpack.c.l.b16 %v5599
      %v5632 = vunpack.c.l.b16 %v5600
      %v5633 = vunpack.c.l.b16 %v5601
      %v5634 = vunpack.c.l.b16 %v5602
      %v5635 = vunpack.c.l.b16 %v5603
      %v5636 = vunpack.c.l.b16 %v5604
      %v5637 = vpack.c.b16 %v5622, %v5621
      %v5638 = vpack.c.b16 %v5624, %v5623
      %v5639 = vpack.c.b16 %v5626, %v5625
      %v5640 = vpack.c.b16 %v5628, %v5627
      %v5641 = vpack.c.b16 %v5630, %v5629
      %v5642 = vpack.c.b16 %v5632, %v5631
      %v5643 = vpack.c.b16 %v5634, %v5633
      %v5644 = vpack.c.b16 %v5636, %v5635
      %5653 = vmatprep.subr.bf16.mxu0 0
      %5654 = vmatpush1.bf16.msra.mxu0 %v5644
      %5655 = vmatprep.subr.bf16.mxu0 0
      %5656 = vmatpush1.bf16.msra.mxu0 %v5643
      %5657 = vmatprep.subr.bf16.mxu0 0
      %5658 = vmatpush1.bf16.msra.mxu0 %v5642
      %5659 = vmatprep.subr.bf16.mxu0 0
      %5660 = vmatpush1.bf16.msra.mxu0 %v5641
      %5661 = vmatprep.subr.bf16.mxu0 0
      %5662 = vmatpush1.bf16.msra.mxu0 %v5640
      %5663 = vmatprep.subr.bf16.mxu0 0
      %5664 = vmatpush1.bf16.msra.mxu0 %v5639
      %5665 = vmatprep.subr.bf16.mxu0 0
      %5666 = vmatpush1.bf16.msra.mxu0 %v5638
      %5667 = vmatprep.subr.bf16.mxu0 0
      %5668 = vmatpush1.bf16.msra.mxu0 %v5637
      %5669 = vmatprep.subr.bf16.mxu0 0
      %5670 = vmatpush2.bf16.msra.mxu0 0
      %5671 = vmatprep.subr.bf16.mxu0 0
      %5672 = vmatpush2.bf16.msra.mxu0 0
      %5673 = vmatprep.subr.bf16.mxu0 0
      %5674 = vmatpush2.bf16.msra.mxu0 0
      %5675 = vmatprep.subr.bf16.mxu0 0
      %5676 = vmatpush2.bf16.msra.mxu0 0
      %5677 = vmatprep.subr.bf16.mxu0 0
      %5678 = vmatpush2.bf16.msra.mxu0 0
      %5679 = vmatprep.subr.bf16.mxu0 0
      %5680 = vmatpush2.bf16.msra.mxu0 0
      %5681 = vmatprep.subr.bf16.mxu0 0
      %5682 = vmatpush2.bf16.msra.mxu0 0
      %5683 = vmatprep.subr.bf16.mxu0 0
      %5684 = vmatpush2.bf16.msra.mxu0 0
      %5685 = vmatprep.mubr.bf16.mxu0 0
      %5686 = vmatmul.mubr.bf16.gmra.mxu0 %v5584
      %v5687 = vpop.f32.mrf.mxu0
      %v5688 = vadd.f32 0.0, %v5687
      %v5689 = vpop.f32.mrf.mxu0
      %v5690 = vpop.f32.mrf.mxu0
      %v5691 = vadd.f32 0.0, %v5690
      %v5692 = vpop.f32.mrf.mxu0
      %5693 = vmatprep.mubr.bf16.mxu0 0
      %5694 = vmatmul.mubr.bf16.gmra.mxu0 %v5585
      %v5695 = vpop.f32.mrf.mxu0
      %v5696 = vadd.f32 0.0, %v5695
      %v5697 = vpop.f32.mrf.mxu0
      %v5698 = vpop.f32.mrf.mxu0
      %v5699 = vadd.f32 0.0, %v5698
      %v5700 = vpop.f32.mrf.mxu0
      %5701 = vmatprep.mubr.bf16.mxu0 0
      %5702 = vmatmul.mubr.bf16.gmra.mxu0 %v5586
      %v5703 = vpop.f32.mrf.mxu0
      %v5704 = vadd.f32 0.0, %v5703
      %v5705 = vpop.f32.mrf.mxu0
      %v5706 = vpop.f32.mrf.mxu0
      %v5707 = vadd.f32 0.0, %v5706
      %v5708 = vpop.f32.mrf.mxu0
      %5709 = vmatprep.mubr.bf16.mxu0 0
      %5710 = vmatmul.mubr.bf16.gmra.mxu0 %v5587
      %v5711 = vpop.f32.mrf.mxu0
      %v5712 = vadd.f32 0.0, %v5711
      %v5713 = vpop.f32.mrf.mxu0
      %v5714 = vpop.f32.mrf.mxu0
      %v5715 = vadd.f32 0.0, %v5714
      %v5716 = vpop.f32.mrf.mxu0
      %5717 = vdwg.mxu0
      %v5718 = vadd.f32 %v5567, %v5688
      %v5719 = vadd.f32 %v5568, %v5691
      %v5720 = vadd.f32 %v5569, %v5696
      %v5721 = vadd.f32 %v5570, %v5699
      %v5722 = vadd.f32 %v5571, %v5704
      %v5723 = vadd.f32 %v5572, %v5707
      %v5724 = vadd.f32 %v5573, %v5712
      %v5725 = vadd.f32 %v5574, %v5715
      %v5726 = vld [vmem:[%s5575 + $0x8] sm:$0xff]
      %v5727 = vld [vmem:[%s5575 + $0x20] sm:$0xff]
      %v5728 = vld [vmem:[%s5575 + $0x38] sm:$0xff]
      %v5729 = vld [vmem:[%s5575 + $0x50] sm:$0xff]
      %v5730 = vld [vmem:[%s5575 + $0x68] sm:$0xff]
      %v5731 = vld [vmem:[%s5575 + $0x80] sm:$0xff]
      %v5732 = vld [vmem:[%s5575 + $0x98] sm:$0xff]
      %v5733 = vld [vmem:[%s5575 + $0xb0] sm:$0xff]
      %v5734 = vpack.c.bf16 %v5727, %v5726
      %v5735 = vpack.c.bf16 %v5729, %v5728
      %v5736 = vpack.c.bf16 %v5731, %v5730
      %v5737 = vpack.c.bf16 %v5733, %v5732
      %s5738 = scalar_lea.vmem %s5, 448
      %v5739 = vld [vmem:[%s5738] sm:$0xf]
      %v5740 = vld [vmem:[%s5738 + $0x4] sm:$0xf]
      %v5741 = vld [vmem:[%s5738 + $0x8] sm:$0xf]
      %v5742 = vld [vmem:[%s5738 + $0xc] sm:$0xf]
      %v5743 = vld [vmem:[%s5738 + $0x10] sm:$0xf]
      %v5744 = vld [vmem:[%s5738 + $0x14] sm:$0xf]
      %v5745 = vld [vmem:[%s5738 + $0x18] sm:$0xf]
      %v5746 = vld [vmem:[%s5738 + $0x1c] sm:$0xf]
      %v5747 = vld [vmem:[%s5738 + $0x20] sm:$0xf]
      %v5748 = vld [vmem:[%s5738 + $0x24] sm:$0xf]
      %v5749 = vld [vmem:[%s5738 + $0x28] sm:$0xf]
      %v5750 = vld [vmem:[%s5738 + $0x2c] sm:$0xf]
      %v5751 = vld [vmem:[%s5738 + $0x30] sm:$0xf]
      %v5752 = vld [vmem:[%s5738 + $0x34] sm:$0xf]
      %v5753 = vld [vmem:[%s5738 + $0x38] sm:$0xf]
      %v5754 = vld [vmem:[%s5738 + $0x3c] sm:$0xf]
      %v5771 = vunpack.c.l.b16 %v5739
      %v5772 = vunpack.c.l.b16 %v5740
      %v5773 = vunpack.c.l.b16 %v5741
      %v5774 = vunpack.c.l.b16 %v5742
      %v5775 = vunpack.c.l.b16 %v5743
      %v5776 = vunpack.c.l.b16 %v5744
      %v5777 = vunpack.c.l.b16 %v5745
      %v5778 = vunpack.c.l.b16 %v5746
      %v5779 = vunpack.c.l.b16 %v5747
      %v5780 = vunpack.c.l.b16 %v5748
      %v5781 = vunpack.c.l.b16 %v5749
      %v5782 = vunpack.c.l.b16 %v5750
      %v5783 = vunpack.c.l.b16 %v5751
      %v5784 = vunpack.c.l.b16 %v5752
      %v5785 = vunpack.c.l.b16 %v5753
      %v5786 = vunpack.c.l.b16 %v5754
      %v5787 = vpack.c.b16 %v5772, %v5771
      %v5788 = vpack.c.b16 %v5774, %v5773
      %v5789 = vpack.c.b16 %v5776, %v5775
      %v5790 = vpack.c.b16 %v5778, %v5777
      %v5791 = vpack.c.b16 %v5780, %v5779
      %v5792 = vpack.c.b16 %v5782, %v5781
      %v5793 = vpack.c.b16 %v5784, %v5783
      %v5794 = vpack.c.b16 %v5786, %v5785
      %5803 = vmatprep.subr.bf16.mxu0 0
      %5804 = vmatpush1.bf16.msra.mxu0 %v5794
      %5805 = vmatprep.subr.bf16.mxu0 0
      %5806 = vmatpush1.bf16.msra.mxu0 %v5793
      %5807 = vmatprep.subr.bf16.mxu0 0
      %5808 = vmatpush1.bf16.msra.mxu0 %v5792
      %5809 = vmatprep.subr.bf16.mxu0 0
      %5810 = vmatpush1.bf16.msra.mxu0 %v5791
      %5811 = vmatprep.subr.bf16.mxu0 0
      %5812 = vmatpush1.bf16.msra.mxu0 %v5790
      %5813 = vmatprep.subr.bf16.mxu0 0
      %5814 = vmatpush1.bf16.msra.mxu0 %v5789
      %5815 = vmatprep.subr.bf16.mxu0 0
      %5816 = vmatpush1.bf16.msra.mxu0 %v5788
      %5817 = vmatprep.subr.bf16.mxu0 0
      %5818 = vmatpush1.bf16.msra.mxu0 %v5787
      %5819 = vmatprep.subr.bf16.mxu0 0
      %5820 = vmatpush2.bf16.msra.mxu0 0
      %5821 = vmatprep.subr.bf16.mxu0 0
      %5822 = vmatpush2.bf16.msra.mxu0 0
      %5823 = vmatprep.subr.bf16.mxu0 0
      %5824 = vmatpush2.bf16.msra.mxu0 0
      %5825 = vmatprep.subr.bf16.mxu0 0
      %5826 = vmatpush2.bf16.msra.mxu0 0
      %5827 = vmatprep.subr.bf16.mxu0 0
      %5828 = vmatpush2.bf16.msra.mxu0 0
      %5829 = vmatprep.subr.bf16.mxu0 0
      %5830 = vmatpush2.bf16.msra.mxu0 0
      %5831 = vmatprep.subr.bf16.mxu0 0
      %5832 = vmatpush2.bf16.msra.mxu0 0
      %5833 = vmatprep.subr.bf16.mxu0 0
      %5834 = vmatpush2.bf16.msra.mxu0 0
      %5835 = vmatprep.mubr.bf16.mxu0 0
      %5836 = vmatmul.mubr.bf16.gmra.mxu0 %v5734
      %v5837 = vpop.f32.mrf.mxu0
      %v5838 = vadd.f32 0.0, %v5837
      %v5839 = vpop.f32.mrf.mxu0
      %v5840 = vpop.f32.mrf.mxu0
      %v5841 = vadd.f32 0.0, %v5840
      %v5842 = vpop.f32.mrf.mxu0
      %5843 = vmatprep.mubr.bf16.mxu0 0
      %5844 = vmatmul.mubr.bf16.gmra.mxu0 %v5735
      %v5845 = vpop.f32.mrf.mxu0
      %v5846 = vadd.f32 0.0, %v5845
      %v5847 = vpop.f32.mrf.mxu0
      %v5848 = vpop.f32.mrf.mxu0
      %v5849 = vadd.f32 0.0, %v5848
      %v5850 = vpop.f32.mrf.mxu0
      %5851 = vmatprep.mubr.bf16.mxu0 0
      %5852 = vmatmul.mubr.bf16.gmra.mxu0 %v5736
      %v5853 = vpop.f32.mrf.mxu0
      %v5854 = vadd.f32 0.0, %v5853
      %v5855 = vpop.f32.mrf.mxu0
      %v5856 = vpop.f32.mrf.mxu0
      %v5857 = vadd.f32 0.0, %v5856
      %v5858 = vpop.f32.mrf.mxu0
      %5859 = vmatprep.mubr.bf16.mxu0 0
      %5860 = vmatmul.mubr.bf16.gmra.mxu0 %v5737
      %v5861 = vpop.f32.mrf.mxu0
      %v5862 = vadd.f32 0.0, %v5861
      %v5863 = vpop.f32.mrf.mxu0
      %v5864 = vpop.f32.mrf.mxu0
      %v5865 = vadd.f32 0.0, %v5864
      %v5866 = vpop.f32.mrf.mxu0
      %5867 = vdwg.mxu0
      %v5868 = vadd.f32 %v5718, %v5838
      %v5869 = vadd.f32 %v5719, %v5841
      %v5870 = vadd.f32 %v5720, %v5846
      %v5871 = vadd.f32 %v5721, %v5849
      %v5872 = vadd.f32 %v5722, %v5854
      %v5873 = vadd.f32 %v5723, %v5857
      %v5874 = vadd.f32 %v5724, %v5862
      %v5875 = vadd.f32 %v5725, %v5865
      %v5876 = vld [vmem:[%s5575 + $0x9] sm:$0xff]
      %v5877 = vld [vmem:[%s5575 + $0x21] sm:$0xff]
      %v5878 = vld [vmem:[%s5575 + $0x39] sm:$0xff]
      %v5879 = vld [vmem:[%s5575 + $0x51] sm:$0xff]
      %v5880 = vld [vmem:[%s5575 + $0x69] sm:$0xff]
      %v5881 = vld [vmem:[%s5575 + $0x81] sm:$0xff]
      %v5882 = vld [vmem:[%s5575 + $0x99] sm:$0xff]
      %v5883 = vld [vmem:[%s5575 + $0xb1] sm:$0xff]
      %v5884 = vpack.c.bf16 %v5877, %v5876
      %v5885 = vpack.c.bf16 %v5879, %v5878
      %v5886 = vpack.c.bf16 %v5881, %v5880
      %v5887 = vpack.c.bf16 %v5883, %v5882
      %s5888 = scalar_lea.vmem %s5, 512
      %v5889 = vld [vmem:[%s5888] sm:$0xf]
      %v5890 = vld [vmem:[%s5888 + $0x4] sm:$0xf]
      %v5891 = vld [vmem:[%s5888 + $0x8] sm:$0xf]
      %v5892 = vld [vmem:[%s5888 + $0xc] sm:$0xf]
      %v5893 = vld [vmem:[%s5888 + $0x10] sm:$0xf]
      %v5894 = vld [vmem:[%s5888 + $0x14] sm:$0xf]
      %v5895 = vld [vmem:[%s5888 + $0x18] sm:$0xf]
      %v5896 = vld [vmem:[%s5888 + $0x1c] sm:$0xf]
      %v5897 = vld [vmem:[%s5888 + $0x20] sm:$0xf]
      %v5898 = vld [vmem:[%s5888 + $0x24] sm:$0xf]
      %v5899 = vld [vmem:[%s5888 + $0x28] sm:$0xf]
      %v5900 = vld [vmem:[%s5888 + $0x2c] sm:$0xf]
      %v5901 = vld [vmem:[%s5888 + $0x30] sm:$0xf]
      %v5902 = vld [vmem:[%s5888 + $0x34] sm:$0xf]
      %v5903 = vld [vmem:[%s5888 + $0x38] sm:$0xf]
      %v5904 = vld [vmem:[%s5888 + $0x3c] sm:$0xf]
      %v5921 = vunpack.c.l.b16 %v5889
      %v5922 = vunpack.c.l.b16 %v5890
      %v5923 = vunpack.c.l.b16 %v5891
      %v5924 = vunpack.c.l.b16 %v5892
      %v5925 = vunpack.c.l.b16 %v5893
      %v5926 = vunpack.c.l.b16 %v5894
      %v5927 = vunpack.c.l.b16 %v5895
      %v5928 = vunpack.c.l.b16 %v5896
      %v5929 = vunpack.c.l.b16 %v5897
      %v5930 = vunpack.c.l.b16 %v5898
      %v5931 = vunpack.c.l.b16 %v5899
      %v5932 = vunpack.c.l.b16 %v5900
      %v5933 = vunpack.c.l.b16 %v5901
      %v5934 = vunpack.c.l.b16 %v5902
      %v5935 = vunpack.c.l.b16 %v5903
      %v5936 = vunpack.c.l.b16 %v5904
      %v5937 = vpack.c.b16 %v5922, %v5921
      %v5938 = vpack.c.b16 %v5924, %v5923
      %v5939 = vpack.c.b16 %v5926, %v5925
      %v5940 = vpack.c.b16 %v5928, %v5927
      %v5941 = vpack.c.b16 %v5930, %v5929
      %v5942 = vpack.c.b16 %v5932, %v5931
      %v5943 = vpack.c.b16 %v5934, %v5933
      %v5944 = vpack.c.b16 %v5936, %v5935
      %5953 = vmatprep.subr.bf16.mxu0 0
      %5954 = vmatpush1.bf16.msra.mxu0 %v5944
      %5955 = vmatprep.subr.bf16.mxu0 0
      %5956 = vmatpush1.bf16.msra.mxu0 %v5943
      %5957 = vmatprep.subr.bf16.mxu0 0
      %5958 = vmatpush1.bf16.msra.mxu0 %v5942
      %5959 = vmatprep.subr.bf16.mxu0 0
      %5960 = vmatpush1.bf16.msra.mxu0 %v5941
      %5961 = vmatprep.subr.bf16.mxu0 0
      %5962 = vmatpush1.bf16.msra.mxu0 %v5940
      %5963 = vmatprep.subr.bf16.mxu0 0
      %5964 = vmatpush1.bf16.msra.mxu0 %v5939
      %5965 = vmatprep.subr.bf16.mxu0 0
      %5966 = vmatpush1.bf16.msra.mxu0 %v5938
      %5967 = vmatprep.subr.bf16.mxu0 0
      %5968 = vmatpush1.bf16.msra.mxu0 %v5937
      %5969 = vmatprep.subr.bf16.mxu0 0
      %5970 = vmatpush2.bf16.msra.mxu0 0
      %5971 = vmatprep.subr.bf16.mxu0 0
      %5972 = vmatpush2.bf16.msra.mxu0 0
      %5973 = vmatprep.subr.bf16.mxu0 0
      %5974 = vmatpush2.bf16.msra.mxu0 0
      %5975 = vmatprep.subr.bf16.mxu0 0
      %5976 = vmatpush2.bf16.msra.mxu0 0
      %5977 = vmatprep.subr.bf16.mxu0 0
      %5978 = vmatpush2.bf16.msra.mxu0 0
      %5979 = vmatprep.subr.bf16.mxu0 0
      %5980 = vmatpush2.bf16.msra.mxu0 0
      %5981 = vmatprep.subr.bf16.mxu0 0
      %5982 = vmatpush2.bf16.msra.mxu0 0
      %5983 = vmatprep.subr.bf16.mxu0 0
      %5984 = vmatpush2.bf16.msra.mxu0 0
      %5985 = vmatprep.mubr.bf16.mxu0 0
      %5986 = vmatmul.mubr.bf16.gmra.mxu0 %v5884
      %v5987 = vpop.f32.mrf.mxu0
      %v5988 = vadd.f32 0.0, %v5987
      %v5989 = vpop.f32.mrf.mxu0
      %v5990 = vpop.f32.mrf.mxu0
      %v5991 = vadd.f32 0.0, %v5990
      %v5992 = vpop.f32.mrf.mxu0
      %5993 = vmatprep.mubr.bf16.mxu0 0
      %5994 = vmatmul.mubr.bf16.gmra.mxu0 %v5885
      %v5995 = vpop.f32.mrf.mxu0
      %v5996 = vadd.f32 0.0, %v5995
      %v5997 = vpop.f32.mrf.mxu0
      %v5998 = vpop.f32.mrf.mxu0
      %v5999 = vadd.f32 0.0, %v5998
      %v6000 = vpop.f32.mrf.mxu0
      %6001 = vmatprep.mubr.bf16.mxu0 0
      %6002 = vmatmul.mubr.bf16.gmra.mxu0 %v5886
      %v6003 = vpop.f32.mrf.mxu0
      %v6004 = vadd.f32 0.0, %v6003
      %v6005 = vpop.f32.mrf.mxu0
      %v6006 = vpop.f32.mrf.mxu0
      %v6007 = vadd.f32 0.0, %v6006
      %v6008 = vpop.f32.mrf.mxu0
      %6009 = vmatprep.mubr.bf16.mxu0 0
      %6010 = vmatmul.mubr.bf16.gmra.mxu0 %v5887
      %v6011 = vpop.f32.mrf.mxu0
      %v6012 = vadd.f32 0.0, %v6011
      %v6013 = vpop.f32.mrf.mxu0
      %v6014 = vpop.f32.mrf.mxu0
      %v6015 = vadd.f32 0.0, %v6014
      %v6016 = vpop.f32.mrf.mxu0
      %6017 = vdwg.mxu0
      %v6018 = vadd.f32 %v5868, %v5988
      %v6019 = vadd.f32 %v5869, %v5991
      %v6020 = vadd.f32 %v5870, %v5996
      %v6021 = vadd.f32 %v5871, %v5999
      %v6022 = vadd.f32 %v5872, %v6004
      %v6023 = vadd.f32 %v5873, %v6007
      %v6024 = vadd.f32 %v5874, %v6012
      %v6025 = vadd.f32 %v5875, %v6015
      %v6026 = vld [vmem:[%s6] sm:$0x1]
      %v6027 = vld [vmem:[%s6 + $0x1] sm:$0x1]
      %v6028 = vld [vmem:[%s6 + $0x2] sm:$0x1]
      %v6029 = vlaneseq
      %v6030 = vshrl.u32 %v6029, 7
      %v6031 = vsub.s32 0, %v6030
      %v6032 = vrot.slane %v6026, %v6031
      %v6033 = vadd.f32 %v6018, %v6032
      %v6034 = vadd.f32 %v6019, %v6032
      %v6035 = vadd.f32 %v6020, %v6032
      %v6036 = vadd.f32 %v6021, %v6032
      %v6037 = vadd.f32 %v6022, %v6032
      %v6038 = vadd.f32 %v6023, %v6032
      %v6039 = vadd.f32 %v6024, %v6032
      %v6040 = vadd.f32 %v6025, %v6032
      %v6041 = vmax.f32 %v6033, 0.0
      %v6042 = vmax.f32 %v6034, 0.0
      %v6043 = vmax.f32 %v6035, 0.0
      %v6044 = vmax.f32 %v6036, 0.0
      %v6045 = vmax.f32 %v6037, 0.0
      %v6046 = vmax.f32 %v6038, 0.0
      %v6047 = vmax.f32 %v6039, 0.0
      %v6048 = vmax.f32 %v6040, 0.0
      %v6049 = vlaneseq
      %v6050 = vshrl.u32 %v6049, 7
      %v6051 = vsub.s32 0, %v6050
      %v6052 = vrot.slane %v6027, %v6051
      %v6053 = vmul.f32 %v6041, %v6052
      %v6054 = vmul.f32 %v6042, %v6052
      %v6055 = vmul.f32 %v6043, %v6052
      %v6056 = vmul.f32 %v6044, %v6052
      %v6057 = vmul.f32 %v6045, %v6052
      %v6058 = vmul.f32 %v6046, %v6052
      %v6059 = vmul.f32 %v6047, %v6052
      %v6060 = vmul.f32 %v6048, %v6052
      %v6061 = vlaneseq
      %v6062 = vshrl.u32 %v6061, 7
      %v6063 = vsub.s32 0, %v6062
      %v6064 = vrot.slane %v6028, %v6063
      %v6065 = vadd.f32 %v6053, %v6064
      %v6066 = vadd.f32 %v6054, %v6064
      %v6067 = vadd.f32 %v6055, %v6064
      %v6068 = vadd.f32 %v6056, %v6064
      %v6069 = vadd.f32 %v6057, %v6064
      %v6070 = vadd.f32 %v6058, %v6064
      %v6071 = vadd.f32 %v6059, %v6064
      %v6072 = vadd.f32 %v6060, %v6064
      %6073 = vst [vmem:[%s278] sm:$0xff] %v6065
      %6074 = vst [vmem:[%s278 + $0x8] sm:$0xff] %v6066
      %6075 = vst [vmem:[%s278 + $0x10] sm:$0xff] %v6067
      %6076 = vst [vmem:[%s278 + $0x18] sm:$0xff] %v6068
      %6077 = vst [vmem:[%s278 + $0x20] sm:$0xff] %v6069
      %6078 = vst [vmem:[%s278 + $0x28] sm:$0xff] %v6070
      %6079 = vst [vmem:[%s278 + $0x30] sm:$0xff] %v6071
      %6080 = vst [vmem:[%s278 + $0x38] sm:$0xff] %v6072
      %p6081 = scmp.lt.s32.totalorder %s18, 1
      %s6082 = scalar_select %p6081, %s18, 1
      %s6083 = smul.addr %s6082, 8
      %s6084 = smul.addr %s6083, 8
      %s6085 = scalar_lea.vmem %s7, %s6084
      // Predicated region
      $region49: #{forward.2} parent=47 // pred_check
        %p6086 = pneg %p188
      $region50: #{forward.2} parent=47 // pred_check_branch
        %6088 = sbr.rel (%p6086) target = $region52
      $region51: #{forward.2} parent=47 // pred_region
        _
      $region52: #{forward.2} parent=47 // pred_fallthru
        _
    $region48: #{forward.2} parent=5 // pred_fallthru
      _
    %p6089 = scmp.le.s32.totalorder 2, %s13
    // Predicated region
    $region53: #{forward.2} parent=5 // pred_check
      %p6090 = pneg %p6089
    $region54: #{forward.2} parent=5 // pred_check_branch
      %6092 = sbr.rel (%p6090) target = $region56
    $region55: #{forward.2} parent=5 // pred_region
      %s6093 = ssub.s32 %s13, 2
      // Predicated region
      $region57: #{forward.2} parent=55 // pred_check
        %p6094 = pneg %p194
      $region58: #{forward.2} parent=55 // pred_check_branch
        %6096 = sbr.rel (%p6094) target = $region60
      $region59: #{forward.2} parent=55 // pred_region
        %p6097 = scmp.lt.s32.totalorder %s19, 1
        %s6098 = scalar_select %p6097, %s19, 1
        %s6099 = smul.addr %s6098, 8
        %s6100 = smul.addr %s6099, 8
        %s6101 = scalar_lea.vmem %s7, %s6100
      $region60: #{forward.2} parent=55 // pred_fallthru
        _
    $region56: #{forward.2} parent=5 // pred_fallthru
      _
  $region6: #{forward.2} parent=0 // loop_footer
    %s17 = sadd.s32 1, %s13
  $region7: #{forward.2} parent=0 // loop_footer_branch
    %12 = sbr.rel target = $region3
  $region8: #{forward.2} parent=0 // loop_exit
    _

// kernel: forward.3
$region0: #{forward.3}
  #allocation0 [shape = 'u32[]', space=smem, size = 0x4, offset = 0x4, fixed_abs, tag = 'smem constant byte address 0x4 - core index']
  #allocation1 [shape = 'u32[144,128]{1,0:T(1,128)}', space=vmem, size = 0x12000, scoped, tag = 'internal scratch']
  %s0 = inlined_call_operand.vmem [shape: f32[2,8192], index: 0, kind: input, shape index: {}]
  %s1 = inlined_call_operand.vmem [shape: bf16[8192,128], index: 1, kind: input, shape index: {}]
  %s2 = inlined_call_operand.vmem [shape: f32[1,128], index: 2, kind: input, shape index: {}]
  %s3 = inlined_call_operand.hbm [shape: f32[2,128], index: 3, kind: output, shape index: {}]
  %s4 = sld [smem:[#allocation0]]
  $region22: #{forward.3} parent=0
    _
  %s6 = ssub.s32 1, %s4
  %s7 = scalar_select 0, %s6, %s4
  $region1: #{forward.3} parent=0
    #allocation2 [shape = 'u8[1024]{0}', space=vmem, size = 0x400, scoped, tag = 'output window, operand 0, single buffered']
    #allocation3 [shape = 's32[1]{0}', space=sflag, size = 0x4, scoped, tag = 'scoped memory for forward.3']
    %8 = vsyncpa [#allocation3], 0
    // Predicated region
    $region2: #{forward.3} parent=1 // pred_check
      _
    $region3: #{forward.3} parent=1 // pred_check_branch
      %10 = sbr.rel (0) target = $region5
    $region4: #{forward.3} parent=1 // pred_region
      _
    $region5: #{forward.3} parent=1 // pred_fallthru
      _
    // Predicated region
    $region6: #{forward.3} parent=1 // pred_check
      _
    $region7: #{forward.3} parent=1 // pred_check_branch
      %12 = sbr.rel (0) target = $region9
    $region8: #{forward.3} parent=1 // pred_region
      _
    $region9: #{forward.3} parent=1 // pred_fallthru
      _
    // Predicated region
    $region10: #{forward.3} parent=1 // pred_check
      _
    $region11: #{forward.3} parent=1 // pred_check_branch
      %14 = sbr.rel (0) target = $region13
    $region12: #{forward.3} parent=1 // pred_region
      _
    $region13: #{forward.3} parent=1 // pred_fallthru
      _
    %v16 = vld [vmem:[%s0] sm:$0xff]
    %v17 = vld [vmem:[%s0 + $0x8] sm:$0xff]
    %v18 = vld [vmem:[%s0 + $0x10] sm:$0xff]
    %v19 = vld [vmem:[%s0 + $0x18] sm:$0xff]
    %v20 = vld [vmem:[%s0 + $0x20] sm:$0xff]
    %v21 = vld [vmem:[%s0 + $0x28] sm:$0xff]
    %v22 = vld [vmem:[%s0 + $0x30] sm:$0xff]
    %v23 = vld [vmem:[%s0 + $0x38] sm:$0xff]
    %v24 = vld [vmem:[%s0 + $0x40] sm:$0xff]
    %v25 = vld [vmem:[%s0 + $0x48] sm:$0xff]
    %v26 = vld [vmem:[%s0 + $0x50] sm:$0xff]
    %v27 = vld [vmem:[%s0 + $0x58] sm:$0xff]
    %v28 = vld [vmem:[%s0 + $0x60] sm:$0xff]
    %v29 = vld [vmem:[%s0 + $0x68] sm:$0xff]
    %v30 = vld [vmem:[%s0 + $0x70] sm:$0xff]
    %v31 = vld [vmem:[%s0 + $0x78] sm:$0xff]
    %v48 = vcombine.high %v16, %v16
    %v50 = vunpack.c.l.s4 1983009808
    %v51 = vunpack.c.0.s8 %v50
    %v52 = vlaneseq
    %v53 = vshrl.u32 %v52, 7
    %v54 = vsub.s32 %v51, %v53
    %v55 = vrot.slane %v16, %v54
    %v57 = vunpack.c.l.s4 1983009808
    %v58 = vunpack.c.0.s8 %v57
    %v59 = vlaneseq
    %v60 = vshrl.u32 %v59, 7
    %v61 = vsub.s32 %v58, %v60
    %v62 = vrot.slane %v48, %v61
    %v63 = vcombine.high %v55, %v55
    %v64 = vcombine.high %v62, %v62
    %v65 = vcombine.high %v17, %v17
    %v67 = vunpack.c.l.s4 1983009808
    %v68 = vunpack.c.0.s8 %v67
    %v69 = vlaneseq
    %v70 = vshrl.u32 %v69, 7
    %v71 = vsub.s32 %v68, %v70
    %v72 = vrot.slane %v17, %v71
    %v74 = vunpack.c.l.s4 1983009808
    %v75 = vunpack.c.0.s8 %v74
    %v76 = vlaneseq
    %v77 = vshrl.u32 %v76, 7
    %v78 = vsub.s32 %v75, %v77
    %v79 = vrot.slane %v65, %v78
    %v80 = vcombine.high %v72, %v72
    %v81 = vcombine.high %v79, %v79
    %v82 = vcombine.high %v18, %v18
    %v84 = vunpack.c.l.s4 1983009808
    %v85 = vunpack.c.0.s8 %v84
    %v86 = vlaneseq
    %v87 = vshrl.u32 %v86, 7
    %v88 = vsub.s32 %v85, %v87
    %v89 = vrot.slane %v18, %v88
    %v91 = vunpack.c.l.s4 1983009808
    %v92 = vunpack.c.0.s8 %v91
    %v93 = vlaneseq
    %v94 = vshrl.u32 %v93, 7
    %v95 = vsub.s32 %v92, %v94
    %v96 = vrot.slane %v82, %v95
    %v97 = vcombine.high %v89, %v89
    %v98 = vcombine.high %v96, %v96
    %v99 = vcombine.high %v19, %v19
    %v101 = vunpack.c.l.s4 1983009808
    %v102 = vunpack.c.0.s8 %v101
    %v103 = vlaneseq
    %v104 = vshrl.u32 %v103, 7
    %v105 = vsub.s32 %v102, %v104
    %v106 = vrot.slane %v19, %v105
    %v108 = vunpack.c.l.s4 1983009808
    %v109 = vunpack.c.0.s8 %v108
    %v110 = vlaneseq
    %v111 = vshrl.u32 %v110, 7
    %v112 = vsub.s32 %v109, %v111
    %v113 = vrot.slane %v99, %v112
    %v114 = vcombine.high %v106, %v106
    %v115 = vcombine.high %v113, %v113
    %v116 = vcombine.high %v20, %v20
    %v118 = vunpack.c.l.s4 1983009808
    %v119 = vunpack.c.0.s8 %v118
    %v120 = vlaneseq
    %v121 = vshrl.u32 %v120, 7
    %v122 = vsub.s32 %v119, %v121
    %v123 = vrot.slane %v20, %v122
    %v125 = vunpack.c.l.s4 1983009808
    %v126 = vunpack.c.0.s8 %v125
    %v127 = vlaneseq
    %v128 = vshrl.u32 %v127, 7
    %v129 = vsub.s32 %v126, %v128
    %v130 = vrot.slane %v116, %v129
    %v131 = vcombine.high %v123, %v123
    %v132 = vcombine.high %v130, %v130
    %v133 = vcombine.high %v21, %v21
    %v135 = vunpack.c.l.s4 1983009808
    %v136 = vunpack.c.0.s8 %v135
    %v137 = vlaneseq
    %v138 = vshrl.u32 %v137, 7
    %v139 = vsub.s32 %v136, %v138
    %v140 = vrot.slane %v21, %v139
    %v142 = vunpack.c.l.s4 1983009808
    %v143 = vunpack.c.0.s8 %v142
    %v144 = vlaneseq
    %v145 = vshrl.u32 %v144, 7
    %v146 = vsub.s32 %v143, %v145
    %v147 = vrot.slane %v133, %v146
    %v148 = vcombine.high %v140, %v140
    %v149 = vcombine.high %v147, %v147
    %v150 = vcombine.high %v22, %v22
    %v152 = vunpack.c.l.s4 1983009808
    %v153 = vunpack.c.0.s8 %v152
    %v154 = vlaneseq
    %v155 = vshrl.u32 %v154, 7
    %v156 = vsub.s32 %v153, %v155
    %v157 = vrot.slane %v22, %v156
    %v159 = vunpack.c.l.s4 1983009808
    %v160 = vunpack.c.0.s8 %v159
    %v161 = vlaneseq
    %v162 = vshrl.u32 %v161, 7
    %v163 = vsub.s32 %v160, %v162
    %v164 = vrot.slane %v150, %v163
    %v165 = vcombine.high %v157, %v157
    %v166 = vcombine.high %v164, %v164
    %v167 = vcombine.high %v23, %v23
    %v169 = vunpack.c.l.s4 1983009808
    %v170 = vunpack.c.0.s8 %v169
    %v171 = vlaneseq
    %v172 = vshrl.u32 %v171, 7
    %v173 = vsub.s32 %v170, %v172
    %v174 = vrot.slane %v23, %v173
    %v176 = vunpack.c.l.s4 1983009808
    %v177 = vunpack.c.0.s8 %v176
    %v178 = vlaneseq
    %v179 = vshrl.u32 %v178, 7
    %v180 = vsub.s32 %v177, %v179
    %v181 = vrot.slane %v167, %v180
    %v182 = vcombine.high %v174, %v174
    %v183 = vcombine.high %v181, %v181
    %v184 = vcombine.high %v24, %v24
    %v186 = vunpack.c.l.s4 1983009808
    %v187 = vunpack.c.0.s8 %v186
    %v188 = vlaneseq
    %v189 = vshrl.u32 %v188, 7
    %v190 = vsub.s32 %v187, %v189
    %v191 = vrot.slane %v24, %v190
    %v193 = vunpack.c.l.s4 1983009808
    %v194 = vunpack.c.0.s8 %v193
    %v195 = vlaneseq
    %v196 = vshrl.u32 %v195, 7
    %v197 = vsub.s32 %v194, %v196
    %v198 = vrot.slane %v184, %v197
    %v199 = vcombine.high %v191, %v191
    %v200 = vcombine.high %v198, %v198
    %v201 = vcombine.high %v25, %v25
    %v203 = vunpack.c.l.s4 1983009808
    %v204 = vunpack.c.0.s8 %v203
    %v205 = vlaneseq
    %v206 = vshrl.u32 %v205, 7
    %v207 = vsub.s32 %v204, %v206
    %v208 = vrot.slane %v25, %v207
    %v210 = vunpack.c.l.s4 1983009808
    %v211 = vunpack.c.0.s8 %v210
    %v212 = vlaneseq
    %v213 = vshrl.u32 %v212, 7
    %v214 = vsub.s32 %v211, %v213
    %v215 = vrot.slane %v201, %v214
    %v216 = vcombine.high %v208, %v208
    %v217 = vcombine.high %v215, %v215
    %v218 = vcombine.high %v26, %v26
    %v220 = vunpack.c.l.s4 1983009808
    %v221 = vunpack.c.0.s8 %v220
    %v222 = vlaneseq
    %v223 = vshrl.u32 %v222, 7
    %v224 = vsub.s32 %v221, %v223
    %v225 = vrot.slane %v26, %v224
    %v227 = vunpack.c.l.s4 1983009808
    %v228 = vunpack.c.0.s8 %v227
    %v229 = vlaneseq
    %v230 = vshrl.u32 %v229, 7
    %v231 = vsub.s32 %v228, %v230
    %v232 = vrot.slane %v218, %v231
    %v233 = vcombine.high %v225, %v225
    %v234 = vcombine.high %v232, %v232
    %v235 = vcombine.high %v27, %v27
    %v237 = vunpack.c.l.s4 1983009808
    %v238 = vunpack.c.0.s8 %v237
    %v239 = vlaneseq
    %v240 = vshrl.u32 %v239, 7
    %v241 = vsub.s32 %v238, %v240
    %v242 = vrot.slane %v27, %v241
    %v244 = vunpack.c.l.s4 1983009808
    %v245 = vunpack.c.0.s8 %v244
    %v246 = vlaneseq
    %v247 = vshrl.u32 %v246, 7
    %v248 = vsub.s32 %v245, %v247
    %v249 = vrot.slane %v235, %v248
    %v250 = vcombine.high %v242, %v242
    %v251 = vcombine.high %v249, %v249
    %v252 = vcombine.high %v28, %v28
    %v254 = vunpack.c.l.s4 1983009808
    %v255 = vunpack.c.0.s8 %v254
    %v256 = vlaneseq
    %v257 = vshrl.u32 %v256, 7
    %v258 = vsub.s32 %v255, %v257
    %v259 = vrot.slane %v28, %v258
    %v261 = vunpack.c.l.s4 1983009808
    %v262 = vunpack.c.0.s8 %v261
    %v263 = vlaneseq
    %v264 = vshrl.u32 %v263, 7
    %v265 = vsub.s32 %v262, %v264
    %v266 = vrot.slane %v252, %v265
    %v267 = vcombine.high %v259, %v259
    %v268 = vcombine.high %v266, %v266
    %v269 = vcombine.high %v29, %v29
    %v271 = vunpack.c.l.s4 1983009808
    %v272 = vunpack.c.0.s8 %v271
    %v273 = vlaneseq
    %v274 = vshrl.u32 %v273, 7
    %v275 = vsub.s32 %v272, %v274
    %v276 = vrot.slane %v29, %v275
    %v278 = vunpack.c.l.s4 1983009808
    %v279 = vunpack.c.0.s8 %v278
    %v280 = vlaneseq
    %v281 = vshrl.u32 %v280, 7
    %v282 = vsub.s32 %v279, %v281
    %v283 = vrot.slane %v269, %v282
    %v284 = vcombine.high %v276, %v276
    %v285 = vcombine.high %v283, %v283
    %v286 = vcombine.high %v30, %v30
    %v288 = vunpack.c.l.s4 1983009808
    %v289 = vunpack.c.0.s8 %v288
    %v290 = vlaneseq
    %v291 = vshrl.u32 %v290, 7
    %v292 = vsub.s32 %v289, %v291
    %v293 = vrot.slane %v30, %v292
    %v295 = vunpack.c.l.s4 1983009808
    %v296 = vunpack.c.0.s8 %v295
    %v297 = vlaneseq
    %v298 = vshrl.u32 %v297, 7
    %v299 = vsub.s32 %v296, %v298
    %v300 = vrot.slane %v286, %v299
    %v301 = vcombine.high %v293, %v293
    %v302 = vcombine.high %v300, %v300
    %v303 = vcombine.high %v31, %v31
    %v305 = vunpack.c.l.s4 1983009808
    %v306 = vunpack.c.0.s8 %v305
    %v307 = vlaneseq
    %v308 = vshrl.u32 %v307, 7
    %v309 = vsub.s32 %v306, %v308
    %v310 = vrot.slane %v31, %v309
    %v312 = vunpack.c.l.s4 1983009808
    %v313 = vunpack.c.0.s8 %v312
    %v314 = vlaneseq
    %v315 = vshrl.u32 %v314, 7
    %v316 = vsub.s32 %v313, %v315
    %v317 = vrot.slane %v303, %v316
    %v318 = vcombine.high %v310, %v310
    %v319 = vcombine.high %v317, %v317
    %v384 = vpack.c.bf16 %v55, %v55
    %v385 = vpack.c.bf16 %v63, %v63
    %v386 = vpack.c.bf16 %v62, %v62
    %v387 = vpack.c.bf16 %v64, %v64
    %v388 = vpack.c.bf16 %v72, %v72
    %v389 = vpack.c.bf16 %v80, %v80
    %v390 = vpack.c.bf16 %v79, %v79
    %v391 = vpack.c.bf16 %v81, %v81
    %v392 = vpack.c.bf16 %v89, %v89
    %v393 = vpack.c.bf16 %v97, %v97
    %v394 = vpack.c.bf16 %v96, %v96
    %v395 = vpack.c.bf16 %v98, %v98
    %v396 = vpack.c.bf16 %v106, %v106
    %v397 = vpack.c.bf16 %v114, %v114
    %v398 = vpack.c.bf16 %v113, %v113
    %v399 = vpack.c.bf16 %v115, %v115
    %v400 = vpack.c.bf16 %v123, %v123
    %v401 = vpack.c.bf16 %v131, %v131
    %v402 = vpack.c.bf16 %v130, %v130
    %v403 = vpack.c.bf16 %v132, %v132
    %v404 = vpack.c.bf16 %v140, %v140
    %v405 = vpack.c.bf16 %v148, %v148
    %v406 = vpack.c.bf16 %v147, %v147
    %v407 = vpack.c.bf16 %v149, %v149
    %v408 = vpack.c.bf16 %v157, %v157
    %v409 = vpack.c.bf16 %v165, %v165
    %v410 = vpack.c.bf16 %v164, %v164
    %v411 = vpack.c.bf16 %v166, %v166
    %v412 = vpack.c.bf16 %v174, %v174
    %v413 = vpack.c.bf16 %v182, %v182
    %v414 = vpack.c.bf16 %v181, %v181
    %v415 = vpack.c.bf16 %v183, %v183
    %v416 = vpack.c.bf16 %v191, %v191
    %v417 = vpack.c.bf16 %v199, %v199
    %v418 = vpack.c.bf16 %v198, %v198
    %v419 = vpack.c.bf16 %v200, %v200
    %v420 = vpack.c.bf16 %v208, %v208
    %v421 = vpack.c.bf16 %v216, %v216
    %v422 = vpack.c.bf16 %v215, %v215
    %v423 = vpack.c.bf16 %v217, %v217
    %v424 = vpack.c.bf16 %v225, %v225
    %v425 = vpack.c.bf16 %v233, %v233
    %v426 = vpack.c.bf16 %v232, %v232
    %v427 = vpack.c.bf16 %v234, %v234
    %v428 = vpack.c.bf16 %v242, %v242
    %v429 = vpack.c.bf16 %v250, %v250
    %v430 = vpack.c.bf16 %v249, %v249
    %v431 = vpack.c.bf16 %v251, %v251
    %v432 = vpack.c.bf16 %v259, %v259
    %v433 = vpack.c.bf16 %v267, %v267
    %v434 = vpack.c.bf16 %v266, %v266
    %v435 = vpack.c.bf16 %v268, %v268
    %v436 = vpack.c.bf16 %v276, %v276
    %v437 = vpack.c.bf16 %v284, %v284
    %v438 = vpack.c.bf16 %v283, %v283
    %v439 = vpack.c.bf16 %v285, %v285
    %v440 = vpack.c.bf16 %v293, %v293
    %v441 = vpack.c.bf16 %v301, %v301
    %v442 = vpack.c.bf16 %v300, %v300
    %v443 = vpack.c.bf16 %v302, %v302
    %v444 = vpack.c.bf16 %v310, %v310
    %v445 = vpack.c.bf16 %v318, %v318
    %v446 = vpack.c.bf16 %v317, %v317
    %v447 = vpack.c.bf16 %v319, %v319
    %v448 = vld [vmem:[%s1] sm:$0xf]
    %v449 = vld [vmem:[%s1 + $0x4] sm:$0xf]
    %v450 = vld [vmem:[%s1 + $0x8] sm:$0xf]
    %v451 = vld [vmem:[%s1 + $0xc] sm:$0xf]
    %v452 = vld [vmem:[%s1 + $0x10] sm:$0xf]
    %v453 = vld [vmem:[%s1 + $0x14] sm:$0xf]
    %v454 = vld [vmem:[%s1 + $0x18] sm:$0xf]
    %v455 = vld [vmem:[%s1 + $0x1c] sm:$0xf]
    %v456 = vld [vmem:[%s1 + $0x20] sm:$0xf]
    %v457 = vld [vmem:[%s1 + $0x24] sm:$0xf]
    %v458 = vld [vmem:[%s1 + $0x28] sm:$0xf]
    %v459 = vld [vmem:[%s1 + $0x2c] sm:$0xf]
    %v460 = vld [vmem:[%s1 + $0x30] sm:$0xf]
    %v461 = vld [vmem:[%s1 + $0x34] sm:$0xf]
    %v462 = vld [vmem:[%s1 + $0x38] sm:$0xf]
    %v463 = vld [vmem:[%s1 + $0x3c] sm:$0xf]
    %v464 = vld [vmem:[%s1 + $0x40] sm:$0xf]
    %v465 = vld [vmem:[%s1 + $0x44] sm:$0xf]
    %v466 = vld [vmem:[%s1 + $0x48] sm:$0xf]
    %v467 = vld [vmem:[%s1 + $0x4c] sm:$0xf]
    %v468 = vld [vmem:[%s1 + $0x50] sm:$0xf]
    %v469 = vld [vmem:[%s1 + $0x54] sm:$0xf]
    %v470 = vld [vmem:[%s1 + $0x58] sm:$0xf]
    %v471 = vld [vmem:[%s1 + $0x5c] sm:$0xf]
    %v472 = vld [vmem:[%s1 + $0x60] sm:$0xf]
    %v473 = vld [vmem:[%s1 + $0x64] sm:$0xf]
    %v474 = vld [vmem:[%s1 + $0x68] sm:$0xf]
    %v475 = vld [vmem:[%s1 + $0x6c] sm:$0xf]
    %v476 = vld [vmem:[%s1 + $0x70] sm:$0xf]
    %v477 = vld [vmem:[%s1 + $0x74] sm:$0xf]
    %v478 = vld [vmem:[%s1 + $0x78] sm:$0xf]
    %v479 = vld [vmem:[%s1 + $0x7c] sm:$0xf]
    %v480 = vld [vmem:[%s1 + $0x80] sm:$0xf]
    %v481 = vld [vmem:[%s1 + $0x84] sm:$0xf]
    %v482 = vld [vmem:[%s1 + $0x88] sm:$0xf]
    %v483 = vld [vmem:[%s1 + $0x8c] sm:$0xf]
    %v484 = vld [vmem:[%s1 + $0x90] sm:$0xf]
    %v485 = vld [vmem:[%s1 + $0x94] sm:$0xf]
    %v486 = vld [vmem:[%s1 + $0x98] sm:$0xf]
    %v487 = vld [vmem:[%s1 + $0x9c] sm:$0xf]
    %v488 = vld [vmem:[%s1 + $0xa0] sm:$0xf]
    %v489 = vld [vmem:[%s1 + $0xa4] sm:$0xf]
    %v490 = vld [vmem:[%s1 + $0xa8] sm:$0xf]
    %v491 = vld [vmem:[%s1 + $0xac] sm:$0xf]
    %v492 = vld [vmem:[%s1 + $0xb0] sm:$0xf]
    %v493 = vld [vmem:[%s1 + $0xb4] sm:$0xf]
    %v494 = vld [vmem:[%s1 + $0xb8] sm:$0xf]
    %v495 = vld [vmem:[%s1 + $0xbc] sm:$0xf]
    %v496 = vld [vmem:[%s1 + $0xc0] sm:$0xf]
    %v497 = vld [vmem:[%s1 + $0xc4] sm:$0xf]
    %v498 = vld [vmem:[%s1 + $0xc8] sm:$0xf]
    %v499 = vld [vmem:[%s1 + $0xcc] sm:$0xf]
    %v500 = vld [vmem:[%s1 + $0xd0] sm:$0xf]
    %v501 = vld [vmem:[%s1 + $0xd4] sm:$0xf]
    %v502 = vld [vmem:[%s1 + $0xd8] sm:$0xf]
    %v503 = vld [vmem:[%s1 + $0xdc] sm:$0xf]
    %v504 = vld [vmem:[%s1 + $0xe0] sm:$0xf]
    %v505 = vld [vmem:[%s1 + $0xe4] sm:$0xf]
    %v506 = vld [vmem:[%s1 + $0xe8] sm:$0xf]
    %v507 = vld [vmem:[%s1 + $0xec] sm:$0xf]
    %v508 = vld [vmem:[%s1 + $0xf0] sm:$0xf]
    %v509 = vld [vmem:[%s1 + $0xf4] sm:$0xf]
    %v510 = vld [vmem:[%s1 + $0xf8] sm:$0xf]
    %v511 = vld [vmem:[%s1 + $0xfc] sm:$0xf]
    %v512 = vld [vmem:[%s1 + $0x100] sm:$0xf]
    %v513 = vld [vmem:[%s1 + $0x104] sm:$0xf]
    %v514 = vld [vmem:[%s1 + $0x108] sm:$0xf]
    %v515 = vld [vmem:[%s1 + $0x10c] sm:$0xf]
    %v516 = vld [vmem:[%s1 + $0x110] sm:$0xf]
    %v517 = vld [vmem:[%s1 + $0x114] sm:$0xf]
    %v518 = vld [vmem:[%s1 + $0x118] sm:$0xf]
    %v519 = vld [vmem:[%s1 + $0x11c] sm:$0xf]
    %v520 = vld [vmem:[%s1 + $0x120] sm:$0xf]
    %v521 = vld [vmem:[%s1 + $0x124] sm:$0xf]
    %v522 = vld [vmem:[%s1 + $0x128] sm:$0xf]
    %v523 = vld [vmem:[%s1 + $0x12c] sm:$0xf]
    %v524 = vld [vmem:[%s1 + $0x130] sm:$0xf]
    %v525 = vld [vmem:[%s1 + $0x134] sm:$0xf]
    %v526 = vld [vmem:[%s1 + $0x138] sm:$0xf]
    %v527 = vld [vmem:[%s1 + $0x13c] sm:$0xf]
    %v528 = vld [vmem:[%s1 + $0x140] sm:$0xf]
    %v529 = vld [vmem:[%s1 + $0x144] sm:$0xf]
    %v530 = vld [vmem:[%s1 + $0x148] sm:$0xf]
    %v531 = vld [vmem:[%s1 + $0x14c] sm:$0xf]
    %v532 = vld [vmem:[%s1 + $0x150] sm:$0xf]
    %v533 = vld [vmem:[%s1 + $0x154] sm:$0xf]
    %v534 = vld [vmem:[%s1 + $0x158] sm:$0xf]
    %v535 = vld [vmem:[%s1 + $0x15c] sm:$0xf]
    %v536 = vld [vmem:[%s1 + $0x160] sm:$0xf]
    %v537 = vld [vmem:[%s1 + $0x164] sm:$0xf]
    %v538 = vld [vmem:[%s1 + $0x168] sm:$0xf]
    %v539 = vld [vmem:[%s1 + $0x16c] sm:$0xf]
    %v540 = vld [vmem:[%s1 + $0x170] sm:$0xf]
    %v541 = vld [vmem:[%s1 + $0x174] sm:$0xf]
    %v542 = vld [vmem:[%s1 + $0x178] sm:$0xf]
    %v543 = vld [vmem:[%s1 + $0x17c] sm:$0xf]
    %v544 = vld [vmem:[%s1 + $0x180] sm:$0xf]
    %v545 = vld [vmem:[%s1 + $0x184] sm:$0xf]
    %v546 = vld [vmem:[%s1 + $0x188] sm:$0xf]
    %v547 = vld [vmem:[%s1 + $0x18c] sm:$0xf]
    %v548 = vld [vmem:[%s1 + $0x190] sm:$0xf]
    %v549 = vld [vmem:[%s1 + $0x194] sm:$0xf]
    %v550 = vld [vmem:[%s1 + $0x198] sm:$0xf]
    %v551 = vld [vmem:[%s1 + $0x19c] sm:$0xf]
    %v552 = vld [vmem:[%s1 + $0x1a0] sm:$0xf]
    %v553 = vld [vmem:[%s1 + $0x1a4] sm:$0xf]
    %v554 = vld [vmem:[%s1 + $0x1a8] sm:$0xf]
    %v555 = vld [vmem:[%s1 + $0x1ac] sm:$0xf]
    %v556 = vld [vmem:[%s1 + $0x1b0] sm:$0xf]
    %v557 = vld [vmem:[%s1 + $0x1b4] sm:$0xf]
    %v558 = vld [vmem:[%s1 + $0x1b8] sm:$0xf]
    %v559 = vld [vmem:[%s1 + $0x1bc] sm:$0xf]
    %v560 = vld [vmem:[%s1 + $0x1c0] sm:$0xf]
    %v561 = vld [vmem:[%s1 + $0x1c4] sm:$0xf]
    %v562 = vld [vmem:[%s1 + $0x1c8] sm:$0xf]
    %v563 = vld [vmem:[%s1 + $0x1cc] sm:$0xf]
    %v564 = vld [vmem:[%s1 + $0x1d0] sm:$0xf]
    %v565 = vld [vmem:[%s1 + $0x1d4] sm:$0xf]
    %v566 = vld [vmem:[%s1 + $0x1d8] sm:$0xf]
    %v567 = vld [vmem:[%s1 + $0x1dc] sm:$0xf]
    %v568 = vld [vmem:[%s1 + $0x1e0] sm:$0xf]
    %v569 = vld [vmem:[%s1 + $0x1e4] sm:$0xf]
    %v570 = vld [vmem:[%s1 + $0x1e8] sm:$0xf]
    %v571 = vld [vmem:[%s1 + $0x1ec] sm:$0xf]
    %v572 = vld [vmem:[%s1 + $0x1f0] sm:$0xf]
    %v573 = vld [vmem:[%s1 + $0x1f4] sm:$0xf]
    %v574 = vld [vmem:[%s1 + $0x1f8] sm:$0xf]
    %v575 = vld [vmem:[%s1 + $0x1fc] sm:$0xf]
    %v576 = vld [vmem:[%s1 + $0x200] sm:$0xf]
    %v577 = vld [vmem:[%s1 + $0x204] sm:$0xf]
    %v578 = vld [vmem:[%s1 + $0x208] sm:$0xf]
    %v579 = vld [vmem:[%s1 + $0x20c] sm:$0xf]
    %v580 = vld [vmem:[%s1 + $0x210] sm:$0xf]
    %v581 = vld [vmem:[%s1 + $0x214] sm:$0xf]
    %v582 = vld [vmem:[%s1 + $0x218] sm:$0xf]
    %v583 = vld [vmem:[%s1 + $0x21c] sm:$0xf]
    %v584 = vld [vmem:[%s1 + $0x220] sm:$0xf]
    %v585 = vld [vmem:[%s1 + $0x224] sm:$0xf]
    %v586 = vld [vmem:[%s1 + $0x228] sm:$0xf]
    %v587 = vld [vmem:[%s1 + $0x22c] sm:$0xf]
    %v588 = vld [vmem:[%s1 + $0x230] sm:$0xf]
    %v589 = vld [vmem:[%s1 + $0x234] sm:$0xf]
    %v590 = vld [vmem:[%s1 + $0x238] sm:$0xf]
    %v591 = vld [vmem:[%s1 + $0x23c] sm:$0xf]
    %v592 = vld [vmem:[%s1 + $0x240] sm:$0xf]
    %v593 = vld [vmem:[%s1 + $0x244] sm:$0xf]
    %v594 = vld [vmem:[%s1 + $0x248] sm:$0xf]
    %v595 = vld [vmem:[%s1 + $0x24c] sm:$0xf]
    %v596 = vld [vmem:[%s1 + $0x250] sm:$0xf]
    %v597 = vld [vmem:[%s1 + $0x254] sm:$0xf]
    %v598 = vld [vmem:[%s1 + $0x258] sm:$0xf]
    %v599 = vld [vmem:[%s1 + $0x25c] sm:$0xf]
    %v600 = vld [vmem:[%s1 + $0x260] sm:$0xf]
    %v601 = vld [vmem:[%s1 + $0x264] sm:$0xf]
    %v602 = vld [vmem:[%s1 + $0x268] sm:$0xf]
    %v603 = vld [vmem:[%s1 + $0x26c] sm:$0xf]
    %v604 = vld [vmem:[%s1 + $0x270] sm:$0xf]
    %v605 = vld [vmem:[%s1 + $0x274] sm:$0xf]
    %v606 = vld [vmem:[%s1 + $0x278] sm:$0xf]
    %v607 = vld [vmem:[%s1 + $0x27c] sm:$0xf]
    %v608 = vld [vmem:[%s1 + $0x280] sm:$0xf]
    %v609 = vld [vmem:[%s1 + $0x284] sm:$0xf]
    %v610 = vld [vmem:[%s1 + $0x288] sm:$0xf]
    %v611 = vld [vmem:[%s1 + $0x28c] sm:$0xf]
    %v612 = vld [vmem:[%s1 + $0x290] sm:$0xf]
    %v613 = vld [vmem:[%s1 + $0x294] sm:$0xf]
    %v614 = vld [vmem:[%s1 + $0x298] sm:$0xf]
    %v615 = vld [vmem:[%s1 + $0x29c] sm:$0xf]
    %v616 = vld [vmem:[%s1 + $0x2a0] sm:$0xf]
    %v617 = vld [vmem:[%s1 + $0x2a4] sm:$0xf]
    %v618 = vld [vmem:[%s1 + $0x2a8] sm:$0xf]
    %v619 = vld [vmem:[%s1 + $0x2ac] sm:$0xf]
    %v620 = vld [vmem:[%s1 + $0x2b0] sm:$0xf]
    %v621 = vld [vmem:[%s1 + $0x2b4] sm:$0xf]
    %v622 = vld [vmem:[%s1 + $0x2b8] sm:$0xf]
    %v623 = vld [vmem:[%s1 + $0x2bc] sm:$0xf]
    %v624 = vld [vmem:[%s1 + $0x2c0] sm:$0xf]
    %v625 = vld [vmem:[%s1 + $0x2c4] sm:$0xf]
    %v626 = vld [vmem:[%s1 + $0x2c8] sm:$0xf]
    %v627 = vld [vmem:[%s1 + $0x2cc] sm:$0xf]
    %v628 = vld [vmem:[%s1 + $0x2d0] sm:$0xf]
    %v629 = vld [vmem:[%s1 + $0x2d4] sm:$0xf]
    %v630 = vld [vmem:[%s1 + $0x2d8] sm:$0xf]
    %v631 = vld [vmem:[%s1 + $0x2dc] sm:$0xf]
    %v632 = vld [vmem:[%s1 + $0x2e0] sm:$0xf]
    %v633 = vld [vmem:[%s1 + $0x2e4] sm:$0xf]
    %v634 = vld [vmem:[%s1 + $0x2e8] sm:$0xf]
    %v635 = vld [vmem:[%s1 + $0x2ec] sm:$0xf]
    %v636 = vld [vmem:[%s1 + $0x2f0] sm:$0xf]
    %v637 = vld [vmem:[%s1 + $0x2f4] sm:$0xf]
    %v638 = vld [vmem:[%s1 + $0x2f8] sm:$0xf]
    %v639 = vld [vmem:[%s1 + $0x2fc] sm:$0xf]
    %v640 = vld [vmem:[%s1 + $0x300] sm:$0xf]
    %v641 = vld [vmem:[%s1 + $0x304] sm:$0xf]
    %v642 = vld [vmem:[%s1 + $0x308] sm:$0xf]
    %v643 = vld [vmem:[%s1 + $0x30c] sm:$0xf]
    %v644 = vld [vmem:[%s1 + $0x310] sm:$0xf]
    %v645 = vld [vmem:[%s1 + $0x314] sm:$0xf]
    %v646 = vld [vmem:[%s1 + $0x318] sm:$0xf]
    %v647 = vld [vmem:[%s1 + $0x31c] sm:$0xf]
    %v648 = vld [vmem:[%s1 + $0x320] sm:$0xf]
    %v649 = vld [vmem:[%s1 + $0x324] sm:$0xf]
    %v650 = vld [vmem:[%s1 + $0x328] sm:$0xf]
    %v651 = vld [vmem:[%s1 + $0x32c] sm:$0xf]
    %v652 = vld [vmem:[%s1 + $0x330] sm:$0xf]
    %v653 = vld [vmem:[%s1 + $0x334] sm:$0xf]
    %v654 = vld [vmem:[%s1 + $0x338] sm:$0xf]
    %v655 = vld [vmem:[%s1 + $0x33c] sm:$0xf]
    %v656 = vld [vmem:[%s1 + $0x340] sm:$0xf]
    %v657 = vld [vmem:[%s1 + $0x344] sm:$0xf]
    %v658 = vld [vmem:[%s1 + $0x348] sm:$0xf]
    %v659 = vld [vmem:[%s1 + $0x34c] sm:$0xf]
    %v660 = vld [vmem:[%s1 + $0x350] sm:$0xf]
    %v661 = vld [vmem:[%s1 + $0x354] sm:$0xf]
    %v662 = vld [vmem:[%s1 + $0x358] sm:$0xf]
    %v663 = vld [vmem:[%s1 + $0x35c] sm:$0xf]
    %v664 = vld [vmem:[%s1 + $0x360] sm:$0xf]
    %v665 = vld [vmem:[%s1 + $0x364] sm:$0xf]
    %v666 = vld [vmem:[%s1 + $0x368] sm:$0xf]
    %v667 = vld [vmem:[%s1 + $0x36c] sm:$0xf]
    %v668 = vld [vmem:[%s1 + $0x370] sm:$0xf]
    %v669 = vld [vmem:[%s1 + $0x374] sm:$0xf]
    %v670 = vld [vmem:[%s1 + $0x378] sm:$0xf]
    %v671 = vld [vmem:[%s1 + $0x37c] sm:$0xf]
    %v672 = vld [vmem:[%s1 + $0x380] sm:$0xf]
    %v673 = vld [vmem:[%s1 + $0x384] sm:$0xf]
    %v674 = vld [vmem:[%s1 + $0x388] sm:$0xf]
    %v675 = vld [vmem:[%s1 + $0x38c] sm:$0xf]
    %v676 = vld [vmem:[%s1 + $0x390] sm:$0xf]
    %v677 = vld [vmem:[%s1 + $0x394] sm:$0xf]
    %v678 = vld [vmem:[%s1 + $0x398] sm:$0xf]
    %v679 = vld [vmem:[%s1 + $0x39c] sm:$0xf]
    %v680 = vld [vmem:[%s1 + $0x3a0] sm:$0xf]
    %v681 = vld [vmem:[%s1 + $0x3a4] sm:$0xf]
    %v682 = vld [vmem:[%s1 + $0x3a8] sm:$0xf]
    %v683 = vld [vmem:[%s1 + $0x3ac] sm:$0xf]
    %v684 = vld [vmem:[%s1 + $0x3b0] sm:$0xf]
    %v685 = vld [vmem:[%s1 + $0x3b4] sm:$0xf]
    %v686 = vld [vmem:[%s1 + $0x3b8] sm:$0xf]
    %v687 = vld [vmem:[%s1 + $0x3bc] sm:$0xf]
    %v688 = vld [vmem:[%s1 + $0x3c0] sm:$0xf]
    %v689 = vld [vmem:[%s1 + $0x3c4] sm:$0xf]
    %v690 = vld [vmem:[%s1 + $0x3c8] sm:$0xf]
    %v691 = vld [vmem:[%s1 + $0x3cc] sm:$0xf]
    %v692 = vld [vmem:[%s1 + $0x3d0] sm:$0xf]
    %v693 = vld [vmem:[%s1 + $0x3d4] sm:$0xf]
    %v694 = vld [vmem:[%s1 + $0x3d8] sm:$0xf]
    %v695 = vld [vmem:[%s1 + $0x3dc] sm:$0xf]
    %v696 = vld [vmem:[%s1 + $0x3e0] sm:$0xf]
    %v697 = vld [vmem:[%s1 + $0x3e4] sm:$0xf]
    %v698 = vld [vmem:[%s1 + $0x3e8] sm:$0xf]
    %v699 = vld [vmem:[%s1 + $0x3ec] sm:$0xf]
    %v700 = vld [vmem:[%s1 + $0x3f0] sm:$0xf]
    %v701 = vld [vmem:[%s1 + $0x3f4] sm:$0xf]
    %v702 = vld [vmem:[%s1 + $0x3f8] sm:$0xf]
    %v703 = vld [vmem:[%s1 + $0x3fc] sm:$0xf]
    %v704 = vld [vmem:[%s1 + $0x400] sm:$0xf]
    %v705 = vld [vmem:[%s1 + $0x404] sm:$0xf]
    %v706 = vld [vmem:[%s1 + $0x408] sm:$0xf]
    %v707 = vld [vmem:[%s1 + $0x40c] sm:$0xf]
    %v708 = vld [vmem:[%s1 + $0x410] sm:$0xf]
    %v709 = vld [vmem:[%s1 + $0x414] sm:$0xf]
    %v710 = vld [vmem:[%s1 + $0x418] sm:$0xf]
    %v711 = vld [vmem:[%s1 + $0x41c] sm:$0xf]
    %v712 = vld [vmem:[%s1 + $0x420] sm:$0xf]
    %v713 = vld [vmem:[%s1 + $0x424] sm:$0xf]
    %v714 = vld [vmem:[%s1 + $0x428] sm:$0xf]
    %v715 = vld [vmem:[%s1 + $0x42c] sm:$0xf]
    %v716 = vld [vmem:[%s1 + $0x430] sm:$0xf]
    %v717 = vld [vmem:[%s1 + $0x434] sm:$0xf]
    %v718 = vld [vmem:[%s1 + $0x438] sm:$0xf]
    %v719 = vld [vmem:[%s1 + $0x43c] sm:$0xf]
    %v720 = vld [vmem:[%s1 + $0x440] sm:$0xf]
    %v721 = vld [vmem:[%s1 + $0x444] sm:$0xf]
    %v722 = vld [vmem:[%s1 + $0x448] sm:$0xf]
    %v723 = vld [vmem:[%s1 + $0x44c] sm:$0xf]
    %v724 = vld [vmem:[%s1 + $0x450] sm:$0xf]
    %v725 = vld [vmem:[%s1 + $0x454] sm:$0xf]
    %v726 = vld [vmem:[%s1 + $0x458] sm:$0xf]
    %v727 = vld [vmem:[%s1 + $0x45c] sm:$0xf]
    %v728 = vld [vmem:[%s1 + $0x460] sm:$0xf]
    %v729 = vld [vmem:[%s1 + $0x464] sm:$0xf]
    %v730 = vld [vmem:[%s1 + $0x468] sm:$0xf]
    %v731 = vld [vmem:[%s1 + $0x46c] sm:$0xf]
    %v732 = vld [vmem:[%s1 + $0x470] sm:$0xf]
    %v733 = vld [vmem:[%s1 + $0x474] sm:$0xf]
    %v734 = vld [vmem:[%s1 + $0x478] sm:$0xf]
    %v735 = vld [vmem:[%s1 + $0x47c] sm:$0xf]
    %v736 = vld [vmem:[%s1 + $0x480] sm:$0xf]
    %v737 = vld [vmem:[%s1 + $0x484] sm:$0xf]
    %v738 = vld [vmem:[%s1 + $0x488] sm:$0xf]
    %v739 = vld [vmem:[%s1 + $0x48c] sm:$0xf]
    %v740 = vld [vmem:[%s1 + $0x490] sm:$0xf]
    %v741 = vld [vmem:[%s1 + $0x494] sm:$0xf]
    %v742 = vld [vmem:[%s1 + $0x498] sm:$0xf]
    %v743 = vld [vmem:[%s1 + $0x49c] sm:$0xf]
    %v744 = vld [vmem:[%s1 + $0x4a0] sm:$0xf]
    %v745 = vld [vmem:[%s1 + $0x4a4] sm:$0xf]
    %v746 = vld [vmem:[%s1 + $0x4a8] sm:$0xf]
    %v747 = vld [vmem:[%s1 + $0x4ac] sm:$0xf]
    %v748 = vld [vmem:[%s1 + $0x4b0] sm:$0xf]
    %v749 = vld [vmem:[%s1 + $0x4b4] sm:$0xf]
    %v750 = vld [vmem:[%s1 + $0x4b8] sm:$0xf]
    %v751 = vld [vmem:[%s1 + $0x4bc] sm:$0xf]
    %v752 = vld [vmem:[%s1 + $0x4c0] sm:$0xf]
    %v753 = vld [vmem:[%s1 + $0x4c4] sm:$0xf]
    %v754 = vld [vmem:[%s1 + $0x4c8] sm:$0xf]
    %v755 = vld [vmem:[%s1 + $0x4cc] sm:$0xf]
    %v756 = vld [vmem:[%s1 + $0x4d0] sm:$0xf]
    %v757 = vld [vmem:[%s1 + $0x4d4] sm:$0xf]
    %v758 = vld [vmem:[%s1 + $0x4d8] sm:$0xf]
    %v759 = vld [vmem:[%s1 + $0x4dc] sm:$0xf]
    %v760 = vld [vmem:[%s1 + $0x4e0] sm:$0xf]
    %v761 = vld [vmem:[%s1 + $0x4e4] sm:$0xf]
    %v762 = vld [vmem:[%s1 + $0x4e8] sm:$0xf]
    %v763 = vld [vmem:[%s1 + $0x4ec] sm:$0xf]
    %v764 = vld [vmem:[%s1 + $0x4f0] sm:$0xf]
    %v765 = vld [vmem:[%s1 + $0x4f4] sm:$0xf]
    %v766 = vld [vmem:[%s1 + $0x4f8] sm:$0xf]
    %v767 = vld [vmem:[%s1 + $0x4fc] sm:$0xf]
    %v768 = vld [vmem:[%s1 + $0x500] sm:$0xf]
    %v769 = vld [vmem:[%s1 + $0x504] sm:$0xf]
    %v770 = vld [vmem:[%s1 + $0x508] sm:$0xf]
    %v771 = vld [vmem:[%s1 + $0x50c] sm:$0xf]
    %v772 = vld [vmem:[%s1 + $0x510] sm:$0xf]
    %v773 = vld [vmem:[%s1 + $0x514] sm:$0xf]
    %v774 = vld [vmem:[%s1 + $0x518] sm:$0xf]
    %v775 = vld [vmem:[%s1 + $0x51c] sm:$0xf]
    %v776 = vld [vmem:[%s1 + $0x520] sm:$0xf]
    %v777 = vld [vmem:[%s1 + $0x524] sm:$0xf]
    %v778 = vld [vmem:[%s1 + $0x528] sm:$0xf]
    %v779 = vld [vmem:[%s1 + $0x52c] sm:$0xf]
    %v780 = vld [vmem:[%s1 + $0x530] sm:$0xf]
    %v781 = vld [vmem:[%s1 + $0x534] sm:$0xf]
    %v782 = vld [vmem:[%s1 + $0x538] sm:$0xf]
    %v783 = vld [vmem:[%s1 + $0x53c] sm:$0xf]
    %v784 = vld [vmem:[%s1 + $0x540] sm:$0xf]
    %v785 = vld [vmem:[%s1 + $0x544] sm:$0xf]
    %v786 = vld [vmem:[%s1 + $0x548] sm:$0xf]
    %v787 = vld [vmem:[%s1 + $0x54c] sm:$0xf]
    %v788 = vld [vmem:[%s1 + $0x550] sm:$0xf]
    %v789 = vld [vmem:[%s1 + $0x554] sm:$0xf]
    %v790 = vld [vmem:[%s1 + $0x558] sm:$0xf]
    %v791 = vld [vmem:[%s1 + $0x55c] sm:$0xf]
    %v792 = vld [vmem:[%s1 + $0x560] sm:$0xf]
    %v793 = vld [vmem:[%s1 + $0x564] sm:$0xf]
    %v794 = vld [vmem:[%s1 + $0x568] sm:$0xf]
    %v795 = vld [vmem:[%s1 + $0x56c] sm:$0xf]
    %v796 = vld [vmem:[%s1 + $0x570] sm:$0xf]
    %v797 = vld [vmem:[%s1 + $0x574] sm:$0xf]
    %v798 = vld [vmem:[%s1 + $0x578] sm:$0xf]
    %v799 = vld [vmem:[%s1 + $0x57c] sm:$0xf]
    %v800 = vld [vmem:[%s1 + $0x580] sm:$0xf]
    %v801 = vld [vmem:[%s1 + $0x584] sm:$0xf]
    %v802 = vld [vmem:[%s1 + $0x588] sm:$0xf]
    %v803 = vld [vmem:[%s1 + $0x58c] sm:$0xf]
    %v804 = vld [vmem:[%s1 + $0x590] sm:$0xf]
    %v805 = vld [vmem:[%s1 + $0x594] sm:$0xf]
    %v806 = vld [vmem:[%s1 + $0x598] sm:$0xf]
    %v807 = vld [vmem:[%s1 + $0x59c] sm:$0xf]
    %v808 = vld [vmem:[%s1 + $0x5a0] sm:$0xf]
    %v809 = vld [vmem:[%s1 + $0x5a4] sm:$0xf]
    %v810 = vld [vmem:[%s1 + $0x5a8] sm:$0xf]
    %v811 = vld [vmem:[%s1 + $0x5ac] sm:$0xf]
    %v812 = vld [vmem:[%s1 + $0x5b0] sm:$0xf]
    %v813 = vld [vmem:[%s1 + $0x5b4] sm:$0xf]
    %v814 = vld [vmem:[%s1 + $0x5b8] sm:$0xf]
    %v815 = vld [vmem:[%s1 + $0x5bc] sm:$0xf]
    %v816 = vld [vmem:[%s1 + $0x5c0] sm:$0xf]
    %v817 = vld [vmem:[%s1 + $0x5c4] sm:$0xf]
    %v818 = vld [vmem:[%s1 + $0x5c8] sm:$0xf]
    %v819 = vld [vmem:[%s1 + $0x5cc] sm:$0xf]
    %v820 = vld [vmem:[%s1 + $0x5d0] sm:$0xf]
    %v821 = vld [vmem:[%s1 + $0x5d4] sm:$0xf]
    %v822 = vld [vmem:[%s1 + $0x5d8] sm:$0xf]
    %v823 = vld [vmem:[%s1 + $0x5dc] sm:$0xf]
    %v824 = vld [vmem:[%s1 + $0x5e0] sm:$0xf]
    %v825 = vld [vmem:[%s1 + $0x5e4] sm:$0xf]
    %v826 = vld [vmem:[%s1 + $0x5e8] sm:$0xf]
    %v827 = vld [vmem:[%s1 + $0x5ec] sm:$0xf]
    %v828 = vld [vmem:[%s1 + $0x5f0] sm:$0xf]
    %v829 = vld [vmem:[%s1 + $0x5f4] sm:$0xf]
    %v830 = vld [vmem:[%s1 + $0x5f8] sm:$0xf]
    %v831 = vld [vmem:[%s1 + $0x5fc] sm:$0xf]
    %v832 = vld [vmem:[%s1 + $0x600] sm:$0xf]
    %v833 = vld [vmem:[%s1 + $0x604] sm:$0xf]
    %v834 = vld [vmem:[%s1 + $0x608] sm:$0xf]
    %v835 = vld [vmem:[%s1 + $0x60c] sm:$0xf]
    %v836 = vld [vmem:[%s1 + $0x610] sm:$0xf]
    %v837 = vld [vmem:[%s1 + $0x614] sm:$0xf]
    %v838 = vld [vmem:[%s1 + $0x618] sm:$0xf]
    %v839 = vld [vmem:[%s1 + $0x61c] sm:$0xf]
    %v840 = vld [vmem:[%s1 + $0x620] sm:$0xf]
    %v841 = vld [vmem:[%s1 + $0x624] sm:$0xf]
    %v842 = vld [vmem:[%s1 + $0x628] sm:$0xf]
    %v843 = vld [vmem:[%s1 + $0x62c] sm:$0xf]
    %v844 = vld [vmem:[%s1 + $0x630] sm:$0xf]
    %v845 = vld [vmem:[%s1 + $0x634] sm:$0xf]
    %v846 = vld [vmem:[%s1 + $0x638] sm:$0xf]
    %v847 = vld [vmem:[%s1 + $0x63c] sm:$0xf]
    %v848 = vld [vmem:[%s1 + $0x640] sm:$0xf]
    %v849 = vld [vmem:[%s1 + $0x644] sm:$0xf]
    %v850 = vld [vmem:[%s1 + $0x648] sm:$0xf]
    %v851 = vld [vmem:[%s1 + $0x64c] sm:$0xf]
    %v852 = vld [vmem:[%s1 + $0x650] sm:$0xf]
    %v853 = vld [vmem:[%s1 + $0x654] sm:$0xf]
    %v854 = vld [vmem:[%s1 + $0x658] sm:$0xf]
    %v855 = vld [vmem:[%s1 + $0x65c] sm:$0xf]
    %v856 = vld [vmem:[%s1 + $0x660] sm:$0xf]
    %v857 = vld [vmem:[%s1 + $0x664] sm:$0xf]
    %v858 = vld [vmem:[%s1 + $0x668] sm:$0xf]
    %v859 = vld [vmem:[%s1 + $0x66c] sm:$0xf]
    %v860 = vld [vmem:[%s1 + $0x670] sm:$0xf]
    %v861 = vld [vmem:[%s1 + $0x674] sm:$0xf]
    %v862 = vld [vmem:[%s1 + $0x678] sm:$0xf]
    %v863 = vld [vmem:[%s1 + $0x67c] sm:$0xf]
    %v864 = vld [vmem:[%s1 + $0x680] sm:$0xf]
    %v865 = vld [vmem:[%s1 + $0x684] sm:$0xf]
    %v866 = vld [vmem:[%s1 + $0x688] sm:$0xf]
    %v867 = vld [vmem:[%s1 + $0x68c] sm:$0xf]
    %v868 = vld [vmem:[%s1 + $0x690] sm:$0xf]
    %v869 = vld [vmem:[%s1 + $0x694] sm:$0xf]
    %v870 = vld [vmem:[%s1 + $0x698] sm:$0xf]
    %v871 = vld [vmem:[%s1 + $0x69c] sm:$0xf]
    %v872 = vld [vmem:[%s1 + $0x6a0] sm:$0xf]
    %v873 = vld [vmem:[%s1 + $0x6a4] sm:$0xf]
    %v874 = vld [vmem:[%s1 + $0x6a8] sm:$0xf]
    %v875 = vld [vmem:[%s1 + $0x6ac] sm:$0xf]
    %v876 = vld [vmem:[%s1 + $0x6b0] sm:$0xf]
    %v877 = vld [vmem:[%s1 + $0x6b4] sm:$0xf]
    %v878 = vld [vmem:[%s1 + $0x6b8] sm:$0xf]
    %v879 = vld [vmem:[%s1 + $0x6bc] sm:$0xf]
    %v880 = vld [vmem:[%s1 + $0x6c0] sm:$0xf]
    %v881 = vld [vmem:[%s1 + $0x6c4] sm:$0xf]
    %v882 = vld [vmem:[%s1 + $0x6c8] sm:$0xf]
    %v883 = vld [vmem:[%s1 + $0x6cc] sm:$0xf]
    %v884 = vld [vmem:[%s1 + $0x6d0] sm:$0xf]
    %v885 = vld [vmem:[%s1 + $0x6d4] sm:$0xf]
    %v886 = vld [vmem:[%s1 + $0x6d8] sm:$0xf]
    %v887 = vld [vmem:[%s1 + $0x6dc] sm:$0xf]
    %v888 = vld [vmem:[%s1 + $0x6e0] sm:$0xf]
    %v889 = vld [vmem:[%s1 + $0x6e4] sm:$0xf]
    %v890 = vld [vmem:[%s1 + $0x6e8] sm:$0xf]
    %v891 = vld [vmem:[%s1 + $0x6ec] sm:$0xf]
    %v892 = vld [vmem:[%s1 + $0x6f0] sm:$0xf]
    %v893 = vld [vmem:[%s1 + $0x6f4] sm:$0xf]
    %v894 = vld [vmem:[%s1 + $0x6f8] sm:$0xf]
    %v895 = vld [vmem:[%s1 + $0x6fc] sm:$0xf]
    %v896 = vld [vmem:[%s1 + $0x700] sm:$0xf]
    %v897 = vld [vmem:[%s1 + $0x704] sm:$0xf]
    %v898 = vld [vmem:[%s1 + $0x708] sm:$0xf]
    %v899 = vld [vmem:[%s1 + $0x70c] sm:$0xf]
    %v900 = vld [vmem:[%s1 + $0x710] sm:$0xf]
    %v901 = vld [vmem:[%s1 + $0x714] sm:$0xf]
    %v902 = vld [vmem:[%s1 + $0x718] sm:$0xf]
    %v903 = vld [vmem:[%s1 + $0x71c] sm:$0xf]
    %v904 = vld [vmem:[%s1 + $0x720] sm:$0xf]
    %v905 = vld [vmem:[%s1 + $0x724] sm:$0xf]
    %v906 = vld [vmem:[%s1 + $0x728] sm:$0xf]
    %v907 = vld [vmem:[%s1 + $0x72c] sm:$0xf]
    %v908 = vld [vmem:[%s1 + $0x730] sm:$0xf]
    %v909 = vld [vmem:[%s1 + $0x734] sm:$0xf]
    %v910 = vld [vmem:[%s1 + $0x738] sm:$0xf]
    %v911 = vld [vmem:[%s1 + $0x73c] sm:$0xf]
    %v912 = vld [vmem:[%s1 + $0x740] sm:$0xf]
    %v913 = vld [vmem:[%s1 + $0x744] sm:$0xf]
    %v914 = vld [vmem:[%s1 + $0x748] sm:$0xf]
    %v915 = vld [vmem:[%s1 + $0x74c] sm:$0xf]
    %v916 = vld [vmem:[%s1 + $0x750] sm:$0xf]
    %v917 = vld [vmem:[%s1 + $0x754] sm:$0xf]
    %v918 = vld [vmem:[%s1 + $0x758] sm:$0xf]
    %v919 = vld [vmem:[%s1 + $0x75c] sm:$0xf]
    %v920 = vld [vmem:[%s1 + $0x760] sm:$0xf]
    %v921 = vld [vmem:[%s1 + $0x764] sm:$0xf]
    %v922 = vld [vmem:[%s1 + $0x768] sm:$0xf]
    %v923 = vld [vmem:[%s1 + $0x76c] sm:$0xf]
    %v924 = vld [vmem:[%s1 + $0x770] sm:$0xf]
    %v925 = vld [vmem:[%s1 + $0x774] sm:$0xf]
    %v926 = vld [vmem:[%s1 + $0x778] sm:$0xf]
    %v927 = vld [vmem:[%s1 + $0x77c] sm:$0xf]
    %v928 = vld [vmem:[%s1 + $0x780] sm:$0xf]
    %v929 = vld [vmem:[%s1 + $0x784] sm:$0xf]
    %v930 = vld [vmem:[%s1 + $0x788] sm:$0xf]
    %v931 = vld [vmem:[%s1 + $0x78c] sm:$0xf]
    %v932 = vld [vmem:[%s1 + $0x790] sm:$0xf]
    %v933 = vld [vmem:[%s1 + $0x794] sm:$0xf]
    %v934 = vld [vmem:[%s1 + $0x798] sm:$0xf]
    %v935 = vld [vmem:[%s1 + $0x79c] sm:$0xf]
    %v936 = vld [vmem:[%s1 + $0x7a0] sm:$0xf]
    %v937 = vld [vmem:[%s1 + $0x7a4] sm:$0xf]
    %v938 = vld [vmem:[%s1 + $0x7a8] sm:$0xf]
    %v939 = vld [vmem:[%s1 + $0x7ac] sm:$0xf]
    %v940 = vld [vmem:[%s1 + $0x7b0] sm:$0xf]
    %v941 = vld [vmem:[%s1 + $0x7b4] sm:$0xf]
    %v942 = vld [vmem:[%s1 + $0x7b8] sm:$0xf]
    %v943 = vld [vmem:[%s1 + $0x7bc] sm:$0xf]
    %v944 = vld [vmem:[%s1 + $0x7c0] sm:$0xf]
    %v945 = vld [vmem:[%s1 + $0x7c4] sm:$0xf]
    %v946 = vld [vmem:[%s1 + $0x7c8] sm:$0xf]
    %v947 = vld [vmem:[%s1 + $0x7cc] sm:$0xf]
    %v948 = vld [vmem:[%s1 + $0x7d0] sm:$0xf]
    %v949 = vld [vmem:[%s1 + $0x7d4] sm:$0xf]
    %v950 = vld [vmem:[%s1 + $0x7d8] sm:$0xf]
    %v951 = vld [vmem:[%s1 + $0x7dc] sm:$0xf]
    %v952 = vld [vmem:[%s1 + $0x7e0] sm:$0xf]
    %v953 = vld [vmem:[%s1 + $0x7e4] sm:$0xf]
    %v954 = vld [vmem:[%s1 + $0x7e8] sm:$0xf]
    %v955 = vld [vmem:[%s1 + $0x7ec] sm:$0xf]
    %v956 = vld [vmem:[%s1 + $0x7f0] sm:$0xf]
    %v957 = vld [vmem:[%s1 + $0x7f4] sm:$0xf]
    %v958 = vld [vmem:[%s1 + $0x7f8] sm:$0xf]
    %v959 = vld [vmem:[%s1 + $0x7fc] sm:$0xf]
    %v960 = vld [vmem:[%s1 + $0x800] sm:$0xf]
    %v961 = vld [vmem:[%s1 + $0x804] sm:$0xf]
    %v962 = vld [vmem:[%s1 + $0x808] sm:$0xf]
    %v963 = vld [vmem:[%s1 + $0x80c] sm:$0xf]
    %v964 = vld [vmem:[%s1 + $0x810] sm:$0xf]
    %v965 = vld [vmem:[%s1 + $0x814] sm:$0xf]
    %v966 = vld [vmem:[%s1 + $0x818] sm:$0xf]
    %v967 = vld [vmem:[%s1 + $0x81c] sm:$0xf]
    %v968 = vld [vmem:[%s1 + $0x820] sm:$0xf]
    %v969 = vld [vmem:[%s1 + $0x824] sm:$0xf]
    %v970 = vld [vmem:[%s1 + $0x828] sm:$0xf]
    %v971 = vld [vmem:[%s1 + $0x82c] sm:$0xf]
    %v972 = vld [vmem:[%s1 + $0x830] sm:$0xf]
    %v973 = vld [vmem:[%s1 + $0x834] sm:$0xf]
    %v974 = vld [vmem:[%s1 + $0x838] sm:$0xf]
    %v975 = vld [vmem:[%s1 + $0x83c] sm:$0xf]
    %v976 = vld [vmem:[%s1 + $0x840] sm:$0xf]
    %v977 = vld [vmem:[%s1 + $0x844] sm:$0xf]
    %v978 = vld [vmem:[%s1 + $0x848] sm:$0xf]
    %v979 = vld [vmem:[%s1 + $0x84c] sm:$0xf]
    %v980 = vld [vmem:[%s1 + $0x850] sm:$0xf]
    %v981 = vld [vmem:[%s1 + $0x854] sm:$0xf]
    %v982 = vld [vmem:[%s1 + $0x858] sm:$0xf]
    %v983 = vld [vmem:[%s1 + $0x85c] sm:$0xf]
    %v984 = vld [vmem:[%s1 + $0x860] sm:$0xf]
    %v985 = vld [vmem:[%s1 + $0x864] sm:$0xf]
    %v986 = vld [vmem:[%s1 + $0x868] sm:$0xf]
    %v987 = vld [vmem:[%s1 + $0x86c] sm:$0xf]
    %v988 = vld [vmem:[%s1 + $0x870] sm:$0xf]
    %v989 = vld [vmem:[%s1 + $0x874] sm:$0xf]
    %v990 = vld [vmem:[%s1 + $0x878] sm:$0xf]
    %v991 = vld [vmem:[%s1 + $0x87c] sm:$0xf]
    %v992 = vld [vmem:[%s1 + $0x880] sm:$0xf]
    %v993 = vld [vmem:[%s1 + $0x884] sm:$0xf]
    %v994 = vld [vmem:[%s1 + $0x888] sm:$0xf]
    %v995 = vld [vmem:[%s1 + $0x88c] sm:$0xf]
    %v996 = vld [vmem:[%s1 + $0x890] sm:$0xf]
    %v997 = vld [vmem:[%s1 + $0x894] sm:$0xf]
    %v998 = vld [vmem:[%s1 + $0x898] sm:$0xf]
    %v999 = vld [vmem:[%s1 + $0x89c] sm:$0xf]
    %v1000 = vld [vmem:[%s1 + $0x8a0] sm:$0xf]
    %v1001 = vld [vmem:[%s1 + $0x8a4] sm:$0xf]
    %v1002 = vld [vmem:[%s1 + $0x8a8] sm:$0xf]
    %v1003 = vld [vmem:[%s1 + $0x8ac] sm:$0xf]
    %v1004 = vld [vmem:[%s1 + $0x8b0] sm:$0xf]
    %v1005 = vld [vmem:[%s1 + $0x8b4] sm:$0xf]
    %v1006 = vld [vmem:[%s1 + $0x8b8] sm:$0xf]
    %v1007 = vld [vmem:[%s1 + $0x8bc] sm:$0xf]
    %v1008 = vld [vmem:[%s1 + $0x8c0] sm:$0xf]
    %v1009 = vld [vmem:[%s1 + $0x8c4] sm:$0xf]
    %v1010 = vld [vmem:[%s1 + $0x8c8] sm:$0xf]
    %v1011 = vld [vmem:[%s1 + $0x8cc] sm:$0xf]
    %v1012 = vld [vmem:[%s1 + $0x8d0] sm:$0xf]
    %v1013 = vld [vmem:[%s1 + $0x8d4] sm:$0xf]
    %v1014 = vld [vmem:[%s1 + $0x8d8] sm:$0xf]
    %v1015 = vld [vmem:[%s1 + $0x8dc] sm:$0xf]
    %v1016 = vld [vmem:[%s1 + $0x8e0] sm:$0xf]
    %v1017 = vld [vmem:[%s1 + $0x8e4] sm:$0xf]
    %v1018 = vld [vmem:[%s1 + $0x8e8] sm:$0xf]
    %v1019 = vld [vmem:[%s1 + $0x8ec] sm:$0xf]
    %v1020 = vld [vmem:[%s1 + $0x8f0] sm:$0xf]
    %v1021 = vld [vmem:[%s1 + $0x8f4] sm:$0xf]
    %v1022 = vld [vmem:[%s1 + $0x8f8] sm:$0xf]
    %v1023 = vld [vmem:[%s1 + $0x8fc] sm:$0xf]
    %v1024 = vld [vmem:[%s1 + $0x900] sm:$0xf]
    %v1025 = vld [vmem:[%s1 + $0x904] sm:$0xf]
    %v1026 = vld [vmem:[%s1 + $0x908] sm:$0xf]
    %v1027 = vld [vmem:[%s1 + $0x90c] sm:$0xf]
    %v1028 = vld [vmem:[%s1 + $0x910] sm:$0xf]
    %v1029 = vld [vmem:[%s1 + $0x914] sm:$0xf]
    %v1030 = vld [vmem:[%s1 + $0x918] sm:$0xf]
    %v1031 = vld [vmem:[%s1 + $0x91c] sm:$0xf]
    %v1032 = vld [vmem:[%s1 + $0x920] sm:$0xf]
    %v1033 = vld [vmem:[%s1 + $0x924] sm:$0xf]
    %v1034 = vld [vmem:[%s1 + $0x928] sm:$0xf]
    %v1035 = vld [vmem:[%s1 + $0x92c] sm:$0xf]
    %v1036 = vld [vmem:[%s1 + $0x930] sm:$0xf]
    %v1037 = vld [vmem:[%s1 + $0x934] sm:$0xf]
    %v1038 = vld [vmem:[%s1 + $0x938] sm:$0xf]
    %v1039 = vld [vmem:[%s1 + $0x93c] sm:$0xf]
    %v1040 = vld [vmem:[%s1 + $0x940] sm:$0xf]
    %v1041 = vld [vmem:[%s1 + $0x944] sm:$0xf]
    %v1042 = vld [vmem:[%s1 + $0x948] sm:$0xf]
    %v1043 = vld [vmem:[%s1 + $0x94c] sm:$0xf]
    %v1044 = vld [vmem:[%s1 + $0x950] sm:$0xf]
    %v1045 = vld [vmem:[%s1 + $0x954] sm:$0xf]
    %v1046 = vld [vmem:[%s1 + $0x958] sm:$0xf]
    %v1047 = vld [vmem:[%s1 + $0x95c] sm:$0xf]
    %v1048 = vld [vmem:[%s1 + $0x960] sm:$0xf]
    %v1049 = vld [vmem:[%s1 + $0x964] sm:$0xf]
    %v1050 = vld [vmem:[%s1 + $0x968] sm:$0xf]
    %v1051 = vld [vmem:[%s1 + $0x96c] sm:$0xf]
    %v1052 = vld [vmem:[%s1 + $0x970] sm:$0xf]
    %v1053 = vld [vmem:[%s1 + $0x974] sm:$0xf]
    %v1054 = vld [vmem:[%s1 + $0x978] sm:$0xf]
    %v1055 = vld [vmem:[%s1 + $0x97c] sm:$0xf]
    %v1056 = vld [vmem:[%s1 + $0x980] sm:$0xf]
    %v1057 = vld [vmem:[%s1 + $0x984] sm:$0xf]
    %v1058 = vld [vmem:[%s1 + $0x988] sm:$0xf]
    %v1059 = vld [vmem:[%s1 + $0x98c] sm:$0xf]
    %v1060 = vld [vmem:[%s1 + $0x990] sm:$0xf]
    %v1061 = vld [vmem:[%s1 + $0x994] sm:$0xf]
    %v1062 = vld [vmem:[%s1 + $0x998] sm:$0xf]
    %v1063 = vld [vmem:[%s1 + $0x99c] sm:$0xf]
    %v1064 = vld [vmem:[%s1 + $0x9a0] sm:$0xf]
    %v1065 = vld [vmem:[%s1 + $0x9a4] sm:$0xf]
    %v1066 = vld [vmem:[%s1 + $0x9a8] sm:$0xf]
    %v1067 = vld [vmem:[%s1 + $0x9ac] sm:$0xf]
    %v1068 = vld [vmem:[%s1 + $0x9b0] sm:$0xf]
    %v1069 = vld [vmem:[%s1 + $0x9b4] sm:$0xf]
    %v1070 = vld [vmem:[%s1 + $0x9b8] sm:$0xf]
    %v1071 = vld [vmem:[%s1 + $0x9bc] sm:$0xf]
    %v1072 = vld [vmem:[%s1 + $0x9c0] sm:$0xf]
    %v1073 = vld [vmem:[%s1 + $0x9c4] sm:$0xf]
    %v1074 = vld [vmem:[%s1 + $0x9c8] sm:$0xf]
    %v1075 = vld [vmem:[%s1 + $0x9cc] sm:$0xf]
    %v1076 = vld [vmem:[%s1 + $0x9d0] sm:$0xf]
    %v1077 = vld [vmem:[%s1 + $0x9d4] sm:$0xf]
    %v1078 = vld [vmem:[%s1 + $0x9d8] sm:$0xf]
    %v1079 = vld [vmem:[%s1 + $0x9dc] sm:$0xf]
    %v1080 = vld [vmem:[%s1 + $0x9e0] sm:$0xf]
    %v1081 = vld [vmem:[%s1 + $0x9e4] sm:$0xf]
    %v1082 = vld [vmem:[%s1 + $0x9e8] sm:$0xf]
    %v1083 = vld [vmem:[%s1 + $0x9ec] sm:$0xf]
    %v1084 = vld [vmem:[%s1 + $0x9f0] sm:$0xf]
    %v1085 = vld [vmem:[%s1 + $0x9f4] sm:$0xf]
    %v1086 = vld [vmem:[%s1 + $0x9f8] sm:$0xf]
    %v1087 = vld [vmem:[%s1 + $0x9fc] sm:$0xf]
    %v1088 = vld [vmem:[%s1 + $0xa00] sm:$0xf]
    %v1089 = vld [vmem:[%s1 + $0xa04] sm:$0xf]
    %v1090 = vld [vmem:[%s1 + $0xa08] sm:$0xf]
    %v1091 = vld [vmem:[%s1 + $0xa0c] sm:$0xf]
    %v1092 = vld [vmem:[%s1 + $0xa10] sm:$0xf]
    %v1093 = vld [vmem:[%s1 + $0xa14] sm:$0xf]
    %v1094 = vld [vmem:[%s1 + $0xa18] sm:$0xf]
    %v1095 = vld [vmem:[%s1 + $0xa1c] sm:$0xf]
    %v1096 = vld [vmem:[%s1 + $0xa20] sm:$0xf]
    %v1097 = vld [vmem:[%s1 + $0xa24] sm:$0xf]
    %v1098 = vld [vmem:[%s1 + $0xa28] sm:$0xf]
    %v1099 = vld [vmem:[%s1 + $0xa2c] sm:$0xf]
    %v1100 = vld [vmem:[%s1 + $0xa30] sm:$0xf]
    %v1101 = vld [vmem:[%s1 + $0xa34] sm:$0xf]
    %v1102 = vld [vmem:[%s1 + $0xa38] sm:$0xf]
    %v1103 = vld [vmem:[%s1 + $0xa3c] sm:$0xf]
    %v1104 = vld [vmem:[%s1 + $0xa40] sm:$0xf]
    %v1105 = vld [vmem:[%s1 + $0xa44] sm:$0xf]
    %v1106 = vld [vmem:[%s1 + $0xa48] sm:$0xf]
    %v1107 = vld [vmem:[%s1 + $0xa4c] sm:$0xf]
    %v1108 = vld [vmem:[%s1 + $0xa50] sm:$0xf]
    %v1109 = vld [vmem:[%s1 + $0xa54] sm:$0xf]
    %v1110 = vld [vmem:[%s1 + $0xa58] sm:$0xf]
    %v1111 = vld [vmem:[%s1 + $0xa5c] sm:$0xf]
    %v1112 = vld [vmem:[%s1 + $0xa60] sm:$0xf]
    %v1113 = vld [vmem:[%s1 + $0xa64] sm:$0xf]
    %v1114 = vld [vmem:[%s1 + $0xa68] sm:$0xf]
    %v1115 = vld [vmem:[%s1 + $0xa6c] sm:$0xf]
    %v1116 = vld [vmem:[%s1 + $0xa70] sm:$0xf]
    %v1117 = vld [vmem:[%s1 + $0xa74] sm:$0xf]
    %v1118 = vld [vmem:[%s1 + $0xa78] sm:$0xf]
    %v1119 = vld [vmem:[%s1 + $0xa7c] sm:$0xf]
    %v1120 = vld [vmem:[%s1 + $0xa80] sm:$0xf]
    %v1121 = vld [vmem:[%s1 + $0xa84] sm:$0xf]
    %v1122 = vld [vmem:[%s1 + $0xa88] sm:$0xf]
    %v1123 = vld [vmem:[%s1 + $0xa8c] sm:$0xf]
    %v1124 = vld [vmem:[%s1 + $0xa90] sm:$0xf]
    %v1125 = vld [vmem:[%s1 + $0xa94] sm:$0xf]
    %v1126 = vld [vmem:[%s1 + $0xa98] sm:$0xf]
    %v1127 = vld [vmem:[%s1 + $0xa9c] sm:$0xf]
    %v1128 = vld [vmem:[%s1 + $0xaa0] sm:$0xf]
    %v1129 = vld [vmem:[%s1 + $0xaa4] sm:$0xf]
    %v1130 = vld [vmem:[%s1 + $0xaa8] sm:$0xf]
    %v1131 = vld [vmem:[%s1 + $0xaac] sm:$0xf]
    %v1132 = vld [vmem:[%s1 + $0xab0] sm:$0xf]
    %v1133 = vld [vmem:[%s1 + $0xab4] sm:$0xf]
    %v1134 = vld [vmem:[%s1 + $0xab8] sm:$0xf]
    %v1135 = vld [vmem:[%s1 + $0xabc] sm:$0xf]
    %v1136 = vld [vmem:[%s1 + $0xac0] sm:$0xf]
    %v1137 = vld [vmem:[%s1 + $0xac4] sm:$0xf]
    %v1138 = vld [vmem:[%s1 + $0xac8] sm:$0xf]
    %v1139 = vld [vmem:[%s1 + $0xacc] sm:$0xf]
    %v1140 = vld [vmem:[%s1 + $0xad0] sm:$0xf]
    %v1141 = vld [vmem:[%s1 + $0xad4] sm:$0xf]
    %v1142 = vld [vmem:[%s1 + $0xad8] sm:$0xf]
    %v1143 = vld [vmem:[%s1 + $0xadc] sm:$0xf]
    %v1144 = vld [vmem:[%s1 + $0xae0] sm:$0xf]
    %v1145 = vld [vmem:[%s1 + $0xae4] sm:$0xf]
    %v1146 = vld [vmem:[%s1 + $0xae8] sm:$0xf]
    %v1147 = vld [vmem:[%s1 + $0xaec] sm:$0xf]
    %v1148 = vld [vmem:[%s1 + $0xaf0] sm:$0xf]
    %v1149 = vld [vmem:[%s1 + $0xaf4] sm:$0xf]
    %v1150 = vld [vmem:[%s1 + $0xaf8] sm:$0xf]
    %v1151 = vld [vmem:[%s1 + $0xafc] sm:$0xf]
    %v1152 = vld [vmem:[%s1 + $0xb00] sm:$0xf]
    %v1153 = vld [vmem:[%s1 + $0xb04] sm:$0xf]
    %v1154 = vld [vmem:[%s1 + $0xb08] sm:$0xf]
    %v1155 = vld [vmem:[%s1 + $0xb0c] sm:$0xf]
    %v1156 = vld [vmem:[%s1 + $0xb10] sm:$0xf]
    %v1157 = vld [vmem:[%s1 + $0xb14] sm:$0xf]
    %v1158 = vld [vmem:[%s1 + $0xb18] sm:$0xf]
    %v1159 = vld [vmem:[%s1 + $0xb1c] sm:$0xf]
    %v1160 = vld [vmem:[%s1 + $0xb20] sm:$0xf]
    %v1161 = vld [vmem:[%s1 + $0xb24] sm:$0xf]
    %v1162 = vld [vmem:[%s1 + $0xb28] sm:$0xf]
    %v1163 = vld [vmem:[%s1 + $0xb2c] sm:$0xf]
    %v1164 = vld [vmem:[%s1 + $0xb30] sm:$0xf]
    %v1165 = vld [vmem:[%s1 + $0xb34] sm:$0xf]
    %v1166 = vld [vmem:[%s1 + $0xb38] sm:$0xf]
    %v1167 = vld [vmem:[%s1 + $0xb3c] sm:$0xf]
    %v1168 = vld [vmem:[%s1 + $0xb40] sm:$0xf]
    %v1169 = vld [vmem:[%s1 + $0xb44] sm:$0xf]
    %v1170 = vld [vmem:[%s1 + $0xb48] sm:$0xf]
    %v1171 = vld [vmem:[%s1 + $0xb4c] sm:$0xf]
    %v1172 = vld [vmem:[%s1 + $0xb50] sm:$0xf]
    %v1173 = vld [vmem:[%s1 + $0xb54] sm:$0xf]
    %v1174 = vld [vmem:[%s1 + $0xb58] sm:$0xf]
    %v1175 = vld [vmem:[%s1 + $0xb5c] sm:$0xf]
    %v1176 = vld [vmem:[%s1 + $0xb60] sm:$0xf]
    %v1177 = vld [vmem:[%s1 + $0xb64] sm:$0xf]
    %v1178 = vld [vmem:[%s1 + $0xb68] sm:$0xf]
    %v1179 = vld [vmem:[%s1 + $0xb6c] sm:$0xf]
    %v1180 = vld [vmem:[%s1 + $0xb70] sm:$0xf]
    %v1181 = vld [vmem:[%s1 + $0xb74] sm:$0xf]
    %v1182 = vld [vmem:[%s1 + $0xb78] sm:$0xf]
    %v1183 = vld [vmem:[%s1 + $0xb7c] sm:$0xf]
    %v1184 = vld [vmem:[%s1 + $0xb80] sm:$0xf]
    %v1185 = vld [vmem:[%s1 + $0xb84] sm:$0xf]
    %v1186 = vld [vmem:[%s1 + $0xb88] sm:$0xf]
    %v1187 = vld [vmem:[%s1 + $0xb8c] sm:$0xf]
    %v1188 = vld [vmem:[%s1 + $0xb90] sm:$0xf]
    %v1189 = vld [vmem:[%s1 + $0xb94] sm:$0xf]
    %v1190 = vld [vmem:[%s1 + $0xb98] sm:$0xf]
    %v1191 = vld [vmem:[%s1 + $0xb9c] sm:$0xf]
    %v1192 = vld [vmem:[%s1 + $0xba0] sm:$0xf]
    %v1193 = vld [vmem:[%s1 + $0xba4] sm:$0xf]
    %v1194 = vld [vmem:[%s1 + $0xba8] sm:$0xf]
    %v1195 = vld [vmem:[%s1 + $0xbac] sm:$0xf]
    %v1196 = vld [vmem:[%s1 + $0xbb0] sm:$0xf]
    %v1197 = vld [vmem:[%s1 + $0xbb4] sm:$0xf]
    %v1198 = vld [vmem:[%s1 + $0xbb8] sm:$0xf]
    %v1199 = vld [vmem:[%s1 + $0xbbc] sm:$0xf]
    %v1200 = vld [vmem:[%s1 + $0xbc0] sm:$0xf]
    %v1201 = vld [vmem:[%s1 + $0xbc4] sm:$0xf]
    %v1202 = vld [vmem:[%s1 + $0xbc8] sm:$0xf]
    %v1203 = vld [vmem:[%s1 + $0xbcc] sm:$0xf]
    %v1204 = vld [vmem:[%s1 + $0xbd0] sm:$0xf]
    %v1205 = vld [vmem:[%s1 + $0xbd4] sm:$0xf]
    %v1206 = vld [vmem:[%s1 + $0xbd8] sm:$0xf]
    %v1207 = vld [vmem:[%s1 + $0xbdc] sm:$0xf]
    %v1208 = vld [vmem:[%s1 + $0xbe0] sm:$0xf]
    %v1209 = vld [vmem:[%s1 + $0xbe4] sm:$0xf]
    %v1210 = vld [vmem:[%s1 + $0xbe8] sm:$0xf]
    %v1211 = vld [vmem:[%s1 + $0xbec] sm:$0xf]
    %v1212 = vld [vmem:[%s1 + $0xbf0] sm:$0xf]
    %v1213 = vld [vmem:[%s1 + $0xbf4] sm:$0xf]
    %v1214 = vld [vmem:[%s1 + $0xbf8] sm:$0xf]
    %v1215 = vld [vmem:[%s1 + $0xbfc] sm:$0xf]
    %v1216 = vld [vmem:[%s1 + $0xc00] sm:$0xf]
    %v1217 = vld [vmem:[%s1 + $0xc04] sm:$0xf]
    %v1218 = vld [vmem:[%s1 + $0xc08] sm:$0xf]
    %v1219 = vld [vmem:[%s1 + $0xc0c] sm:$0xf]
    %v1220 = vld [vmem:[%s1 + $0xc10] sm:$0xf]
    %v1221 = vld [vmem:[%s1 + $0xc14] sm:$0xf]
    %v1222 = vld [vmem:[%s1 + $0xc18] sm:$0xf]
    %v1223 = vld [vmem:[%s1 + $0xc1c] sm:$0xf]
    %v1224 = vld [vmem:[%s1 + $0xc20] sm:$0xf]
    %v1225 = vld [vmem:[%s1 + $0xc24] sm:$0xf]
    %v1226 = vld [vmem:[%s1 + $0xc28] sm:$0xf]
    %v1227 = vld [vmem:[%s1 + $0xc2c] sm:$0xf]
    %v1228 = vld [vmem:[%s1 + $0xc30] sm:$0xf]
    %v1229 = vld [vmem:[%s1 + $0xc34] sm:$0xf]
    %v1230 = vld [vmem:[%s1 + $0xc38] sm:$0xf]
    %v1231 = vld [vmem:[%s1 + $0xc3c] sm:$0xf]
    %v1232 = vld [vmem:[%s1 + $0xc40] sm:$0xf]
    %v1233 = vld [vmem:[%s1 + $0xc44] sm:$0xf]
    %v1234 = vld [vmem:[%s1 + $0xc48] sm:$0xf]
    %v1235 = vld [vmem:[%s1 + $0xc4c] sm:$0xf]
    %v1236 = vld [vmem:[%s1 + $0xc50] sm:$0xf]
    %v1237 = vld [vmem:[%s1 + $0xc54] sm:$0xf]
    %v1238 = vld [vmem:[%s1 + $0xc58] sm:$0xf]
    %v1239 = vld [vmem:[%s1 + $0xc5c] sm:$0xf]
    %v1240 = vld [vmem:[%s1 + $0xc60] sm:$0xf]
    %v1241 = vld [vmem:[%s1 + $0xc64] sm:$0xf]
    %v1242 = vld [vmem:[%s1 + $0xc68] sm:$0xf]
    %v1243 = vld [vmem:[%s1 + $0xc6c] sm:$0xf]
    %v1244 = vld [vmem:[%s1 + $0xc70] sm:$0xf]
    %v1245 = vld [vmem:[%s1 + $0xc74] sm:$0xf]
    %v1246 = vld [vmem:[%s1 + $0xc78] sm:$0xf]
    %v1247 = vld [vmem:[%s1 + $0xc7c] sm:$0xf]
    %v1248 = vld [vmem:[%s1 + $0xc80] sm:$0xf]
    %v1249 = vld [vmem:[%s1 + $0xc84] sm:$0xf]
    %v1250 = vld [vmem:[%s1 + $0xc88] sm:$0xf]
    %v1251 = vld [vmem:[%s1 + $0xc8c] sm:$0xf]
    %v1252 = vld [vmem:[%s1 + $0xc90] sm:$0xf]
    %v1253 = vld [vmem:[%s1 + $0xc94] sm:$0xf]
    %v1254 = vld [vmem:[%s1 + $0xc98] sm:$0xf]
    %v1255 = vld [vmem:[%s1 + $0xc9c] sm:$0xf]
    %v1256 = vld [vmem:[%s1 + $0xca0] sm:$0xf]
    %v1257 = vld [vmem:[%s1 + $0xca4] sm:$0xf]
    %v1258 = vld [vmem:[%s1 + $0xca8] sm:$0xf]
    %v1259 = vld [vmem:[%s1 + $0xcac] sm:$0xf]
    %v1260 = vld [vmem:[%s1 + $0xcb0] sm:$0xf]
    %v1261 = vld [vmem:[%s1 + $0xcb4] sm:$0xf]
    %v1262 = vld [vmem:[%s1 + $0xcb8] sm:$0xf]
    %v1263 = vld [vmem:[%s1 + $0xcbc] sm:$0xf]
    %v1264 = vld [vmem:[%s1 + $0xcc0] sm:$0xf]
    %v1265 = vld [vmem:[%s1 + $0xcc4] sm:$0xf]
    %v1266 = vld [vmem:[%s1 + $0xcc8] sm:$0xf]
    %v1267 = vld [vmem:[%s1 + $0xccc] sm:$0xf]
    %v1268 = vld [vmem:[%s1 + $0xcd0] sm:$0xf]
    %v1269 = vld [vmem:[%s1 + $0xcd4] sm:$0xf]
    %v1270 = vld [vmem:[%s1 + $0xcd8] sm:$0xf]
    %v1271 = vld [vmem:[%s1 + $0xcdc] sm:$0xf]
    %v1272 = vld [vmem:[%s1 + $0xce0] sm:$0xf]
    %v1273 = vld [vmem:[%s1 + $0xce4] sm:$0xf]
    %v1274 = vld [vmem:[%s1 + $0xce8] sm:$0xf]
    %v1275 = vld [vmem:[%s1 + $0xcec] sm:$0xf]
    %v1276 = vld [vmem:[%s1 + $0xcf0] sm:$0xf]
    %v1277 = vld [vmem:[%s1 + $0xcf4] sm:$0xf]
    %v1278 = vld [vmem:[%s1 + $0xcf8] sm:$0xf]
    %v1279 = vld [vmem:[%s1 + $0xcfc] sm:$0xf]
    %v1280 = vld [vmem:[%s1 + $0xd00] sm:$0xf]
    %v1281 = vld [vmem:[%s1 + $0xd04] sm:$0xf]
    %v1282 = vld [vmem:[%s1 + $0xd08] sm:$0xf]
    %v1283 = vld [vmem:[%s1 + $0xd0c] sm:$0xf]
    %v1284 = vld [vmem:[%s1 + $0xd10] sm:$0xf]
    %v1285 = vld [vmem:[%s1 + $0xd14] sm:$0xf]
    %v1286 = vld [vmem:[%s1 + $0xd18] sm:$0xf]
    %v1287 = vld [vmem:[%s1 + $0xd1c] sm:$0xf]
    %v1288 = vld [vmem:[%s1 + $0xd20] sm:$0xf]
    %v1289 = vld [vmem:[%s1 + $0xd24] sm:$0xf]
    %v1290 = vld [vmem:[%s1 + $0xd28] sm:$0xf]
    %v1291 = vld [vmem:[%s1 + $0xd2c] sm:$0xf]
    %v1292 = vld [vmem:[%s1 + $0xd30] sm:$0xf]
    %v1293 = vld [vmem:[%s1 + $0xd34] sm:$0xf]
    %v1294 = vld [vmem:[%s1 + $0xd38] sm:$0xf]
    %v1295 = vld [vmem:[%s1 + $0xd3c] sm:$0xf]
    %v1296 = vld [vmem:[%s1 + $0xd40] sm:$0xf]
    %v1297 = vld [vmem:[%s1 + $0xd44] sm:$0xf]
    %v1298 = vld [vmem:[%s1 + $0xd48] sm:$0xf]
    %v1299 = vld [vmem:[%s1 + $0xd4c] sm:$0xf]
    %v1300 = vld [vmem:[%s1 + $0xd50] sm:$0xf]
    %v1301 = vld [vmem:[%s1 + $0xd54] sm:$0xf]
    %v1302 = vld [vmem:[%s1 + $0xd58] sm:$0xf]
    %v1303 = vld [vmem:[%s1 + $0xd5c] sm:$0xf]
    %v1304 = vld [vmem:[%s1 + $0xd60] sm:$0xf]
    %v1305 = vld [vmem:[%s1 + $0xd64] sm:$0xf]
    %v1306 = vld [vmem:[%s1 + $0xd68] sm:$0xf]
    %v1307 = vld [vmem:[%s1 + $0xd6c] sm:$0xf]
    %v1308 = vld [vmem:[%s1 + $0xd70] sm:$0xf]
    %v1309 = vld [vmem:[%s1 + $0xd74] sm:$0xf]
    %v1310 = vld [vmem:[%s1 + $0xd78] sm:$0xf]
    %v1311 = vld [vmem:[%s1 + $0xd7c] sm:$0xf]
    %v1312 = vld [vmem:[%s1 + $0xd80] sm:$0xf]
    %v1313 = vld [vmem:[%s1 + $0xd84] sm:$0xf]
    %v1314 = vld [vmem:[%s1 + $0xd88] sm:$0xf]
    %v1315 = vld [vmem:[%s1 + $0xd8c] sm:$0xf]
    %v1316 = vld [vmem:[%s1 + $0xd90] sm:$0xf]
    %v1317 = vld [vmem:[%s1 + $0xd94] sm:$0xf]
    %v1318 = vld [vmem:[%s1 + $0xd98] sm:$0xf]
    %v1319 = vld [vmem:[%s1 + $0xd9c] sm:$0xf]
    %v1320 = vld [vmem:[%s1 + $0xda0] sm:$0xf]
    %v1321 = vld [vmem:[%s1 + $0xda4] sm:$0xf]
    %v1322 = vld [vmem:[%s1 + $0xda8] sm:$0xf]
    %v1323 = vld [vmem:[%s1 + $0xdac] sm:$0xf]
    %v1324 = vld [vmem:[%s1 + $0xdb0] sm:$0xf]
    %v1325 = vld [vmem:[%s1 + $0xdb4] sm:$0xf]
    %v1326 = vld [vmem:[%s1 + $0xdb8] sm:$0xf]
    %v1327 = vld [vmem:[%s1 + $0xdbc] sm:$0xf]
    %v1328 = vld [vmem:[%s1 + $0xdc0] sm:$0xf]
    %v1329 = vld [vmem:[%s1 + $0xdc4] sm:$0xf]
    %v1330 = vld [vmem:[%s1 + $0xdc8] sm:$0xf]
    %v1331 = vld [vmem:[%s1 + $0xdcc] sm:$0xf]
    %v1332 = vld [vmem:[%s1 + $0xdd0] sm:$0xf]
    %v1333 = vld [vmem:[%s1 + $0xdd4] sm:$0xf]
    %v1334 = vld [vmem:[%s1 + $0xdd8] sm:$0xf]
    %v1335 = vld [vmem:[%s1 + $0xddc] sm:$0xf]
    %v1336 = vld [vmem:[%s1 + $0xde0] sm:$0xf]
    %v1337 = vld [vmem:[%s1 + $0xde4] sm:$0xf]
    %v1338 = vld [vmem:[%s1 + $0xde8] sm:$0xf]
    %v1339 = vld [vmem:[%s1 + $0xdec] sm:$0xf]
    %v1340 = vld [vmem:[%s1 + $0xdf0] sm:$0xf]
    %v1341 = vld [vmem:[%s1 + $0xdf4] sm:$0xf]
    %v1342 = vld [vmem:[%s1 + $0xdf8] sm:$0xf]
    %v1343 = vld [vmem:[%s1 + $0xdfc] sm:$0xf]
    %v1344 = vld [vmem:[%s1 + $0xe00] sm:$0xf]
    %v1345 = vld [vmem:[%s1 + $0xe04] sm:$0xf]
    %v1346 = vld [vmem:[%s1 + $0xe08] sm:$0xf]
    %v1347 = vld [vmem:[%s1 + $0xe0c] sm:$0xf]
    %v1348 = vld [vmem:[%s1 + $0xe10] sm:$0xf]
    %v1349 = vld [vmem:[%s1 + $0xe14] sm:$0xf]
    %v1350 = vld [vmem:[%s1 + $0xe18] sm:$0xf]
    %v1351 = vld [vmem:[%s1 + $0xe1c] sm:$0xf]
    %v1352 = vld [vmem:[%s1 + $0xe20] sm:$0xf]
    %v1353 = vld [vmem:[%s1 + $0xe24] sm:$0xf]
    %v1354 = vld [vmem:[%s1 + $0xe28] sm:$0xf]
    %v1355 = vld [vmem:[%s1 + $0xe2c] sm:$0xf]
    %v1356 = vld [vmem:[%s1 + $0xe30] sm:$0xf]
    %v1357 = vld [vmem:[%s1 + $0xe34] sm:$0xf]
    %v1358 = vld [vmem:[%s1 + $0xe38] sm:$0xf]
    %v1359 = vld [vmem:[%s1 + $0xe3c] sm:$0xf]
    %v1360 = vld [vmem:[%s1 + $0xe40] sm:$0xf]
    %v1361 = vld [vmem:[%s1 + $0xe44] sm:$0xf]
    %v1362 = vld [vmem:[%s1 + $0xe48] sm:$0xf]
    %v1363 = vld [vmem:[%s1 + $0xe4c] sm:$0xf]
    %v1364 = vld [vmem:[%s1 + $0xe50] sm:$0xf]
    %v1365 = vld [vmem:[%s1 + $0xe54] sm:$0xf]
    %v1366 = vld [vmem:[%s1 + $0xe58] sm:$0xf]
    %v1367 = vld [vmem:[%s1 + $0xe5c] sm:$0xf]
    %v1368 = vld [vmem:[%s1 + $0xe60] sm:$0xf]
    %v1369 = vld [vmem:[%s1 + $0xe64] sm:$0xf]
    %v1370 = vld [vmem:[%s1 + $0xe68] sm:$0xf]
    %v1371 = vld [vmem:[%s1 + $0xe6c] sm:$0xf]
    %v1372 = vld [vmem:[%s1 + $0xe70] sm:$0xf]
    %v1373 = vld [vmem:[%s1 + $0xe74] sm:$0xf]
    %v1374 = vld [vmem:[%s1 + $0xe78] sm:$0xf]
    %v1375 = vld [vmem:[%s1 + $0xe7c] sm:$0xf]
    %v1376 = vld [vmem:[%s1 + $0xe80] sm:$0xf]
    %v1377 = vld [vmem:[%s1 + $0xe84] sm:$0xf]
    %v1378 = vld [vmem:[%s1 + $0xe88] sm:$0xf]
    %v1379 = vld [vmem:[%s1 + $0xe8c] sm:$0xf]
    %v1380 = vld [vmem:[%s1 + $0xe90] sm:$0xf]
    %v1381 = vld [vmem:[%s1 + $0xe94] sm:$0xf]
    %v1382 = vld [vmem:[%s1 + $0xe98] sm:$0xf]
    %v1383 = vld [vmem:[%s1 + $0xe9c] sm:$0xf]
    %v1384 = vld [vmem:[%s1 + $0xea0] sm:$0xf]
    %v1385 = vld [vmem:[%s1 + $0xea4] sm:$0xf]
    %v1386 = vld [vmem:[%s1 + $0xea8] sm:$0xf]
    %v1387 = vld [vmem:[%s1 + $0xeac] sm:$0xf]
    %v1388 = vld [vmem:[%s1 + $0xeb0] sm:$0xf]
    %v1389 = vld [vmem:[%s1 + $0xeb4] sm:$0xf]
    %v1390 = vld [vmem:[%s1 + $0xeb8] sm:$0xf]
    %v1391 = vld [vmem:[%s1 + $0xebc] sm:$0xf]
    %v1392 = vld [vmem:[%s1 + $0xec0] sm:$0xf]
    %v1393 = vld [vmem:[%s1 + $0xec4] sm:$0xf]
    %v1394 = vld [vmem:[%s1 + $0xec8] sm:$0xf]
    %v1395 = vld [vmem:[%s1 + $0xecc] sm:$0xf]
    %v1396 = vld [vmem:[%s1 + $0xed0] sm:$0xf]
    %v1397 = vld [vmem:[%s1 + $0xed4] sm:$0xf]
    %v1398 = vld [vmem:[%s1 + $0xed8] sm:$0xf]
    %v1399 = vld [vmem:[%s1 + $0xedc] sm:$0xf]
    %v1400 = vld [vmem:[%s1 + $0xee0] sm:$0xf]
    %v1401 = vld [vmem:[%s1 + $0xee4] sm:$0xf]
    %v1402 = vld [vmem:[%s1 + $0xee8] sm:$0xf]
    %v1403 = vld [vmem:[%s1 + $0xeec] sm:$0xf]
    %v1404 = vld [vmem:[%s1 + $0xef0] sm:$0xf]
    %v1405 = vld [vmem:[%s1 + $0xef4] sm:$0xf]
    %v1406 = vld [vmem:[%s1 + $0xef8] sm:$0xf]
    %v1407 = vld [vmem:[%s1 + $0xefc] sm:$0xf]
    %v1408 = vld [vmem:[%s1 + $0xf00] sm:$0xf]
    %v1409 = vld [vmem:[%s1 + $0xf04] sm:$0xf]
    %v1410 = vld [vmem:[%s1 + $0xf08] sm:$0xf]
    %v1411 = vld [vmem:[%s1 + $0xf0c] sm:$0xf]
    %v1412 = vld [vmem:[%s1 + $0xf10] sm:$0xf]
    %v1413 = vld [vmem:[%s1 + $0xf14] sm:$0xf]
    %v1414 = vld [vmem:[%s1 + $0xf18] sm:$0xf]
    %v1415 = vld [vmem:[%s1 + $0xf1c] sm:$0xf]
    %v1416 = vld [vmem:[%s1 + $0xf20] sm:$0xf]
    %v1417 = vld [vmem:[%s1 + $0xf24] sm:$0xf]
    %v1418 = vld [vmem:[%s1 + $0xf28] sm:$0xf]
    %v1419 = vld [vmem:[%s1 + $0xf2c] sm:$0xf]
    %v1420 = vld [vmem:[%s1 + $0xf30] sm:$0xf]
    %v1421 = vld [vmem:[%s1 + $0xf34] sm:$0xf]
    %v1422 = vld [vmem:[%s1 + $0xf38] sm:$0xf]
    %v1423 = vld [vmem:[%s1 + $0xf3c] sm:$0xf]
    %v1424 = vld [vmem:[%s1 + $0xf40] sm:$0xf]
    %v1425 = vld [vmem:[%s1 + $0xf44] sm:$0xf]
    %v1426 = vld [vmem:[%s1 + $0xf48] sm:$0xf]
    %v1427 = vld [vmem:[%s1 + $0xf4c] sm:$0xf]
    %v1428 = vld [vmem:[%s1 + $0xf50] sm:$0xf]
    %v1429 = vld [vmem:[%s1 + $0xf54] sm:$0xf]
    %v1430 = vld [vmem:[%s1 + $0xf58] sm:$0xf]
    %v1431 = vld [vmem:[%s1 + $0xf5c] sm:$0xf]
    %v1432 = vld [vmem:[%s1 + $0xf60] sm:$0xf]
    %v1433 = vld [vmem:[%s1 + $0xf64] sm:$0xf]
    %v1434 = vld [vmem:[%s1 + $0xf68] sm:$0xf]
    %v1435 = vld [vmem:[%s1 + $0xf6c] sm:$0xf]
    %v1436 = vld [vmem:[%s1 + $0xf70] sm:$0xf]
    %v1437 = vld [vmem:[%s1 + $0xf74] sm:$0xf]
    %v1438 = vld [vmem:[%s1 + $0xf78] sm:$0xf]
    %v1439 = vld [vmem:[%s1 + $0xf7c] sm:$0xf]
    %v1440 = vld [vmem:[%s1 + $0xf80] sm:$0xf]
    %v1441 = vld [vmem:[%s1 + $0xf84] sm:$0xf]
    %v1442 = vld [vmem:[%s1 + $0xf88] sm:$0xf]
    %v1443 = vld [vmem:[%s1 + $0xf8c] sm:$0xf]
    %v1444 = vld [vmem:[%s1 + $0xf90] sm:$0xf]
    %v1445 = vld [vmem:[%s1 + $0xf94] sm:$0xf]
    %v1446 = vld [vmem:[%s1 + $0xf98] sm:$0xf]
    %v1447 = vld [vmem:[%s1 + $0xf9c] sm:$0xf]
    %v1448 = vld [vmem:[%s1 + $0xfa0] sm:$0xf]
    %v1449 = vld [vmem:[%s1 + $0xfa4] sm:$0xf]
    %v1450 = vld [vmem:[%s1 + $0xfa8] sm:$0xf]
    %v1451 = vld [vmem:[%s1 + $0xfac] sm:$0xf]
    %v1452 = vld [vmem:[%s1 + $0xfb0] sm:$0xf]
    %v1453 = vld [vmem:[%s1 + $0xfb4] sm:$0xf]
    %v1454 = vld [vmem:[%s1 + $0xfb8] sm:$0xf]
    %v1455 = vld [vmem:[%s1 + $0xfbc] sm:$0xf]
    %v1456 = vld [vmem:[%s1 + $0xfc0] sm:$0xf]
    %v1457 = vld [vmem:[%s1 + $0xfc4] sm:$0xf]
    %v1458 = vld [vmem:[%s1 + $0xfc8] sm:$0xf]
    %v1459 = vld [vmem:[%s1 + $0xfcc] sm:$0xf]
    %v1460 = vld [vmem:[%s1 + $0xfd0] sm:$0xf]
    %v1461 = vld [vmem:[%s1 + $0xfd4] sm:$0xf]
    %v1462 = vld [vmem:[%s1 + $0xfd8] sm:$0xf]
    %v1463 = vld [vmem:[%s1 + $0xfdc] sm:$0xf]
    %v1464 = vld [vmem:[%s1 + $0xfe0] sm:$0xf]
    %v1465 = vld [vmem:[%s1 + $0xfe4] sm:$0xf]
    %v1466 = vld [vmem:[%s1 + $0xfe8] sm:$0xf]
    %v1467 = vld [vmem:[%s1 + $0xfec] sm:$0xf]
    %v1468 = vld [vmem:[%s1 + $0xff0] sm:$0xf]
    %v1469 = vld [vmem:[%s1 + $0xff4] sm:$0xf]
    %v1470 = vld [vmem:[%s1 + $0xff8] sm:$0xf]
    %v1471 = vld [vmem:[%s1 + $0xffc] sm:$0xf]
    %v1472 = vld [vmem:[%s2] sm:$0x1]
    %v1474 = vlaneseq
    %v1475 = vshrl.u32 %v1474, 7
    %v1476 = vsub.s32 0, %v1475
    %v1477 = vrot.slane %v1472, %v1476
    %v2503 = vunpack.c.l.b16 %v448
    %v2504 = vunpack.c.l.b16 %v449
    %v2505 = vunpack.c.l.b16 %v450
    %v2506 = vunpack.c.l.b16 %v451
    %v2507 = vunpack.c.l.b16 %v452
    %v2508 = vunpack.c.l.b16 %v453
    %v2509 = vunpack.c.l.b16 %v454
    %v2510 = vunpack.c.l.b16 %v455
    %v2511 = vunpack.c.l.b16 %v456
    %v2512 = vunpack.c.l.b16 %v457
    %v2513 = vunpack.c.l.b16 %v458
    %v2514 = vunpack.c.l.b16 %v459
    %v2515 = vunpack.c.l.b16 %v460
    %v2516 = vunpack.c.l.b16 %v461
    %v2517 = vunpack.c.l.b16 %v462
    %v2518 = vunpack.c.l.b16 %v463
    %v2519 = vunpack.c.l.b16 %v464
    %v2520 = vunpack.c.l.b16 %v465
    %v2521 = vunpack.c.l.b16 %v466
    %v2522 = vunpack.c.l.b16 %v467
    %v2523 = vunpack.c.l.b16 %v468
    %v2524 = vunpack.c.l.b16 %v469
    %v2525 = vunpack.c.l.b16 %v470
    %v2526 = vunpack.c.l.b16 %v471
    %v2527 = vunpack.c.l.b16 %v472
    %v2528 = vunpack.c.l.b16 %v473
    %v2529 = vunpack.c.l.b16 %v474
    %v2530 = vunpack.c.l.b16 %v475
    %v2531 = vunpack.c.l.b16 %v476
    %v2532 = vunpack.c.l.b16 %v477
    %v2533 = vunpack.c.l.b16 %v478
    %v2534 = vunpack.c.l.b16 %v479
    %v2535 = vunpack.c.l.b16 %v480
    %v2536 = vunpack.c.l.b16 %v481
    %v2537 = vunpack.c.l.b16 %v482
    %v2538 = vunpack.c.l.b16 %v483
    %v2539 = vunpack.c.l.b16 %v484
    %v2540 = vunpack.c.l.b16 %v485
    %v2541 = vunpack.c.l.b16 %v486
    %v2542 = vunpack.c.l.b16 %v487
    %v2543 = vunpack.c.l.b16 %v488
    %v2544 = vunpack.c.l.b16 %v489
    %v2545 = vunpack.c.l.b16 %v490
    %v2546 = vunpack.c.l.b16 %v491
    %v2547 = vunpack.c.l.b16 %v492
    %v2548 = vunpack.c.l.b16 %v493
    %v2549 = vunpack.c.l.b16 %v494
    %v2550 = vunpack.c.l.b16 %v495
    %v2551 = vunpack.c.l.b16 %v496
    %v2552 = vunpack.c.l.b16 %v497
    %v2553 = vunpack.c.l.b16 %v498
    %v2554 = vunpack.c.l.b16 %v499
    %v2555 = vunpack.c.l.b16 %v500
    %v2556 = vunpack.c.l.b16 %v501
    %v2557 = vunpack.c.l.b16 %v502
    %v2558 = vunpack.c.l.b16 %v503
    %v2559 = vunpack.c.l.b16 %v504
    %v2560 = vunpack.c.l.b16 %v505
    %v2561 = vunpack.c.l.b16 %v506
    %v2562 = vunpack.c.l.b16 %v507
    %v2563 = vunpack.c.l.b16 %v508
    %v2564 = vunpack.c.l.b16 %v509
    %v2565 = vunpack.c.l.b16 %v510
    %v2566 = vunpack.c.l.b16 %v511
    %v2567 = vunpack.c.l.b16 %v512
    %v2568 = vunpack.c.l.b16 %v513
    %v2569 = vunpack.c.l.b16 %v514
    %v2570 = vunpack.c.l.b16 %v515
    %v2571 = vunpack.c.l.b16 %v516
    %v2572 = vunpack.c.l.b16 %v517
    %v2573 = vunpack.c.l.b16 %v518
    %v2574 = vunpack.c.l.b16 %v519
    %v2575 = vunpack.c.l.b16 %v520
    %v2576 = vunpack.c.l.b16 %v521
    %v2577 = vunpack.c.l.b16 %v522
    %v2578 = vunpack.c.l.b16 %v523
    %v2579 = vunpack.c.l.b16 %v524
    %v2580 = vunpack.c.l.b16 %v525
    %v2581 = vunpack.c.l.b16 %v526
    %v2582 = vunpack.c.l.b16 %v527
    %v2583 = vunpack.c.l.b16 %v528
    %v2584 = vunpack.c.l.b16 %v529
    %v2585 = vunpack.c.l.b16 %v530
    %v2586 = vunpack.c.l.b16 %v531
    %v2587 = vunpack.c.l.b16 %v532
    %v2588 = vunpack.c.l.b16 %v533
    %v2589 = vunpack.c.l.b16 %v534
    %v2590 = vunpack.c.l.b16 %v535
    %v2591 = vunpack.c.l.b16 %v536
    %v2592 = vunpack.c.l.b16 %v537
    %v2593 = vunpack.c.l.b16 %v538
    %v2594 = vunpack.c.l.b16 %v539
    %v2595 = vunpack.c.l.b16 %v540
    %v2596 = vunpack.c.l.b16 %v541
    %v2597 = vunpack.c.l.b16 %v542
    %v2598 = vunpack.c.l.b16 %v543
    %v2599 = vunpack.c.l.b16 %v544
    %v2600 = vunpack.c.l.b16 %v545
    %v2601 = vunpack.c.l.b16 %v546
    %v2602 = vunpack.c.l.b16 %v547
    %v2603 = vunpack.c.l.b16 %v548
    %v2604 = vunpack.c.l.b16 %v549
    %v2605 = vunpack.c.l.b16 %v550
    %v2606 = vunpack.c.l.b16 %v551
    %v2607 = vunpack.c.l.b16 %v552
    %v2608 = vunpack.c.l.b16 %v553
    %v2609 = vunpack.c.l.b16 %v554
    %v2610 = vunpack.c.l.b16 %v555
    %v2611 = vunpack.c.l.b16 %v556
    %v2612 = vunpack.c.l.b16 %v557
    %v2613 = vunpack.c.l.b16 %v558
    %v2614 = vunpack.c.l.b16 %v559
    %v2615 = vunpack.c.l.b16 %v560
    %v2616 = vunpack.c.l.b16 %v561
    %v2617 = vunpack.c.l.b16 %v562
    %v2618 = vunpack.c.l.b16 %v563
    %v2619 = vunpack.c.l.b16 %v564
    %v2620 = vunpack.c.l.b16 %v565
    %v2621 = vunpack.c.l.b16 %v566
    %v2622 = vunpack.c.l.b16 %v567
    %v2623 = vunpack.c.l.b16 %v568
    %v2624 = vunpack.c.l.b16 %v569
    %v2625 = vunpack.c.l.b16 %v570
    %v2626 = vunpack.c.l.b16 %v571
    %v2627 = vunpack.c.l.b16 %v572
    %v2628 = vunpack.c.l.b16 %v573
    %v2629 = vunpack.c.l.b16 %v574
    %v2630 = vunpack.c.l.b16 %v575
    %v2631 = vunpack.c.l.b16 %v576
    %v2632 = vunpack.c.l.b16 %v577
    %v2633 = vunpack.c.l.b16 %v578
    %v2634 = vunpack.c.l.b16 %v579
    %v2635 = vunpack.c.l.b16 %v580
    %v2636 = vunpack.c.l.b16 %v581
    %v2637 = vunpack.c.l.b16 %v582
    %v2638 = vunpack.c.l.b16 %v583
    %v2639 = vunpack.c.l.b16 %v584
    %v2640 = vunpack.c.l.b16 %v585
    %v2641 = vunpack.c.l.b16 %v586
    %v2642 = vunpack.c.l.b16 %v587
    %v2643 = vunpack.c.l.b16 %v588
    %v2644 = vunpack.c.l.b16 %v589
    %v2645 = vunpack.c.l.b16 %v590
    %v2646 = vunpack.c.l.b16 %v591
    %v2647 = vunpack.c.l.b16 %v592
    %v2648 = vunpack.c.l.b16 %v593
    %v2649 = vunpack.c.l.b16 %v594
    %v2650 = vunpack.c.l.b16 %v595
    %v2651 = vunpack.c.l.b16 %v596
    %v2652 = vunpack.c.l.b16 %v597
    %v2653 = vunpack.c.l.b16 %v598
    %v2654 = vunpack.c.l.b16 %v599
    %v2655 = vunpack.c.l.b16 %v600
    %v2656 = vunpack.c.l.b16 %v601
    %v2657 = vunpack.c.l.b16 %v602
    %v2658 = vunpack.c.l.b16 %v603
    %v2659 = vunpack.c.l.b16 %v604
    %v2660 = vunpack.c.l.b16 %v605
    %v2661 = vunpack.c.l.b16 %v606
    %v2662 = vunpack.c.l.b16 %v607
    %v2663 = vunpack.c.l.b16 %v608
    %v2664 = vunpack.c.l.b16 %v609
    %v2665 = vunpack.c.l.b16 %v610
    %v2666 = vunpack.c.l.b16 %v611
    %v2667 = vunpack.c.l.b16 %v612
    %v2668 = vunpack.c.l.b16 %v613
    %v2669 = vunpack.c.l.b16 %v614
    %v2670 = vunpack.c.l.b16 %v615
    %v2671 = vunpack.c.l.b16 %v616
    %v2672 = vunpack.c.l.b16 %v617
    %v2673 = vunpack.c.l.b16 %v618
    %v2674 = vunpack.c.l.b16 %v619
    %v2675 = vunpack.c.l.b16 %v620
    %v2676 = vunpack.c.l.b16 %v621
    %v2677 = vunpack.c.l.b16 %v622
    %v2678 = vunpack.c.l.b16 %v623
    %v2679 = vunpack.c.l.b16 %v624
    %v2680 = vunpack.c.l.b16 %v625
    %v2681 = vunpack.c.l.b16 %v626
    %v2682 = vunpack.c.l.b16 %v627
    %v2683 = vunpack.c.l.b16 %v628
    %v2684 = vunpack.c.l.b16 %v629
    %v2685 = vunpack.c.l.b16 %v630
    %v2686 = vunpack.c.l.b16 %v631
    %v2687 = vunpack.c.l.b16 %v632
    %v2688 = vunpack.c.l.b16 %v633
    %v2689 = vunpack.c.l.b16 %v634
    %v2690 = vunpack.c.l.b16 %v635
    %v2691 = vunpack.c.l.b16 %v636
    %v2692 = vunpack.c.l.b16 %v637
    %v2693 = vunpack.c.l.b16 %v638
    %v2694 = vunpack.c.l.b16 %v639
    %v2695 = vunpack.c.l.b16 %v640
    %v2696 = vunpack.c.l.b16 %v641
    %v2697 = vunpack.c.l.b16 %v642
    %v2698 = vunpack.c.l.b16 %v643
    %v2699 = vunpack.c.l.b16 %v644
    %v2700 = vunpack.c.l.b16 %v645
    %v2701 = vunpack.c.l.b16 %v646
    %v2702 = vunpack.c.l.b16 %v647
    %v2703 = vunpack.c.l.b16 %v648
    %v2704 = vunpack.c.l.b16 %v649
    %v2705 = vunpack.c.l.b16 %v650
    %v2706 = vunpack.c.l.b16 %v651
    %v2707 = vunpack.c.l.b16 %v652
    %v2708 = vunpack.c.l.b16 %v653
    %v2709 = vunpack.c.l.b16 %v654
    %v2710 = vunpack.c.l.b16 %v655
    %v2711 = vunpack.c.l.b16 %v656
    %v2712 = vunpack.c.l.b16 %v657
    %v2713 = vunpack.c.l.b16 %v658
    %v2714 = vunpack.c.l.b16 %v659
    %v2715 = vunpack.c.l.b16 %v660
    %v2716 = vunpack.c.l.b16 %v661
    %v2717 = vunpack.c.l.b16 %v662
    %v2718 = vunpack.c.l.b16 %v663
    %v2719 = vunpack.c.l.b16 %v664
    %v2720 = vunpack.c.l.b16 %v665
    %v2721 = vunpack.c.l.b16 %v666
    %v2722 = vunpack.c.l.b16 %v667
    %v2723 = vunpack.c.l.b16 %v668
    %v2724 = vunpack.c.l.b16 %v669
    %v2725 = vunpack.c.l.b16 %v670
    %v2726 = vunpack.c.l.b16 %v671
    %v2727 = vunpack.c.l.b16 %v672
    %v2728 = vunpack.c.l.b16 %v673
    %v2729 = vunpack.c.l.b16 %v674
    %v2730 = vunpack.c.l.b16 %v675
    %v2731 = vunpack.c.l.b16 %v676
    %v2732 = vunpack.c.l.b16 %v677
    %v2733 = vunpack.c.l.b16 %v678
    %v2734 = vunpack.c.l.b16 %v679
    %v2735 = vunpack.c.l.b16 %v680
    %v2736 = vunpack.c.l.b16 %v681
    %v2737 = vunpack.c.l.b16 %v682
    %v2738 = vunpack.c.l.b16 %v683
    %v2739 = vunpack.c.l.b16 %v684
    %v2740 = vunpack.c.l.b16 %v685
    %v2741 = vunpack.c.l.b16 %v686
    %v2742 = vunpack.c.l.b16 %v687
    %v2743 = vunpack.c.l.b16 %v688
    %v2744 = vunpack.c.l.b16 %v689
    %v2745 = vunpack.c.l.b16 %v690
    %v2746 = vunpack.c.l.b16 %v691
    %v2747 = vunpack.c.l.b16 %v692
    %v2748 = vunpack.c.l.b16 %v693
    %v2749 = vunpack.c.l.b16 %v694
    %v2750 = vunpack.c.l.b16 %v695
    %v2751 = vunpack.c.l.b16 %v696
    %v2752 = vunpack.c.l.b16 %v697
    %v2753 = vunpack.c.l.b16 %v698
    %v2754 = vunpack.c.l.b16 %v699
    %v2755 = vunpack.c.l.b16 %v700
    %v2756 = vunpack.c.l.b16 %v701
    %v2757 = vunpack.c.l.b16 %v702
    %v2758 = vunpack.c.l.b16 %v703
    %v2759 = vunpack.c.l.b16 %v704
    %v2760 = vunpack.c.l.b16 %v705
    %v2761 = vunpack.c.l.b16 %v706
    %v2762 = vunpack.c.l.b16 %v707
    %v2763 = vunpack.c.l.b16 %v708
    %v2764 = vunpack.c.l.b16 %v709
    %v2765 = vunpack.c.l.b16 %v710
    %v2766 = vunpack.c.l.b16 %v711
    %v2767 = vunpack.c.l.b16 %v712
    %v2768 = vunpack.c.l.b16 %v713
    %v2769 = vunpack.c.l.b16 %v714
    %v2770 = vunpack.c.l.b16 %v715
    %v2771 = vunpack.c.l.b16 %v716
    %v2772 = vunpack.c.l.b16 %v717
    %v2773 = vunpack.c.l.b16 %v718
    %v2774 = vunpack.c.l.b16 %v719
    %v2775 = vunpack.c.l.b16 %v720
    %v2776 = vunpack.c.l.b16 %v721
    %v2777 = vunpack.c.l.b16 %v722
    %v2778 = vunpack.c.l.b16 %v723
    %v2779 = vunpack.c.l.b16 %v724
    %v2780 = vunpack.c.l.b16 %v725
    %v2781 = vunpack.c.l.b16 %v726
    %v2782 = vunpack.c.l.b16 %v727
    %v2783 = vunpack.c.l.b16 %v728
    %v2784 = vunpack.c.l.b16 %v729
    %v2785 = vunpack.c.l.b16 %v730
    %v2786 = vunpack.c.l.b16 %v731
    %v2787 = vunpack.c.l.b16 %v732
    %v2788 = vunpack.c.l.b16 %v733
    %v2789 = vunpack.c.l.b16 %v734
    %v2790 = vunpack.c.l.b16 %v735
    %v2791 = vunpack.c.l.b16 %v736
    %v2792 = vunpack.c.l.b16 %v737
    %v2793 = vunpack.c.l.b16 %v738
    %v2794 = vunpack.c.l.b16 %v739
    %v2795 = vunpack.c.l.b16 %v740
    %v2796 = vunpack.c.l.b16 %v741
    %v2797 = vunpack.c.l.b16 %v742
    %v2798 = vunpack.c.l.b16 %v743
    %v2799 = vunpack.c.l.b16 %v744
    %v2800 = vunpack.c.l.b16 %v745
    %v2801 = vunpack.c.l.b16 %v746
    %v2802 = vunpack.c.l.b16 %v747
    %v2803 = vunpack.c.l.b16 %v748
    %v2804 = vunpack.c.l.b16 %v749
    %v2805 = vunpack.c.l.b16 %v750
    %v2806 = vunpack.c.l.b16 %v751
    %v2807 = vunpack.c.l.b16 %v752
    %v2808 = vunpack.c.l.b16 %v753
    %v2809 = vunpack.c.l.b16 %v754
    %v2810 = vunpack.c.l.b16 %v755
    %v2811 = vunpack.c.l.b16 %v756
    %v2812 = vunpack.c.l.b16 %v757
    %v2813 = vunpack.c.l.b16 %v758
    %v2814 = vunpack.c.l.b16 %v759
    %v2815 = vunpack.c.l.b16 %v760
    %v2816 = vunpack.c.l.b16 %v761
    %v2817 = vunpack.c.l.b16 %v762
    %v2818 = vunpack.c.l.b16 %v763
    %v2819 = vunpack.c.l.b16 %v764
    %v2820 = vunpack.c.l.b16 %v765
    %v2821 = vunpack.c.l.b16 %v766
    %v2822 = vunpack.c.l.b16 %v767
    %v2823 = vunpack.c.l.b16 %v768
    %v2824 = vunpack.c.l.b16 %v769
    %v2825 = vunpack.c.l.b16 %v770
    %v2826 = vunpack.c.l.b16 %v771
    %v2827 = vunpack.c.l.b16 %v772
    %v2828 = vunpack.c.l.b16 %v773
    %v2829 = vunpack.c.l.b16 %v774
    %v2830 = vunpack.c.l.b16 %v775
    %v2831 = vunpack.c.l.b16 %v776
    %v2832 = vunpack.c.l.b16 %v777
    %v2833 = vunpack.c.l.b16 %v778
    %v2834 = vunpack.c.l.b16 %v779
    %v2835 = vunpack.c.l.b16 %v780
    %v2836 = vunpack.c.l.b16 %v781
    %v2837 = vunpack.c.l.b16 %v782
    %v2838 = vunpack.c.l.b16 %v783
    %v2839 = vunpack.c.l.b16 %v784
    %v2840 = vunpack.c.l.b16 %v785
    %v2841 = vunpack.c.l.b16 %v786
    %v2842 = vunpack.c.l.b16 %v787
    %v2843 = vunpack.c.l.b16 %v788
    %v2844 = vunpack.c.l.b16 %v789
    %v2845 = vunpack.c.l.b16 %v790
    %v2846 = vunpack.c.l.b16 %v791
    %v2847 = vunpack.c.l.b16 %v792
    %v2848 = vunpack.c.l.b16 %v793
    %v2849 = vunpack.c.l.b16 %v794
    %v2850 = vunpack.c.l.b16 %v795
    %v2851 = vunpack.c.l.b16 %v796
    %v2852 = vunpack.c.l.b16 %v797
    %v2853 = vunpack.c.l.b16 %v798
    %v2854 = vunpack.c.l.b16 %v799
    %v2855 = vunpack.c.l.b16 %v800
    %v2856 = vunpack.c.l.b16 %v801
    %v2857 = vunpack.c.l.b16 %v802
    %v2858 = vunpack.c.l.b16 %v803
    %v2859 = vunpack.c.l.b16 %v804
    %v2860 = vunpack.c.l.b16 %v805
    %v2861 = vunpack.c.l.b16 %v806
    %v2862 = vunpack.c.l.b16 %v807
    %v2863 = vunpack.c.l.b16 %v808
    %v2864 = vunpack.c.l.b16 %v809
    %v2865 = vunpack.c.l.b16 %v810
    %v2866 = vunpack.c.l.b16 %v811
    %v2867 = vunpack.c.l.b16 %v812
    %v2868 = vunpack.c.l.b16 %v813
    %v2869 = vunpack.c.l.b16 %v814
    %v2870 = vunpack.c.l.b16 %v815
    %v2871 = vunpack.c.l.b16 %v816
    %v2872 = vunpack.c.l.b16 %v817
    %v2873 = vunpack.c.l.b16 %v818
    %v2874 = vunpack.c.l.b16 %v819
    %v2875 = vunpack.c.l.b16 %v820
    %v2876 = vunpack.c.l.b16 %v821
    %v2877 = vunpack.c.l.b16 %v822
    %v2878 = vunpack.c.l.b16 %v823
    %v2879 = vunpack.c.l.b16 %v824
    %v2880 = vunpack.c.l.b16 %v825
    %v2881 = vunpack.c.l.b16 %v826
    %v2882 = vunpack.c.l.b16 %v827
    %v2883 = vunpack.c.l.b16 %v828
    %v2884 = vunpack.c.l.b16 %v829
    %v2885 = vunpack.c.l.b16 %v830
    %v2886 = vunpack.c.l.b16 %v831
    %v2887 = vunpack.c.l.b16 %v832
    %v2888 = vunpack.c.l.b16 %v833
    %v2889 = vunpack.c.l.b16 %v834
    %v2890 = vunpack.c.l.b16 %v835
    %v2891 = vunpack.c.l.b16 %v836
    %v2892 = vunpack.c.l.b16 %v837
    %v2893 = vunpack.c.l.b16 %v838
    %v2894 = vunpack.c.l.b16 %v839
    %v2895 = vunpack.c.l.b16 %v840
    %v2896 = vunpack.c.l.b16 %v841
    %v2897 = vunpack.c.l.b16 %v842
    %v2898 = vunpack.c.l.b16 %v843
    %v2899 = vunpack.c.l.b16 %v844
    %v2900 = vunpack.c.l.b16 %v845
    %v2901 = vunpack.c.l.b16 %v846
    %v2902 = vunpack.c.l.b16 %v847
    %v2903 = vunpack.c.l.b16 %v848
    %v2904 = vunpack.c.l.b16 %v849
    %v2905 = vunpack.c.l.b16 %v850
    %v2906 = vunpack.c.l.b16 %v851
    %v2907 = vunpack.c.l.b16 %v852
    %v2908 = vunpack.c.l.b16 %v853
    %v2909 = vunpack.c.l.b16 %v854
    %v2910 = vunpack.c.l.b16 %v855
    %v2911 = vunpack.c.l.b16 %v856
    %v2912 = vunpack.c.l.b16 %v857
    %v2913 = vunpack.c.l.b16 %v858
    %v2914 = vunpack.c.l.b16 %v859
    %v2915 = vunpack.c.l.b16 %v860
    %v2916 = vunpack.c.l.b16 %v861
    %v2917 = vunpack.c.l.b16 %v862
    %v2918 = vunpack.c.l.b16 %v863
    %v2919 = vunpack.c.l.b16 %v864
    %v2920 = vunpack.c.l.b16 %v865
    %v2921 = vunpack.c.l.b16 %v866
    %v2922 = vunpack.c.l.b16 %v867
    %v2923 = vunpack.c.l.b16 %v868
    %v2924 = vunpack.c.l.b16 %v869
    %v2925 = vunpack.c.l.b16 %v870
    %v2926 = vunpack.c.l.b16 %v871
    %v2927 = vunpack.c.l.b16 %v872
    %v2928 = vunpack.c.l.b16 %v873
    %v2929 = vunpack.c.l.b16 %v874
    %v2930 = vunpack.c.l.b16 %v875
    %v2931 = vunpack.c.l.b16 %v876
    %v2932 = vunpack.c.l.b16 %v877
    %v2933 = vunpack.c.l.b16 %v878
    %v2934 = vunpack.c.l.b16 %v879
    %v2935 = vunpack.c.l.b16 %v880
    %v2936 = vunpack.c.l.b16 %v881
    %v2937 = vunpack.c.l.b16 %v882
    %v2938 = vunpack.c.l.b16 %v883
    %v2939 = vunpack.c.l.b16 %v884
    %v2940 = vunpack.c.l.b16 %v885
    %v2941 = vunpack.c.l.b16 %v886
    %v2942 = vunpack.c.l.b16 %v887
    %v2943 = vunpack.c.l.b16 %v888
    %v2944 = vunpack.c.l.b16 %v889
    %v2945 = vunpack.c.l.b16 %v890
    %v2946 = vunpack.c.l.b16 %v891
    %v2947 = vunpack.c.l.b16 %v892
    %v2948 = vunpack.c.l.b16 %v893
    %v2949 = vunpack.c.l.b16 %v894
    %v2950 = vunpack.c.l.b16 %v895
    %v2951 = vunpack.c.l.b16 %v896
    %v2952 = vunpack.c.l.b16 %v897
    %v2953 = vunpack.c.l.b16 %v898
    %v2954 = vunpack.c.l.b16 %v899
    %v2955 = vunpack.c.l.b16 %v900
    %v2956 = vunpack.c.l.b16 %v901
    %v2957 = vunpack.c.l.b16 %v902
    %v2958 = vunpack.c.l.b16 %v903
    %v2959 = vunpack.c.l.b16 %v904
    %v2960 = vunpack.c.l.b16 %v905
    %v2961 = vunpack.c.l.b16 %v906
    %v2962 = vunpack.c.l.b16 %v907
    %v2963 = vunpack.c.l.b16 %v908
    %v2964 = vunpack.c.l.b16 %v909
    %v2965 = vunpack.c.l.b16 %v910
    %v2966 = vunpack.c.l.b16 %v911
    %v2967 = vunpack.c.l.b16 %v912
    %v2968 = vunpack.c.l.b16 %v913
    %v2969 = vunpack.c.l.b16 %v914
    %v2970 = vunpack.c.l.b16 %v915
    %v2971 = vunpack.c.l.b16 %v916
    %v2972 = vunpack.c.l.b16 %v917
    %v2973 = vunpack.c.l.b16 %v918
    %v2974 = vunpack.c.l.b16 %v919
    %v2975 = vunpack.c.l.b16 %v920
    %v2976 = vunpack.c.l.b16 %v921
    %v2977 = vunpack.c.l.b16 %v922
    %v2978 = vunpack.c.l.b16 %v923
    %v2979 = vunpack.c.l.b16 %v924
    %v2980 = vunpack.c.l.b16 %v925
    %v2981 = vunpack.c.l.b16 %v926
    %v2982 = vunpack.c.l.b16 %v927
    %v2983 = vunpack.c.l.b16 %v928
    %v2984 = vunpack.c.l.b16 %v929
    %v2985 = vunpack.c.l.b16 %v930
    %v2986 = vunpack.c.l.b16 %v931
    %v2987 = vunpack.c.l.b16 %v932
    %v2988 = vunpack.c.l.b16 %v933
    %v2989 = vunpack.c.l.b16 %v934
    %v2990 = vunpack.c.l.b16 %v935
    %v2991 = vunpack.c.l.b16 %v936
    %v2992 = vunpack.c.l.b16 %v937
    %v2993 = vunpack.c.l.b16 %v938
    %v2994 = vunpack.c.l.b16 %v939
    %v2995 = vunpack.c.l.b16 %v940
    %v2996 = vunpack.c.l.b16 %v941
    %v2997 = vunpack.c.l.b16 %v942
    %v2998 = vunpack.c.l.b16 %v943
    %v2999 = vunpack.c.l.b16 %v944
    %v3000 = vunpack.c.l.b16 %v945
    %v3001 = vunpack.c.l.b16 %v946
    %v3002 = vunpack.c.l.b16 %v947
    %v3003 = vunpack.c.l.b16 %v948
    %v3004 = vunpack.c.l.b16 %v949
    %v3005 = vunpack.c.l.b16 %v950
    %v3006 = vunpack.c.l.b16 %v951
    %v3007 = vunpack.c.l.b16 %v952
    %v3008 = vunpack.c.l.b16 %v953
    %v3009 = vunpack.c.l.b16 %v954
    %v3010 = vunpack.c.l.b16 %v955
    %v3011 = vunpack.c.l.b16 %v956
    %v3012 = vunpack.c.l.b16 %v957
    %v3013 = vunpack.c.l.b16 %v958
    %v3014 = vunpack.c.l.b16 %v959
    %v3015 = vunpack.c.l.b16 %v960
    %v3016 = vunpack.c.l.b16 %v961
    %v3017 = vunpack.c.l.b16 %v962
    %v3018 = vunpack.c.l.b16 %v963
    %v3019 = vunpack.c.l.b16 %v964
    %v3020 = vunpack.c.l.b16 %v965
    %v3021 = vunpack.c.l.b16 %v966
    %v3022 = vunpack.c.l.b16 %v967
    %v3023 = vunpack.c.l.b16 %v968
    %v3024 = vunpack.c.l.b16 %v969
    %v3025 = vunpack.c.l.b16 %v970
    %v3026 = vunpack.c.l.b16 %v971
    %v3027 = vunpack.c.l.b16 %v972
    %v3028 = vunpack.c.l.b16 %v973
    %v3029 = vunpack.c.l.b16 %v974
    %v3030 = vunpack.c.l.b16 %v975
    %v3031 = vunpack.c.l.b16 %v976
    %v3032 = vunpack.c.l.b16 %v977
    %v3033 = vunpack.c.l.b16 %v978
    %v3034 = vunpack.c.l.b16 %v979
    %v3035 = vunpack.c.l.b16 %v980
    %v3036 = vunpack.c.l.b16 %v981
    %v3037 = vunpack.c.l.b16 %v982
    %v3038 = vunpack.c.l.b16 %v983
    %v3039 = vunpack.c.l.b16 %v984
    %v3040 = vunpack.c.l.b16 %v985
    %v3041 = vunpack.c.l.b16 %v986
    %v3042 = vunpack.c.l.b16 %v987
    %v3043 = vunpack.c.l.b16 %v988
    %v3044 = vunpack.c.l.b16 %v989
    %v3045 = vunpack.c.l.b16 %v990
    %v3046 = vunpack.c.l.b16 %v991
    %v3047 = vunpack.c.l.b16 %v992
    %v3048 = vunpack.c.l.b16 %v993
    %v3049 = vunpack.c.l.b16 %v994
    %v3050 = vunpack.c.l.b16 %v995
    %v3051 = vunpack.c.l.b16 %v996
    %v3052 = vunpack.c.l.b16 %v997
    %v3053 = vunpack.c.l.b16 %v998
    %v3054 = vunpack.c.l.b16 %v999
    %v3055 = vunpack.c.l.b16 %v1000
    %v3056 = vunpack.c.l.b16 %v1001
    %v3057 = vunpack.c.l.b16 %v1002
    %v3058 = vunpack.c.l.b16 %v1003
    %v3059 = vunpack.c.l.b16 %v1004
    %v3060 = vunpack.c.l.b16 %v1005
    %v3061 = vunpack.c.l.b16 %v1006
    %v3062 = vunpack.c.l.b16 %v1007
    %v3063 = vunpack.c.l.b16 %v1008
    %v3064 = vunpack.c.l.b16 %v1009
    %v3065 = vunpack.c.l.b16 %v1010
    %v3066 = vunpack.c.l.b16 %v1011
    %v3067 = vunpack.c.l.b16 %v1012
    %v3068 = vunpack.c.l.b16 %v1013
    %v3069 = vunpack.c.l.b16 %v1014
    %v3070 = vunpack.c.l.b16 %v1015
    %v3071 = vunpack.c.l.b16 %v1016
    %v3072 = vunpack.c.l.b16 %v1017
    %v3073 = vunpack.c.l.b16 %v1018
    %v3074 = vunpack.c.l.b16 %v1019
    %v3075 = vunpack.c.l.b16 %v1020
    %v3076 = vunpack.c.l.b16 %v1021
    %v3077 = vunpack.c.l.b16 %v1022
    %v3078 = vunpack.c.l.b16 %v1023
    %v3079 = vunpack.c.l.b16 %v1024
    %v3080 = vunpack.c.l.b16 %v1025
    %v3081 = vunpack.c.l.b16 %v1026
    %v3082 = vunpack.c.l.b16 %v1027
    %v3083 = vunpack.c.l.b16 %v1028
    %v3084 = vunpack.c.l.b16 %v1029
    %v3085 = vunpack.c.l.b16 %v1030
    %v3086 = vunpack.c.l.b16 %v1031
    %v3087 = vunpack.c.l.b16 %v1032
    %v3088 = vunpack.c.l.b16 %v1033
    %v3089 = vunpack.c.l.b16 %v1034
    %v3090 = vunpack.c.l.b16 %v1035
    %v3091 = vunpack.c.l.b16 %v1036
    %v3092 = vunpack.c.l.b16 %v1037
    %v3093 = vunpack.c.l.b16 %v1038
    %v3094 = vunpack.c.l.b16 %v1039
    %v3095 = vunpack.c.l.b16 %v1040
    %v3096 = vunpack.c.l.b16 %v1041
    %v3097 = vunpack.c.l.b16 %v1042
    %v3098 = vunpack.c.l.b16 %v1043
    %v3099 = vunpack.c.l.b16 %v1044
    %v3100 = vunpack.c.l.b16 %v1045
    %v3101 = vunpack.c.l.b16 %v1046
    %v3102 = vunpack.c.l.b16 %v1047
    %v3103 = vunpack.c.l.b16 %v1048
    %v3104 = vunpack.c.l.b16 %v1049
    %v3105 = vunpack.c.l.b16 %v1050
    %v3106 = vunpack.c.l.b16 %v1051
    %v3107 = vunpack.c.l.b16 %v1052
    %v3108 = vunpack.c.l.b16 %v1053
    %v3109 = vunpack.c.l.b16 %v1054
    %v3110 = vunpack.c.l.b16 %v1055
    %v3111 = vunpack.c.l.b16 %v1056
    %v3112 = vunpack.c.l.b16 %v1057
    %v3113 = vunpack.c.l.b16 %v1058
    %v3114 = vunpack.c.l.b16 %v1059
    %v3115 = vunpack.c.l.b16 %v1060
    %v3116 = vunpack.c.l.b16 %v1061
    %v3117 = vunpack.c.l.b16 %v1062
    %v3118 = vunpack.c.l.b16 %v1063
    %v3119 = vunpack.c.l.b16 %v1064
    %v3120 = vunpack.c.l.b16 %v1065
    %v3121 = vunpack.c.l.b16 %v1066
    %v3122 = vunpack.c.l.b16 %v1067
    %v3123 = vunpack.c.l.b16 %v1068
    %v3124 = vunpack.c.l.b16 %v1069
    %v3125 = vunpack.c.l.b16 %v1070
    %v3126 = vunpack.c.l.b16 %v1071
    %v3127 = vunpack.c.l.b16 %v1072
    %v3128 = vunpack.c.l.b16 %v1073
    %v3129 = vunpack.c.l.b16 %v1074
    %v3130 = vunpack.c.l.b16 %v1075
    %v3131 = vunpack.c.l.b16 %v1076
    %v3132 = vunpack.c.l.b16 %v1077
    %v3133 = vunpack.c.l.b16 %v1078
    %v3134 = vunpack.c.l.b16 %v1079
    %v3135 = vunpack.c.l.b16 %v1080
    %v3136 = vunpack.c.l.b16 %v1081
    %v3137 = vunpack.c.l.b16 %v1082
    %v3138 = vunpack.c.l.b16 %v1083
    %v3139 = vunpack.c.l.b16 %v1084
    %v3140 = vunpack.c.l.b16 %v1085
    %v3141 = vunpack.c.l.b16 %v1086
    %v3142 = vunpack.c.l.b16 %v1087
    %v3143 = vunpack.c.l.b16 %v1088
    %v3144 = vunpack.c.l.b16 %v1089
    %v3145 = vunpack.c.l.b16 %v1090
    %v3146 = vunpack.c.l.b16 %v1091
    %v3147 = vunpack.c.l.b16 %v1092
    %v3148 = vunpack.c.l.b16 %v1093
    %v3149 = vunpack.c.l.b16 %v1094
    %v3150 = vunpack.c.l.b16 %v1095
    %v3151 = vunpack.c.l.b16 %v1096
    %v3152 = vunpack.c.l.b16 %v1097
    %v3153 = vunpack.c.l.b16 %v1098
    %v3154 = vunpack.c.l.b16 %v1099
    %v3155 = vunpack.c.l.b16 %v1100
    %v3156 = vunpack.c.l.b16 %v1101
    %v3157 = vunpack.c.l.b16 %v1102
    %v3158 = vunpack.c.l.b16 %v1103
    %v3159 = vunpack.c.l.b16 %v1104
    %v3160 = vunpack.c.l.b16 %v1105
    %v3161 = vunpack.c.l.b16 %v1106
    %v3162 = vunpack.c.l.b16 %v1107
    %v3163 = vunpack.c.l.b16 %v1108
    %v3164 = vunpack.c.l.b16 %v1109
    %v3165 = vunpack.c.l.b16 %v1110
    %v3166 = vunpack.c.l.b16 %v1111
    %v3167 = vunpack.c.l.b16 %v1112
    %v3168 = vunpack.c.l.b16 %v1113
    %v3169 = vunpack.c.l.b16 %v1114
    %v3170 = vunpack.c.l.b16 %v1115
    %v3171 = vunpack.c.l.b16 %v1116
    %v3172 = vunpack.c.l.b16 %v1117
    %v3173 = vunpack.c.l.b16 %v1118
    %v3174 = vunpack.c.l.b16 %v1119
    %v3175 = vunpack.c.l.b16 %v1120
    %v3176 = vunpack.c.l.b16 %v1121
    %v3177 = vunpack.c.l.b16 %v1122
    %v3178 = vunpack.c.l.b16 %v1123
    %v3179 = vunpack.c.l.b16 %v1124
    %v3180 = vunpack.c.l.b16 %v1125
    %v3181 = vunpack.c.l.b16 %v1126
    %v3182 = vunpack.c.l.b16 %v1127
    %v3183 = vunpack.c.l.b16 %v1128
    %v3184 = vunpack.c.l.b16 %v1129
    %v3185 = vunpack.c.l.b16 %v1130
    %v3186 = vunpack.c.l.b16 %v1131
    %v3187 = vunpack.c.l.b16 %v1132
    %v3188 = vunpack.c.l.b16 %v1133
    %v3189 = vunpack.c.l.b16 %v1134
    %v3190 = vunpack.c.l.b16 %v1135
    %v3191 = vunpack.c.l.b16 %v1136
    %v3192 = vunpack.c.l.b16 %v1137
    %v3193 = vunpack.c.l.b16 %v1138
    %v3194 = vunpack.c.l.b16 %v1139
    %v3195 = vunpack.c.l.b16 %v1140
    %v3196 = vunpack.c.l.b16 %v1141
    %v3197 = vunpack.c.l.b16 %v1142
    %v3198 = vunpack.c.l.b16 %v1143
    %v3199 = vunpack.c.l.b16 %v1144
    %v3200 = vunpack.c.l.b16 %v1145
    %v3201 = vunpack.c.l.b16 %v1146
    %v3202 = vunpack.c.l.b16 %v1147
    %v3203 = vunpack.c.l.b16 %v1148
    %v3204 = vunpack.c.l.b16 %v1149
    %v3205 = vunpack.c.l.b16 %v1150
    %v3206 = vunpack.c.l.b16 %v1151
    %v3207 = vunpack.c.l.b16 %v1152
    %v3208 = vunpack.c.l.b16 %v1153
    %v3209 = vunpack.c.l.b16 %v1154
    %v3210 = vunpack.c.l.b16 %v1155
    %v3211 = vunpack.c.l.b16 %v1156
    %v3212 = vunpack.c.l.b16 %v1157
    %v3213 = vunpack.c.l.b16 %v1158
    %v3214 = vunpack.c.l.b16 %v1159
    %v3215 = vunpack.c.l.b16 %v1160
    %v3216 = vunpack.c.l.b16 %v1161
    %v3217 = vunpack.c.l.b16 %v1162
    %v3218 = vunpack.c.l.b16 %v1163
    %v3219 = vunpack.c.l.b16 %v1164
    %v3220 = vunpack.c.l.b16 %v1165
    %v3221 = vunpack.c.l.b16 %v1166
    %v3222 = vunpack.c.l.b16 %v1167
    %v3223 = vunpack.c.l.b16 %v1168
    %v3224 = vunpack.c.l.b16 %v1169
    %v3225 = vunpack.c.l.b16 %v1170
    %v3226 = vunpack.c.l.b16 %v1171
    %v3227 = vunpack.c.l.b16 %v1172
    %v3228 = vunpack.c.l.b16 %v1173
    %v3229 = vunpack.c.l.b16 %v1174
    %v3230 = vunpack.c.l.b16 %v1175
    %v3231 = vunpack.c.l.b16 %v1176
    %v3232 = vunpack.c.l.b16 %v1177
    %v3233 = vunpack.c.l.b16 %v1178
    %v3234 = vunpack.c.l.b16 %v1179
    %v3235 = vunpack.c.l.b16 %v1180
    %v3236 = vunpack.c.l.b16 %v1181
    %v3237 = vunpack.c.l.b16 %v1182
    %v3238 = vunpack.c.l.b16 %v1183
    %v3239 = vunpack.c.l.b16 %v1184
    %v3240 = vunpack.c.l.b16 %v1185
    %v3241 = vunpack.c.l.b16 %v1186
    %v3242 = vunpack.c.l.b16 %v1187
    %v3243 = vunpack.c.l.b16 %v1188
    %v3244 = vunpack.c.l.b16 %v1189
    %v3245 = vunpack.c.l.b16 %v1190
    %v3246 = vunpack.c.l.b16 %v1191
    %v3247 = vunpack.c.l.b16 %v1192
    %v3248 = vunpack.c.l.b16 %v1193
    %v3249 = vunpack.c.l.b16 %v1194
    %v3250 = vunpack.c.l.b16 %v1195
    %v3251 = vunpack.c.l.b16 %v1196
    %v3252 = vunpack.c.l.b16 %v1197
    %v3253 = vunpack.c.l.b16 %v1198
    %v3254 = vunpack.c.l.b16 %v1199
    %v3255 = vunpack.c.l.b16 %v1200
    %v3256 = vunpack.c.l.b16 %v1201
    %v3257 = vunpack.c.l.b16 %v1202
    %v3258 = vunpack.c.l.b16 %v1203
    %v3259 = vunpack.c.l.b16 %v1204
    %v3260 = vunpack.c.l.b16 %v1205
    %v3261 = vunpack.c.l.b16 %v1206
    %v3262 = vunpack.c.l.b16 %v1207
    %v3263 = vunpack.c.l.b16 %v1208
    %v3264 = vunpack.c.l.b16 %v1209
    %v3265 = vunpack.c.l.b16 %v1210
    %v3266 = vunpack.c.l.b16 %v1211
    %v3267 = vunpack.c.l.b16 %v1212
    %v3268 = vunpack.c.l.b16 %v1213
    %v3269 = vunpack.c.l.b16 %v1214
    %v3270 = vunpack.c.l.b16 %v1215
    %v3271 = vunpack.c.l.b16 %v1216
    %v3272 = vunpack.c.l.b16 %v1217
    %v3273 = vunpack.c.l.b16 %v1218
    %v3274 = vunpack.c.l.b16 %v1219
    %v3275 = vunpack.c.l.b16 %v1220
    %v3276 = vunpack.c.l.b16 %v1221
    %v3277 = vunpack.c.l.b16 %v1222
    %v3278 = vunpack.c.l.b16 %v1223
    %v3279 = vunpack.c.l.b16 %v1224
    %v3280 = vunpack.c.l.b16 %v1225
    %v3281 = vunpack.c.l.b16 %v1226
    %v3282 = vunpack.c.l.b16 %v1227
    %v3283 = vunpack.c.l.b16 %v1228
    %v3284 = vunpack.c.l.b16 %v1229
    %v3285 = vunpack.c.l.b16 %v1230
    %v3286 = vunpack.c.l.b16 %v1231
    %v3287 = vunpack.c.l.b16 %v1232
    %v3288 = vunpack.c.l.b16 %v1233
    %v3289 = vunpack.c.l.b16 %v1234
    %v3290 = vunpack.c.l.b16 %v1235
    %v3291 = vunpack.c.l.b16 %v1236
    %v3292 = vunpack.c.l.b16 %v1237
    %v3293 = vunpack.c.l.b16 %v1238
    %v3294 = vunpack.c.l.b16 %v1239
    %v3295 = vunpack.c.l.b16 %v1240
    %v3296 = vunpack.c.l.b16 %v1241
    %v3297 = vunpack.c.l.b16 %v1242
    %v3298 = vunpack.c.l.b16 %v1243
    %v3299 = vunpack.c.l.b16 %v1244
    %v3300 = vunpack.c.l.b16 %v1245
    %v3301 = vunpack.c.l.b16 %v1246
    %v3302 = vunpack.c.l.b16 %v1247
    %v3303 = vunpack.c.l.b16 %v1248
    %v3304 = vunpack.c.l.b16 %v1249
    %v3305 = vunpack.c.l.b16 %v1250
    %v3306 = vunpack.c.l.b16 %v1251
    %v3307 = vunpack.c.l.b16 %v1252
    %v3308 = vunpack.c.l.b16 %v1253
    %v3309 = vunpack.c.l.b16 %v1254
    %v3310 = vunpack.c.l.b16 %v1255
    %v3311 = vunpack.c.l.b16 %v1256
    %v3312 = vunpack.c.l.b16 %v1257
    %v3313 = vunpack.c.l.b16 %v1258
    %v3314 = vunpack.c.l.b16 %v1259
    %v3315 = vunpack.c.l.b16 %v1260
    %v3316 = vunpack.c.l.b16 %v1261
    %v3317 = vunpack.c.l.b16 %v1262
    %v3318 = vunpack.c.l.b16 %v1263
    %v3319 = vunpack.c.l.b16 %v1264
    %v3320 = vunpack.c.l.b16 %v1265
    %v3321 = vunpack.c.l.b16 %v1266
    %v3322 = vunpack.c.l.b16 %v1267
    %v3323 = vunpack.c.l.b16 %v1268
    %v3324 = vunpack.c.l.b16 %v1269
    %v3325 = vunpack.c.l.b16 %v1270
    %v3326 = vunpack.c.l.b16 %v1271
    %v3327 = vunpack.c.l.b16 %v1272
    %v3328 = vunpack.c.l.b16 %v1273
    %v3329 = vunpack.c.l.b16 %v1274
    %v3330 = vunpack.c.l.b16 %v1275
    %v3331 = vunpack.c.l.b16 %v1276
    %v3332 = vunpack.c.l.b16 %v1277
    %v3333 = vunpack.c.l.b16 %v1278
    %v3334 = vunpack.c.l.b16 %v1279
    %v3335 = vunpack.c.l.b16 %v1280
    %v3336 = vunpack.c.l.b16 %v1281
    %v3337 = vunpack.c.l.b16 %v1282
    %v3338 = vunpack.c.l.b16 %v1283
    %v3339 = vunpack.c.l.b16 %v1284
    %v3340 = vunpack.c.l.b16 %v1285
    %v3341 = vunpack.c.l.b16 %v1286
    %v3342 = vunpack.c.l.b16 %v1287
    %v3343 = vunpack.c.l.b16 %v1288
    %v3344 = vunpack.c.l.b16 %v1289
    %v3345 = vunpack.c.l.b16 %v1290
    %v3346 = vunpack.c.l.b16 %v1291
    %v3347 = vunpack.c.l.b16 %v1292
    %v3348 = vunpack.c.l.b16 %v1293
    %v3349 = vunpack.c.l.b16 %v1294
    %v3350 = vunpack.c.l.b16 %v1295
    %v3351 = vunpack.c.l.b16 %v1296
    %v3352 = vunpack.c.l.b16 %v1297
    %v3353 = vunpack.c.l.b16 %v1298
    %v3354 = vunpack.c.l.b16 %v1299
    %v3355 = vunpack.c.l.b16 %v1300
    %v3356 = vunpack.c.l.b16 %v1301
    %v3357 = vunpack.c.l.b16 %v1302
    %v3358 = vunpack.c.l.b16 %v1303
    %v3359 = vunpack.c.l.b16 %v1304
    %v3360 = vunpack.c.l.b16 %v1305
    %v3361 = vunpack.c.l.b16 %v1306
    %v3362 = vunpack.c.l.b16 %v1307
    %v3363 = vunpack.c.l.b16 %v1308
    %v3364 = vunpack.c.l.b16 %v1309
    %v3365 = vunpack.c.l.b16 %v1310
    %v3366 = vunpack.c.l.b16 %v1311
    %v3367 = vunpack.c.l.b16 %v1312
    %v3368 = vunpack.c.l.b16 %v1313
    %v3369 = vunpack.c.l.b16 %v1314
    %v3370 = vunpack.c.l.b16 %v1315
    %v3371 = vunpack.c.l.b16 %v1316
    %v3372 = vunpack.c.l.b16 %v1317
    %v3373 = vunpack.c.l.b16 %v1318
    %v3374 = vunpack.c.l.b16 %v1319
    %v3375 = vunpack.c.l.b16 %v1320
    %v3376 = vunpack.c.l.b16 %v1321
    %v3377 = vunpack.c.l.b16 %v1322
    %v3378 = vunpack.c.l.b16 %v1323
    %v3379 = vunpack.c.l.b16 %v1324
    %v3380 = vunpack.c.l.b16 %v1325
    %v3381 = vunpack.c.l.b16 %v1326
    %v3382 = vunpack.c.l.b16 %v1327
    %v3383 = vunpack.c.l.b16 %v1328
    %v3384 = vunpack.c.l.b16 %v1329
    %v3385 = vunpack.c.l.b16 %v1330
    %v3386 = vunpack.c.l.b16 %v1331
    %v3387 = vunpack.c.l.b16 %v1332
    %v3388 = vunpack.c.l.b16 %v1333
    %v3389 = vunpack.c.l.b16 %v1334
    %v3390 = vunpack.c.l.b16 %v1335
    %v3391 = vunpack.c.l.b16 %v1336
    %v3392 = vunpack.c.l.b16 %v1337
    %v3393 = vunpack.c.l.b16 %v1338
    %v3394 = vunpack.c.l.b16 %v1339
    %v3395 = vunpack.c.l.b16 %v1340
    %v3396 = vunpack.c.l.b16 %v1341
    %v3397 = vunpack.c.l.b16 %v1342
    %v3398 = vunpack.c.l.b16 %v1343
    %v3399 = vunpack.c.l.b16 %v1344
    %v3400 = vunpack.c.l.b16 %v1345
    %v3401 = vunpack.c.l.b16 %v1346
    %v3402 = vunpack.c.l.b16 %v1347
    %v3403 = vunpack.c.l.b16 %v1348
    %v3404 = vunpack.c.l.b16 %v1349
    %v3405 = vunpack.c.l.b16 %v1350
    %v3406 = vunpack.c.l.b16 %v1351
    %v3407 = vunpack.c.l.b16 %v1352
    %v3408 = vunpack.c.l.b16 %v1353
    %v3409 = vunpack.c.l.b16 %v1354
    %v3410 = vunpack.c.l.b16 %v1355
    %v3411 = vunpack.c.l.b16 %v1356
    %v3412 = vunpack.c.l.b16 %v1357
    %v3413 = vunpack.c.l.b16 %v1358
    %v3414 = vunpack.c.l.b16 %v1359
    %v3415 = vunpack.c.l.b16 %v1360
    %v3416 = vunpack.c.l.b16 %v1361
    %v3417 = vunpack.c.l.b16 %v1362
    %v3418 = vunpack.c.l.b16 %v1363
    %v3419 = vunpack.c.l.b16 %v1364
    %v3420 = vunpack.c.l.b16 %v1365
    %v3421 = vunpack.c.l.b16 %v1366
    %v3422 = vunpack.c.l.b16 %v1367
    %v3423 = vunpack.c.l.b16 %v1368
    %v3424 = vunpack.c.l.b16 %v1369
    %v3425 = vunpack.c.l.b16 %v1370
    %v3426 = vunpack.c.l.b16 %v1371
    %v3427 = vunpack.c.l.b16 %v1372
    %v3428 = vunpack.c.l.b16 %v1373
    %v3429 = vunpack.c.l.b16 %v1374
    %v3430 = vunpack.c.l.b16 %v1375
    %v3431 = vunpack.c.l.b16 %v1376
    %v3432 = vunpack.c.l.b16 %v1377
    %v3433 = vunpack.c.l.b16 %v1378
    %v3434 = vunpack.c.l.b16 %v1379
    %v3435 = vunpack.c.l.b16 %v1380
    %v3436 = vunpack.c.l.b16 %v1381
    %v3437 = vunpack.c.l.b16 %v1382
    %v3438 = vunpack.c.l.b16 %v1383
    %v3439 = vunpack.c.l.b16 %v1384
    %v3440 = vunpack.c.l.b16 %v1385
    %v3441 = vunpack.c.l.b16 %v1386
    %v3442 = vunpack.c.l.b16 %v1387
    %v3443 = vunpack.c.l.b16 %v1388
    %v3444 = vunpack.c.l.b16 %v1389
    %v3445 = vunpack.c.l.b16 %v1390
    %v3446 = vunpack.c.l.b16 %v1391
    %v3447 = vunpack.c.l.b16 %v1392
    %v3448 = vunpack.c.l.b16 %v1393
    %v3449 = vunpack.c.l.b16 %v1394
    %v3450 = vunpack.c.l.b16 %v1395
    %v3451 = vunpack.c.l.b16 %v1396
    %v3452 = vunpack.c.l.b16 %v1397
    %v3453 = vunpack.c.l.b16 %v1398
    %v3454 = vunpack.c.l.b16 %v1399
    %v3455 = vunpack.c.l.b16 %v1400
    %v3456 = vunpack.c.l.b16 %v1401
    %v3457 = vunpack.c.l.b16 %v1402
    %v3458 = vunpack.c.l.b16 %v1403
    %v3459 = vunpack.c.l.b16 %v1404
    %v3460 = vunpack.c.l.b16 %v1405
    %v3461 = vunpack.c.l.b16 %v1406
    %v3462 = vunpack.c.l.b16 %v1407
    %v3463 = vunpack.c.l.b16 %v1408
    %v3464 = vunpack.c.l.b16 %v1409
    %v3465 = vunpack.c.l.b16 %v1410
    %v3466 = vunpack.c.l.b16 %v1411
    %v3467 = vunpack.c.l.b16 %v1412
    %v3468 = vunpack.c.l.b16 %v1413
    %v3469 = vunpack.c.l.b16 %v1414
    %v3470 = vunpack.c.l.b16 %v1415
    %v3471 = vunpack.c.l.b16 %v1416
    %v3472 = vunpack.c.l.b16 %v1417
    %v3473 = vunpack.c.l.b16 %v1418
    %v3474 = vunpack.c.l.b16 %v1419
    %v3475 = vunpack.c.l.b16 %v1420
    %v3476 = vunpack.c.l.b16 %v1421
    %v3477 = vunpack.c.l.b16 %v1422
    %v3478 = vunpack.c.l.b16 %v1423
    %v3479 = vunpack.c.l.b16 %v1424
    %v3480 = vunpack.c.l.b16 %v1425
    %v3481 = vunpack.c.l.b16 %v1426
    %v3482 = vunpack.c.l.b16 %v1427
    %v3483 = vunpack.c.l.b16 %v1428
    %v3484 = vunpack.c.l.b16 %v1429
    %v3485 = vunpack.c.l.b16 %v1430
    %v3486 = vunpack.c.l.b16 %v1431
    %v3487 = vunpack.c.l.b16 %v1432
    %v3488 = vunpack.c.l.b16 %v1433
    %v3489 = vunpack.c.l.b16 %v1434
    %v3490 = vunpack.c.l.b16 %v1435
    %v3491 = vunpack.c.l.b16 %v1436
    %v3492 = vunpack.c.l.b16 %v1437
    %v3493 = vunpack.c.l.b16 %v1438
    %v3494 = vunpack.c.l.b16 %v1439
    %v3495 = vunpack.c.l.b16 %v1440
    %v3496 = vunpack.c.l.b16 %v1441
    %v3497 = vunpack.c.l.b16 %v1442
    %v3498 = vunpack.c.l.b16 %v1443
    %v3499 = vunpack.c.l.b16 %v1444
    %v3500 = vunpack.c.l.b16 %v1445
    %v3501 = vunpack.c.l.b16 %v1446
    %v3502 = vunpack.c.l.b16 %v1447
    %v3503 = vunpack.c.l.b16 %v1448
    %v3504 = vunpack.c.l.b16 %v1449
    %v3505 = vunpack.c.l.b16 %v1450
    %v3506 = vunpack.c.l.b16 %v1451
    %v3507 = vunpack.c.l.b16 %v1452
    %v3508 = vunpack.c.l.b16 %v1453
    %v3509 = vunpack.c.l.b16 %v1454
    %v3510 = vunpack.c.l.b16 %v1455
    %v3511 = vunpack.c.l.b16 %v1456
    %v3512 = vunpack.c.l.b16 %v1457
    %v3513 = vunpack.c.l.b16 %v1458
    %v3514 = vunpack.c.l.b16 %v1459
    %v3515 = vunpack.c.l.b16 %v1460
    %v3516 = vunpack.c.l.b16 %v1461
    %v3517 = vunpack.c.l.b16 %v1462
    %v3518 = vunpack.c.l.b16 %v1463
    %v3519 = vunpack.c.l.b16 %v1464
    %v3520 = vunpack.c.l.b16 %v1465
    %v3521 = vunpack.c.l.b16 %v1466
    %v3522 = vunpack.c.l.b16 %v1467
    %v3523 = vunpack.c.l.b16 %v1468
    %v3524 = vunpack.c.l.b16 %v1469
    %v3525 = vunpack.c.l.b16 %v1470
    %v3526 = vunpack.c.l.b16 %v1471
    %v3527 = vpack.c.b16 %v2504, %v2503
    %v3528 = vpack.c.b16 %v2506, %v2505
    %v3529 = vpack.c.b16 %v2508, %v2507
    %v3530 = vpack.c.b16 %v2510, %v2509
    %v3531 = vpack.c.b16 %v2512, %v2511
    %v3532 = vpack.c.b16 %v2514, %v2513
    %v3533 = vpack.c.b16 %v2516, %v2515
    %v3534 = vpack.c.b16 %v2518, %v2517
    %v3535 = vpack.c.b16 %v2520, %v2519
    %v3536 = vpack.c.b16 %v2522, %v2521
    %v3537 = vpack.c.b16 %v2524, %v2523
    %v3538 = vpack.c.b16 %v2526, %v2525
    %v3539 = vpack.c.b16 %v2528, %v2527
    %v3540 = vpack.c.b16 %v2530, %v2529
    %v3541 = vpack.c.b16 %v2532, %v2531
    %v3542 = vpack.c.b16 %v2534, %v2533
    %v3543 = vpack.c.b16 %v2536, %v2535
    %v3544 = vpack.c.b16 %v2538, %v2537
    %v3545 = vpack.c.b16 %v2540, %v2539
    %v3546 = vpack.c.b16 %v2542, %v2541
    %v3547 = vpack.c.b16 %v2544, %v2543
    %v3548 = vpack.c.b16 %v2546, %v2545
    %v3549 = vpack.c.b16 %v2548, %v2547
    %v3550 = vpack.c.b16 %v2550, %v2549
    %v3551 = vpack.c.b16 %v2552, %v2551
    %v3552 = vpack.c.b16 %v2554, %v2553
    %v3553 = vpack.c.b16 %v2556, %v2555
    %v3554 = vpack.c.b16 %v2558, %v2557
    %v3555 = vpack.c.b16 %v2560, %v2559
    %v3556 = vpack.c.b16 %v2562, %v2561
    %v3557 = vpack.c.b16 %v2564, %v2563
    %v3558 = vpack.c.b16 %v2566, %v2565
    %v3559 = vpack.c.b16 %v2568, %v2567
    %v3560 = vpack.c.b16 %v2570, %v2569
    %v3561 = vpack.c.b16 %v2572, %v2571
    %v3562 = vpack.c.b16 %v2574, %v2573
    %v3563 = vpack.c.b16 %v2576, %v2575
    %v3564 = vpack.c.b16 %v2578, %v2577
    %v3565 = vpack.c.b16 %v2580, %v2579
    %v3566 = vpack.c.b16 %v2582, %v2581
    %v3567 = vpack.c.b16 %v2584, %v2583
    %v3568 = vpack.c.b16 %v2586, %v2585
    %v3569 = vpack.c.b16 %v2588, %v2587
    %v3570 = vpack.c.b16 %v2590, %v2589
    %v3571 = vpack.c.b16 %v2592, %v2591
    %v3572 = vpack.c.b16 %v2594, %v2593
    %v3573 = vpack.c.b16 %v2596, %v2595
    %v3574 = vpack.c.b16 %v2598, %v2597
    %v3575 = vpack.c.b16 %v2600, %v2599
    %v3576 = vpack.c.b16 %v2602, %v2601
    %v3577 = vpack.c.b16 %v2604, %v2603
    %v3578 = vpack.c.b16 %v2606, %v2605
    %v3579 = vpack.c.b16 %v2608, %v2607
    %v3580 = vpack.c.b16 %v2610, %v2609
    %v3581 = vpack.c.b16 %v2612, %v2611
    %v3582 = vpack.c.b16 %v2614, %v2613
    %v3583 = vpack.c.b16 %v2616, %v2615
    %v3584 = vpack.c.b16 %v2618, %v2617
    %v3585 = vpack.c.b16 %v2620, %v2619
    %v3586 = vpack.c.b16 %v2622, %v2621
    %v3587 = vpack.c.b16 %v2624, %v2623
    %v3588 = vpack.c.b16 %v2626, %v2625
    %v3589 = vpack.c.b16 %v2628, %v2627
    %v3590 = vpack.c.b16 %v2630, %v2629
    %v3591 = vpack.c.b16 %v2632, %v2631
    %v3592 = vpack.c.b16 %v2634, %v2633
    %v3593 = vpack.c.b16 %v2636, %v2635
    %v3594 = vpack.c.b16 %v2638, %v2637
    %v3595 = vpack.c.b16 %v2640, %v2639
    %v3596 = vpack.c.b16 %v2642, %v2641
    %v3597 = vpack.c.b16 %v2644, %v2643
    %v3598 = vpack.c.b16 %v2646, %v2645
    %v3599 = vpack.c.b16 %v2648, %v2647
    %v3600 = vpack.c.b16 %v2650, %v2649
    %v3601 = vpack.c.b16 %v2652, %v2651
    %v3602 = vpack.c.b16 %v2654, %v2653
    %v3603 = vpack.c.b16 %v2656, %v2655
    %v3604 = vpack.c.b16 %v2658, %v2657
    %v3605 = vpack.c.b16 %v2660, %v2659
    %v3606 = vpack.c.b16 %v2662, %v2661
    %v3607 = vpack.c.b16 %v2664, %v2663
    %v3608 = vpack.c.b16 %v2666, %v2665
    %v3609 = vpack.c.b16 %v2668, %v2667
    %v3610 = vpack.c.b16 %v2670, %v2669
    %v3611 = vpack.c.b16 %v2672, %v2671
    %v3612 = vpack.c.b16 %v2674, %v2673
    %v3613 = vpack.c.b16 %v2676, %v2675
    %v3614 = vpack.c.b16 %v2678, %v2677
    %v3615 = vpack.c.b16 %v2680, %v2679
    %v3616 = vpack.c.b16 %v2682, %v2681
    %v3617 = vpack.c.b16 %v2684, %v2683
    %v3618 = vpack.c.b16 %v2686, %v2685
    %v3619 = vpack.c.b16 %v2688, %v2687
    %v3620 = vpack.c.b16 %v2690, %v2689
    %v3621 = vpack.c.b16 %v2692, %v2691
    %v3622 = vpack.c.b16 %v2694, %v2693
    %v3623 = vpack.c.b16 %v2696, %v2695
    %v3624 = vpack.c.b16 %v2698, %v2697
    %v3625 = vpack.c.b16 %v2700, %v2699
    %v3626 = vpack.c.b16 %v2702, %v2701
    %v3627 = vpack.c.b16 %v2704, %v2703
    %v3628 = vpack.c.b16 %v2706, %v2705
    %v3629 = vpack.c.b16 %v2708, %v2707
    %v3630 = vpack.c.b16 %v2710, %v2709
    %v3631 = vpack.c.b16 %v2712, %v2711
    %v3632 = vpack.c.b16 %v2714, %v2713
    %v3633 = vpack.c.b16 %v2716, %v2715
    %v3634 = vpack.c.b16 %v2718, %v2717
    %v3635 = vpack.c.b16 %v2720, %v2719
    %v3636 = vpack.c.b16 %v2722, %v2721
    %v3637 = vpack.c.b16 %v2724, %v2723
    %v3638 = vpack.c.b16 %v2726, %v2725
    %v3639 = vpack.c.b16 %v2728, %v2727
    %v3640 = vpack.c.b16 %v2730, %v2729
    %v3641 = vpack.c.b16 %v2732, %v2731
    %v3642 = vpack.c.b16 %v2734, %v2733
    %v3643 = vpack.c.b16 %v2736, %v2735
    %v3644 = vpack.c.b16 %v2738, %v2737
    %v3645 = vpack.c.b16 %v2740, %v2739
    %v3646 = vpack.c.b16 %v2742, %v2741
    %v3647 = vpack.c.b16 %v2744, %v2743
    %v3648 = vpack.c.b16 %v2746, %v2745
    %v3649 = vpack.c.b16 %v2748, %v2747
    %v3650 = vpack.c.b16 %v2750, %v2749
    %v3651 = vpack.c.b16 %v2752, %v2751
    %v3652 = vpack.c.b16 %v2754, %v2753
    %v3653 = vpack.c.b16 %v2756, %v2755
    %v3654 = vpack.c.b16 %v2758, %v2757
    %v3655 = vpack.c.b16 %v2760, %v2759
    %v3656 = vpack.c.b16 %v2762, %v2761
    %v3657 = vpack.c.b16 %v2764, %v2763
    %v3658 = vpack.c.b16 %v2766, %v2765
    %v3659 = vpack.c.b16 %v2768, %v2767
    %v3660 = vpack.c.b16 %v2770, %v2769
    %v3661 = vpack.c.b16 %v2772, %v2771
    %v3662 = vpack.c.b16 %v2774, %v2773
    %v3663 = vpack.c.b16 %v2776, %v2775
    %v3664 = vpack.c.b16 %v2778, %v2777
    %v3665 = vpack.c.b16 %v2780, %v2779
    %v3666 = vpack.c.b16 %v2782, %v2781
    %v3667 = vpack.c.b16 %v2784, %v2783
    %v3668 = vpack.c.b16 %v2786, %v2785
    %v3669 = vpack.c.b16 %v2788, %v2787
    %v3670 = vpack.c.b16 %v2790, %v2789
    %v3671 = vpack.c.b16 %v2792, %v2791
    %v3672 = vpack.c.b16 %v2794, %v2793
    %v3673 = vpack.c.b16 %v2796, %v2795
    %v3674 = vpack.c.b16 %v2798, %v2797
    %v3675 = vpack.c.b16 %v2800, %v2799
    %v3676 = vpack.c.b16 %v2802, %v2801
    %v3677 = vpack.c.b16 %v2804, %v2803
    %v3678 = vpack.c.b16 %v2806, %v2805
    %v3679 = vpack.c.b16 %v2808, %v2807
    %v3680 = vpack.c.b16 %v2810, %v2809
    %v3681 = vpack.c.b16 %v2812, %v2811
    %v3682 = vpack.c.b16 %v2814, %v2813
    %v3683 = vpack.c.b16 %v2816, %v2815
    %v3684 = vpack.c.b16 %v2818, %v2817
    %v3685 = vpack.c.b16 %v2820, %v2819
    %v3686 = vpack.c.b16 %v2822, %v2821
    %v3687 = vpack.c.b16 %v2824, %v2823
    %v3688 = vpack.c.b16 %v2826, %v2825
    %v3689 = vpack.c.b16 %v2828, %v2827
    %v3690 = vpack.c.b16 %v2830, %v2829
    %v3691 = vpack.c.b16 %v2832, %v2831
    %v3692 = vpack.c.b16 %v2834, %v2833
    %v3693 = vpack.c.b16 %v2836, %v2835
    %v3694 = vpack.c.b16 %v2838, %v2837
    %v3695 = vpack.c.b16 %v2840, %v2839
    %v3696 = vpack.c.b16 %v2842, %v2841
    %v3697 = vpack.c.b16 %v2844, %v2843
    %v3698 = vpack.c.b16 %v2846, %v2845
    %v3699 = vpack.c.b16 %v2848, %v2847
    %v3700 = vpack.c.b16 %v2850, %v2849
    %v3701 = vpack.c.b16 %v2852, %v2851
    %v3702 = vpack.c.b16 %v2854, %v2853
    %v3703 = vpack.c.b16 %v2856, %v2855
    %v3704 = vpack.c.b16 %v2858, %v2857
    %v3705 = vpack.c.b16 %v2860, %v2859
    %v3706 = vpack.c.b16 %v2862, %v2861
    %v3707 = vpack.c.b16 %v2864, %v2863
    %v3708 = vpack.c.b16 %v2866, %v2865
    %v3709 = vpack.c.b16 %v2868, %v2867
    %v3710 = vpack.c.b16 %v2870, %v2869
    %v3711 = vpack.c.b16 %v2872, %v2871
    %v3712 = vpack.c.b16 %v2874, %v2873
    %v3713 = vpack.c.b16 %v2876, %v2875
    %v3714 = vpack.c.b16 %v2878, %v2877
    %v3715 = vpack.c.b16 %v2880, %v2879
    %v3716 = vpack.c.b16 %v2882, %v2881
    %v3717 = vpack.c.b16 %v2884, %v2883
    %v3718 = vpack.c.b16 %v2886, %v2885
    %v3719 = vpack.c.b16 %v2888, %v2887
    %v3720 = vpack.c.b16 %v2890, %v2889
    %v3721 = vpack.c.b16 %v2892, %v2891
    %v3722 = vpack.c.b16 %v2894, %v2893
    %v3723 = vpack.c.b16 %v2896, %v2895
    %v3724 = vpack.c.b16 %v2898, %v2897
    %v3725 = vpack.c.b16 %v2900, %v2899
    %v3726 = vpack.c.b16 %v2902, %v2901
    %v3727 = vpack.c.b16 %v2904, %v2903
    %v3728 = vpack.c.b16 %v2906, %v2905
    %v3729 = vpack.c.b16 %v2908, %v2907
    %v3730 = vpack.c.b16 %v2910, %v2909
    %v3731 = vpack.c.b16 %v2912, %v2911
    %v3732 = vpack.c.b16 %v2914, %v2913
    %v3733 = vpack.c.b16 %v2916, %v2915
    %v3734 = vpack.c.b16 %v2918, %v2917
    %v3735 = vpack.c.b16 %v2920, %v2919
    %v3736 = vpack.c.b16 %v2922, %v2921
    %v3737 = vpack.c.b16 %v2924, %v2923
    %v3738 = vpack.c.b16 %v2926, %v2925
    %v3739 = vpack.c.b16 %v2928, %v2927
    %v3740 = vpack.c.b16 %v2930, %v2929
    %v3741 = vpack.c.b16 %v2932, %v2931
    %v3742 = vpack.c.b16 %v2934, %v2933
    %v3743 = vpack.c.b16 %v2936, %v2935
    %v3744 = vpack.c.b16 %v2938, %v2937
    %v3745 = vpack.c.b16 %v2940, %v2939
    %v3746 = vpack.c.b16 %v2942, %v2941
    %v3747 = vpack.c.b16 %v2944, %v2943
    %v3748 = vpack.c.b16 %v2946, %v2945
    %v3749 = vpack.c.b16 %v2948, %v2947
    %v3750 = vpack.c.b16 %v2950, %v2949
    %v3751 = vpack.c.b16 %v2952, %v2951
    %v3752 = vpack.c.b16 %v2954, %v2953
    %v3753 = vpack.c.b16 %v2956, %v2955
    %v3754 = vpack.c.b16 %v2958, %v2957
    %v3755 = vpack.c.b16 %v2960, %v2959
    %v3756 = vpack.c.b16 %v2962, %v2961
    %v3757 = vpack.c.b16 %v2964, %v2963
    %v3758 = vpack.c.b16 %v2966, %v2965
    %v3759 = vpack.c.b16 %v2968, %v2967
    %v3760 = vpack.c.b16 %v2970, %v2969
    %v3761 = vpack.c.b16 %v2972, %v2971
    %v3762 = vpack.c.b16 %v2974, %v2973
    %v3763 = vpack.c.b16 %v2976, %v2975
    %v3764 = vpack.c.b16 %v2978, %v2977
    %v3765 = vpack.c.b16 %v2980, %v2979
    %v3766 = vpack.c.b16 %v2982, %v2981
    %v3767 = vpack.c.b16 %v2984, %v2983
    %v3768 = vpack.c.b16 %v2986, %v2985
    %v3769 = vpack.c.b16 %v2988, %v2987
    %v3770 = vpack.c.b16 %v2990, %v2989
    %v3771 = vpack.c.b16 %v2992, %v2991
    %v3772 = vpack.c.b16 %v2994, %v2993
    %v3773 = vpack.c.b16 %v2996, %v2995
    %v3774 = vpack.c.b16 %v2998, %v2997
    %v3775 = vpack.c.b16 %v3000, %v2999
    %v3776 = vpack.c.b16 %v3002, %v3001
    %v3777 = vpack.c.b16 %v3004, %v3003
    %v3778 = vpack.c.b16 %v3006, %v3005
    %v3779 = vpack.c.b16 %v3008, %v3007
    %v3780 = vpack.c.b16 %v3010, %v3009
    %v3781 = vpack.c.b16 %v3012, %v3011
    %v3782 = vpack.c.b16 %v3014, %v3013
    %v3783 = vpack.c.b16 %v3016, %v3015
    %v3784 = vpack.c.b16 %v3018, %v3017
    %v3785 = vpack.c.b16 %v3020, %v3019
    %v3786 = vpack.c.b16 %v3022, %v3021
    %v3787 = vpack.c.b16 %v3024, %v3023
    %v3788 = vpack.c.b16 %v3026, %v3025
    %v3789 = vpack.c.b16 %v3028, %v3027
    %v3790 = vpack.c.b16 %v3030, %v3029
    %v3791 = vpack.c.b16 %v3032, %v3031
    %v3792 = vpack.c.b16 %v3034, %v3033
    %v3793 = vpack.c.b16 %v3036, %v3035
    %v3794 = vpack.c.b16 %v3038, %v3037
    %v3795 = vpack.c.b16 %v3040, %v3039
    %v3796 = vpack.c.b16 %v3042, %v3041
    %v3797 = vpack.c.b16 %v3044, %v3043
    %v3798 = vpack.c.b16 %v3046, %v3045
    %v3799 = vpack.c.b16 %v3048, %v3047
    %v3800 = vpack.c.b16 %v3050, %v3049
    %v3801 = vpack.c.b16 %v3052, %v3051
    %v3802 = vpack.c.b16 %v3054, %v3053
    %v3803 = vpack.c.b16 %v3056, %v3055
    %v3804 = vpack.c.b16 %v3058, %v3057
    %v3805 = vpack.c.b16 %v3060, %v3059
    %v3806 = vpack.c.b16 %v3062, %v3061
    %v3807 = vpack.c.b16 %v3064, %v3063
    %v3808 = vpack.c.b16 %v3066, %v3065
    %v3809 = vpack.c.b16 %v3068, %v3067
    %v3810 = vpack.c.b16 %v3070, %v3069
    %v3811 = vpack.c.b16 %v3072, %v3071
    %v3812 = vpack.c.b16 %v3074, %v3073
    %v3813 = vpack.c.b16 %v3076, %v3075
    %v3814 = vpack.c.b16 %v3078, %v3077
    %v3815 = vpack.c.b16 %v3080, %v3079
    %v3816 = vpack.c.b16 %v3082, %v3081
    %v3817 = vpack.c.b16 %v3084, %v3083
    %v3818 = vpack.c.b16 %v3086, %v3085
    %v3819 = vpack.c.b16 %v3088, %v3087
    %v3820 = vpack.c.b16 %v3090, %v3089
    %v3821 = vpack.c.b16 %v3092, %v3091
    %v3822 = vpack.c.b16 %v3094, %v3093
    %v3823 = vpack.c.b16 %v3096, %v3095
    %v3824 = vpack.c.b16 %v3098, %v3097
    %v3825 = vpack.c.b16 %v3100, %v3099
    %v3826 = vpack.c.b16 %v3102, %v3101
    %v3827 = vpack.c.b16 %v3104, %v3103
    %v3828 = vpack.c.b16 %v3106, %v3105
    %v3829 = vpack.c.b16 %v3108, %v3107
    %v3830 = vpack.c.b16 %v3110, %v3109
    %v3831 = vpack.c.b16 %v3112, %v3111
    %v3832 = vpack.c.b16 %v3114, %v3113
    %v3833 = vpack.c.b16 %v3116, %v3115
    %v3834 = vpack.c.b16 %v3118, %v3117
    %v3835 = vpack.c.b16 %v3120, %v3119
    %v3836 = vpack.c.b16 %v3122, %v3121
    %v3837 = vpack.c.b16 %v3124, %v3123
    %v3838 = vpack.c.b16 %v3126, %v3125
    %v3839 = vpack.c.b16 %v3128, %v3127
    %v3840 = vpack.c.b16 %v3130, %v3129
    %v3841 = vpack.c.b16 %v3132, %v3131
    %v3842 = vpack.c.b16 %v3134, %v3133
    %v3843 = vpack.c.b16 %v3136, %v3135
    %v3844 = vpack.c.b16 %v3138, %v3137
    %v3845 = vpack.c.b16 %v3140, %v3139
    %v3846 = vpack.c.b16 %v3142, %v3141
    %v3847 = vpack.c.b16 %v3144, %v3143
    %v3848 = vpack.c.b16 %v3146, %v3145
    %v3849 = vpack.c.b16 %v3148, %v3147
    %v3850 = vpack.c.b16 %v3150, %v3149
    %v3851 = vpack.c.b16 %v3152, %v3151
    %v3852 = vpack.c.b16 %v3154, %v3153
    %v3853 = vpack.c.b16 %v3156, %v3155
    %v3854 = vpack.c.b16 %v3158, %v3157
    %v3855 = vpack.c.b16 %v3160, %v3159
    %v3856 = vpack.c.b16 %v3162, %v3161
    %v3857 = vpack.c.b16 %v3164, %v3163
    %v3858 = vpack.c.b16 %v3166, %v3165
    %v3859 = vpack.c.b16 %v3168, %v3167
    %v3860 = vpack.c.b16 %v3170, %v3169
    %v3861 = vpack.c.b16 %v3172, %v3171
    %v3862 = vpack.c.b16 %v3174, %v3173
    %v3863 = vpack.c.b16 %v3176, %v3175
    %v3864 = vpack.c.b16 %v3178, %v3177
    %v3865 = vpack.c.b16 %v3180, %v3179
    %v3866 = vpack.c.b16 %v3182, %v3181
    %v3867 = vpack.c.b16 %v3184, %v3183
    %v3868 = vpack.c.b16 %v3186, %v3185
    %v3869 = vpack.c.b16 %v3188, %v3187
    %v3870 = vpack.c.b16 %v3190, %v3189
    %v3871 = vpack.c.b16 %v3192, %v3191
    %v3872 = vpack.c.b16 %v3194, %v3193
    %v3873 = vpack.c.b16 %v3196, %v3195
    %v3874 = vpack.c.b16 %v3198, %v3197
    %v3875 = vpack.c.b16 %v3200, %v3199
    %v3876 = vpack.c.b16 %v3202, %v3201
    %v3877 = vpack.c.b16 %v3204, %v3203
    %v3878 = vpack.c.b16 %v3206, %v3205
    %v3879 = vpack.c.b16 %v3208, %v3207
    %v3880 = vpack.c.b16 %v3210, %v3209
    %v3881 = vpack.c.b16 %v3212, %v3211
    %v3882 = vpack.c.b16 %v3214, %v3213
    %v3883 = vpack.c.b16 %v3216, %v3215
    %v3884 = vpack.c.b16 %v3218, %v3217
    %v3885 = vpack.c.b16 %v3220, %v3219
    %v3886 = vpack.c.b16 %v3222, %v3221
    %v3887 = vpack.c.b16 %v3224, %v3223
    %v3888 = vpack.c.b16 %v3226, %v3225
    %v3889 = vpack.c.b16 %v3228, %v3227
    %v3890 = vpack.c.b16 %v3230, %v3229
    %v3891 = vpack.c.b16 %v3232, %v3231
    %v3892 = vpack.c.b16 %v3234, %v3233
    %v3893 = vpack.c.b16 %v3236, %v3235
    %v3894 = vpack.c.b16 %v3238, %v3237
    %v3895 = vpack.c.b16 %v3240, %v3239
    %v3896 = vpack.c.b16 %v3242, %v3241
    %v3897 = vpack.c.b16 %v3244, %v3243
    %v3898 = vpack.c.b16 %v3246, %v3245
    %v3899 = vpack.c.b16 %v3248, %v3247
    %v3900 = vpack.c.b16 %v3250, %v3249
    %v3901 = vpack.c.b16 %v3252, %v3251
    %v3902 = vpack.c.b16 %v3254, %v3253
    %v3903 = vpack.c.b16 %v3256, %v3255
    %v3904 = vpack.c.b16 %v3258, %v3257
    %v3905 = vpack.c.b16 %v3260, %v3259
    %v3906 = vpack.c.b16 %v3262, %v3261
    %v3907 = vpack.c.b16 %v3264, %v3263
    %v3908 = vpack.c.b16 %v3266, %v3265
    %v3909 = vpack.c.b16 %v3268, %v3267
    %v3910 = vpack.c.b16 %v3270, %v3269
    %v3911 = vpack.c.b16 %v3272, %v3271
    %v3912 = vpack.c.b16 %v3274, %v3273
    %v3913 = vpack.c.b16 %v3276, %v3275
    %v3914 = vpack.c.b16 %v3278, %v3277
    %v3915 = vpack.c.b16 %v3280, %v3279
    %v3916 = vpack.c.b16 %v3282, %v3281
    %v3917 = vpack.c.b16 %v3284, %v3283
    %v3918 = vpack.c.b16 %v3286, %v3285
    %v3919 = vpack.c.b16 %v3288, %v3287
    %v3920 = vpack.c.b16 %v3290, %v3289
    %v3921 = vpack.c.b16 %v3292, %v3291
    %v3922 = vpack.c.b16 %v3294, %v3293
    %v3923 = vpack.c.b16 %v3296, %v3295
    %v3924 = vpack.c.b16 %v3298, %v3297
    %v3925 = vpack.c.b16 %v3300, %v3299
    %v3926 = vpack.c.b16 %v3302, %v3301
    %v3927 = vpack.c.b16 %v3304, %v3303
    %v3928 = vpack.c.b16 %v3306, %v3305
    %v3929 = vpack.c.b16 %v3308, %v3307
    %v3930 = vpack.c.b16 %v3310, %v3309
    %v3931 = vpack.c.b16 %v3312, %v3311
    %v3932 = vpack.c.b16 %v3314, %v3313
    %v3933 = vpack.c.b16 %v3316, %v3315
    %v3934 = vpack.c.b16 %v3318, %v3317
    %v3935 = vpack.c.b16 %v3320, %v3319
    %v3936 = vpack.c.b16 %v3322, %v3321
    %v3937 = vpack.c.b16 %v3324, %v3323
    %v3938 = vpack.c.b16 %v3326, %v3325
    %v3939 = vpack.c.b16 %v3328, %v3327
    %v3940 = vpack.c.b16 %v3330, %v3329
    %v3941 = vpack.c.b16 %v3332, %v3331
    %v3942 = vpack.c.b16 %v3334, %v3333
    %v3943 = vpack.c.b16 %v3336, %v3335
    %v3944 = vpack.c.b16 %v3338, %v3337
    %v3945 = vpack.c.b16 %v3340, %v3339
    %v3946 = vpack.c.b16 %v3342, %v3341
    %v3947 = vpack.c.b16 %v3344, %v3343
    %v3948 = vpack.c.b16 %v3346, %v3345
    %v3949 = vpack.c.b16 %v3348, %v3347
    %v3950 = vpack.c.b16 %v3350, %v3349
    %v3951 = vpack.c.b16 %v3352, %v3351
    %v3952 = vpack.c.b16 %v3354, %v3353
    %v3953 = vpack.c.b16 %v3356, %v3355
    %v3954 = vpack.c.b16 %v3358, %v3357
    %v3955 = vpack.c.b16 %v3360, %v3359
    %v3956 = vpack.c.b16 %v3362, %v3361
    %v3957 = vpack.c.b16 %v3364, %v3363
    %v3958 = vpack.c.b16 %v3366, %v3365
    %v3959 = vpack.c.b16 %v3368, %v3367
    %v3960 = vpack.c.b16 %v3370, %v3369
    %v3961 = vpack.c.b16 %v3372, %v3371
    %v3962 = vpack.c.b16 %v3374, %v3373
    %v3963 = vpack.c.b16 %v3376, %v3375
    %v3964 = vpack.c.b16 %v3378, %v3377
    %v3965 = vpack.c.b16 %v3380, %v3379
    %v3966 = vpack.c.b16 %v3382, %v3381
    %v3967 = vpack.c.b16 %v3384, %v3383
    %v3968 = vpack.c.b16 %v3386, %v3385
    %v3969 = vpack.c.b16 %v3388, %v3387
    %v3970 = vpack.c.b16 %v3390, %v3389
    %v3971 = vpack.c.b16 %v3392, %v3391
    %v3972 = vpack.c.b16 %v3394, %v3393
    %v3973 = vpack.c.b16 %v3396, %v3395
    %v3974 = vpack.c.b16 %v3398, %v3397
    %v3975 = vpack.c.b16 %v3400, %v3399
    %v3976 = vpack.c.b16 %v3402, %v3401
    %v3977 = vpack.c.b16 %v3404, %v3403
    %v3978 = vpack.c.b16 %v3406, %v3405
    %v3979 = vpack.c.b16 %v3408, %v3407
    %v3980 = vpack.c.b16 %v3410, %v3409
    %v3981 = vpack.c.b16 %v3412, %v3411
    %v3982 = vpack.c.b16 %v3414, %v3413
    %v3983 = vpack.c.b16 %v3416, %v3415
    %v3984 = vpack.c.b16 %v3418, %v3417
    %v3985 = vpack.c.b16 %v3420, %v3419
    %v3986 = vpack.c.b16 %v3422, %v3421
    %v3987 = vpack.c.b16 %v3424, %v3423
    %v3988 = vpack.c.b16 %v3426, %v3425
    %v3989 = vpack.c.b16 %v3428, %v3427
    %v3990 = vpack.c.b16 %v3430, %v3429
    %v3991 = vpack.c.b16 %v3432, %v3431
    %v3992 = vpack.c.b16 %v3434, %v3433
    %v3993 = vpack.c.b16 %v3436, %v3435
    %v3994 = vpack.c.b16 %v3438, %v3437
    %v3995 = vpack.c.b16 %v3440, %v3439
    %v3996 = vpack.c.b16 %v3442, %v3441
    %v3997 = vpack.c.b16 %v3444, %v3443
    %v3998 = vpack.c.b16 %v3446, %v3445
    %v3999 = vpack.c.b16 %v3448, %v3447
    %v4000 = vpack.c.b16 %v3450, %v3449
    %v4001 = vpack.c.b16 %v3452, %v3451
    %v4002 = vpack.c.b16 %v3454, %v3453
    %v4003 = vpack.c.b16 %v3456, %v3455
    %v4004 = vpack.c.b16 %v3458, %v3457
    %v4005 = vpack.c.b16 %v3460, %v3459
    %v4006 = vpack.c.b16 %v3462, %v3461
    %v4007 = vpack.c.b16 %v3464, %v3463
    %v4008 = vpack.c.b16 %v3466, %v3465
    %v4009 = vpack.c.b16 %v3468, %v3467
    %v4010 = vpack.c.b16 %v3470, %v3469
    %v4011 = vpack.c.b16 %v3472, %v3471
    %v4012 = vpack.c.b16 %v3474, %v3473
    %v4013 = vpack.c.b16 %v3476, %v3475
    %v4014 = vpack.c.b16 %v3478, %v3477
    %v4015 = vpack.c.b16 %v3480, %v3479
    %v4016 = vpack.c.b16 %v3482, %v3481
    %v4017 = vpack.c.b16 %v3484, %v3483
    %v4018 = vpack.c.b16 %v3486, %v3485
    %v4019 = vpack.c.b16 %v3488, %v3487
    %v4020 = vpack.c.b16 %v3490, %v3489
    %v4021 = vpack.c.b16 %v3492, %v3491
    %v4022 = vpack.c.b16 %v3494, %v3493
    %v4023 = vpack.c.b16 %v3496, %v3495
    %v4024 = vpack.c.b16 %v3498, %v3497
    %v4025 = vpack.c.b16 %v3500, %v3499
    %v4026 = vpack.c.b16 %v3502, %v3501
    %v4027 = vpack.c.b16 %v3504, %v3503
    %v4028 = vpack.c.b16 %v3506, %v3505
    %v4029 = vpack.c.b16 %v3508, %v3507
    %v4030 = vpack.c.b16 %v3510, %v3509
    %v4031 = vpack.c.b16 %v3512, %v3511
    %v4032 = vpack.c.b16 %v3514, %v3513
    %v4033 = vpack.c.b16 %v3516, %v3515
    %v4034 = vpack.c.b16 %v3518, %v3517
    %v4035 = vpack.c.b16 %v3520, %v3519
    %v4036 = vpack.c.b16 %v3522, %v3521
    %v4037 = vpack.c.b16 %v3524, %v3523
    %v4038 = vpack.c.b16 %v3526, %v3525
    %4551 = vmatprep.subr.bf16.mxu0 0
    %4552 = vmatpush1.bf16.msra.mxu0 %v3534
    %4553 = vmatprep.subr.bf16.mxu0 0
    %4554 = vmatpush1.bf16.msra.mxu0 %v3533
    %4555 = vmatprep.subr.bf16.mxu0 0
    %4556 = vmatpush1.bf16.msra.mxu0 %v3532
    %4557 = vmatprep.subr.bf16.mxu0 0
    %4558 = vmatpush1.bf16.msra.mxu0 %v3531
    %4559 = vmatprep.subr.bf16.mxu0 0
    %4560 = vmatpush1.bf16.msra.mxu0 %v3530
    %4561 = vmatprep.subr.bf16.mxu0 0
    %4562 = vmatpush1.bf16.msra.mxu0 %v3529
    %4563 = vmatprep.subr.bf16.mxu0 0
    %4564 = vmatpush1.bf16.msra.mxu0 %v3528
    %4565 = vmatprep.subr.bf16.mxu0 0
    %4566 = vmatpush1.bf16.msra.mxu0 %v3527
    %4567 = vmatprep.subr.bf16.mxu0 0
    %4568 = vmatpush2.bf16.msra.mxu0 %v3542
    %4569 = vmatprep.subr.bf16.mxu0 0
    %4570 = vmatpush2.bf16.msra.mxu0 %v3541
    %4571 = vmatprep.subr.bf16.mxu0 0
    %4572 = vmatpush2.bf16.msra.mxu0 %v3540
    %4573 = vmatprep.subr.bf16.mxu0 0
    %4574 = vmatpush2.bf16.msra.mxu0 %v3539
    %4575 = vmatprep.subr.bf16.mxu0 0
    %4576 = vmatpush2.bf16.msra.mxu0 %v3538
    %4577 = vmatprep.subr.bf16.mxu0 0
    %4578 = vmatpush2.bf16.msra.mxu0 %v3537
    %4579 = vmatprep.subr.bf16.mxu0 0
    %4580 = vmatpush2.bf16.msra.mxu0 %v3536
    %4581 = vmatprep.subr.bf16.mxu0 0
    %4582 = vmatpush2.bf16.msra.mxu0 %v3535
    %4583 = vmatprep.mubr.bf16.mxu0 %v385
    %4584 = vmatmul.mubr.bf16.gmra.mxu0 %v384
    %v4585 = vpop.f32.mrf.mxu0
    %v4586 = vadd.f32 %v1477, %v4585
    %v4587 = vpop.f32.mrf.mxu0
    %v4588 = vpop.f32.mrf.mxu0
    %v4589 = vpop.f32.mrf.mxu0
    %4590 = vdwg.mxu0
    %4591 = vmatprep.subr.bf16.mxu0 0
    %4592 = vmatpush1.bf16.msra.mxu0 %v3550
    %4593 = vmatprep.subr.bf16.mxu0 0
    %4594 = vmatpush1.bf16.msra.mxu0 %v3549
    %4595 = vmatprep.subr.bf16.mxu0 0
    %4596 = vmatpush1.bf16.msra.mxu0 %v3548
    %4597 = vmatprep.subr.bf16.mxu0 0
    %4598 = vmatpush1.bf16.msra.mxu0 %v3547
    %4599 = vmatprep.subr.bf16.mxu0 0
    %4600 = vmatpush1.bf16.msra.mxu0 %v3546
    %4601 = vmatprep.subr.bf16.mxu0 0
    %4602 = vmatpush1.bf16.msra.mxu0 %v3545
    %4603 = vmatprep.subr.bf16.mxu0 0
    %4604 = vmatpush1.bf16.msra.mxu0 %v3544
    %4605 = vmatprep.subr.bf16.mxu0 0
    %4606 = vmatpush1.bf16.msra.mxu0 %v3543
    %4607 = vmatprep.subr.bf16.mxu0 0
    %4608 = vmatpush2.bf16.msra.mxu0 %v3558
    %4609 = vmatprep.subr.bf16.mxu0 0
    %4610 = vmatpush2.bf16.msra.mxu0 %v3557
    %4611 = vmatprep.subr.bf16.mxu0 0
    %4612 = vmatpush2.bf16.msra.mxu0 %v3556
    %4613 = vmatprep.subr.bf16.mxu0 0
    %4614 = vmatpush2.bf16.msra.mxu0 %v3555
    %4615 = vmatprep.subr.bf16.mxu0 0
    %4616 = vmatpush2.bf16.msra.mxu0 %v3554
    %4617 = vmatprep.subr.bf16.mxu0 0
    %4618 = vmatpush2.bf16.msra.mxu0 %v3553
    %4619 = vmatprep.subr.bf16.mxu0 0
    %4620 = vmatpush2.bf16.msra.mxu0 %v3552
    %4621 = vmatprep.subr.bf16.mxu0 0
    %4622 = vmatpush2.bf16.msra.mxu0 %v3551
    %4623 = vmatprep.mubr.bf16.mxu0 %v387
    %4624 = vmatmul.mubr.bf16.gmra.mxu0 %v386
    %v4625 = vpop.f32.mrf.mxu0
    %v4626 = vadd.f32 %v4586, %v4625
    %v4627 = vpop.f32.mrf.mxu0
    %v4628 = vpop.f32.mrf.mxu0
    %v4629 = vpop.f32.mrf.mxu0
    %4630 = vdwg.mxu0
    %4631 = vmatprep.subr.bf16.mxu0 0
    %4632 = vmatpush1.bf16.msra.mxu0 %v3566
    %4633 = vmatprep.subr.bf16.mxu0 0
    %4634 = vmatpush1.bf16.msra.mxu0 %v3565
    %4635 = vmatprep.subr.bf16.mxu0 0
    %4636 = vmatpush1.bf16.msra.mxu0 %v3564
    %4637 = vmatprep.subr.bf16.mxu0 0
    %4638 = vmatpush1.bf16.msra.mxu0 %v3563
    %4639 = vmatprep.subr.bf16.mxu0 0
    %4640 = vmatpush1.bf16.msra.mxu0 %v3562
    %4641 = vmatprep.subr.bf16.mxu0 0
    %4642 = vmatpush1.bf16.msra.mxu0 %v3561
    %4643 = vmatprep.subr.bf16.mxu0 0
    %4644 = vmatpush1.bf16.msra.mxu0 %v3560
    %4645 = vmatprep.subr.bf16.mxu0 0
    %4646 = vmatpush1.bf16.msra.mxu0 %v3559
    %4647 = vmatprep.subr.bf16.mxu0 0
    %4648 = vmatpush2.bf16.msra.mxu0 %v3574
    %4649 = vmatprep.subr.bf16.mxu0 0
    %4650 = vmatpush2.bf16.msra.mxu0 %v3573
    %4651 = vmatprep.subr.bf16.mxu0 0
    %4652 = vmatpush2.bf16.msra.mxu0 %v3572
    %4653 = vmatprep.subr.bf16.mxu0 0
    %4654 = vmatpush2.bf16.msra.mxu0 %v3571
    %4655 = vmatprep.subr.bf16.mxu0 0
    %4656 = vmatpush2.bf16.msra.mxu0 %v3570
    %4657 = vmatprep.subr.bf16.mxu0 0
    %4658 = vmatpush2.bf16.msra.mxu0 %v3569
    %4659 = vmatprep.subr.bf16.mxu0 0
    %4660 = vmatpush2.bf16.msra.mxu0 %v3568
    %4661 = vmatprep.subr.bf16.mxu0 0
    %4662 = vmatpush2.bf16.msra.mxu0 %v3567
    %4663 = vmatprep.mubr.bf16.mxu0 %v389
    %4664 = vmatmul.mubr.bf16.gmra.mxu0 %v388
    %v4665 = vpop.f32.mrf.mxu0
    %v4666 = vadd.f32 %v4626, %v4665
    %v4667 = vpop.f32.mrf.mxu0
    %v4668 = vpop.f32.mrf.mxu0
    %v4669 = vpop.f32.mrf.mxu0
    %4670 = vdwg.mxu0
    %4671 = vmatprep.subr.bf16.mxu0 0
    %4672 = vmatpush1.bf16.msra.mxu0 %v3582
    %4673 = vmatprep.subr.bf16.mxu0 0
    %4674 = vmatpush1.bf16.msra.mxu0 %v3581
    %4675 = vmatprep.subr.bf16.mxu0 0
    %4676 = vmatpush1.bf16.msra.mxu0 %v3580
    %4677 = vmatprep.subr.bf16.mxu0 0
    %4678 = vmatpush1.bf16.msra.mxu0 %v3579
    %4679 = vmatprep.subr.bf16.mxu0 0
    %4680 = vmatpush1.bf16.msra.mxu0 %v3578
    %4681 = vmatprep.subr.bf16.mxu0 0
    %4682 = vmatpush1.bf16.msra.mxu0 %v3577
    %4683 = vmatprep.subr.bf16.mxu0 0
    %4684 = vmatpush1.bf16.msra.mxu0 %v3576
    %4685 = vmatprep.subr.bf16.mxu0 0
    %4686 = vmatpush1.bf16.msra.mxu0 %v3575
    %4687 = vmatprep.subr.bf16.mxu0 0
    %4688 = vmatpush2.bf16.msra.mxu0 %v3590
    %4689 = vmatprep.subr.bf16.mxu0 0
    %4690 = vmatpush2.bf16.msra.mxu0 %v3589
    %4691 = vmatprep.subr.bf16.mxu0 0
    %4692 = vmatpush2.bf16.msra.mxu0 %v3588
    %4693 = vmatprep.subr.bf16.mxu0 0
    %4694 = vmatpush2.bf16.msra.mxu0 %v3587
    %4695 = vmatprep.subr.bf16.mxu0 0
    %4696 = vmatpush2.bf16.msra.mxu0 %v3586
    %4697 = vmatprep.subr.bf16.mxu0 0
    %4698 = vmatpush2.bf16.msra.mxu0 %v3585
    %4699 = vmatprep.subr.bf16.mxu0 0
    %4700 = vmatpush2.bf16.msra.mxu0 %v3584
    %4701 = vmatprep.subr.bf16.mxu0 0
    %4702 = vmatpush2.bf16.msra.mxu0 %v3583
    %4703 = vmatprep.mubr.bf16.mxu0 %v391
    %4704 = vmatmul.mubr.bf16.gmra.mxu0 %v390
    %v4705 = vpop.f32.mrf.mxu0
    %v4706 = vadd.f32 %v4666, %v4705
    %v4707 = vpop.f32.mrf.mxu0
    %v4708 = vpop.f32.mrf.mxu0
    %v4709 = vpop.f32.mrf.mxu0
    %4710 = vdwg.mxu0
    %4711 = vmatprep.subr.bf16.mxu0 0
    %4712 = vmatpush1.bf16.msra.mxu0 %v3598
    %4713 = vmatprep.subr.bf16.mxu0 0
    %4714 = vmatpush1.bf16.msra.mxu0 %v3597
    %4715 = vmatprep.subr.bf16.mxu0 0
    %4716 = vmatpush1.bf16.msra.mxu0 %v3596
    %4717 = vmatprep.subr.bf16.mxu0 0
    %4718 = vmatpush1.bf16.msra.mxu0 %v3595
    %4719 = vmatprep.subr.bf16.mxu0 0
    %4720 = vmatpush1.bf16.msra.mxu0 %v3594
    %4721 = vmatprep.subr.bf16.mxu0 0
    %4722 = vmatpush1.bf16.msra.mxu0 %v3593
    %4723 = vmatprep.subr.bf16.mxu0 0
    %4724 = vmatpush1.bf16.msra.mxu0 %v3592
    %4725 = vmatprep.subr.bf16.mxu0 0
    %4726 = vmatpush1.bf16.msra.mxu0 %v3591
    %4727 = vmatprep.subr.bf16.mxu0 0
    %4728 = vmatpush2.bf16.msra.mxu0 %v3606
    %4729 = vmatprep.subr.bf16.mxu0 0
    %4730 = vmatpush2.bf16.msra.mxu0 %v3605
    %4731 = vmatprep.subr.bf16.mxu0 0
    %4732 = vmatpush2.bf16.msra.mxu0 %v3604
    %4733 = vmatprep.subr.bf16.mxu0 0
    %4734 = vmatpush2.bf16.msra.mxu0 %v3603
    %4735 = vmatprep.subr.bf16.mxu0 0
    %4736 = vmatpush2.bf16.msra.mxu0 %v3602
    %4737 = vmatprep.subr.bf16.mxu0 0
    %4738 = vmatpush2.bf16.msra.mxu0 %v3601
    %4739 = vmatprep.subr.bf16.mxu0 0
    %4740 = vmatpush2.bf16.msra.mxu0 %v3600
    %4741 = vmatprep.subr.bf16.mxu0 0
    %4742 = vmatpush2.bf16.msra.mxu0 %v3599
    %4743 = vmatprep.mubr.bf16.mxu0 %v393
    %4744 = vmatmul.mubr.bf16.gmra.mxu0 %v392
    %v4745 = vpop.f32.mrf.mxu0
    %v4746 = vadd.f32 %v4706, %v4745
    %v4747 = vpop.f32.mrf.mxu0
    %v4748 = vpop.f32.mrf.mxu0
    %v4749 = vpop.f32.mrf.mxu0
    %4750 = vdwg.mxu0
    %4751 = vmatprep.subr.bf16.mxu0 0
    %4752 = vmatpush1.bf16.msra.mxu0 %v3614
    %4753 = vmatprep.subr.bf16.mxu0 0
    %4754 = vmatpush1.bf16.msra.mxu0 %v3613
    %4755 = vmatprep.subr.bf16.mxu0 0
    %4756 = vmatpush1.bf16.msra.mxu0 %v3612
    %4757 = vmatprep.subr.bf16.mxu0 0
    %4758 = vmatpush1.bf16.msra.mxu0 %v3611
    %4759 = vmatprep.subr.bf16.mxu0 0
    %4760 = vmatpush1.bf16.msra.mxu0 %v3610
    %4761 = vmatprep.subr.bf16.mxu0 0
    %4762 = vmatpush1.bf16.msra.mxu0 %v3609
    %4763 = vmatprep.subr.bf16.mxu0 0
    %4764 = vmatpush1.bf16.msra.mxu0 %v3608
    %4765 = vmatprep.subr.bf16.mxu0 0
    %4766 = vmatpush1.bf16.msra.mxu0 %v3607
    %4767 = vmatprep.subr.bf16.mxu0 0
    %4768 = vmatpush2.bf16.msra.mxu0 %v3622
    %4769 = vmatprep.subr.bf16.mxu0 0
    %4770 = vmatpush2.bf16.msra.mxu0 %v3621
    %4771 = vmatprep.subr.bf16.mxu0 0
    %4772 = vmatpush2.bf16.msra.mxu0 %v3620
    %4773 = vmatprep.subr.bf16.mxu0 0
    %4774 = vmatpush2.bf16.msra.mxu0 %v3619
    %4775 = vmatprep.subr.bf16.mxu0 0
    %4776 = vmatpush2.bf16.msra.mxu0 %v3618
    %4777 = vmatprep.subr.bf16.mxu0 0
    %4778 = vmatpush2.bf16.msra.mxu0 %v3617
    %4779 = vmatprep.subr.bf16.mxu0 0
    %4780 = vmatpush2.bf16.msra.mxu0 %v3616
    %4781 = vmatprep.subr.bf16.mxu0 0
    %4782 = vmatpush2.bf16.msra.mxu0 %v3615
    %4783 = vmatprep.mubr.bf16.mxu0 %v395
    %4784 = vmatmul.mubr.bf16.gmra.mxu0 %v394
    %v4785 = vpop.f32.mrf.mxu0
    %v4786 = vadd.f32 %v4746, %v4785
    %v4787 = vpop.f32.mrf.mxu0
    %v4788 = vpop.f32.mrf.mxu0
    %v4789 = vpop.f32.mrf.mxu0
    %4790 = vdwg.mxu0
    %4791 = vmatprep.subr.bf16.mxu0 0
    %4792 = vmatpush1.bf16.msra.mxu0 %v3630
    %4793 = vmatprep.subr.bf16.mxu0 0
    %4794 = vmatpush1.bf16.msra.mxu0 %v3629
    %4795 = vmatprep.subr.bf16.mxu0 0
    %4796 = vmatpush1.bf16.msra.mxu0 %v3628
    %4797 = vmatprep.subr.bf16.mxu0 0
    %4798 = vmatpush1.bf16.msra.mxu0 %v3627
    %4799 = vmatprep.subr.bf16.mxu0 0
    %4800 = vmatpush1.bf16.msra.mxu0 %v3626
    %4801 = vmatprep.subr.bf16.mxu0 0
    %4802 = vmatpush1.bf16.msra.mxu0 %v3625
    %4803 = vmatprep.subr.bf16.mxu0 0
    %4804 = vmatpush1.bf16.msra.mxu0 %v3624
    %4805 = vmatprep.subr.bf16.mxu0 0
    %4806 = vmatpush1.bf16.msra.mxu0 %v3623
    %4807 = vmatprep.subr.bf16.mxu0 0
    %4808 = vmatpush2.bf16.msra.mxu0 %v3638
    %4809 = vmatprep.subr.bf16.mxu0 0
    %4810 = vmatpush2.bf16.msra.mxu0 %v3637
    %4811 = vmatprep.subr.bf16.mxu0 0
    %4812 = vmatpush2.bf16.msra.mxu0 %v3636
    %4813 = vmatprep.subr.bf16.mxu0 0
    %4814 = vmatpush2.bf16.msra.mxu0 %v3635
    %4815 = vmatprep.subr.bf16.mxu0 0
    %4816 = vmatpush2.bf16.msra.mxu0 %v3634
    %4817 = vmatprep.subr.bf16.mxu0 0
    %4818 = vmatpush2.bf16.msra.mxu0 %v3633
    %4819 = vmatprep.subr.bf16.mxu0 0
    %4820 = vmatpush2.bf16.msra.mxu0 %v3632
    %4821 = vmatprep.subr.bf16.mxu0 0
    %4822 = vmatpush2.bf16.msra.mxu0 %v3631
    %4823 = vmatprep.mubr.bf16.mxu0 %v397
    %4824 = vmatmul.mubr.bf16.gmra.mxu0 %v396
    %v4825 = vpop.f32.mrf.mxu0
    %v4826 = vadd.f32 %v4786, %v4825
    %v4827 = vpop.f32.mrf.mxu0
    %v4828 = vpop.f32.mrf.mxu0
    %v4829 = vpop.f32.mrf.mxu0
    %4830 = vdwg.mxu0
    %4831 = vmatprep.subr.bf16.mxu0 0
    %4832 = vmatpush1.bf16.msra.mxu0 %v3646
    %4833 = vmatprep.subr.bf16.mxu0 0
    %4834 = vmatpush1.bf16.msra.mxu0 %v3645
    %4835 = vmatprep.subr.bf16.mxu0 0
    %4836 = vmatpush1.bf16.msra.mxu0 %v3644
    %4837 = vmatprep.subr.bf16.mxu0 0
    %4838 = vmatpush1.bf16.msra.mxu0 %v3643
    %4839 = vmatprep.subr.bf16.mxu0 0
    %4840 = vmatpush1.bf16.msra.mxu0 %v3642
    %4841 = vmatprep.subr.bf16.mxu0 0
    %4842 = vmatpush1.bf16.msra.mxu0 %v3641
    %4843 = vmatprep.subr.bf16.mxu0 0
    %4844 = vmatpush1.bf16.msra.mxu0 %v3640
    %4845 = vmatprep.subr.bf16.mxu0 0
    %4846 = vmatpush1.bf16.msra.mxu0 %v3639
    %4847 = vmatprep.subr.bf16.mxu0 0
    %4848 = vmatpush2.bf16.msra.mxu0 %v3654
    %4849 = vmatprep.subr.bf16.mxu0 0
    %4850 = vmatpush2.bf16.msra.mxu0 %v3653
    %4851 = vmatprep.subr.bf16.mxu0 0
    %4852 = vmatpush2.bf16.msra.mxu0 %v3652
    %4853 = vmatprep.subr.bf16.mxu0 0
    %4854 = vmatpush2.bf16.msra.mxu0 %v3651
    %4855 = vmatprep.subr.bf16.mxu0 0
    %4856 = vmatpush2.bf16.msra.mxu0 %v3650
    %4857 = vmatprep.subr.bf16.mxu0 0
    %4858 = vmatpush2.bf16.msra.mxu0 %v3649
    %4859 = vmatprep.subr.bf16.mxu0 0
    %4860 = vmatpush2.bf16.msra.mxu0 %v3648
    %4861 = vmatprep.subr.bf16.mxu0 0
    %4862 = vmatpush2.bf16.msra.mxu0 %v3647
    %4863 = vmatprep.mubr.bf16.mxu0 %v399
    %4864 = vmatmul.mubr.bf16.gmra.mxu0 %v398
    %v4865 = vpop.f32.mrf.mxu0
    %v4866 = vadd.f32 %v4826, %v4865
    %v4867 = vpop.f32.mrf.mxu0
    %v4868 = vpop.f32.mrf.mxu0
    %v4869 = vpop.f32.mrf.mxu0
    %4870 = vdwg.mxu0
    %4871 = vmatprep.subr.bf16.mxu0 0
    %4872 = vmatpush1.bf16.msra.mxu0 %v3662
    %4873 = vmatprep.subr.bf16.mxu0 0
    %4874 = vmatpush1.bf16.msra.mxu0 %v3661
    %4875 = vmatprep.subr.bf16.mxu0 0
    %4876 = vmatpush1.bf16.msra.mxu0 %v3660
    %4877 = vmatprep.subr.bf16.mxu0 0
    %4878 = vmatpush1.bf16.msra.mxu0 %v3659
    %4879 = vmatprep.subr.bf16.mxu0 0
    %4880 = vmatpush1.bf16.msra.mxu0 %v3658
    %4881 = vmatprep.subr.bf16.mxu0 0
    %4882 = vmatpush1.bf16.msra.mxu0 %v3657
    %4883 = vmatprep.subr.bf16.mxu0 0
    %4884 = vmatpush1.bf16.msra.mxu0 %v3656
    %4885 = vmatprep.subr.bf16.mxu0 0
    %4886 = vmatpush1.bf16.msra.mxu0 %v3655
    %4887 = vmatprep.subr.bf16.mxu0 0
    %4888 = vmatpush2.bf16.msra.mxu0 %v3670
    %4889 = vmatprep.subr.bf16.mxu0 0
    %4890 = vmatpush2.bf16.msra.mxu0 %v3669
    %4891 = vmatprep.subr.bf16.mxu0 0
    %4892 = vmatpush2.bf16.msra.mxu0 %v3668
    %4893 = vmatprep.subr.bf16.mxu0 0
    %4894 = vmatpush2.bf16.msra.mxu0 %v3667
    %4895 = vmatprep.subr.bf16.mxu0 0
    %4896 = vmatpush2.bf16.msra.mxu0 %v3666
    %4897 = vmatprep.subr.bf16.mxu0 0
    %4898 = vmatpush2.bf16.msra.mxu0 %v3665
    %4899 = vmatprep.subr.bf16.mxu0 0
    %4900 = vmatpush2.bf16.msra.mxu0 %v3664
    %4901 = vmatprep.subr.bf16.mxu0 0
    %4902 = vmatpush2.bf16.msra.mxu0 %v3663
    %4903 = vmatprep.mubr.bf16.mxu0 %v401
    %4904 = vmatmul.mubr.bf16.gmra.mxu0 %v400
    %v4905 = vpop.f32.mrf.mxu0
    %v4906 = vadd.f32 %v4866, %v4905
    %v4907 = vpop.f32.mrf.mxu0
    %v4908 = vpop.f32.mrf.mxu0
    %v4909 = vpop.f32.mrf.mxu0
    %4910 = vdwg.mxu0
    %4911 = vmatprep.subr.bf16.mxu0 0
    %4912 = vmatpush1.bf16.msra.mxu0 %v3678
    %4913 = vmatprep.subr.bf16.mxu0 0
    %4914 = vmatpush1.bf16.msra.mxu0 %v3677
    %4915 = vmatprep.subr.bf16.mxu0 0
    %4916 = vmatpush1.bf16.msra.mxu0 %v3676
    %4917 = vmatprep.subr.bf16.mxu0 0
    %4918 = vmatpush1.bf16.msra.mxu0 %v3675
    %4919 = vmatprep.subr.bf16.mxu0 0
    %4920 = vmatpush1.bf16.msra.mxu0 %v3674
    %4921 = vmatprep.subr.bf16.mxu0 0
    %4922 = vmatpush1.bf16.msra.mxu0 %v3673
    %4923 = vmatprep.subr.bf16.mxu0 0
    %4924 = vmatpush1.bf16.msra.mxu0 %v3672
    %4925 = vmatprep.subr.bf16.mxu0 0
    %4926 = vmatpush1.bf16.msra.mxu0 %v3671
    %4927 = vmatprep.subr.bf16.mxu0 0
    %4928 = vmatpush2.bf16.msra.mxu0 %v3686
    %4929 = vmatprep.subr.bf16.mxu0 0
    %4930 = vmatpush2.bf16.msra.mxu0 %v3685
    %4931 = vmatprep.subr.bf16.mxu0 0
    %4932 = vmatpush2.bf16.msra.mxu0 %v3684
    %4933 = vmatprep.subr.bf16.mxu0 0
    %4934 = vmatpush2.bf16.msra.mxu0 %v3683
    %4935 = vmatprep.subr.bf16.mxu0 0
    %4936 = vmatpush2.bf16.msra.mxu0 %v3682
    %4937 = vmatprep.subr.bf16.mxu0 0
    %4938 = vmatpush2.bf16.msra.mxu0 %v3681
    %4939 = vmatprep.subr.bf16.mxu0 0
    %4940 = vmatpush2.bf16.msra.mxu0 %v3680
    %4941 = vmatprep.subr.bf16.mxu0 0
    %4942 = vmatpush2.bf16.msra.mxu0 %v3679
    %4943 = vmatprep.mubr.bf16.mxu0 %v403
    %4944 = vmatmul.mubr.bf16.gmra.mxu0 %v402
    %v4945 = vpop.f32.mrf.mxu0
    %v4946 = vadd.f32 %v4906, %v4945
    %v4947 = vpop.f32.mrf.mxu0
    %v4948 = vpop.f32.mrf.mxu0
    %v4949 = vpop.f32.mrf.mxu0
    %4950 = vdwg.mxu0
    %4951 = vmatprep.subr.bf16.mxu0 0
    %4952 = vmatpush1.bf16.msra.mxu0 %v3694
    %4953 = vmatprep.subr.bf16.mxu0 0
    %4954 = vmatpush1.bf16.msra.mxu0 %v3693
    %4955 = vmatprep.subr.bf16.mxu0 0
    %4956 = vmatpush1.bf16.msra.mxu0 %v3692
    %4957 = vmatprep.subr.bf16.mxu0 0
    %4958 = vmatpush1.bf16.msra.mxu0 %v3691
    %4959 = vmatprep.subr.bf16.mxu0 0
    %4960 = vmatpush1.bf16.msra.mxu0 %v3690
    %4961 = vmatprep.subr.bf16.mxu0 0
    %4962 = vmatpush1.bf16.msra.mxu0 %v3689
    %4963 = vmatprep.subr.bf16.mxu0 0
    %4964 = vmatpush1.bf16.msra.mxu0 %v3688
    %4965 = vmatprep.subr.bf16.mxu0 0
    %4966 = vmatpush1.bf16.msra.mxu0 %v3687
    %4967 = vmatprep.subr.bf16.mxu0 0
    %4968 = vmatpush2.bf16.msra.mxu0 %v3702
    %4969 = vmatprep.subr.bf16.mxu0 0
    %4970 = vmatpush2.bf16.msra.mxu0 %v3701
    %4971 = vmatprep.subr.bf16.mxu0 0
    %4972 = vmatpush2.bf16.msra.mxu0 %v3700
    %4973 = vmatprep.subr.bf16.mxu0 0
    %4974 = vmatpush2.bf16.msra.mxu0 %v3699
    %4975 = vmatprep.subr.bf16.mxu0 0
    %4976 = vmatpush2.bf16.msra.mxu0 %v3698
    %4977 = vmatprep.subr.bf16.mxu0 0
    %4978 = vmatpush2.bf16.msra.mxu0 %v3697
    %4979 = vmatprep.subr.bf16.mxu0 0
    %4980 = vmatpush2.bf16.msra.mxu0 %v3696
    %4981 = vmatprep.subr.bf16.mxu0 0
    %4982 = vmatpush2.bf16.msra.mxu0 %v3695
    %4983 = vmatprep.mubr.bf16.mxu0 %v405
    %4984 = vmatmul.mubr.bf16.gmra.mxu0 %v404
    %v4985 = vpop.f32.mrf.mxu0
    %v4986 = vadd.f32 %v4946, %v4985
    %v4987 = vpop.f32.mrf.mxu0
    %v4988 = vpop.f32.mrf.mxu0
    %v4989 = vpop.f32.mrf.mxu0
    %4990 = vdwg.mxu0
    %4991 = vmatprep.subr.bf16.mxu0 0
    %4992 = vmatpush1.bf16.msra.mxu0 %v3710
    %4993 = vmatprep.subr.bf16.mxu0 0
    %4994 = vmatpush1.bf16.msra.mxu0 %v3709
    %4995 = vmatprep.subr.bf16.mxu0 0
    %4996 = vmatpush1.bf16.msra.mxu0 %v3708
    %4997 = vmatprep.subr.bf16.mxu0 0
    %4998 = vmatpush1.bf16.msra.mxu0 %v3707
    %4999 = vmatprep.subr.bf16.mxu0 0
    %5000 = vmatpush1.bf16.msra.mxu0 %v3706
    %5001 = vmatprep.subr.bf16.mxu0 0
    %5002 = vmatpush1.bf16.msra.mxu0 %v3705
    %5003 = vmatprep.subr.bf16.mxu0 0
    %5004 = vmatpush1.bf16.msra.mxu0 %v3704
    %5005 = vmatprep.subr.bf16.mxu0 0
    %5006 = vmatpush1.bf16.msra.mxu0 %v3703
    %5007 = vmatprep.subr.bf16.mxu0 0
    %5008 = vmatpush2.bf16.msra.mxu0 %v3718
    %5009 = vmatprep.subr.bf16.mxu0 0
    %5010 = vmatpush2.bf16.msra.mxu0 %v3717
    %5011 = vmatprep.subr.bf16.mxu0 0
    %5012 = vmatpush2.bf16.msra.mxu0 %v3716
    %5013 = vmatprep.subr.bf16.mxu0 0
    %5014 = vmatpush2.bf16.msra.mxu0 %v3715
    %5015 = vmatprep.subr.bf16.mxu0 0
    %5016 = vmatpush2.bf16.msra.mxu0 %v3714
    %5017 = vmatprep.subr.bf16.mxu0 0
    %5018 = vmatpush2.bf16.msra.mxu0 %v3713
    %5019 = vmatprep.subr.bf16.mxu0 0
    %5020 = vmatpush2.bf16.msra.mxu0 %v3712
    %5021 = vmatprep.subr.bf16.mxu0 0
    %5022 = vmatpush2.bf16.msra.mxu0 %v3711
    %5023 = vmatprep.mubr.bf16.mxu0 %v407
    %5024 = vmatmul.mubr.bf16.gmra.mxu0 %v406
    %v5025 = vpop.f32.mrf.mxu0
    %v5026 = vadd.f32 %v4986, %v5025
    %v5027 = vpop.f32.mrf.mxu0
    %v5028 = vpop.f32.mrf.mxu0
    %v5029 = vpop.f32.mrf.mxu0
    %5030 = vdwg.mxu0
    %5031 = vmatprep.subr.bf16.mxu0 0
    %5032 = vmatpush1.bf16.msra.mxu0 %v3726
    %5033 = vmatprep.subr.bf16.mxu0 0
    %5034 = vmatpush1.bf16.msra.mxu0 %v3725
    %5035 = vmatprep.subr.bf16.mxu0 0
    %5036 = vmatpush1.bf16.msra.mxu0 %v3724
    %5037 = vmatprep.subr.bf16.mxu0 0
    %5038 = vmatpush1.bf16.msra.mxu0 %v3723
    %5039 = vmatprep.subr.bf16.mxu0 0
    %5040 = vmatpush1.bf16.msra.mxu0 %v3722
    %5041 = vmatprep.subr.bf16.mxu0 0
    %5042 = vmatpush1.bf16.msra.mxu0 %v3721
    %5043 = vmatprep.subr.bf16.mxu0 0
    %5044 = vmatpush1.bf16.msra.mxu0 %v3720
    %5045 = vmatprep.subr.bf16.mxu0 0
    %5046 = vmatpush1.bf16.msra.mxu0 %v3719
    %5047 = vmatprep.subr.bf16.mxu0 0
    %5048 = vmatpush2.bf16.msra.mxu0 %v3734
    %5049 = vmatprep.subr.bf16.mxu0 0
    %5050 = vmatpush2.bf16.msra.mxu0 %v3733
    %5051 = vmatprep.subr.bf16.mxu0 0
    %5052 = vmatpush2.bf16.msra.mxu0 %v3732
    %5053 = vmatprep.subr.bf16.mxu0 0
    %5054 = vmatpush2.bf16.msra.mxu0 %v3731
    %5055 = vmatprep.subr.bf16.mxu0 0
    %5056 = vmatpush2.bf16.msra.mxu0 %v3730
    %5057 = vmatprep.subr.bf16.mxu0 0
    %5058 = vmatpush2.bf16.msra.mxu0 %v3729
    %5059 = vmatprep.subr.bf16.mxu0 0
    %5060 = vmatpush2.bf16.msra.mxu0 %v3728
    %5061 = vmatprep.subr.bf16.mxu0 0
    %5062 = vmatpush2.bf16.msra.mxu0 %v3727
    %5063 = vmatprep.mubr.bf16.mxu0 %v409
    %5064 = vmatmul.mubr.bf16.gmra.mxu0 %v408
    %v5065 = vpop.f32.mrf.mxu0
    %v5066 = vadd.f32 %v5026, %v5065
    %v5067 = vpop.f32.mrf.mxu0
    %v5068 = vpop.f32.mrf.mxu0
    %v5069 = vpop.f32.mrf.mxu0
    %5070 = vdwg.mxu0
    %5071 = vmatprep.subr.bf16.mxu0 0
    %5072 = vmatpush1.bf16.msra.mxu0 %v3742
    %5073 = vmatprep.subr.bf16.mxu0 0
    %5074 = vmatpush1.bf16.msra.mxu0 %v3741
    %5075 = vmatprep.subr.bf16.mxu0 0
    %5076 = vmatpush1.bf16.msra.mxu0 %v3740
    %5077 = vmatprep.subr.bf16.mxu0 0
    %5078 = vmatpush1.bf16.msra.mxu0 %v3739
    %5079 = vmatprep.subr.bf16.mxu0 0
    %5080 = vmatpush1.bf16.msra.mxu0 %v3738
    %5081 = vmatprep.subr.bf16.mxu0 0
    %5082 = vmatpush1.bf16.msra.mxu0 %v3737
    %5083 = vmatprep.subr.bf16.mxu0 0
    %5084 = vmatpush1.bf16.msra.mxu0 %v3736
    %5085 = vmatprep.subr.bf16.mxu0 0
    %5086 = vmatpush1.bf16.msra.mxu0 %v3735
    %5087 = vmatprep.subr.bf16.mxu0 0
    %5088 = vmatpush2.bf16.msra.mxu0 %v3750
    %5089 = vmatprep.subr.bf16.mxu0 0
    %5090 = vmatpush2.bf16.msra.mxu0 %v3749
    %5091 = vmatprep.subr.bf16.mxu0 0
    %5092 = vmatpush2.bf16.msra.mxu0 %v3748
    %5093 = vmatprep.subr.bf16.mxu0 0
    %5094 = vmatpush2.bf16.msra.mxu0 %v3747
    %5095 = vmatprep.subr.bf16.mxu0 0
    %5096 = vmatpush2.bf16.msra.mxu0 %v3746
    %5097 = vmatprep.subr.bf16.mxu0 0
    %5098 = vmatpush2.bf16.msra.mxu0 %v3745
    %5099 = vmatprep.subr.bf16.mxu0 0
    %5100 = vmatpush2.bf16.msra.mxu0 %v3744
    %5101 = vmatprep.subr.bf16.mxu0 0
    %5102 = vmatpush2.bf16.msra.mxu0 %v3743
    %5103 = vmatprep.mubr.bf16.mxu0 %v411
    %5104 = vmatmul.mubr.bf16.gmra.mxu0 %v410
    %v5105 = vpop.f32.mrf.mxu0
    %v5106 = vadd.f32 %v5066, %v5105
    %v5107 = vpop.f32.mrf.mxu0
    %v5108 = vpop.f32.mrf.mxu0
    %v5109 = vpop.f32.mrf.mxu0
    %5110 = vdwg.mxu0
    %5111 = vmatprep.subr.bf16.mxu0 0
    %5112 = vmatpush1.bf16.msra.mxu0 %v3758
    %5113 = vmatprep.subr.bf16.mxu0 0
    %5114 = vmatpush1.bf16.msra.mxu0 %v3757
    %5115 = vmatprep.subr.bf16.mxu0 0
    %5116 = vmatpush1.bf16.msra.mxu0 %v3756
    %5117 = vmatprep.subr.bf16.mxu0 0
    %5118 = vmatpush1.bf16.msra.mxu0 %v3755
    %5119 = vmatprep.subr.bf16.mxu0 0
    %5120 = vmatpush1.bf16.msra.mxu0 %v3754
    %5121 = vmatprep.subr.bf16.mxu0 0
    %5122 = vmatpush1.bf16.msra.mxu0 %v3753
    %5123 = vmatprep.subr.bf16.mxu0 0
    %5124 = vmatpush1.bf16.msra.mxu0 %v3752
    %5125 = vmatprep.subr.bf16.mxu0 0
    %5126 = vmatpush1.bf16.msra.mxu0 %v3751
    %5127 = vmatprep.subr.bf16.mxu0 0
    %5128 = vmatpush2.bf16.msra.mxu0 %v3766
    %5129 = vmatprep.subr.bf16.mxu0 0
    %5130 = vmatpush2.bf16.msra.mxu0 %v3765
    %5131 = vmatprep.subr.bf16.mxu0 0
    %5132 = vmatpush2.bf16.msra.mxu0 %v3764
    %5133 = vmatprep.subr.bf16.mxu0 0
    %5134 = vmatpush2.bf16.msra.mxu0 %v3763
    %5135 = vmatprep.subr.bf16.mxu0 0
    %5136 = vmatpush2.bf16.msra.mxu0 %v3762
    %5137 = vmatprep.subr.bf16.mxu0 0
    %5138 = vmatpush2.bf16.msra.mxu0 %v3761
    %5139 = vmatprep.subr.bf16.mxu0 0
    %5140 = vmatpush2.bf16.msra.mxu0 %v3760
    %5141 = vmatprep.subr.bf16.mxu0 0
    %5142 = vmatpush2.bf16.msra.mxu0 %v3759
    %5143 = vmatprep.mubr.bf16.mxu0 %v413
    %5144 = vmatmul.mubr.bf16.gmra.mxu0 %v412
    %v5145 = vpop.f32.mrf.mxu0
    %v5146 = vadd.f32 %v5106, %v5145
    %v5147 = vpop.f32.mrf.mxu0
    %v5148 = vpop.f32.mrf.mxu0
    %v5149 = vpop.f32.mrf.mxu0
    %5150 = vdwg.mxu0
    %5151 = vmatprep.subr.bf16.mxu0 0
    %5152 = vmatpush1.bf16.msra.mxu0 %v3774
    %5153 = vmatprep.subr.bf16.mxu0 0
    %5154 = vmatpush1.bf16.msra.mxu0 %v3773
    %5155 = vmatprep.subr.bf16.mxu0 0
    %5156 = vmatpush1.bf16.msra.mxu0 %v3772
    %5157 = vmatprep.subr.bf16.mxu0 0
    %5158 = vmatpush1.bf16.msra.mxu0 %v3771
    %5159 = vmatprep.subr.bf16.mxu0 0
    %5160 = vmatpush1.bf16.msra.mxu0 %v3770
    %5161 = vmatprep.subr.bf16.mxu0 0
    %5162 = vmatpush1.bf16.msra.mxu0 %v3769
    %5163 = vmatprep.subr.bf16.mxu0 0
    %5164 = vmatpush1.bf16.msra.mxu0 %v3768
    %5165 = vmatprep.subr.bf16.mxu0 0
    %5166 = vmatpush1.bf16.msra.mxu0 %v3767
    %5167 = vmatprep.subr.bf16.mxu0 0
    %5168 = vmatpush2.bf16.msra.mxu0 %v3782
    %5169 = vmatprep.subr.bf16.mxu0 0
    %5170 = vmatpush2.bf16.msra.mxu0 %v3781
    %5171 = vmatprep.subr.bf16.mxu0 0
    %5172 = vmatpush2.bf16.msra.mxu0 %v3780
    %5173 = vmatprep.subr.bf16.mxu0 0
    %5174 = vmatpush2.bf16.msra.mxu0 %v3779
    %5175 = vmatprep.subr.bf16.mxu0 0
    %5176 = vmatpush2.bf16.msra.mxu0 %v3778
    %5177 = vmatprep.subr.bf16.mxu0 0
    %5178 = vmatpush2.bf16.msra.mxu0 %v3777
    %5179 = vmatprep.subr.bf16.mxu0 0
    %5180 = vmatpush2.bf16.msra.mxu0 %v3776
    %5181 = vmatprep.subr.bf16.mxu0 0
    %5182 = vmatpush2.bf16.msra.mxu0 %v3775
    %5183 = vmatprep.mubr.bf16.mxu0 %v415
    %5184 = vmatmul.mubr.bf16.gmra.mxu0 %v414
    %v5185 = vpop.f32.mrf.mxu0
    %v5186 = vadd.f32 %v5146, %v5185
    %v5187 = vpop.f32.mrf.mxu0
    %v5188 = vpop.f32.mrf.mxu0
    %v5189 = vpop.f32.mrf.mxu0
    %5190 = vdwg.mxu0
    %5191 = vmatprep.subr.bf16.mxu0 0
    %5192 = vmatpush1.bf16.msra.mxu0 %v3790
    %5193 = vmatprep.subr.bf16.mxu0 0
    %5194 = vmatpush1.bf16.msra.mxu0 %v3789
    %5195 = vmatprep.subr.bf16.mxu0 0
    %5196 = vmatpush1.bf16.msra.mxu0 %v3788
    %5197 = vmatprep.subr.bf16.mxu0 0
    %5198 = vmatpush1.bf16.msra.mxu0 %v3787
    %5199 = vmatprep.subr.bf16.mxu0 0
    %5200 = vmatpush1.bf16.msra.mxu0 %v3786
    %5201 = vmatprep.subr.bf16.mxu0 0
    %5202 = vmatpush1.bf16.msra.mxu0 %v3785
    %5203 = vmatprep.subr.bf16.mxu0 0
    %5204 = vmatpush1.bf16.msra.mxu0 %v3784
    %5205 = vmatprep.subr.bf16.mxu0 0
    %5206 = vmatpush1.bf16.msra.mxu0 %v3783
    %5207 = vmatprep.subr.bf16.mxu0 0
    %5208 = vmatpush2.bf16.msra.mxu0 %v3798
    %5209 = vmatprep.subr.bf16.mxu0 0
    %5210 = vmatpush2.bf16.msra.mxu0 %v3797
    %5211 = vmatprep.subr.bf16.mxu0 0
    %5212 = vmatpush2.bf16.msra.mxu0 %v3796
    %5213 = vmatprep.subr.bf16.mxu0 0
    %5214 = vmatpush2.bf16.msra.mxu0 %v3795
    %5215 = vmatprep.subr.bf16.mxu0 0
    %5216 = vmatpush2.bf16.msra.mxu0 %v3794
    %5217 = vmatprep.subr.bf16.mxu0 0
    %5218 = vmatpush2.bf16.msra.mxu0 %v3793
    %5219 = vmatprep.subr.bf16.mxu0 0
    %5220 = vmatpush2.bf16.msra.mxu0 %v3792
    %5221 = vmatprep.subr.bf16.mxu0 0
    %5222 = vmatpush2.bf16.msra.mxu0 %v3791
    %5223 = vmatprep.mubr.bf16.mxu0 %v417
    %5224 = vmatmul.mubr.bf16.gmra.mxu0 %v416
    %v5225 = vpop.f32.mrf.mxu0
    %v5226 = vadd.f32 %v5186, %v5225
    %v5227 = vpop.f32.mrf.mxu0
    %v5228 = vpop.f32.mrf.mxu0
    %v5229 = vpop.f32.mrf.mxu0
    %5230 = vdwg.mxu0
    %5231 = vmatprep.subr.bf16.mxu0 0
    %5232 = vmatpush1.bf16.msra.mxu0 %v3806
    %5233 = vmatprep.subr.bf16.mxu0 0
    %5234 = vmatpush1.bf16.msra.mxu0 %v3805
    %5235 = vmatprep.subr.bf16.mxu0 0
    %5236 = vmatpush1.bf16.msra.mxu0 %v3804
    %5237 = vmatprep.subr.bf16.mxu0 0
    %5238 = vmatpush1.bf16.msra.mxu0 %v3803
    %5239 = vmatprep.subr.bf16.mxu0 0
    %5240 = vmatpush1.bf16.msra.mxu0 %v3802
    %5241 = vmatprep.subr.bf16.mxu0 0
    %5242 = vmatpush1.bf16.msra.mxu0 %v3801
    %5243 = vmatprep.subr.bf16.mxu0 0
    %5244 = vmatpush1.bf16.msra.mxu0 %v3800
    %5245 = vmatprep.subr.bf16.mxu0 0
    %5246 = vmatpush1.bf16.msra.mxu0 %v3799
    %5247 = vmatprep.subr.bf16.mxu0 0
    %5248 = vmatpush2.bf16.msra.mxu0 %v3814
    %5249 = vmatprep.subr.bf16.mxu0 0
    %5250 = vmatpush2.bf16.msra.mxu0 %v3813
    %5251 = vmatprep.subr.bf16.mxu0 0
    %5252 = vmatpush2.bf16.msra.mxu0 %v3812
    %5253 = vmatprep.subr.bf16.mxu0 0
    %5254 = vmatpush2.bf16.msra.mxu0 %v3811
    %5255 = vmatprep.subr.bf16.mxu0 0
    %5256 = vmatpush2.bf16.msra.mxu0 %v3810
    %5257 = vmatprep.subr.bf16.mxu0 0
    %5258 = vmatpush2.bf16.msra.mxu0 %v3809
    %5259 = vmatprep.subr.bf16.mxu0 0
    %5260 = vmatpush2.bf16.msra.mxu0 %v3808
    %5261 = vmatprep.subr.bf16.mxu0 0
    %5262 = vmatpush2.bf16.msra.mxu0 %v3807
    %5263 = vmatprep.mubr.bf16.mxu0 %v419
    %5264 = vmatmul.mubr.bf16.gmra.mxu0 %v418
    %v5265 = vpop.f32.mrf.mxu0
    %v5266 = vadd.f32 %v5226, %v5265
    %v5267 = vpop.f32.mrf.mxu0
    %v5268 = vpop.f32.mrf.mxu0
    %v5269 = vpop.f32.mrf.mxu0
    %5270 = vdwg.mxu0
    %5271 = vmatprep.subr.bf16.mxu0 0
    %5272 = vmatpush1.bf16.msra.mxu0 %v3822
    %5273 = vmatprep.subr.bf16.mxu0 0
    %5274 = vmatpush1.bf16.msra.mxu0 %v3821
    %5275 = vmatprep.subr.bf16.mxu0 0
    %5276 = vmatpush1.bf16.msra.mxu0 %v3820
    %5277 = vmatprep.subr.bf16.mxu0 0
    %5278 = vmatpush1.bf16.msra.mxu0 %v3819
    %5279 = vmatprep.subr.bf16.mxu0 0
    %5280 = vmatpush1.bf16.msra.mxu0 %v3818
    %5281 = vmatprep.subr.bf16.mxu0 0
    %5282 = vmatpush1.bf16.msra.mxu0 %v3817
    %5283 = vmatprep.subr.bf16.mxu0 0
    %5284 = vmatpush1.bf16.msra.mxu0 %v3816
    %5285 = vmatprep.subr.bf16.mxu0 0
    %5286 = vmatpush1.bf16.msra.mxu0 %v3815
    %5287 = vmatprep.subr.bf16.mxu0 0
    %5288 = vmatpush2.bf16.msra.mxu0 %v3830
    %5289 = vmatprep.subr.bf16.mxu0 0
    %5290 = vmatpush2.bf16.msra.mxu0 %v3829
    %5291 = vmatprep.subr.bf16.mxu0 0
    %5292 = vmatpush2.bf16.msra.mxu0 %v3828
    %5293 = vmatprep.subr.bf16.mxu0 0
    %5294 = vmatpush2.bf16.msra.mxu0 %v3827
    %5295 = vmatprep.subr.bf16.mxu0 0
    %5296 = vmatpush2.bf16.msra.mxu0 %v3826
    %5297 = vmatprep.subr.bf16.mxu0 0
    %5298 = vmatpush2.bf16.msra.mxu0 %v3825
    %5299 = vmatprep.subr.bf16.mxu0 0
    %5300 = vmatpush2.bf16.msra.mxu0 %v3824
    %5301 = vmatprep.subr.bf16.mxu0 0
    %5302 = vmatpush2.bf16.msra.mxu0 %v3823
    %5303 = vmatprep.mubr.bf16.mxu0 %v421
    %5304 = vmatmul.mubr.bf16.gmra.mxu0 %v420
    %v5305 = vpop.f32.mrf.mxu0
    %v5306 = vadd.f32 %v5266, %v5305
    %v5307 = vpop.f32.mrf.mxu0
    %v5308 = vpop.f32.mrf.mxu0
    %v5309 = vpop.f32.mrf.mxu0
    %5310 = vdwg.mxu0
    %5311 = vmatprep.subr.bf16.mxu0 0
    %5312 = vmatpush1.bf16.msra.mxu0 %v3838
    %5313 = vmatprep.subr.bf16.mxu0 0
    %5314 = vmatpush1.bf16.msra.mxu0 %v3837
    %5315 = vmatprep.subr.bf16.mxu0 0
    %5316 = vmatpush1.bf16.msra.mxu0 %v3836
    %5317 = vmatprep.subr.bf16.mxu0 0
    %5318 = vmatpush1.bf16.msra.mxu0 %v3835
    %5319 = vmatprep.subr.bf16.mxu0 0
    %5320 = vmatpush1.bf16.msra.mxu0 %v3834
    %5321 = vmatprep.subr.bf16.mxu0 0
    %5322 = vmatpush1.bf16.msra.mxu0 %v3833
    %5323 = vmatprep.subr.bf16.mxu0 0
    %5324 = vmatpush1.bf16.msra.mxu0 %v3832
    %5325 = vmatprep.subr.bf16.mxu0 0
    %5326 = vmatpush1.bf16.msra.mxu0 %v3831
    %5327 = vmatprep.subr.bf16.mxu0 0
    %5328 = vmatpush2.bf16.msra.mxu0 %v3846
    %5329 = vmatprep.subr.bf16.mxu0 0
    %5330 = vmatpush2.bf16.msra.mxu0 %v3845
    %5331 = vmatprep.subr.bf16.mxu0 0
    %5332 = vmatpush2.bf16.msra.mxu0 %v3844
    %5333 = vmatprep.subr.bf16.mxu0 0
    %5334 = vmatpush2.bf16.msra.mxu0 %v3843
    %5335 = vmatprep.subr.bf16.mxu0 0
    %5336 = vmatpush2.bf16.msra.mxu0 %v3842
    %5337 = vmatprep.subr.bf16.mxu0 0
    %5338 = vmatpush2.bf16.msra.mxu0 %v3841
    %5339 = vmatprep.subr.bf16.mxu0 0
    %5340 = vmatpush2.bf16.msra.mxu0 %v3840
    %5341 = vmatprep.subr.bf16.mxu0 0
    %5342 = vmatpush2.bf16.msra.mxu0 %v3839
    %5343 = vmatprep.mubr.bf16.mxu0 %v423
    %5344 = vmatmul.mubr.bf16.gmra.mxu0 %v422
    %v5345 = vpop.f32.mrf.mxu0
    %v5346 = vadd.f32 %v5306, %v5345
    %v5347 = vpop.f32.mrf.mxu0
    %v5348 = vpop.f32.mrf.mxu0
    %v5349 = vpop.f32.mrf.mxu0
    %5350 = vdwg.mxu0
    %5351 = vmatprep.subr.bf16.mxu0 0
    %5352 = vmatpush1.bf16.msra.mxu0 %v3854
    %5353 = vmatprep.subr.bf16.mxu0 0
    %5354 = vmatpush1.bf16.msra.mxu0 %v3853
    %5355 = vmatprep.subr.bf16.mxu0 0
    %5356 = vmatpush1.bf16.msra.mxu0 %v3852
    %5357 = vmatprep.subr.bf16.mxu0 0
    %5358 = vmatpush1.bf16.msra.mxu0 %v3851
    %5359 = vmatprep.subr.bf16.mxu0 0
    %5360 = vmatpush1.bf16.msra.mxu0 %v3850
    %5361 = vmatprep.subr.bf16.mxu0 0
    %5362 = vmatpush1.bf16.msra.mxu0 %v3849
    %5363 = vmatprep.subr.bf16.mxu0 0
    %5364 = vmatpush1.bf16.msra.mxu0 %v3848
    %5365 = vmatprep.subr.bf16.mxu0 0
    %5366 = vmatpush1.bf16.msra.mxu0 %v3847
    %5367 = vmatprep.subr.bf16.mxu0 0
    %5368 = vmatpush2.bf16.msra.mxu0 %v3862
    %5369 = vmatprep.subr.bf16.mxu0 0
    %5370 = vmatpush2.bf16.msra.mxu0 %v3861
    %5371 = vmatprep.subr.bf16.mxu0 0
    %5372 = vmatpush2.bf16.msra.mxu0 %v3860
    %5373 = vmatprep.subr.bf16.mxu0 0
    %5374 = vmatpush2.bf16.msra.mxu0 %v3859
    %5375 = vmatprep.subr.bf16.mxu0 0
    %5376 = vmatpush2.bf16.msra.mxu0 %v3858
    %5377 = vmatprep.subr.bf16.mxu0 0
    %5378 = vmatpush2.bf16.msra.mxu0 %v3857
    %5379 = vmatprep.subr.bf16.mxu0 0
    %5380 = vmatpush2.bf16.msra.mxu0 %v3856
    %5381 = vmatprep.subr.bf16.mxu0 0
    %5382 = vmatpush2.bf16.msra.mxu0 %v3855
    %5383 = vmatprep.mubr.bf16.mxu0 %v425
    %5384 = vmatmul.mubr.bf16.gmra.mxu0 %v424
    %v5385 = vpop.f32.mrf.mxu0
    %v5386 = vadd.f32 %v5346, %v5385
    %v5387 = vpop.f32.mrf.mxu0
    %v5388 = vpop.f32.mrf.mxu0
    %v5389 = vpop.f32.mrf.mxu0
    %5390 = vdwg.mxu0
    %5391 = vmatprep.subr.bf16.mxu0 0
    %5392 = vmatpush1.bf16.msra.mxu0 %v3870
    %5393 = vmatprep.subr.bf16.mxu0 0
    %5394 = vmatpush1.bf16.msra.mxu0 %v3869
    %5395 = vmatprep.subr.bf16.mxu0 0
    %5396 = vmatpush1.bf16.msra.mxu0 %v3868
    %5397 = vmatprep.subr.bf16.mxu0 0
    %5398 = vmatpush1.bf16.msra.mxu0 %v3867
    %5399 = vmatprep.subr.bf16.mxu0 0
    %5400 = vmatpush1.bf16.msra.mxu0 %v3866
    %5401 = vmatprep.subr.bf16.mxu0 0
    %5402 = vmatpush1.bf16.msra.mxu0 %v3865
    %5403 = vmatprep.subr.bf16.mxu0 0
    %5404 = vmatpush1.bf16.msra.mxu0 %v3864
    %5405 = vmatprep.subr.bf16.mxu0 0
    %5406 = vmatpush1.bf16.msra.mxu0 %v3863
    %5407 = vmatprep.subr.bf16.mxu0 0
    %5408 = vmatpush2.bf16.msra.mxu0 %v3878
    %5409 = vmatprep.subr.bf16.mxu0 0
    %5410 = vmatpush2.bf16.msra.mxu0 %v3877
    %5411 = vmatprep.subr.bf16.mxu0 0
    %5412 = vmatpush2.bf16.msra.mxu0 %v3876
    %5413 = vmatprep.subr.bf16.mxu0 0
    %5414 = vmatpush2.bf16.msra.mxu0 %v3875
    %5415 = vmatprep.subr.bf16.mxu0 0
    %5416 = vmatpush2.bf16.msra.mxu0 %v3874
    %5417 = vmatprep.subr.bf16.mxu0 0
    %5418 = vmatpush2.bf16.msra.mxu0 %v3873
    %5419 = vmatprep.subr.bf16.mxu0 0
    %5420 = vmatpush2.bf16.msra.mxu0 %v3872
    %5421 = vmatprep.subr.bf16.mxu0 0
    %5422 = vmatpush2.bf16.msra.mxu0 %v3871
    %5423 = vmatprep.mubr.bf16.mxu0 %v427
    %5424 = vmatmul.mubr.bf16.gmra.mxu0 %v426
    %v5425 = vpop.f32.mrf.mxu0
    %v5426 = vadd.f32 %v5386, %v5425
    %v5427 = vpop.f32.mrf.mxu0
    %v5428 = vpop.f32.mrf.mxu0
    %v5429 = vpop.f32.mrf.mxu0
    %5430 = vdwg.mxu0
    %5431 = vmatprep.subr.bf16.mxu0 0
    %5432 = vmatpush1.bf16.msra.mxu0 %v3886
    %5433 = vmatprep.subr.bf16.mxu0 0
    %5434 = vmatpush1.bf16.msra.mxu0 %v3885
    %5435 = vmatprep.subr.bf16.mxu0 0
    %5436 = vmatpush1.bf16.msra.mxu0 %v3884
    %5437 = vmatprep.subr.bf16.mxu0 0
    %5438 = vmatpush1.bf16.msra.mxu0 %v3883
    %5439 = vmatprep.subr.bf16.mxu0 0
    %5440 = vmatpush1.bf16.msra.mxu0 %v3882
    %5441 = vmatprep.subr.bf16.mxu0 0
    %5442 = vmatpush1.bf16.msra.mxu0 %v3881
    %5443 = vmatprep.subr.bf16.mxu0 0
    %5444 = vmatpush1.bf16.msra.mxu0 %v3880
    %5445 = vmatprep.subr.bf16.mxu0 0
    %5446 = vmatpush1.bf16.msra.mxu0 %v3879
    %5447 = vmatprep.subr.bf16.mxu0 0
    %5448 = vmatpush2.bf16.msra.mxu0 %v3894
    %5449 = vmatprep.subr.bf16.mxu0 0
    %5450 = vmatpush2.bf16.msra.mxu0 %v3893
    %5451 = vmatprep.subr.bf16.mxu0 0
    %5452 = vmatpush2.bf16.msra.mxu0 %v3892
    %5453 = vmatprep.subr.bf16.mxu0 0
    %5454 = vmatpush2.bf16.msra.mxu0 %v3891
    %5455 = vmatprep.subr.bf16.mxu0 0
    %5456 = vmatpush2.bf16.msra.mxu0 %v3890
    %5457 = vmatprep.subr.bf16.mxu0 0
    %5458 = vmatpush2.bf16.msra.mxu0 %v3889
    %5459 = vmatprep.subr.bf16.mxu0 0
    %5460 = vmatpush2.bf16.msra.mxu0 %v3888
    %5461 = vmatprep.subr.bf16.mxu0 0
    %5462 = vmatpush2.bf16.msra.mxu0 %v3887
    %5463 = vmatprep.mubr.bf16.mxu0 %v429
    %5464 = vmatmul.mubr.bf16.gmra.mxu0 %v428
    %v5465 = vpop.f32.mrf.mxu0
    %v5466 = vadd.f32 %v5426, %v5465
    %v5467 = vpop.f32.mrf.mxu0
    %v5468 = vpop.f32.mrf.mxu0
    %v5469 = vpop.f32.mrf.mxu0
    %5470 = vdwg.mxu0
    %5471 = vmatprep.subr.bf16.mxu0 0
    %5472 = vmatpush1.bf16.msra.mxu0 %v3902
    %5473 = vmatprep.subr.bf16.mxu0 0
    %5474 = vmatpush1.bf16.msra.mxu0 %v3901
    %5475 = vmatprep.subr.bf16.mxu0 0
    %5476 = vmatpush1.bf16.msra.mxu0 %v3900
    %5477 = vmatprep.subr.bf16.mxu0 0
    %5478 = vmatpush1.bf16.msra.mxu0 %v3899
    %5479 = vmatprep.subr.bf16.mxu0 0
    %5480 = vmatpush1.bf16.msra.mxu0 %v3898
    %5481 = vmatprep.subr.bf16.mxu0 0
    %5482 = vmatpush1.bf16.msra.mxu0 %v3897
    %5483 = vmatprep.subr.bf16.mxu0 0
    %5484 = vmatpush1.bf16.msra.mxu0 %v3896
    %5485 = vmatprep.subr.bf16.mxu0 0
    %5486 = vmatpush1.bf16.msra.mxu0 %v3895
    %5487 = vmatprep.subr.bf16.mxu0 0
    %5488 = vmatpush2.bf16.msra.mxu0 %v3910
    %5489 = vmatprep.subr.bf16.mxu0 0
    %5490 = vmatpush2.bf16.msra.mxu0 %v3909
    %5491 = vmatprep.subr.bf16.mxu0 0
    %5492 = vmatpush2.bf16.msra.mxu0 %v3908
    %5493 = vmatprep.subr.bf16.mxu0 0
    %5494 = vmatpush2.bf16.msra.mxu0 %v3907
    %5495 = vmatprep.subr.bf16.mxu0 0
    %5496 = vmatpush2.bf16.msra.mxu0 %v3906
    %5497 = vmatprep.subr.bf16.mxu0 0
    %5498 = vmatpush2.bf16.msra.mxu0 %v3905
    %5499 = vmatprep.subr.bf16.mxu0 0
    %5500 = vmatpush2.bf16.msra.mxu0 %v3904
    %5501 = vmatprep.subr.bf16.mxu0 0
    %5502 = vmatpush2.bf16.msra.mxu0 %v3903
    %5503 = vmatprep.mubr.bf16.mxu0 %v431
    %5504 = vmatmul.mubr.bf16.gmra.mxu0 %v430
    %v5505 = vpop.f32.mrf.mxu0
    %v5506 = vadd.f32 %v5466, %v5505
    %v5507 = vpop.f32.mrf.mxu0
    %v5508 = vpop.f32.mrf.mxu0
    %v5509 = vpop.f32.mrf.mxu0
    %5510 = vdwg.mxu0
    %5511 = vmatprep.subr.bf16.mxu0 0
    %5512 = vmatpush1.bf16.msra.mxu0 %v3918
    %5513 = vmatprep.subr.bf16.mxu0 0
    %5514 = vmatpush1.bf16.msra.mxu0 %v3917
    %5515 = vmatprep.subr.bf16.mxu0 0
    %5516 = vmatpush1.bf16.msra.mxu0 %v3916
    %5517 = vmatprep.subr.bf16.mxu0 0
    %5518 = vmatpush1.bf16.msra.mxu0 %v3915
    %5519 = vmatprep.subr.bf16.mxu0 0
    %5520 = vmatpush1.bf16.msra.mxu0 %v3914
    %5521 = vmatprep.subr.bf16.mxu0 0
    %5522 = vmatpush1.bf16.msra.mxu0 %v3913
    %5523 = vmatprep.subr.bf16.mxu0 0
    %5524 = vmatpush1.bf16.msra.mxu0 %v3912
    %5525 = vmatprep.subr.bf16.mxu0 0
    %5526 = vmatpush1.bf16.msra.mxu0 %v3911
    %5527 = vmatprep.subr.bf16.mxu0 0
    %5528 = vmatpush2.bf16.msra.mxu0 %v3926
    %5529 = vmatprep.subr.bf16.mxu0 0
    %5530 = vmatpush2.bf16.msra.mxu0 %v3925
    %5531 = vmatprep.subr.bf16.mxu0 0
    %5532 = vmatpush2.bf16.msra.mxu0 %v3924
    %5533 = vmatprep.subr.bf16.mxu0 0
    %5534 = vmatpush2.bf16.msra.mxu0 %v3923
    %5535 = vmatprep.subr.bf16.mxu0 0
    %5536 = vmatpush2.bf16.msra.mxu0 %v3922
    %5537 = vmatprep.subr.bf16.mxu0 0
    %5538 = vmatpush2.bf16.msra.mxu0 %v3921
    %5539 = vmatprep.subr.bf16.mxu0 0
    %5540 = vmatpush2.bf16.msra.mxu0 %v3920
    %5541 = vmatprep.subr.bf16.mxu0 0
    %5542 = vmatpush2.bf16.msra.mxu0 %v3919
    %5543 = vmatprep.mubr.bf16.mxu0 %v433
    %5544 = vmatmul.mubr.bf16.gmra.mxu0 %v432
    %v5545 = vpop.f32.mrf.mxu0
    %v5546 = vadd.f32 %v5506, %v5545
    %v5547 = vpop.f32.mrf.mxu0
    %v5548 = vpop.f32.mrf.mxu0
    %v5549 = vpop.f32.mrf.mxu0
    %5550 = vdwg.mxu0
    %5551 = vmatprep.subr.bf16.mxu0 0
    %5552 = vmatpush1.bf16.msra.mxu0 %v3934
    %5553 = vmatprep.subr.bf16.mxu0 0
    %5554 = vmatpush1.bf16.msra.mxu0 %v3933
    %5555 = vmatprep.subr.bf16.mxu0 0
    %5556 = vmatpush1.bf16.msra.mxu0 %v3932
    %5557 = vmatprep.subr.bf16.mxu0 0
    %5558 = vmatpush1.bf16.msra.mxu0 %v3931
    %5559 = vmatprep.subr.bf16.mxu0 0
    %5560 = vmatpush1.bf16.msra.mxu0 %v3930
    %5561 = vmatprep.subr.bf16.mxu0 0
    %5562 = vmatpush1.bf16.msra.mxu0 %v3929
    %5563 = vmatprep.subr.bf16.mxu0 0
    %5564 = vmatpush1.bf16.msra.mxu0 %v3928
    %5565 = vmatprep.subr.bf16.mxu0 0
    %5566 = vmatpush1.bf16.msra.mxu0 %v3927
    %5567 = vmatprep.subr.bf16.mxu0 0
    %5568 = vmatpush2.bf16.msra.mxu0 %v3942
    %5569 = vmatprep.subr.bf16.mxu0 0
    %5570 = vmatpush2.bf16.msra.mxu0 %v3941
    %5571 = vmatprep.subr.bf16.mxu0 0
    %5572 = vmatpush2.bf16.msra.mxu0 %v3940
    %5573 = vmatprep.subr.bf16.mxu0 0
    %5574 = vmatpush2.bf16.msra.mxu0 %v3939
    %5575 = vmatprep.subr.bf16.mxu0 0
    %5576 = vmatpush2.bf16.msra.mxu0 %v3938
    %5577 = vmatprep.subr.bf16.mxu0 0
    %5578 = vmatpush2.bf16.msra.mxu0 %v3937
    %5579 = vmatprep.subr.bf16.mxu0 0
    %5580 = vmatpush2.bf16.msra.mxu0 %v3936
    %5581 = vmatprep.subr.bf16.mxu0 0
    %5582 = vmatpush2.bf16.msra.mxu0 %v3935
    %5583 = vmatprep.mubr.bf16.mxu0 %v435
    %5584 = vmatmul.mubr.bf16.gmra.mxu0 %v434
    %v5585 = vpop.f32.mrf.mxu0
    %v5586 = vadd.f32 %v5546, %v5585
    %v5587 = vpop.f32.mrf.mxu0
    %v5588 = vpop.f32.mrf.mxu0
    %v5589 = vpop.f32.mrf.mxu0
    %5590 = vdwg.mxu0
    %5591 = vmatprep.subr.bf16.mxu0 0
    %5592 = vmatpush1.bf16.msra.mxu0 %v3950
    %5593 = vmatprep.subr.bf16.mxu0 0
    %5594 = vmatpush1.bf16.msra.mxu0 %v3949
    %5595 = vmatprep.subr.bf16.mxu0 0
    %5596 = vmatpush1.bf16.msra.mxu0 %v3948
    %5597 = vmatprep.subr.bf16.mxu0 0
    %5598 = vmatpush1.bf16.msra.mxu0 %v3947
    %5599 = vmatprep.subr.bf16.mxu0 0
    %5600 = vmatpush1.bf16.msra.mxu0 %v3946
    %5601 = vmatprep.subr.bf16.mxu0 0
    %5602 = vmatpush1.bf16.msra.mxu0 %v3945
    %5603 = vmatprep.subr.bf16.mxu0 0
    %5604 = vmatpush1.bf16.msra.mxu0 %v3944
    %5605 = vmatprep.subr.bf16.mxu0 0
    %5606 = vmatpush1.bf16.msra.mxu0 %v3943
    %5607 = vmatprep.subr.bf16.mxu0 0
    %5608 = vmatpush2.bf16.msra.mxu0 %v3958
    %5609 = vmatprep.subr.bf16.mxu0 0
    %5610 = vmatpush2.bf16.msra.mxu0 %v3957
    %5611 = vmatprep.subr.bf16.mxu0 0
    %5612 = vmatpush2.bf16.msra.mxu0 %v3956
    %5613 = vmatprep.subr.bf16.mxu0 0
    %5614 = vmatpush2.bf16.msra.mxu0 %v3955
    %5615 = vmatprep.subr.bf16.mxu0 0
    %5616 = vmatpush2.bf16.msra.mxu0 %v3954
    %5617 = vmatprep.subr.bf16.mxu0 0
    %5618 = vmatpush2.bf16.msra.mxu0 %v3953
    %5619 = vmatprep.subr.bf16.mxu0 0
    %5620 = vmatpush2.bf16.msra.mxu0 %v3952
    %5621 = vmatprep.subr.bf16.mxu0 0
    %5622 = vmatpush2.bf16.msra.mxu0 %v3951
    %5623 = vmatprep.mubr.bf16.mxu0 %v437
    %5624 = vmatmul.mubr.bf16.gmra.mxu0 %v436
    %v5625 = vpop.f32.mrf.mxu0
    %v5626 = vadd.f32 %v5586, %v5625
    %v5627 = vpop.f32.mrf.mxu0
    %v5628 = vpop.f32.mrf.mxu0
    %v5629 = vpop.f32.mrf.mxu0
    %5630 = vdwg.mxu0
    %5631 = vmatprep.subr.bf16.mxu0 0
    %5632 = vmatpush1.bf16.msra.mxu0 %v3966
    %5633 = vmatprep.subr.bf16.mxu0 0
    %5634 = vmatpush1.bf16.msra.mxu0 %v3965
    %5635 = vmatprep.subr.bf16.mxu0 0
    %5636 = vmatpush1.bf16.msra.mxu0 %v3964
    %5637 = vmatprep.subr.bf16.mxu0 0
    %5638 = vmatpush1.bf16.msra.mxu0 %v3963
    %5639 = vmatprep.subr.bf16.mxu0 0
    %5640 = vmatpush1.bf16.msra.mxu0 %v3962
    %5641 = vmatprep.subr.bf16.mxu0 0
    %5642 = vmatpush1.bf16.msra.mxu0 %v3961
    %5643 = vmatprep.subr.bf16.mxu0 0
    %5644 = vmatpush1.bf16.msra.mxu0 %v3960
    %5645 = vmatprep.subr.bf16.mxu0 0
    %5646 = vmatpush1.bf16.msra.mxu0 %v3959
    %5647 = vmatprep.subr.bf16.mxu0 0
    %5648 = vmatpush2.bf16.msra.mxu0 %v3974
    %5649 = vmatprep.subr.bf16.mxu0 0
    %5650 = vmatpush2.bf16.msra.mxu0 %v3973
    %5651 = vmatprep.subr.bf16.mxu0 0
    %5652 = vmatpush2.bf16.msra.mxu0 %v3972
    %5653 = vmatprep.subr.bf16.mxu0 0
    %5654 = vmatpush2.bf16.msra.mxu0 %v3971
    %5655 = vmatprep.subr.bf16.mxu0 0
    %5656 = vmatpush2.bf16.msra.mxu0 %v3970
    %5657 = vmatprep.subr.bf16.mxu0 0
    %5658 = vmatpush2.bf16.msra.mxu0 %v3969
    %5659 = vmatprep.subr.bf16.mxu0 0
    %5660 = vmatpush2.bf16.msra.mxu0 %v3968
    %5661 = vmatprep.subr.bf16.mxu0 0
    %5662 = vmatpush2.bf16.msra.mxu0 %v3967
    %5663 = vmatprep.mubr.bf16.mxu0 %v439
    %5664 = vmatmul.mubr.bf16.gmra.mxu0 %v438
    %v5665 = vpop.f32.mrf.mxu0
    %v5666 = vadd.f32 %v5626, %v5665
    %v5667 = vpop.f32.mrf.mxu0
    %v5668 = vpop.f32.mrf.mxu0
    %v5669 = vpop.f32.mrf.mxu0
    %5670 = vdwg.mxu0
    %5671 = vmatprep.subr.bf16.mxu0 0
    %5672 = vmatpush1.bf16.msra.mxu0 %v3982
    %5673 = vmatprep.subr.bf16.mxu0 0
    %5674 = vmatpush1.bf16.msra.mxu0 %v3981
    %5675 = vmatprep.subr.bf16.mxu0 0
    %5676 = vmatpush1.bf16.msra.mxu0 %v3980
    %5677 = vmatprep.subr.bf16.mxu0 0
    %5678 = vmatpush1.bf16.msra.mxu0 %v3979
    %5679 = vmatprep.subr.bf16.mxu0 0
    %5680 = vmatpush1.bf16.msra.mxu0 %v3978
    %5681 = vmatprep.subr.bf16.mxu0 0
    %5682 = vmatpush1.bf16.msra.mxu0 %v3977
    %5683 = vmatprep.subr.bf16.mxu0 0
    %5684 = vmatpush1.bf16.msra.mxu0 %v3976
    %5685 = vmatprep.subr.bf16.mxu0 0
    %5686 = vmatpush1.bf16.msra.mxu0 %v3975
    %5687 = vmatprep.subr.bf16.mxu0 0
    %5688 = vmatpush2.bf16.msra.mxu0 %v3990
    %5689 = vmatprep.subr.bf16.mxu0 0
    %5690 = vmatpush2.bf16.msra.mxu0 %v3989
    %5691 = vmatprep.subr.bf16.mxu0 0
    %5692 = vmatpush2.bf16.msra.mxu0 %v3988
    %5693 = vmatprep.subr.bf16.mxu0 0
    %5694 = vmatpush2.bf16.msra.mxu0 %v3987
    %5695 = vmatprep.subr.bf16.mxu0 0
    %5696 = vmatpush2.bf16.msra.mxu0 %v3986
    %5697 = vmatprep.subr.bf16.mxu0 0
    %5698 = vmatpush2.bf16.msra.mxu0 %v3985
    %5699 = vmatprep.subr.bf16.mxu0 0
    %5700 = vmatpush2.bf16.msra.mxu0 %v3984
    %5701 = vmatprep.subr.bf16.mxu0 0
    %5702 = vmatpush2.bf16.msra.mxu0 %v3983
    %5703 = vmatprep.mubr.bf16.mxu0 %v441
    %5704 = vmatmul.mubr.bf16.gmra.mxu0 %v440
    %v5705 = vpop.f32.mrf.mxu0
    %v5706 = vadd.f32 %v5666, %v5705
    %v5707 = vpop.f32.mrf.mxu0
    %v5708 = vpop.f32.mrf.mxu0
    %v5709 = vpop.f32.mrf.mxu0
    %5710 = vdwg.mxu0
    %5711 = vmatprep.subr.bf16.mxu0 0
    %5712 = vmatpush1.bf16.msra.mxu0 %v3998
    %5713 = vmatprep.subr.bf16.mxu0 0
    %5714 = vmatpush1.bf16.msra.mxu0 %v3997
    %5715 = vmatprep.subr.bf16.mxu0 0
    %5716 = vmatpush1.bf16.msra.mxu0 %v3996
    %5717 = vmatprep.subr.bf16.mxu0 0
    %5718 = vmatpush1.bf16.msra.mxu0 %v3995
    %5719 = vmatprep.subr.bf16.mxu0 0
    %5720 = vmatpush1.bf16.msra.mxu0 %v3994
    %5721 = vmatprep.subr.bf16.mxu0 0
    %5722 = vmatpush1.bf16.msra.mxu0 %v3993
    %5723 = vmatprep.subr.bf16.mxu0 0
    %5724 = vmatpush1.bf16.msra.mxu0 %v3992
    %5725 = vmatprep.subr.bf16.mxu0 0
    %5726 = vmatpush1.bf16.msra.mxu0 %v3991
    %5727 = vmatprep.subr.bf16.mxu0 0
    %5728 = vmatpush2.bf16.msra.mxu0 %v4006
    %5729 = vmatprep.subr.bf16.mxu0 0
    %5730 = vmatpush2.bf16.msra.mxu0 %v4005
    %5731 = vmatprep.subr.bf16.mxu0 0
    %5732 = vmatpush2.bf16.msra.mxu0 %v4004
    %5733 = vmatprep.subr.bf16.mxu0 0
    %5734 = vmatpush2.bf16.msra.mxu0 %v4003
    %5735 = vmatprep.subr.bf16.mxu0 0
    %5736 = vmatpush2.bf16.msra.mxu0 %v4002
    %5737 = vmatprep.subr.bf16.mxu0 0
    %5738 = vmatpush2.bf16.msra.mxu0 %v4001
    %5739 = vmatprep.subr.bf16.mxu0 0
    %5740 = vmatpush2.bf16.msra.mxu0 %v4000
    %5741 = vmatprep.subr.bf16.mxu0 0
    %5742 = vmatpush2.bf16.msra.mxu0 %v3999
    %5743 = vmatprep.mubr.bf16.mxu0 %v443
    %5744 = vmatmul.mubr.bf16.gmra.mxu0 %v442
    %v5745 = vpop.f32.mrf.mxu0
    %v5746 = vadd.f32 %v5706, %v5745
    %v5747 = vpop.f32.mrf.mxu0
    %v5748 = vpop.f32.mrf.mxu0
    %v5749 = vpop.f32.mrf.mxu0
    %5750 = vdwg.mxu0
    %5751 = vmatprep.subr.bf16.mxu0 0
    %5752 = vmatpush1.bf16.msra.mxu0 %v4014
    %5753 = vmatprep.subr.bf16.mxu0 0
    %5754 = vmatpush1.bf16.msra.mxu0 %v4013
    %5755 = vmatprep.subr.bf16.mxu0 0
    %5756 = vmatpush1.bf16.msra.mxu0 %v4012
    %5757 = vmatprep.subr.bf16.mxu0 0
    %5758 = vmatpush1.bf16.msra.mxu0 %v4011
    %5759 = vmatprep.subr.bf16.mxu0 0
    %5760 = vmatpush1.bf16.msra.mxu0 %v4010
    %5761 = vmatprep.subr.bf16.mxu0 0
    %5762 = vmatpush1.bf16.msra.mxu0 %v4009
    %5763 = vmatprep.subr.bf16.mxu0 0
    %5764 = vmatpush1.bf16.msra.mxu0 %v4008
    %5765 = vmatprep.subr.bf16.mxu0 0
    %5766 = vmatpush1.bf16.msra.mxu0 %v4007
    %5767 = vmatprep.subr.bf16.mxu0 0
    %5768 = vmatpush2.bf16.msra.mxu0 %v4022
    %5769 = vmatprep.subr.bf16.mxu0 0
    %5770 = vmatpush2.bf16.msra.mxu0 %v4021
    %5771 = vmatprep.subr.bf16.mxu0 0
    %5772 = vmatpush2.bf16.msra.mxu0 %v4020
    %5773 = vmatprep.subr.bf16.mxu0 0
    %5774 = vmatpush2.bf16.msra.mxu0 %v4019
    %5775 = vmatprep.subr.bf16.mxu0 0
    %5776 = vmatpush2.bf16.msra.mxu0 %v4018
    %5777 = vmatprep.subr.bf16.mxu0 0
    %5778 = vmatpush2.bf16.msra.mxu0 %v4017
    %5779 = vmatprep.subr.bf16.mxu0 0
    %5780 = vmatpush2.bf16.msra.mxu0 %v4016
    %5781 = vmatprep.subr.bf16.mxu0 0
    %5782 = vmatpush2.bf16.msra.mxu0 %v4015
    %5783 = vmatprep.mubr.bf16.mxu0 %v445
    %5784 = vmatmul.mubr.bf16.gmra.mxu0 %v444
    %v5785 = vpop.f32.mrf.mxu0
    %v5786 = vadd.f32 %v5746, %v5785
    %v5787 = vpop.f32.mrf.mxu0
    %v5788 = vpop.f32.mrf.mxu0
    %v5789 = vpop.f32.mrf.mxu0
    %5790 = vdwg.mxu0
    %5791 = vmatprep.subr.bf16.mxu0 0
    %5792 = vmatpush1.bf16.msra.mxu0 %v4030
    %5793 = vmatprep.subr.bf16.mxu0 0
    %5794 = vmatpush1.bf16.msra.mxu0 %v4029
    %5795 = vmatprep.subr.bf16.mxu0 0
    %5796 = vmatpush1.bf16.msra.mxu0 %v4028
    %5797 = vmatprep.subr.bf16.mxu0 0
    %5798 = vmatpush1.bf16.msra.mxu0 %v4027
    %5799 = vmatprep.subr.bf16.mxu0 0
    %5800 = vmatpush1.bf16.msra.mxu0 %v4026
    %5801 = vmatprep.subr.bf16.mxu0 0
    %5802 = vmatpush1.bf16.msra.mxu0 %v4025
    %5803 = vmatprep.subr.bf16.mxu0 0
    %5804 = vmatpush1.bf16.msra.mxu0 %v4024
    %5805 = vmatprep.subr.bf16.mxu0 0
    %5806 = vmatpush1.bf16.msra.mxu0 %v4023
    %5807 = vmatprep.subr.bf16.mxu0 0
    %5808 = vmatpush2.bf16.msra.mxu0 %v4038
    %5809 = vmatprep.subr.bf16.mxu0 0
    %5810 = vmatpush2.bf16.msra.mxu0 %v4037
    %5811 = vmatprep.subr.bf16.mxu0 0
    %5812 = vmatpush2.bf16.msra.mxu0 %v4036
    %5813 = vmatprep.subr.bf16.mxu0 0
    %5814 = vmatpush2.bf16.msra.mxu0 %v4035
    %5815 = vmatprep.subr.bf16.mxu0 0
    %5816 = vmatpush2.bf16.msra.mxu0 %v4034
    %5817 = vmatprep.subr.bf16.mxu0 0
    %5818 = vmatpush2.bf16.msra.mxu0 %v4033
    %5819 = vmatprep.subr.bf16.mxu0 0
    %5820 = vmatpush2.bf16.msra.mxu0 %v4032
    %5821 = vmatprep.subr.bf16.mxu0 0
    %5822 = vmatpush2.bf16.msra.mxu0 %v4031
    %5823 = vmatprep.mubr.bf16.mxu0 %v447
    %5824 = vmatmul.mubr.bf16.gmra.mxu0 %v446
    %v5825 = vpop.f32.mrf.mxu0
    %v5826 = vadd.f32 %v5786, %v5825
    %v5827 = vpop.f32.mrf.mxu0
    %v5828 = vpop.f32.mrf.mxu0
    %v5829 = vpop.f32.mrf.mxu0
    %5830 = vdwg.mxu0
    %5831 = vst [vmem:[#allocation2] sm:$0x3] %v5826
    // Predicated region
    $region14: #{forward.3} parent=1 // pred_check
      _
    $region15: #{forward.3} parent=1 // pred_check_branch
      %5833 = sbr.rel (0) target = $region17
    $region16: #{forward.3} parent=1 // pred_region
      %s5835 = ssub.s32 32, 32
      %5836 = vsyncadd [#allocation3], %s5835
      %s5838 = sshll.u32 [#allocation2], 4
      %s5839 = int_to_ptr.vmem [resolvable:$true] %s5838
      %5841 = dma.vmem_to_hbm [thread:$0]  %s5839, 32, %s3, [#allocation3]
    $region17: #{forward.3} parent=1 // pred_fallthru
      _
    // Predicated region
    $region18: #{forward.3} parent=1 // pred_check
      _
    $region19: #{forward.3} parent=1 // pred_check_branch
      %5843 = sbr.rel (0) target = $region21
    $region20: #{forward.3} parent=1 // pred_region
      %5844 = dma.done [#allocation3], 32
    $region21: #{forward.3} parent=1 // pred_fallthru
      _
    %5845 = vsyncpa [#allocation3], 1

</llo_original>
